<compile_context>
chip_gen: v5e
topology: v5e:2x2
jax: 0.10.0
libtpu: 0.0.40
codegen_flags: <defaults>
</compile_context>

<pallas_src>
import functools
import math

import jax
import jax.numpy as jnp
from jax.experimental import pallas as pl
from jax.experimental.pallas import tpu as pltpu


# ----------------------------------------------------------------------------
# helpers
# ----------------------------------------------------------------------------

def _tile(dim: int, pref: int) -> int:
    """Pick a tile for `dim`: the preferred size if it divides exactly, else
    the largest 128-aligned power-of-two divisor, else the full dimension
    (a full-dim block always satisfies the TPU (8,128) block constraint)."""
    if dim <= pref:
        return dim
    t = pref
    while t >= 128:
        if dim % t == 0:
            return t
        t //= 2
    return dim


# ----------------------------------------------------------------------------
# tiled GEMM  (bias + optional ReLU epilogue)
# ----------------------------------------------------------------------------

def _linear_kernel(x_ref, w_ref, b_ref, o_ref, acc_ref, *, activation):
    k = pl.program_id(2)

    @pl.when(k == 0)
    def _():
        acc_ref[...] = jnp.zeros_like(acc_ref)

    acc_ref[...] += jnp.dot(x_ref[...], w_ref[...],
                            preferred_element_type=jnp.float32)

    @pl.when(k == pl.num_programs(2) - 1)
    def _():
        y = acc_ref[...] + b_ref[...].astype(jnp.float32)
        if activation == "relu":
            y = jnp.maximum(y, 0.0)
        o_ref[...] = y.astype(o_ref.dtype)


def linear(x, w, b, activation="none", out_dtype=None,
           tm_pref=256, tn_pref=512, tk_pref=512):
    """x:(M,K) @ w:(K,N) + b, tiled with an f32 VMEM accumulator."""
    M, K = x.shape
    N = w.shape[1]
    out_dtype = out_dtype if out_dtype is not None else x.dtype
    tm, tn, tk = _tile(M, tm_pref), _tile(N, tn_pref), _tile(K, tk_pref)
    grid = (M // tm, N // tn, K // tk)
    return pl.pallas_call(
        functools.partial(_linear_kernel, activation=activation),
        out_shape=jax.ShapeDtypeStruct((M, N), out_dtype),
        grid=grid,
        in_specs=[
            pl.BlockSpec((tm, tk), lambda i, j, k: (i, k)),
            pl.BlockSpec((tk, tn), lambda i, j, k: (k, j)),
            pl.BlockSpec((1, tn), lambda i, j, k: (0, j)),
        ],
        out_specs=pl.BlockSpec((tm, tn), lambda i, j, k: (i, j)),
        scratch_shapes=[pltpu.VMEM((tm, tn), jnp.float32)],
        compiler_params=pltpu.CompilerParams(
            dimension_semantics=("parallel", "parallel", "arbitrary")),
    )(x, w, b.reshape(1, N).astype(jnp.float32))


# ----------------------------------------------------------------------------
# tiled GEMM with fused (residual add + LayerNorm) epilogue
#   - the full feature dim N lives in one block so LN statistics are local
# ----------------------------------------------------------------------------

def _linear_add_ln_kernel(x_ref, w_ref, b_ref, r_ref, g_ref, bln_ref,
                          o_ref, acc_ref):
    k = pl.program_id(1)

    @pl.when(k == 0)
    def _():
        acc_ref[...] = jnp.zeros_like(acc_ref)

    acc_ref[...] += jnp.dot(x_ref[...], w_ref[...],
                            preferred_element_type=jnp.float32)

    @pl.when(k == pl.num_programs(1) - 1)
    def _():
        y = (acc_ref[...] + b_ref[...].astype(jnp.float32)
             + r_ref[...].astype(jnp.float32))
        mu = jnp.mean(y, axis=-1, keepdims=True)
        var = jnp.mean(jnp.square(y - mu), axis=-1, keepdims=True)
        yn = (y - mu) * jax.lax.rsqrt(var + 1e-5)
        o_ref[...] = (yn * g_ref[...].astype(jnp.float32)
                      + bln_ref[...].astype(jnp.float32)).astype(o_ref.dtype)


def linear_add_ln(x, w, b, residual, gamma, beta, tm_pref=256, tk_pref=512):
    """LayerNorm(residual + x @ w + b) with the LN fused into the GEMM epilogue."""
    M, K = x.shape
    N = w.shape[1]
    tm, tk = _tile(M, tm_pref), _tile(K, tk_pref)
    grid = (M // tm, K // tk)
    return pl.pallas_call(
        _linear_add_ln_kernel,
        out_shape=jax.ShapeDtypeStruct((M, N), residual.dtype),
        grid=grid,
        in_specs=[
            pl.BlockSpec((tm, tk), lambda i, k: (i, k)),
            pl.BlockSpec((tk, N), lambda i, k: (k, 0)),
            pl.BlockSpec((1, N), lambda i, k: (0, 0)),
            pl.BlockSpec((tm, N), lambda i, k: (i, 0)),
            pl.BlockSpec((1, N), lambda i, k: (0, 0)),
            pl.BlockSpec((1, N), lambda i, k: (0, 0)),
        ],
        out_specs=pl.BlockSpec((tm, N), lambda i, k: (i, 0)),
        scratch_shapes=[pltpu.VMEM((tm, N), jnp.float32)],
        compiler_params=pltpu.CompilerParams(
            dimension_semantics=("parallel", "arbitrary")),
    )(x, w, b.reshape(1, N).astype(jnp.float32), residual,
      gamma.reshape(1, N).astype(jnp.float32),
      beta.reshape(1, N).astype(jnp.float32))


# ----------------------------------------------------------------------------
# flash-style multi-head attention
#   * q/k/v are read as lane-dense D-wide column blocks directly out of the
#     packed projection outputs (no XLA column-slice copies).
#   * masks are rebuilt in-kernel from a (B,1,Sk) pad vector + iota.
#   * fully-masked causal (qi,ki) blocks are skipped.
# ----------------------------------------------------------------------------

def _flash_attn_kernel(q_ref, k_ref, v_ref, pad_ref, o_ref,
                       m_sc, l_sc, acc_sc, *, H, causal):
    qi = pl.program_id(1)
    ki = pl.program_id(2)
    nk = pl.num_programs(2)

    _, tq, D = q_ref.shape
    _, tk, _ = k_ref.shape
    Dh = D // H

    @pl.when(ki == 0)
    def _():
        m_sc[...] = jnp.full_like(m_sc, -jnp.inf)
        l_sc[...] = jnp.zeros_like(l_sc)
        acc_sc[...] = jnp.zeros_like(acc_sc)

    def compute_block():
        q = q_ref[0]          # (tq, D) bf16, Q already carries 1/sqrt(Dh)
        k = k_ref[0]          # (tk, D) bf16
        v = v_ref[0]          # (tk, D) bf16
        pad = pad_ref[0]      # (1, tk) f32, 1.0 at <pad> key positions

        # additive mask bias shared across heads, built once per grid step
        bias = jnp.broadcast_to(jnp.where(pad > 0.5, -1e9, 0.0), (tq, tk))
        if causal:
            q_pos = qi * tq + jax.lax.broadcasted_iota(jnp.int32, (tq, tk), 0)
            k_pos = ki * tk + jax.lax.broadcasted_iota(jnp.int32, (tq, tk), 1)
            bias = jnp.where(k_pos > q_pos, -1e9, bias)

        for h in range(H):        # static unroll over heads
            sl = slice(h * Dh, (h + 1) * Dh)
            qh = q[:, sl]                                  # (tq, Dh)
            kh = k[:, sl]                                  # (tk, Dh)
            vh = v[:, sl]                                  # (tk, Dh)
            s = jax.lax.dot_general(qh, kh, (((1,), (1,)), ((), ())),
                                    preferred_element_type=jnp.float32)
            s = s + bias                                   # (tq, tk) f32

            m_prev = m_sc[h]                               # (tq, 1)
            m_new = jnp.maximum(m_prev, jnp.max(s, axis=-1, keepdims=True))
            alpha = jnp.exp(m_prev - m_new)
            p = jnp.exp(s - m_new)
            l_sc[h] = alpha * l_sc[h] + jnp.sum(p, axis=-1, keepdims=True)
            pv = jnp.dot(p.astype(v.dtype), vh,
                         preferred_element_type=jnp.float32)
            acc_sc[h] = alpha * acc_sc[h] + pv
            m_sc[h] = m_new

    if causal:
        # skip (qi, ki) blocks that lie entirely above the diagonal
        pl.when(ki * tk <= qi * tq + tq - 1)(compute_block)
    else:
        compute_block()

    @pl.when(ki == nk - 1)
    def _():
        # store each head directly into its lane slice (no concatenate)
        for h in range(H):
            inv = pl.reciprocal(l_sc[h], approx=True)       # (tq, 1)
            o_ref[0, :, pl.ds(h * Dh, Dh)] = (acc_sc[h] * inv).astype(o_ref.dtype)


def flash_attention(q_src, k_src, v_src, key_pad, *, H, D, causal,
                    q_col=0, k_col=0, v_col=0, tq_pref=128, tk_pref=128):
    """q_src/k_src/v_src: (B, S, C*D) arrays; {q,k,v}_col selects which D-wide
    column block holds Q/K/V, so fused QKV / KV projection outputs are read
    directly.  Q must already carry the 1/sqrt(Dh) scale (folded into wq).
    key_pad: (B, 1, Sk) with 1.0 at <pad> key positions.  Returns (B, Sq, D)."""
    B, Sq, _ = q_src.shape
    Sk = k_src.shape[1]
    Dh = D // H
    tq, tk = _tile(Sq, tq_pref), _tile(Sk, tk_pref)
    grid = (B, Sq // tq, Sk // tk)
    return pl.pallas_call(
        functools.partial(_flash_attn_kernel, H=H, causal=causal),
        out_shape=jax.ShapeDtypeStruct((B, Sq, D), q_src.dtype),
        grid=grid,
        in_specs=[
            pl.BlockSpec((1, tq, D), lambda b, qi, ki: (b, qi, q_col)),
            pl.BlockSpec((1, tk, D), lambda b, qi, ki: (b, ki, k_col)),
            pl.BlockSpec((1, tk, D), lambda b, qi, ki: (b, ki, v_col)),
            pl.BlockSpec((1, 1, tk), lambda b, qi, ki: (b, 0, ki)),
        ],
        out_specs=pl.BlockSpec((1, tq, D), lambda b, qi, ki: (b, qi, 0)),
        scratch_shapes=[
            pltpu.VMEM((H, tq, 1), jnp.float32),    # running max  m
            pltpu.VMEM((H, tq, 1), jnp.float32),    # running sum  l
            pltpu.VMEM((H, tq, Dh), jnp.float32),   # accumulator
        ],
        compiler_params=pltpu.CompilerParams(
            dimension_semantics=("parallel", "parallel", "arbitrary")),
    )(q_src, k_src, v_src, key_pad)


# ----------------------------------------------------------------------------
# model glue (JAX level: embedding gather, free reshapes only)
# ----------------------------------------------------------------------------

def self_attention_block(x2d, p, key_pad, ln_g, ln_b, *, B, H, causal):
    M, D = x2d.shape
    S = M // B
    qkv = linear(x2d, p["wqkv"], p["bqkv"])            # (M, 3D); Q pre-scaled
    if D % 128 == 0:
        qkv3 = qkv.reshape(B, S, 3 * D)                # free reshape
        o = flash_attention(qkv3, qkv3, qkv3, key_pad, H=H, D=D, causal=causal,
                            q_col=0, k_col=1, v_col=2)
    else:
        # TODO(synk): sub-128 d_model falls back to XLA column slices.
        q = qkv[:, :D].reshape(B, S, D)
        k = qkv[:, D:2 * D].reshape(B, S, D)
        v = qkv[:, 2 * D:].reshape(B, S, D)
        o = flash_attention(q, k, v, key_pad, H=H, D=D, causal=causal)
    return linear_add_ln(o.reshape(M, D), p["wo"], p["bo"], x2d, ln_g, ln_b)


def cross_attention_block(x2d, enc2d, p, src_pad, ln_g, ln_b, *, B, H):
    M, D = x2d.shape
    S_t = M // B
    S_s = enc2d.shape[0] // B
    q = linear(x2d, p["wq"], p["bq"])                  # (M, D); pre-scaled
    kv = linear(enc2d, p["wkv"], p["bkv"])             # (B*S_s, 2D) fused KV
    if D % 128 == 0:
        q3 = q.reshape(B, S_t, D)
        kv3 = kv.reshape(B, S_s, 2 * D)
        o = flash_attention(q3, kv3, kv3, src_pad, H=H, D=D, causal=False,
                            q_col=0, k_col=0, v_col=1)
    else:
        # TODO(synk): sub-128 d_model falls back to XLA column slices.
        q3 = q.reshape(B, S_t, D)
        k = kv[:, :D].reshape(B, S_s, D)
        v = kv[:, D:].reshape(B, S_s, D)
        o = flash_attention(q3, k, v, src_pad, H=H, D=D, causal=False)
    return linear_add_ln(o.reshape(M, D), p["wo"], p["bo"], x2d, ln_g, ln_b)


def ffn_block(x2d, p, ln_g, ln_b):
    h = linear(x2d, p["w1"], p["b1"], activation="relu")
    return linear_add_ln(h, p["w2"], p["b2"], x2d, ln_g, ln_b)


def encoder_layer(x, src_pad, p, B, H):
    x = self_attention_block(x, p["mha"], src_pad, p["ln1_g"], p["ln1_b"],
                             B=B, H=H, causal=False)
    x = ffn_block(x, p, p["ln2_g"], p["ln2_b"])
    return x


def decoder_layer(y, enc_out, tgt_pad, src_pad, p, B, H):
    y = self_attention_block(y, p["self_mha"], tgt_pad, p["ln1_g"], p["ln1_b"],
                             B=B, H=H, causal=True)
    y = cross_attention_block(y, enc_out, p["cross_mha"], src_pad,
                              p["ln2_g"], p["ln2_b"], B=B, H=H)
    y = ffn_block(y, p, p["ln3_g"], p["ln3_b"])
    return y


def positional_encoding(max_len, d_model):
    pos = jnp.arange(max_len, dtype=jnp.float32)[:, None]
    i = jnp.arange(d_model)[None, :]
    angle = pos / jnp.power(10000.0, (2 * (i // 2)).astype(jnp.float32) / d_model)
    return jnp.where(i % 2 == 0, jnp.sin(angle), jnp.cos(angle)).astype(jnp.float32)


def embed(tokens, table, pe):
    # TODO(synk): embedding gather stays in XLA (no clean dense Pallas mapping).
    B, S = tokens.shape
    D = table.shape[1]
    x = table[tokens] * math.sqrt(D) + pe[:S][None, :, :]
    return x.reshape(B * S, D).astype(jnp.bfloat16)


def transformer_forward(params, source, target, B, H):
    S_s = source.shape[1]
    S_t = target.shape[1]

    # pad indicator over KEY positions only (1.0 where token == <pad>); the
    # full padding / look-ahead masks are reconstructed inside the kernel.
    src_pad = (source == 0).astype(jnp.float32).reshape(B, 1, S_s)
    tgt_pad = (target == 0).astype(jnp.float32).reshape(B, 1, S_t)

    x = embed(source, params["enc_emb"], params["pe"])
    for p in params["enc_layers"]:
        x = encoder_layer(x, src_pad, p, B, H)
    enc_out = x

    y = embed(target, params["dec_emb"], params["pe"])
    for p in params["dec_layers"]:
        y = decoder_layer(y, enc_out, tgt_pad, src_pad, p, B, H)

    logits = linear(y, params["w_out"], params["b_out"], out_dtype=jnp.float32)
    return logits.reshape(B, S_t, -1)


# ----------------------------------------------------------------------------
# parameters (bf16 weights for MXU operands, f32 biases / LN params)
#   1/sqrt(Dh) softmax scale is folded into the Q projection columns at init.
# ----------------------------------------------------------------------------

def init_params(key, vocab, d_model, H, ffn_hidden, num_layers, max_len):
    keys = iter(jax.random.split(key, 1024))
    q_scale = 1.0 / math.sqrt(d_model // H)

    def dense(din, dout, col_scale=None):
        w = jax.random.normal(next(keys), (din, dout), jnp.float32) * 0.02
        b = jnp.zeros((dout,), jnp.float32)
        if col_scale is not None:
            w = w * col_scale[None, :]
            b = b * col_scale
        return w.astype(jnp.bfloat16), b

    def mha_self():
        cs = jnp.concatenate([jnp.full((d_model,), q_scale, jnp.float32),
                              jnp.ones((2 * d_model,), jnp.float32)])
        wqkv, bqkv = dense(d_model, 3 * d_model, cs)      # scale folded into Q cols
        wo, bo = dense(d_model, d_model)
        return dict(wqkv=wqkv, bqkv=bqkv, wo=wo, bo=bo)

    def mha_cross():
        wq, bq = dense(d_model, d_model,
                       jnp.full((d_model,), q_scale, jnp.float32))
        wkv, bkv = dense(d_model, 2 * d_model)
        wo, bo = dense(d_model, d_model)
        return dict(wq=wq, bq=bq, wkv=wkv, bkv=bkv, wo=wo, bo=bo)

    def enc_layer():
        w1, b1 = dense(d_model, ffn_hidden)
        w2, b2 = dense(ffn_hidden, d_model)
        return dict(mha=mha_self(),
                    ln1_g=jnp.ones((d_model,), jnp.float32),
                    ln1_b=jnp.zeros((d_model,), jnp.float32),
                    w1=w1, b1=b1, w2=w2, b2=b2,
                    ln2_g=jnp.ones((d_model,), jnp.float32),
                    ln2_b=jnp.zeros((d_model,), jnp.float32))

    def dec_layer():
        w1, b1 = dense(d_model, ffn_hidden)
        w2, b2 = dense(ffn_hidden, d_model)
        return dict(self_mha=mha_self(), cross_mha=mha_cross(),
                    ln1_g=jnp.ones((d_model,), jnp.float32),
                    ln1_b=jnp.zeros((d_model,), jnp.float32),
                    ln2_g=jnp.ones((d_model,), jnp.float32),
                    ln2_b=jnp.zeros((d_model,), jnp.float32),
                    w1=w1, b1=b1, w2=w2, b2=b2,
                    ln3_g=jnp.ones((d_model,), jnp.float32),
                    ln3_b=jnp.zeros((d_model,), jnp.float32))

    w_out, b_out = dense(d_model, vocab)
    return dict(
        enc_emb=jax.random.normal(next(keys), (vocab, d_model), jnp.float32) * 0.02,
        dec_emb=jax.random.normal(next(keys), (vocab, d_model), jnp.float32) * 0.02,
        pe=positional_encoding(max_len, d_model),
        enc_layers=[enc_layer() for _ in range(num_layers)],
        dec_layers=[dec_layer() for _ in range(num_layers)],
        w_out=w_out, b_out=b_out,
    )


# ----------------------------------------------------------------------------
# main
# ----------------------------------------------------------------------------

if __name__ == "__main__":
    VOCAB = 32
    B = 2
    S = 8                 # source and target sequence length
    D_MODEL = 128         # multiple of 128 -> lane-dense fused-QKV column blocks
    HEADS = 4
    FFN = 256
    LAYERS = 2
    MAX_LEN = 64

    key = jax.random.PRNGKey(0)
    k_p, k_s, k_t = jax.random.split(key, 3)
    params = init_params(k_p, VOCAB, D_MODEL, HEADS, FFN, LAYERS, MAX_LEN)

    source = jax.random.randint(k_s, (B, S), 1, VOCAB, dtype=jnp.int32)
    target = jax.random.randint(k_t, (B, S), 1, VOCAB, dtype=jnp.int32)
    # introduce <pad> (= 0) tokens to exercise the padding / look-ahead masks
    source = source.at[:, -2:].set(0)
    target = target.at[:, -1:].set(0)

    fwd = jax.jit(functools.partial(transformer_forward, B=B, H=HEADS))
    out = fwd(params, source, target)
    out = jax.block_until_ready(out)
    assert out.shape == (B, S, VOCAB) and bool(jnp.all(jnp.isfinite(out)))
    print("KERNEL_OK")
</pallas_src>

<mosaic_0001>
module attributes {stable_mosaic.version = 11 : i64} {
  func.func @_linear_add_ln_kernel(%arg0: i32, %arg1: i32, %arg2: memref<16x128xbf16, #tpu.memory_space<vmem>>, %arg3: memref<128x128xbf16, #tpu.memory_space<vmem>>, %arg4: memref<1x128xf32, #tpu.memory_space<vmem>>, %arg5: memref<16x128xbf16, #tpu.memory_space<vmem>>, %arg6: memref<1x128xf32, #tpu.memory_space<vmem>>, %arg7: memref<1x128xf32, #tpu.memory_space<vmem>>, %arg8: memref<16x128xbf16, #tpu.memory_space<vmem>>, %arg9: memref<16x128xf32, #tpu.memory_space<vmem>>) attributes {dimension_semantics = [#tpu.dimension_semantics<parallel>, #tpu.dimension_semantics<arbitrary>], iteration_bounds = array<i64: 1, 1>, scalar_prefetch = 0 : i64, scratch_operands = 1 : i64, tpu.core_type = #tpu.core_type<tc>, window_params = [{transform_indices = @transform_0, window_bounds = array<i64: 16, 128>}, {transform_indices = @transform_1, window_bounds = array<i64: 128, 128>}, {pipeline_mode = #tpu.pipeline_mode<synchronous>, transform_indices = @transform_2, window_bounds = array<i64: 1, 128>}, {transform_indices = @transform_3, window_bounds = array<i64: 16, 128>}, {pipeline_mode = #tpu.pipeline_mode<synchronous>, transform_indices = @transform_4, window_bounds = array<i64: 1, 128>}, {pipeline_mode = #tpu.pipeline_mode<synchronous>, transform_indices = @transform_5, window_bounds = array<i64: 1, 128>}, {transform_indices = @transform_6, window_bounds = array<i64: 16, 128>}]} {
    %c0_i32 = arith.constant 0 : i32
    %0 = arith.cmpi eq, %arg1, %c0_i32 : i32
    %1 = arith.extui %0 : i1 to i32
    %c0_i32_0 = arith.constant 0 : i32
    %2 = arith.cmpi ne, %1, %c0_i32_0 : i32
    scf.if %2 {
      %cst_10 = arith.constant 0.000000e+00 : f32
      %12 = vector.broadcast %cst_10 : f32 to vector<16x128xf32>
      %c0_11 = arith.constant 0 : index
      %c0_12 = arith.constant 0 : index
      %13 = vector.load %arg9[%c0_11, %c0_12] : memref<16x128xf32, #tpu.memory_space<vmem>>, vector<16x128xf32>
      tpu.vector_store %arg9[%c0_11, %c0_12], %12 {strides = array<i32>} : memref<16x128xf32, #tpu.memory_space<vmem>>, vector<16x128xf32>,
    } else {
    }
    %c0 = arith.constant 0 : index
    %c0_1 = arith.constant 0 : index
    %3 = vector.load %arg9[%c0, %c0_1] : memref<16x128xf32, #tpu.memory_space<vmem>>, vector<16x128xf32>
    %c0_2 = arith.constant 0 : index
    %c0_3 = arith.constant 0 : index
    %4 = vector.load %arg2[%c0_2, %c0_3] : memref<16x128xbf16, #tpu.memory_space<vmem>>, vector<16x128xbf16>
    %c0_4 = arith.constant 0 : index
    %c0_5 = arith.constant 0 : index
    %5 = vector.load %arg3[%c0_4, %c0_5] : memref<128x128xbf16, #tpu.memory_space<vmem>>, vector<128x128xbf16>
    %cst = arith.constant dense<0.000000e+00> : vector<16x128xf32>
    %6 = tpu.matmul %4, %5, %cst {dimension_numbers = #tpu.dot_dimension_numbers<[1], [0], [0], [1], [0, 0, 1, 1], [], []>} : vector<16x128xbf16>, vector<128x128xbf16>, vector<16x128xf32> -> vector<16x128xf32>
    %7 = arith.addf %3, %6 : vector<16x128xf32>
    %c0_6 = arith.constant 0 : index
    %c0_7 = arith.constant 0 : index
    %8 = vector.load %arg9[%c0_6, %c0_7] : memref<16x128xf32, #tpu.memory_space<vmem>>, vector<16x128xf32>
    tpu.vector_store %arg9[%c0_6, %c0_7], %7 {strides = array<i32>} : memref<16x128xf32, #tpu.memory_space<vmem>>, vector<16x128xf32>,
    %c0_i32_8 = arith.constant 0 : i32
    %9 = arith.cmpi eq, %arg1, %c0_i32_8 : i32
    %10 = arith.extui %9 : i1 to i32
    %c0_i32_9 = arith.constant 0 : i32
    %11 = arith.cmpi ne, %10, %c0_i32_9 : i32
    scf.if %11 {
      %c0_10 = arith.constant 0 : index
      %c0_11 = arith.constant 0 : index
      %12 = vector.load %arg9[%c0_10, %c0_11] : memref<16x128xf32, #tpu.memory_space<vmem>>, vector<16x128xf32>
      %c0_12 = arith.constant 0 : index
      %c0_13 = arith.constant 0 : index
      %13 = vector.load %arg4[%c0_12, %c0_13] : memref<1x128xf32, #tpu.memory_space<vmem>>, vector<1x128xf32>
      %14 = vector.broadcast %13 : vector<1x128xf32> to vector<16x128xf32>
      %15 = arith.addf %12, %14 : vector<16x128xf32>
      %c0_14 = arith.constant 0 : index
      %c0_15 = arith.constant 0 : index
      %16 = vector.load %arg5[%c0_14, %c0_15] : memref<16x128xbf16, #tpu.memory_space<vmem>>, vector<16x128xbf16>
      %17 = arith.extf %16 : vector<16x128xbf16> to vector<16x128xf32>
      %18 = arith.addf %15, %17 : vector<16x128xf32>
      %cst_16 = arith.constant dense<0.000000e+00> : vector<16xf32>
      %19 = vector.multi_reduction <add>, %18, %cst_16 [1] : vector<16x128xf32> to vector<16xf32>
      %20 = vector.shape_cast %19 : vector<16xf32> to vector<16x1xf32>
      %cst_17 = arith.constant 1.280000e+02 : f32
      %21 = vector.broadcast %cst_17 : f32 to vector<16x1xf32>
      %22 = arith.divf %20, %21 : vector<16x1xf32>
      %23 = vector.broadcast %22 : vector<16x1xf32> to vector<16x128xf32>
      %24 = arith.subf %18, %23 : vector<16x128xf32>
      %25 = arith.mulf %24, %24 : vector<16x128xf32>
      %cst_18 = arith.constant dense<0.000000e+00> : vector<16xf32>
      %26 = vector.multi_reduction <add>, %25, %cst_18 [1] : vector<16x128xf32> to vector<16xf32>
      %27 = vector.shape_cast %26 : vector<16xf32> to vector<16x1xf32>
      %cst_19 = arith.constant 1.280000e+02 : f32
      %28 = vector.broadcast %cst_19 : f32 to vector<16x1xf32>
      %29 = arith.divf %27, %28 : vector<16x1xf32>
      %30 = vector.broadcast %22 : vector<16x1xf32> to vector<16x128xf32>
      %31 = arith.subf %18, %30 : vector<16x128xf32>
      %cst_20 = arith.constant 9.99999974E-6 : f32
      %32 = vector.broadcast %cst_20 : f32 to vector<16x1xf32>
      %33 = arith.addf %29, %32 : vector<16x1xf32>
      %34 = math.rsqrt %33 : vector<16x1xf32>
      %35 = vector.broadcast %34 : vector<16x1xf32> to vector<16x128xf32>
      %36 = arith.mulf %31, %35 : vector<16x128xf32>
      %c0_21 = arith.constant 0 : index
      %c0_22 = arith.constant 0 : index
      %37 = vector.load %arg6[%c0_21, %c0_22] : memref<1x128xf32, #tpu.memory_space<vmem>>, vector<1x128xf32>
      %38 = vector.broadcast %37 : vector<1x128xf32> to vector<16x128xf32>
      %39 = arith.mulf %36, %38 : vector<16x128xf32>
      %c0_23 = arith.constant 0 : index
      %c0_24 = arith.constant 0 : index
      %40 = vector.load %arg7[%c0_23, %c0_24] : memref<1x128xf32, #tpu.memory_space<vmem>>, vector<1x128xf32>
      %41 = vector.broadcast %40 : vector<1x128xf32> to vector<16x128xf32>
      %42 = arith.addf %39, %41 : vector<16x128xf32>
      %43 = arith.truncf %42 : vector<16x128xf32> to vector<16x128xbf16>
      %c0_25 = arith.constant 0 : index
      %c0_26 = arith.constant 0 : index
      %44 = vector.load %arg8[%c0_25, %c0_26] : memref<16x128xbf16, #tpu.memory_space<vmem>>, vector<16x128xbf16>
      tpu.vector_store %arg8[%c0_25, %c0_26], %43 {strides = array<i32>} : memref<16x128xbf16, #tpu.memory_space<vmem>>, vector<16x128xbf16>,
    } else {
    }
    return
  }
  func.func @transform_0(%arg0: i32, %arg1: i32) -> (i32, i32) {
    %c0_i32 = arith.constant 0 : i32
    return %arg0, %arg1 : i32, i32
  }
  func.func @transform_1(%arg0: i32, %arg1: i32) -> (i32, i32) {
    %c0_i32 = arith.constant 0 : i32
    %c0_i32_0 = arith.constant 0 : i32
    return %arg1, %c0_i32 : i32, i32
  }
  func.func @transform_2(%arg0: i32, %arg1: i32) -> (i32, i32) {
    %c0_i32 = arith.constant 0 : i32
    %c0_i32_0 = arith.constant 0 : i32
    %c0_i32_1 = arith.constant 0 : i32
    return %c0_i32, %c0_i32_0 : i32, i32
  }
  func.func @transform_3(%arg0: i32, %arg1: i32) -> (i32, i32) {
    %c0_i32 = arith.constant 0 : i32
    %c0_i32_0 = arith.constant 0 : i32
    return %arg0, %c0_i32 : i32, i32
  }
  func.func @transform_4(%arg0: i32, %arg1: i32) -> (i32, i32) {
    %c0_i32 = arith.constant 0 : i32
    %c0_i32_0 = arith.constant 0 : i32
    %c0_i32_1 = arith.constant 0 : i32
    return %c0_i32, %c0_i32_0 : i32, i32
  }
  func.func @transform_5(%arg0: i32, %arg1: i32) -> (i32, i32) {
    %c0_i32 = arith.constant 0 : i32
    %c0_i32_0 = arith.constant 0 : i32
    %c0_i32_1 = arith.constant 0 : i32
    return %c0_i32, %c0_i32_0 : i32, i32
  }
  func.func @transform_6(%arg0: i32, %arg1: i32) -> (i32, i32) {
    %c0_i32 = arith.constant 0 : i32
    %c0_i32_0 = arith.constant 0 : i32
    return %arg0, %c0_i32 : i32, i32
  }
}

module attributes {stable_mosaic.version = 11 : i64} {
  func.func @_flash_attn_kernel(%arg0: i32, %arg1: i32, %arg2: i32, %arg3: memref<1x8x128xbf16, #tpu.memory_space<vmem>>, %arg4: memref<1x8x128xbf16, #tpu.memory_space<vmem>>, %arg5: memref<1x8x128xbf16, #tpu.memory_space<vmem>>, %arg6: memref<1x1x8xf32, #tpu.memory_space<vmem>>, %arg7: memref<1x8x128xbf16, #tpu.memory_space<vmem>>, %arg8: memref<4x8x1xf32, #tpu.memory_space<vmem>>, %arg9: memref<4x8x1xf32, #tpu.memory_space<vmem>>, %arg10: memref<4x8x32xf32, #tpu.memory_space<vmem>>) attributes {dimension_semantics = [#tpu.dimension_semantics<parallel>, #tpu.dimension_semantics<parallel>, #tpu.dimension_semantics<arbitrary>], iteration_bounds = array<i64: 2, 1, 1>, scalar_prefetch = 0 : i64, scratch_operands = 3 : i64, tpu.core_type = #tpu.core_type<tc>, window_params = [{transform_indices = @transform_0, window_bounds = array<i64: 1, 8, 128>}, {transform_indices = @transform_1, window_bounds = array<i64: 1, 8, 128>}, {transform_indices = @transform_2, window_bounds = array<i64: 1, 8, 128>}, {transform_indices = @transform_3, window_bounds = array<i64: 1, 1, 8>}, {transform_indices = @transform_4, window_bounds = array<i64: 1, 8, 128>}]} {
    %c0_i32 = arith.constant 0 : i32
    %0 = arith.cmpi eq, %arg2, %c0_i32 : i32
    %1 = arith.extui %0 : i1 to i32
    %c0_i32_0 = arith.constant 0 : i32
    %2 = arith.cmpi ne, %1, %c0_i32_0 : i32
    scf.if %2 {
      %cst_101 = arith.constant 0xFF800000 : f32
      %169 = vector.broadcast %cst_101 : f32 to vector<4x8x1xf32>
      %c0_102 = arith.constant 0 : index
      %c0_103 = arith.constant 0 : index
      %c0_104 = arith.constant 0 : index
      %170 = vector.load %arg8[%c0_102, %c0_103, %c0_104] : memref<4x8x1xf32, #tpu.memory_space<vmem>>, vector<4x8x1xf32>
      tpu.vector_store %arg8[%c0_102, %c0_103, %c0_104], %169 {strides = array<i32>} : memref<4x8x1xf32, #tpu.memory_space<vmem>>, vector<4x8x1xf32>,
      %cst_105 = arith.constant 0.000000e+00 : f32
      %171 = vector.broadcast %cst_105 : f32 to vector<4x8x1xf32>
      %c0_106 = arith.constant 0 : index
      %c0_107 = arith.constant 0 : index
      %c0_108 = arith.constant 0 : index
      %172 = vector.load %arg9[%c0_106, %c0_107, %c0_108] : memref<4x8x1xf32, #tpu.memory_space<vmem>>, vector<4x8x1xf32>
      tpu.vector_store %arg9[%c0_106, %c0_107, %c0_108], %171 {strides = array<i32>} : memref<4x8x1xf32, #tpu.memory_space<vmem>>, vector<4x8x1xf32>,
      %cst_109 = arith.constant 0.000000e+00 : f32
      %173 = vector.broadcast %cst_109 : f32 to vector<4x8x32xf32>
      %c0_110 = arith.constant 0 : index
      %c0_111 = arith.constant 0 : index
      %c0_112 = arith.constant 0 : index
      %174 = vector.load %arg10[%c0_110, %c0_111, %c0_112] : memref<4x8x32xf32, #tpu.memory_space<vmem>>, vector<4x8x32xf32>
      tpu.vector_store %arg10[%c0_110, %c0_111, %c0_112], %173 {strides = array<i32>} : memref<4x8x32xf32, #tpu.memory_space<vmem>>, vector<4x8x32xf32>,
    } else {
    }
    %c0 = arith.constant 0 : index
    %c0_1 = arith.constant 0 : index
    %c0_2 = arith.constant 0 : index
    %3 = vector.load %arg3[%c0, %c0_1, %c0_2] : memref<1x8x128xbf16, #tpu.memory_space<vmem>>, vector<1x8x128xbf16>
    %4 = vector.shape_cast %3 : vector<1x8x128xbf16> to vector<8x128xbf16>
    %c0_3 = arith.constant 0 : index
    %c0_4 = arith.constant 0 : index
    %c0_5 = arith.constant 0 : index
    %5 = vector.load %arg4[%c0_3, %c0_4, %c0_5] : memref<1x8x128xbf16, #tpu.memory_space<vmem>>, vector<1x8x128xbf16>
    %6 = vector.shape_cast %5 : vector<1x8x128xbf16> to vector<8x128xbf16>
    %c0_6 = arith.constant 0 : index
    %c0_7 = arith.constant 0 : index
    %c0_8 = arith.constant 0 : index
    %7 = vector.load %arg5[%c0_6, %c0_7, %c0_8] : memref<1x8x128xbf16, #tpu.memory_space<vmem>>, vector<1x8x128xbf16>
    %8 = vector.shape_cast %7 : vector<1x8x128xbf16> to vector<8x128xbf16>
    %c0_9 = arith.constant 0 : index
    %c0_10 = arith.constant 0 : index
    %c0_11 = arith.constant 0 : index
    %9 = vector.load %arg6[%c0_9, %c0_10, %c0_11] : memref<1x1x8xf32, #tpu.memory_space<vmem>>, vector<1x1x8xf32>
    %10 = vector.shape_cast %9 : vector<1x1x8xf32> to vector<1x8xf32>
    %cst = arith.constant 5.000000e-01 : f32
    %11 = vector.broadcast %cst : f32 to vector<1x8xf32>
    %12 = arith.cmpf ogt, %10, %11 : vector<1x8xf32>
    %cst_12 = arith.constant -1.000000e+09 : f32
    %cst_13 = arith.constant 0.000000e+00 : f32
    %13 = vector.broadcast %cst_12 : f32 to vector<1x8xf32>
    %14 = vector.broadcast %cst_13 : f32 to vector<1x8xf32>
    %15 = arith.select %12, %13, %14 : vector<1x8xi1>, vector<1x8xf32>
    %16 = vector.shape_cast %15 : vector<1x8xf32> to vector<1x8xf32>
    %17 = vector.broadcast %16 : vector<1x8xf32> to vector<8x8xf32>
    %18 = vector.extract_strided_slice %4 {offsets = [0, 0], sizes = [8, 32], strides = [1, 1]} : vector<8x128xbf16> to vector<8x32xbf16>
    %19 = vector.extract_strided_slice %6 {offsets = [0, 0], sizes = [8, 32], strides = [1, 1]} : vector<8x128xbf16> to vector<8x32xbf16>
    %20 = vector.extract_strided_slice %8 {offsets = [0, 0], sizes = [8, 32], strides = [1, 1]} : vector<8x128xbf16> to vector<8x32xbf16>
    %cst_14 = arith.constant dense<0.000000e+00> : vector<8x8xf32>
    %21 = tpu.matmul %18, %19, %cst_14 {dimension_numbers = #tpu.dot_dimension_numbers<[1], [1], [0], [0], [0, 0, 1, 0], [], []>} : vector<8x32xbf16>, vector<8x32xbf16>, vector<8x8xf32> -> vector<8x8xf32>
    %22 = arith.addf %21, %17 : vector<8x8xf32>
    %c0_15 = arith.constant 0 : index
    %c0_16 = arith.constant 0 : index
    %c0_17 = arith.constant 0 : index
    %23 = vector.load %arg8[%c0_15, %c0_16, %c0_17] : memref<4x8x1xf32, #tpu.memory_space<vmem>>, vector<1x8x1xf32>
    %24 = vector.shape_cast %23 : vector<1x8x1xf32> to vector<8x1xf32>
    %cst_18 = arith.constant dense<0xFF800000> : vector<8xf32>
    %25 = vector.multi_reduction <maximumf>, %22, %cst_18 [1] : vector<8x8xf32> to vector<8xf32>
    %26 = vector.shape_cast %25 : vector<8xf32> to vector<8x1xf32>
    %27 = arith.maximumf %24, %26 : vector<8x1xf32>
    %28 = arith.subf %24, %27 : vector<8x1xf32>
    %29 = math.exp %28 : vector<8x1xf32>
    %30 = vector.broadcast %27 : vector<8x1xf32> to vector<8x8xf32>
    %31 = arith.subf %22, %30 : vector<8x8xf32>
    %32 = math.exp %31 : vector<8x8xf32>
    %c0_19 = arith.constant 0 : index
    %c0_20 = arith.constant 0 : index
    %c0_21 = arith.constant 0 : index
    %33 = vector.load %arg9[%c0_19, %c0_20, %c0_21] : memref<4x8x1xf32, #tpu.memory_space<vmem>>, vector<1x8x1xf32>
    %34 = vector.shape_cast %33 : vector<1x8x1xf32> to vector<8x1xf32>
    %35 = arith.mulf %29, %34 : vector<8x1xf32>
    %cst_22 = arith.constant dense<0.000000e+00> : vector<8xf32>
    %36 = vector.multi_reduction <add>, %32, %cst_22 [1] : vector<8x8xf32> to vector<8xf32>
    %37 = vector.shape_cast %36 : vector<8xf32> to vector<8x1xf32>
    %38 = arith.addf %35, %37 : vector<8x1xf32>
    %c0_23 = arith.constant 0 : index
    %c0_24 = arith.constant 0 : index
    %c0_25 = arith.constant 0 : index
    %39 = vector.load %arg9[%c0_23, %c0_24, %c0_25] : memref<4x8x1xf32, #tpu.memory_space<vmem>>, vector<1x8x1xf32>
    %40 = vector.shape_cast %39 : vector<1x8x1xf32> to vector<8x1xf32>
    %41 = vector.shape_cast %38 : vector<8x1xf32> to vector<1x8x1xf32>
    tpu.vector_store %arg9[%c0_23, %c0_24, %c0_25], %41 {strides = array<i32>} : memref<4x8x1xf32, #tpu.memory_space<vmem>>, vector<1x8x1xf32>,
    %42 = arith.truncf %32 : vector<8x8xf32> to vector<8x8xbf16>
    %cst_26 = arith.constant dense<0.000000e+00> : vector<8x32xf32>
    %43 = tpu.matmul %42, %20, %cst_26 {dimension_numbers = #tpu.dot_dimension_numbers<[1], [0], [0], [1], [0, 0, 1, 1], [], []>} : vector<8x8xbf16>, vector<8x32xbf16>, vector<8x32xf32> -> vector<8x32xf32>
    %c0_27 = arith.constant 0 : index
    %c0_28 = arith.constant 0 : index
    %c0_29 = arith.constant 0 : index
    %44 = vector.load %arg10[%c0_27, %c0_28, %c0_29] : memref<4x8x32xf32, #tpu.memory_space<vmem>>, vector<1x8x32xf32>
    %45 = vector.shape_cast %44 : vector<1x8x32xf32> to vector<8x32xf32>
    %46 = vector.broadcast %29 : vector<8x1xf32> to vector<8x32xf32>
    %47 = arith.mulf %46, %45 : vector<8x32xf32>
    %48 = arith.addf %47, %43 : vector<8x32xf32>
    %c0_30 = arith.constant 0 : index
    %c0_31 = arith.constant 0 : index
    %c0_32 = arith.constant 0 : index
    %49 = vector.load %arg10[%c0_30, %c0_31, %c0_32] : memref<4x8x32xf32, #tpu.memory_space<vmem>>, vector<1x8x32xf32>
    %50 = vector.shape_cast %49 : vector<1x8x32xf32> to vector<8x32xf32>
    %51 = vector.shape_cast %48 : vector<8x32xf32> to vector<1x8x32xf32>
    tpu.vector_store %arg10[%c0_30, %c0_31, %c0_32], %51 {strides = array<i32>} : memref<4x8x32xf32, #tpu.memory_space<vmem>>, vector<1x8x32xf32>,
    %c0_33 = arith.constant 0 : index
    %c0_34 = arith.constant 0 : index
    %c0_35 = arith.constant 0 : index
    %52 = vector.load %arg8[%c0_33, %c0_34, %c0_35] : memref<4x8x1xf32, #tpu.memory_space<vmem>>, vector<1x8x1xf32>
    %53 = vector.shape_cast %52 : vector<1x8x1xf32> to vector<8x1xf32>
    %54 = vector.shape_cast %27 : vector<8x1xf32> to vector<1x8x1xf32>
    tpu.vector_store %arg8[%c0_33, %c0_34, %c0_35], %54 {strides = array<i32>} : memref<4x8x1xf32, #tpu.memory_space<vmem>>, vector<1x8x1xf32>,
    %55 = vector.extract_strided_slice %4 {offsets = [0, 32], sizes = [8, 32], strides = [1, 1]} : vector<8x128xbf16> to vector<8x32xbf16>
    %56 = vector.extract_strided_slice %6 {offsets = [0, 32], sizes = [8, 32], strides = [1, 1]} : vector<8x128xbf16> to vector<8x32xbf16>
    %57 = vector.extract_strided_slice %8 {offsets = [0, 32], sizes = [8, 32], strides = [1, 1]} : vector<8x128xbf16> to vector<8x32xbf16>
    %cst_36 = arith.constant dense<0.000000e+00> : vector<8x8xf32>
    %58 = tpu.matmul %55, %56, %cst_36 {dimension_numbers = #tpu.dot_dimension_numbers<[1], [1], [0], [0], [0, 0, 1, 0], [], []>} : vector<8x32xbf16>, vector<8x32xbf16>, vector<8x8xf32> -> vector<8x8xf32>
    %59 = arith.addf %58, %17 : vector<8x8xf32>
    %c1 = arith.constant 1 : index
    %c0_37 = arith.constant 0 : index
    %c0_38 = arith.constant 0 : index
    %60 = vector.load %arg8[%c1, %c0_37, %c0_38] : memref<4x8x1xf32, #tpu.memory_space<vmem>>, vector<1x8x1xf32>
    %61 = vector.shape_cast %60 : vector<1x8x1xf32> to vector<8x1xf32>
    %cst_39 = arith.constant dense<0xFF800000> : vector<8xf32>
    %62 = vector.multi_reduction <maximumf>, %59, %cst_39 [1] : vector<8x8xf32> to vector<8xf32>
    %63 = vector.shape_cast %62 : vector<8xf32> to vector<8x1xf32>
    %64 = arith.maximumf %61, %63 : vector<8x1xf32>
    %65 = arith.subf %61, %64 : vector<8x1xf32>
    %66 = math.exp %65 : vector<8x1xf32>
    %67 = vector.broadcast %64 : vector<8x1xf32> to vector<8x8xf32>
    %68 = arith.subf %59, %67 : vector<8x8xf32>
    %69 = math.exp %68 : vector<8x8xf32>
    %c1_40 = arith.constant 1 : index
    %c0_41 = arith.constant 0 : index
    %c0_42 = arith.constant 0 : index
    %70 = vector.load %arg9[%c1_40, %c0_41, %c0_42] : memref<4x8x1xf32, #tpu.memory_space<vmem>>, vector<1x8x1xf32>
    %71 = vector.shape_cast %70 : vector<1x8x1xf32> to vector<8x1xf32>
    %72 = arith.mulf %66, %71 : vector<8x1xf32>
    %cst_43 = arith.constant dense<0.000000e+00> : vector<8xf32>
    %73 = vector.multi_reduction <add>, %69, %cst_43 [1] : vector<8x8xf32> to vector<8xf32>
    %74 = vector.shape_cast %73 : vector<8xf32> to vector<8x1xf32>
    %75 = arith.addf %72, %74 : vector<8x1xf32>
    %c1_44 = arith.constant 1 : index
    %c0_45 = arith.constant 0 : index
    %c0_46 = arith.constant 0 : index
    %76 = vector.load %arg9[%c1_44, %c0_45, %c0_46] : memref<4x8x1xf32, #tpu.memory_space<vmem>>, vector<1x8x1xf32>
    %77 = vector.shape_cast %76 : vector<1x8x1xf32> to vector<8x1xf32>
    %78 = vector.shape_cast %75 : vector<8x1xf32> to vector<1x8x1xf32>
    tpu.vector_store %arg9[%c1_44, %c0_45, %c0_46], %78 {strides = array<i32>} : memref<4x8x1xf32, #tpu.memory_space<vmem>>, vector<1x8x1xf32>,
    %79 = arith.truncf %69 : vector<8x8xf32> to vector<8x8xbf16>
    %cst_47 = arith.constant dense<0.000000e+00> : vector<8x32xf32>
    %80 = tpu.matmul %79, %57, %cst_47 {dimension_numbers = #tpu.dot_dimension_numbers<[1], [0], [0], [1], [0, 0, 1, 1], [], []>} : vector<8x8xbf16>, vector<8x32xbf16>, vector<8x32xf32> -> vector<8x32xf32>
    %c1_48 = arith.constant 1 : index
    %c0_49 = arith.constant 0 : index
    %c0_50 = arith.constant 0 : index
    %81 = vector.load %arg10[%c1_48, %c0_49, %c0_50] : memref<4x8x32xf32, #tpu.memory_space<vmem>>, vector<1x8x32xf32>
    %82 = vector.shape_cast %81 : vector<1x8x32xf32> to vector<8x32xf32>
    %83 = vector.broadcast %66 : vector<8x1xf32> to vector<8x32xf32>
    %84 = arith.mulf %83, %82 : vector<8x32xf32>
    %85 = arith.addf %84, %80 : vector<8x32xf32>
    %c1_51 = arith.constant 1 : index
    %c0_52 = arith.constant 0 : index
    %c0_53 = arith.constant 0 : index
    %86 = vector.load %arg10[%c1_51, %c0_52, %c0_53] : memref<4x8x32xf32, #tpu.memory_space<vmem>>, vector<1x8x32xf32>
    %87 = vector.shape_cast %86 : vector<1x8x32xf32> to vector<8x32xf32>
    %88 = vector.shape_cast %85 : vector<8x32xf32> to vector<1x8x32xf32>
    tpu.vector_store %arg10[%c1_51, %c0_52, %c0_53], %88 {strides = array<i32>} : memref<4x8x32xf32, #tpu.memory_space<vmem>>, vector<1x8x32xf32>,
    %c1_54 = arith.constant 1 : index
    %c0_55 = arith.constant 0 : index
    %c0_56 = arith.constant 0 : index
    %89 = vector.load %arg8[%c1_54, %c0_55, %c0_56] : memref<4x8x1xf32, #tpu.memory_space<vmem>>, vector<1x8x1xf32>
    %90 = vector.shape_cast %89 : vector<1x8x1xf32> to vector<8x1xf32>
    %91 = vector.shape_cast %64 : vector<8x1xf32> to vector<1x8x1xf32>
    tpu.vector_store %arg8[%c1_54, %c0_55, %c0_56], %91 {strides = array<i32>} : memref<4x8x1xf32, #tpu.memory_space<vmem>>, vector<1x8x1xf32>,
    %92 = vector.extract_strided_slice %4 {offsets = [0, 64], sizes = [8, 32], strides = [1, 1]} : vector<8x128xbf16> to vector<8x32xbf16>
    %93 = vector.extract_strided_slice %6 {offsets = [0, 64], sizes = [8, 32], strides = [1, 1]} : vector<8x128xbf16> to vector<8x32xbf16>
    %94 = vector.extract_strided_slice %8 {offsets = [0, 64], sizes = [8, 32], strides = [1, 1]} : vector<8x128xbf16> to vector<8x32xbf16>
    %cst_57 = arith.constant dense<0.000000e+00> : vector<8x8xf32>
    %95 = tpu.matmul %92, %93, %cst_57 {dimension_numbers = #tpu.dot_dimension_numbers<[1], [1], [0], [0], [0, 0, 1, 0], [], []>} : vector<8x32xbf16>, vector<8x32xbf16>, vector<8x8xf32> -> vector<8x8xf32>
    %96 = arith.addf %95, %17 : vector<8x8xf32>
    %c2 = arith.constant 2 : index
    %c0_58 = arith.constant 0 : index
    %c0_59 = arith.constant 0 : index
    %97 = vector.load %arg8[%c2, %c0_58, %c0_59] : memref<4x8x1xf32, #tpu.memory_space<vmem>>, vector<1x8x1xf32>
    %98 = vector.shape_cast %97 : vector<1x8x1xf32> to vector<8x1xf32>
    %cst_60 = arith.constant dense<0xFF800000> : vector<8xf32>
    %99 = vector.multi_reduction <maximumf>, %96, %cst_60 [1] : vector<8x8xf32> to vector<8xf32>
    %100 = vector.shape_cast %99 : vector<8xf32> to vector<8x1xf32>
    %101 = arith.maximumf %98, %100 : vector<8x1xf32>
    %102 = arith.subf %98, %101 : vector<8x1xf32>
    %103 = math.exp %102 : vector<8x1xf32>
    %104 = vector.broadcast %101 : vector<8x1xf32> to vector<8x8xf32>
    %105 = arith.subf %96, %104 : vector<8x8xf32>
    %106 = math.exp %105 : vector<8x8xf32>
    %c2_61 = arith.constant 2 : index
    %c0_62 = arith.constant 0 : index
    %c0_63 = arith.constant 0 : index
    %107 = vector.load %arg9[%c2_61, %c0_62, %c0_63] : memref<4x8x1xf32, #tpu.memory_space<vmem>>, vector<1x8x1xf32>
    %108 = vector.shape_cast %107 : vector<1x8x1xf32> to vector<8x1xf32>
    %109 = arith.mulf %103, %108 : vector<8x1xf32>
    %cst_64 = arith.constant dense<0.000000e+00> : vector<8xf32>
    %110 = vector.multi_reduction <add>, %106, %cst_64 [1] : vector<8x8xf32> to vector<8xf32>
    %111 = vector.shape_cast %110 : vector<8xf32> to vector<8x1xf32>
    %112 = arith.addf %109, %111 : vector<8x1xf32>
    %c2_65 = arith.constant 2 : index
    %c0_66 = arith.constant 0 : index
    %c0_67 = arith.constant 0 : index
    %113 = vector.load %arg9[%c2_65, %c0_66, %c0_67] : memref<4x8x1xf32, #tpu.memory_space<vmem>>, vector<1x8x1xf32>
    %114 = vector.shape_cast %113 : vector<1x8x1xf32> to vector<8x1xf32>
    %115 = vector.shape_cast %112 : vector<8x1xf32> to vector<1x8x1xf32>
    tpu.vector_store %arg9[%c2_65, %c0_66, %c0_67], %115 {strides = array<i32>} : memref<4x8x1xf32, #tpu.memory_space<vmem>>, vector<1x8x1xf32>,
    %116 = arith.truncf %106 : vector<8x8xf32> to vector<8x8xbf16>
    %cst_68 = arith.constant dense<0.000000e+00> : vector<8x32xf32>
    %117 = tpu.matmul %116, %94, %cst_68 {dimension_numbers = #tpu.dot_dimension_numbers<[1], [0], [0], [1], [0, 0, 1, 1], [], []>} : vector<8x8xbf16>, vector<8x32xbf16>, vector<8x32xf32> -> vector<8x32xf32>
    %c2_69 = arith.constant 2 : index
    %c0_70 = arith.constant 0 : index
    %c0_71 = arith.constant 0 : index
    %118 = vector.load %arg10[%c2_69, %c0_70, %c0_71] : memref<4x8x32xf32, #tpu.memory_space<vmem>>, vector<1x8x32xf32>
    %119 = vector.shape_cast %118 : vector<1x8x32xf32> to vector<8x32xf32>
    %120 = vector.broadcast %103 : vector<8x1xf32> to vector<8x32xf32>
    %121 = arith.mulf %120, %119 : vector<8x32xf32>
    %122 = arith.addf %121, %117 : vector<8x32xf32>
    %c2_72 = arith.constant 2 : index
    %c0_73 = arith.constant 0 : index
    %c0_74 = arith.constant 0 : index
    %123 = vector.load %arg10[%c2_72, %c0_73, %c0_74] : memref<4x8x32xf32, #tpu.memory_space<vmem>>, vector<1x8x32xf32>
    %124 = vector.shape_cast %123 : vector<1x8x32xf32> to vector<8x32xf32>
    %125 = vector.shape_cast %122 : vector<8x32xf32> to vector<1x8x32xf32>
    tpu.vector_store %arg10[%c2_72, %c0_73, %c0_74], %125 {strides = array<i32>} : memref<4x8x32xf32, #tpu.memory_space<vmem>>, vector<1x8x32xf32>,
    %c2_75 = arith.constant 2 : index
    %c0_76 = arith.constant 0 : index
    %c0_77 = arith.constant 0 : index
    %126 = vector.load %arg8[%c2_75, %c0_76, %c0_77] : memref<4x8x1xf32, #tpu.memory_space<vmem>>, vector<1x8x1xf32>
    %127 = vector.shape_cast %126 : vector<1x8x1xf32> to vector<8x1xf32>
    %128 = vector.shape_cast %101 : vector<8x1xf32> to vector<1x8x1xf32>
    tpu.vector_store %arg8[%c2_75, %c0_76, %c0_77], %128 {strides = array<i32>} : memref<4x8x1xf32, #tpu.memory_space<vmem>>, vector<1x8x1xf32>,
    %129 = vector.extract_strided_slice %4 {offsets = [0, 96], sizes = [8, 32], strides = [1, 1]} : vector<8x128xbf16> to vector<8x32xbf16>
    %130 = vector.extract_strided_slice %6 {offsets = [0, 96], sizes = [8, 32], strides = [1, 1]} : vector<8x128xbf16> to vector<8x32xbf16>
    %131 = vector.extract_strided_slice %8 {offsets = [0, 96], sizes = [8, 32], strides = [1, 1]} : vector<8x128xbf16> to vector<8x32xbf16>
    %cst_78 = arith.constant dense<0.000000e+00> : vector<8x8xf32>
    %132 = tpu.matmul %129, %130, %cst_78 {dimension_numbers = #tpu.dot_dimension_numbers<[1], [1], [0], [0], [0, 0, 1, 0], [], []>} : vector<8x32xbf16>, vector<8x32xbf16>, vector<8x8xf32> -> vector<8x8xf32>
    %133 = arith.addf %132, %17 : vector<8x8xf32>
    %c3 = arith.constant 3 : index
    %c0_79 = arith.constant 0 : index
    %c0_80 = arith.constant 0 : index
    %134 = vector.load %arg8[%c3, %c0_79, %c0_80] : memref<4x8x1xf32, #tpu.memory_space<vmem>>, vector<1x8x1xf32>
    %135 = vector.shape_cast %134 : vector<1x8x1xf32> to vector<8x1xf32>
    %cst_81 = arith.constant dense<0xFF800000> : vector<8xf32>
    %136 = vector.multi_reduction <maximumf>, %133, %cst_81 [1] : vector<8x8xf32> to vector<8xf32>
    %137 = vector.shape_cast %136 : vector<8xf32> to vector<8x1xf32>
    %138 = arith.maximumf %135, %137 : vector<8x1xf32>
    %139 = arith.subf %135, %138 : vector<8x1xf32>
    %140 = math.exp %139 : vector<8x1xf32>
    %141 = vector.broadcast %138 : vector<8x1xf32> to vector<8x8xf32>
    %142 = arith.subf %133, %141 : vector<8x8xf32>
    %143 = math.exp %142 : vector<8x8xf32>
    %c3_82 = arith.constant 3 : index
    %c0_83 = arith.constant 0 : index
    %c0_84 = arith.constant 0 : index
    %144 = vector.load %arg9[%c3_82, %c0_83, %c0_84] : memref<4x8x1xf32, #tpu.memory_space<vmem>>, vector<1x8x1xf32>
    %145 = vector.shape_cast %144 : vector<1x8x1xf32> to vector<8x1xf32>
    %146 = arith.mulf %140, %145 : vector<8x1xf32>
    %cst_85 = arith.constant dense<0.000000e+00> : vector<8xf32>
    %147 = vector.multi_reduction <add>, %143, %cst_85 [1] : vector<8x8xf32> to vector<8xf32>
    %148 = vector.shape_cast %147 : vector<8xf32> to vector<8x1xf32>
    %149 = arith.addf %146, %148 : vector<8x1xf32>
    %c3_86 = arith.constant 3 : index
    %c0_87 = arith.constant 0 : index
    %c0_88 = arith.constant 0 : index
    %150 = vector.load %arg9[%c3_86, %c0_87, %c0_88] : memref<4x8x1xf32, #tpu.memory_space<vmem>>, vector<1x8x1xf32>
    %151 = vector.shape_cast %150 : vector<1x8x1xf32> to vector<8x1xf32>
    %152 = vector.shape_cast %149 : vector<8x1xf32> to vector<1x8x1xf32>
    tpu.vector_store %arg9[%c3_86, %c0_87, %c0_88], %152 {strides = array<i32>} : memref<4x8x1xf32, #tpu.memory_space<vmem>>, vector<1x8x1xf32>,
    %153 = arith.truncf %143 : vector<8x8xf32> to vector<8x8xbf16>
    %cst_89 = arith.constant dense<0.000000e+00> : vector<8x32xf32>
    %154 = tpu.matmul %153, %131, %cst_89 {dimension_numbers = #tpu.dot_dimension_numbers<[1], [0], [0], [1], [0, 0, 1, 1], [], []>} : vector<8x8xbf16>, vector<8x32xbf16>, vector<8x32xf32> -> vector<8x32xf32>
    %c3_90 = arith.constant 3 : index
    %c0_91 = arith.constant 0 : index
    %c0_92 = arith.constant 0 : index
    %155 = vector.load %arg10[%c3_90, %c0_91, %c0_92] : memref<4x8x32xf32, #tpu.memory_space<vmem>>, vector<1x8x32xf32>
    %156 = vector.shape_cast %155 : vector<1x8x32xf32> to vector<8x32xf32>
    %157 = vector.broadcast %140 : vector<8x1xf32> to vector<8x32xf32>
    %158 = arith.mulf %157, %156 : vector<8x32xf32>
    %159 = arith.addf %158, %154 : vector<8x32xf32>
    %c3_93 = arith.constant 3 : index
    %c0_94 = arith.constant 0 : index
    %c0_95 = arith.constant 0 : index
    %160 = vector.load %arg10[%c3_93, %c0_94, %c0_95] : memref<4x8x32xf32, #tpu.memory_space<vmem>>, vector<1x8x32xf32>
    %161 = vector.shape_cast %160 : vector<1x8x32xf32> to vector<8x32xf32>
    %162 = vector.shape_cast %159 : vector<8x32xf32> to vector<1x8x32xf32>
    tpu.vector_store %arg10[%c3_93, %c0_94, %c0_95], %162 {strides = array<i32>} : memref<4x8x32xf32, #tpu.memory_space<vmem>>, vector<1x8x32xf32>,
    %c3_96 = arith.constant 3 : index
    %c0_97 = arith.constant 0 : index
    %c0_98 = arith.constant 0 : index
    %163 = vector.load %arg8[%c3_96, %c0_97, %c0_98] : memref<4x8x1xf32, #tpu.memory_space<vmem>>, vector<1x8x1xf32>
    %164 = vector.shape_cast %163 : vector<1x8x1xf32> to vector<8x1xf32>
    %165 = vector.shape_cast %138 : vector<8x1xf32> to vector<1x8x1xf32>
    tpu.vector_store %arg8[%c3_96, %c0_97, %c0_98], %165 {strides = array<i32>} : memref<4x8x1xf32, #tpu.memory_space<vmem>>, vector<1x8x1xf32>,
    %c0_i32_99 = arith.constant 0 : i32
    %166 = arith.cmpi eq, %arg2, %c0_i32_99 : i32
    %167 = arith.extui %166 : i1 to i32
    %c0_i32_100 = arith.constant 0 : i32
    %168 = arith.cmpi ne, %167, %c0_i32_100 : i32
    scf.if %168 {
      %c0_101 = arith.constant 0 : index
      %c0_102 = arith.constant 0 : index
      %c0_103 = arith.constant 0 : index
      %169 = vector.load %arg9[%c0_101, %c0_102, %c0_103] : memref<4x8x1xf32, #tpu.memory_space<vmem>>, vector<1x8x1xf32>
      %170 = vector.shape_cast %169 : vector<1x8x1xf32> to vector<8x1xf32>
      %171 = tpu.reciprocal %170 {approx = true} : vector<8x1xf32> -> vector<8x1xf32>
      %c0_104 = arith.constant 0 : index
      %c0_105 = arith.constant 0 : index
      %c0_106 = arith.constant 0 : index
      %172 = vector.load %arg10[%c0_104, %c0_105, %c0_106] : memref<4x8x32xf32, #tpu.memory_space<vmem>>, vector<1x8x32xf32>
      %173 = vector.shape_cast %172 : vector<1x8x32xf32> to vector<8x32xf32>
      %174 = vector.broadcast %171 : vector<8x1xf32> to vector<8x32xf32>
      %175 = arith.mulf %173, %174 : vector<8x32xf32>
      %176 = arith.truncf %175 : vector<8x32xf32> to vector<8x32xbf16>
      %c0_107 = arith.constant 0 : index
      %c0_108 = arith.constant 0 : index
      %c0_109 = arith.constant 0 : index
      %177 = vector.load %arg7[%c0_107, %c0_108, %c0_109] : memref<1x8x128xbf16, #tpu.memory_space<vmem>>, vector<1x8x32xbf16>
      %178 = vector.shape_cast %177 : vector<1x8x32xbf16> to vector<8x32xbf16>
      %179 = vector.shape_cast %176 : vector<8x32xbf16> to vector<1x8x32xbf16>
      tpu.vector_store %arg7[%c0_107, %c0_108, %c0_109], %179 {strides = array<i32>} : memref<1x8x128xbf16, #tpu.memory_space<vmem>>, vector<1x8x32xbf16>,
      %c1_110 = arith.constant 1 : index
      %c0_111 = arith.constant 0 : index
      %c0_112 = arith.constant 0 : index
      %180 = vector.load %arg9[%c1_110, %c0_111, %c0_112] : memref<4x8x1xf32, #tpu.memory_space<vmem>>, vector<1x8x1xf32>
      %181 = vector.shape_cast %180 : vector<1x8x1xf32> to vector<8x1xf32>
      %182 = tpu.reciprocal %181 {approx = true} : vector<8x1xf32> -> vector<8x1xf32>
      %c1_113 = arith.constant 1 : index
      %c0_114 = arith.constant 0 : index
      %c0_115 = arith.constant 0 : index
      %183 = vector.load %arg10[%c1_113, %c0_114, %c0_115] : memref<4x8x32xf32, #tpu.memory_space<vmem>>, vector<1x8x32xf32>
      %184 = vector.shape_cast %183 : vector<1x8x32xf32> to vector<8x32xf32>
      %185 = vector.broadcast %182 : vector<8x1xf32> to vector<8x32xf32>
      %186 = arith.mulf %184, %185 : vector<8x32xf32>
      %187 = arith.truncf %186 : vector<8x32xf32> to vector<8x32xbf16>
      %c0_116 = arith.constant 0 : index
      %c0_117 = arith.constant 0 : index
      %c32 = arith.constant 32 : index
      %188 = vector.load %arg7[%c0_116, %c0_117, %c32] : memref<1x8x128xbf16, #tpu.memory_space<vmem>>, vector<1x8x32xbf16>
      %189 = vector.shape_cast %188 : vector<1x8x32xbf16> to vector<8x32xbf16>
      %190 = vector.shape_cast %187 : vector<8x32xbf16> to vector<1x8x32xbf16>
      tpu.vector_store %arg7[%c0_116, %c0_117, %c32], %190 {strides = array<i32>} : memref<1x8x128xbf16, #tpu.memory_space<vmem>>, vector<1x8x32xbf16>,
      %c2_118 = arith.constant 2 : index
      %c0_119 = arith.constant 0 : index
      %c0_120 = arith.constant 0 : index
      %191 = vector.load %arg9[%c2_118, %c0_119, %c0_120] : memref<4x8x1xf32, #tpu.memory_space<vmem>>, vector<1x8x1xf32>
      %192 = vector.shape_cast %191 : vector<1x8x1xf32> to vector<8x1xf32>
      %193 = tpu.reciprocal %192 {approx = true} : vector<8x1xf32> -> vector<8x1xf32>
      %c2_121 = arith.constant 2 : index
      %c0_122 = arith.constant 0 : index
      %c0_123 = arith.constant 0 : index
      %194 = vector.load %arg10[%c2_121, %c0_122, %c0_123] : memref<4x8x32xf32, #tpu.memory_space<vmem>>, vector<1x8x32xf32>
      %195 = vector.shape_cast %194 : vector<1x8x32xf32> to vector<8x32xf32>
      %196 = vector.broadcast %193 : vector<8x1xf32> to vector<8x32xf32>
      %197 = arith.mulf %195, %196 : vector<8x32xf32>
      %198 = arith.truncf %197 : vector<8x32xf32> to vector<8x32xbf16>
      %c0_124 = arith.constant 0 : index
      %c0_125 = arith.constant 0 : index
      %c64 = arith.constant 64 : index
      %199 = vector.load %arg7[%c0_124, %c0_125, %c64] : memref<1x8x128xbf16, #tpu.memory_space<vmem>>, vector<1x8x32xbf16>
      %200 = vector.shape_cast %199 : vector<1x8x32xbf16> to vector<8x32xbf16>
      %201 = vector.shape_cast %198 : vector<8x32xbf16> to vector<1x8x32xbf16>
      tpu.vector_store %arg7[%c0_124, %c0_125, %c64], %201 {strides = array<i32>} : memref<1x8x128xbf16, #tpu.memory_space<vmem>>, vector<1x8x32xbf16>,
      %c3_126 = arith.constant 3 : index
      %c0_127 = arith.constant 0 : index
      %c0_128 = arith.constant 0 : index
      %202 = vector.load %arg9[%c3_126, %c0_127, %c0_128] : memref<4x8x1xf32, #tpu.memory_space<vmem>>, vector<1x8x1xf32>
      %203 = vector.shape_cast %202 : vector<1x8x1xf32> to vector<8x1xf32>
      %204 = tpu.reciprocal %203 {approx = true} : vector<8x1xf32> -> vector<8x1xf32>
      %c3_129 = arith.constant 3 : index
      %c0_130 = arith.constant 0 : index
      %c0_131 = arith.constant 0 : index
      %205 = vector.load %arg10[%c3_129, %c0_130, %c0_131] : memref<4x8x32xf32, #tpu.memory_space<vmem>>, vector<1x8x32xf32>
      %206 = vector.shape_cast %205 : vector<1x8x32xf32> to vector<8x32xf32>
      %207 = vector.broadcast %204 : vector<8x1xf32> to vector<8x32xf32>
      %208 = arith.mulf %206, %207 : vector<8x32xf32>
      %209 = arith.truncf %208 : vector<8x32xf32> to vector<8x32xbf16>
      %c0_132 = arith.constant 0 : index
      %c0_133 = arith.constant 0 : index
      %c96 = arith.constant 96 : index
      %210 = vector.load %arg7[%c0_132, %c0_133, %c96] : memref<1x8x128xbf16, #tpu.memory_space<vmem>>, vector<1x8x32xbf16>
      %211 = vector.shape_cast %210 : vector<1x8x32xbf16> to vector<8x32xbf16>
      %212 = vector.shape_cast %209 : vector<8x32xbf16> to vector<1x8x32xbf16>
      tpu.vector_store %arg7[%c0_132, %c0_133, %c96], %212 {strides = array<i32>} : memref<1x8x128xbf16, #tpu.memory_space<vmem>>, vector<1x8x32xbf16>,
    } else {
    }
    return
  }
  func.func @transform_0(%arg0: i32, %arg1: i32, %arg2: i32) -> (i32, i32, i32) {
    %c0_i32 = arith.constant 0 : i32
    %c0_i32_0 = arith.constant 0 : i32
    return %arg0, %arg1, %c0_i32 : i32, i32, i32
  }
  func.func @transform_1(%arg0: i32, %arg1: i32, %arg2: i32) -> (i32, i32, i32) {
    %c1_i32 = arith.constant 1 : i32
    %c0_i32 = arith.constant 0 : i32
    return %arg0, %arg2, %c1_i32 : i32, i32, i32
  }
  func.func @transform_2(%arg0: i32, %arg1: i32, %arg2: i32) -> (i32, i32, i32) {
    %c2_i32 = arith.constant 2 : i32
    %c0_i32 = arith.constant 0 : i32
    return %arg0, %arg2, %c2_i32 : i32, i32, i32
  }
  func.func @transform_3(%arg0: i32, %arg1: i32, %arg2: i32) -> (i32, i32, i32) {
    %c0_i32 = arith.constant 0 : i32
    %c0_i32_0 = arith.constant 0 : i32
    return %arg0, %c0_i32, %arg2 : i32, i32, i32
  }
  func.func @transform_4(%arg0: i32, %arg1: i32, %arg2: i32) -> (i32, i32, i32) {
    %c0_i32 = arith.constant 0 : i32
    %c0_i32_0 = arith.constant 0 : i32
    return %arg0, %arg1, %c0_i32 : i32, i32, i32
  }
}

module attributes {stable_mosaic.version = 11 : i64} {
  func.func @_linear_kernel(%arg0: i32, %arg1: i32, %arg2: i32, %arg3: memref<16x128xbf16, #tpu.memory_space<vmem>>, %arg4: memref<128x384xbf16, #tpu.memory_space<vmem>>, %arg5: memref<1x384xf32, #tpu.memory_space<vmem>>, %arg6: memref<16x384xbf16, #tpu.memory_space<vmem>>, %arg7: memref<16x384xf32, #tpu.memory_space<vmem>>) attributes {dimension_semantics = [#tpu.dimension_semantics<parallel>, #tpu.dimension_semantics<parallel>, #tpu.dimension_semantics<arbitrary>], iteration_bounds = array<i64: 1, 1, 1>, scalar_prefetch = 0 : i64, scratch_operands = 1 : i64, tpu.core_type = #tpu.core_type<tc>, window_params = [{transform_indices = @transform_0, window_bounds = array<i64: 16, 128>}, {transform_indices = @transform_1, window_bounds = array<i64: 128, 384>}, {transform_indices = @transform_2, window_bounds = array<i64: 1, 384>}, {transform_indices = @transform_3, window_bounds = array<i64: 16, 384>}]} {
    %c0_i32 = arith.constant 0 : i32
    %0 = arith.cmpi eq, %arg2, %c0_i32 : i32
    %1 = arith.extui %0 : i1 to i32
    %c0_i32_0 = arith.constant 0 : i32
    %2 = arith.cmpi ne, %1, %c0_i32_0 : i32
    scf.if %2 {
      %cst_10 = arith.constant 0.000000e+00 : f32
      %12 = vector.broadcast %cst_10 : f32 to vector<16x384xf32>
      %c0_11 = arith.constant 0 : index
      %c0_12 = arith.constant 0 : index
      %13 = vector.load %arg7[%c0_11, %c0_12] : memref<16x384xf32, #tpu.memory_space<vmem>>, vector<16x384xf32>
      tpu.vector_store %arg7[%c0_11, %c0_12], %12 {strides = array<i32>} : memref<16x384xf32, #tpu.memory_space<vmem>>, vector<16x384xf32>,
    } else {
    }
    %c0 = arith.constant 0 : index
    %c0_1 = arith.constant 0 : index
    %3 = vector.load %arg7[%c0, %c0_1] : memref<16x384xf32, #tpu.memory_space<vmem>>, vector<16x384xf32>
    %c0_2 = arith.constant 0 : index
    %c0_3 = arith.constant 0 : index
    %4 = vector.load %arg3[%c0_2, %c0_3] : memref<16x128xbf16, #tpu.memory_space<vmem>>, vector<16x128xbf16>
    %c0_4 = arith.constant 0 : index
    %c0_5 = arith.constant 0 : index
    %5 = vector.load %arg4[%c0_4, %c0_5] : memref<128x384xbf16, #tpu.memory_space<vmem>>, vector<128x384xbf16>
    %cst = arith.constant dense<0.000000e+00> : vector<16x384xf32>
    %6 = tpu.matmul %4, %5, %cst {dimension_numbers = #tpu.dot_dimension_numbers<[1], [0], [0], [1], [0, 0, 1, 1], [], []>} : vector<16x128xbf16>, vector<128x384xbf16>, vector<16x384xf32> -> vector<16x384xf32>
    %7 = arith.addf %3, %6 : vector<16x384xf32>
    %c0_6 = arith.constant 0 : index
    %c0_7 = arith.constant 0 : index
    %8 = vector.load %arg7[%c0_6, %c0_7] : memref<16x384xf32, #tpu.memory_space<vmem>>, vector<16x384xf32>
    tpu.vector_store %arg7[%c0_6, %c0_7], %7 {strides = array<i32>} : memref<16x384xf32, #tpu.memory_space<vmem>>, vector<16x384xf32>,
    %c0_i32_8 = arith.constant 0 : i32
    %9 = arith.cmpi eq, %arg2, %c0_i32_8 : i32
    %10 = arith.extui %9 : i1 to i32
    %c0_i32_9 = arith.constant 0 : i32
    %11 = arith.cmpi ne, %10, %c0_i32_9 : i32
    scf.if %11 {
      %c0_10 = arith.constant 0 : index
      %c0_11 = arith.constant 0 : index
      %12 = vector.load %arg7[%c0_10, %c0_11] : memref<16x384xf32, #tpu.memory_space<vmem>>, vector<16x384xf32>
      %c0_12 = arith.constant 0 : index
      %c0_13 = arith.constant 0 : index
      %13 = vector.load %arg5[%c0_12, %c0_13] : memref<1x384xf32, #tpu.memory_space<vmem>>, vector<1x384xf32>
      %14 = vector.broadcast %13 : vector<1x384xf32> to vector<16x384xf32>
      %15 = arith.addf %12, %14 : vector<16x384xf32>
      %16 = arith.truncf %15 : vector<16x384xf32> to vector<16x384xbf16>
      %c0_14 = arith.constant 0 : index
      %c0_15 = arith.constant 0 : index
      %17 = vector.load %arg6[%c0_14, %c0_15] : memref<16x384xbf16, #tpu.memory_space<vmem>>, vector<16x384xbf16>
      tpu.vector_store %arg6[%c0_14, %c0_15], %16 {strides = array<i32>} : memref<16x384xbf16, #tpu.memory_space<vmem>>, vector<16x384xbf16>,
    } else {
    }
    return
  }
  func.func @transform_0(%arg0: i32, %arg1: i32, %arg2: i32) -> (i32, i32) {
    %c0_i32 = arith.constant 0 : i32
    return %arg0, %arg2 : i32, i32
  }
  func.func @transform_1(%arg0: i32, %arg1: i32, %arg2: i32) -> (i32, i32) {
    %c0_i32 = arith.constant 0 : i32
    return %arg2, %arg1 : i32, i32
  }
  func.func @transform_2(%arg0: i32, %arg1: i32, %arg2: i32) -> (i32, i32) {
    %c0_i32 = arith.constant 0 : i32
    %c0_i32_0 = arith.constant 0 : i32
    return %c0_i32, %arg1 : i32, i32
  }
  func.func @transform_3(%arg0: i32, %arg1: i32, %arg2: i32) -> (i32, i32) {
    %c0_i32 = arith.constant 0 : i32
    return %arg0, %arg1 : i32, i32
  }
}

module attributes {stable_mosaic.version = 11 : i64} {
  func.func @_linear_kernel(%arg0: i32, %arg1: i32, %arg2: i32, %arg3: memref<16x128xbf16, #tpu.memory_space<vmem>>, %arg4: memref<128x256xbf16, #tpu.memory_space<vmem>>, %arg5: memref<1x256xf32, #tpu.memory_space<vmem>>, %arg6: memref<16x256xbf16, #tpu.memory_space<vmem>>, %arg7: memref<16x256xf32, #tpu.memory_space<vmem>>) attributes {dimension_semantics = [#tpu.dimension_semantics<parallel>, #tpu.dimension_semantics<parallel>, #tpu.dimension_semantics<arbitrary>], iteration_bounds = array<i64: 1, 1, 1>, scalar_prefetch = 0 : i64, scratch_operands = 1 : i64, tpu.core_type = #tpu.core_type<tc>, window_params = [{transform_indices = @transform_0, window_bounds = array<i64: 16, 128>}, {transform_indices = @transform_1, window_bounds = array<i64: 128, 256>}, {transform_indices = @transform_2, window_bounds = array<i64: 1, 256>}, {transform_indices = @transform_3, window_bounds = array<i64: 16, 256>}]} {
    %c0_i32 = arith.constant 0 : i32
    %0 = arith.cmpi eq, %arg2, %c0_i32 : i32
    %1 = arith.extui %0 : i1 to i32
    %c0_i32_0 = arith.constant 0 : i32
    %2 = arith.cmpi ne, %1, %c0_i32_0 : i32
    scf.if %2 {
      %cst_10 = arith.constant 0.000000e+00 : f32
      %12 = vector.broadcast %cst_10 : f32 to vector<16x256xf32>
      %c0_11 = arith.constant 0 : index
      %c0_12 = arith.constant 0 : index
      %13 = vector.load %arg7[%c0_11, %c0_12] : memref<16x256xf32, #tpu.memory_space<vmem>>, vector<16x256xf32>
      tpu.vector_store %arg7[%c0_11, %c0_12], %12 {strides = array<i32>} : memref<16x256xf32, #tpu.memory_space<vmem>>, vector<16x256xf32>,
    } else {
    }
    %c0 = arith.constant 0 : index
    %c0_1 = arith.constant 0 : index
    %3 = vector.load %arg7[%c0, %c0_1] : memref<16x256xf32, #tpu.memory_space<vmem>>, vector<16x256xf32>
    %c0_2 = arith.constant 0 : index
    %c0_3 = arith.constant 0 : index
    %4 = vector.load %arg3[%c0_2, %c0_3] : memref<16x128xbf16, #tpu.memory_space<vmem>>, vector<16x128xbf16>
    %c0_4 = arith.constant 0 : index
    %c0_5 = arith.constant 0 : index
    %5 = vector.load %arg4[%c0_4, %c0_5] : memref<128x256xbf16, #tpu.memory_space<vmem>>, vector<128x256xbf16>
    %cst = arith.constant dense<0.000000e+00> : vector<16x256xf32>
    %6 = tpu.matmul %4, %5, %cst {dimension_numbers = #tpu.dot_dimension_numbers<[1], [0], [0], [1], [0, 0, 1, 1], [], []>} : vector<16x128xbf16>, vector<128x256xbf16>, vector<16x256xf32> -> vector<16x256xf32>
    %7 = arith.addf %3, %6 : vector<16x256xf32>
    %c0_6 = arith.constant 0 : index
    %c0_7 = arith.constant 0 : index
    %8 = vector.load %arg7[%c0_6, %c0_7] : memref<16x256xf32, #tpu.memory_space<vmem>>, vector<16x256xf32>
    tpu.vector_store %arg7[%c0_6, %c0_7], %7 {strides = array<i32>} : memref<16x256xf32, #tpu.memory_space<vmem>>, vector<16x256xf32>,
    %c0_i32_8 = arith.constant 0 : i32
    %9 = arith.cmpi eq, %arg2, %c0_i32_8 : i32
    %10 = arith.extui %9 : i1 to i32
    %c0_i32_9 = arith.constant 0 : i32
    %11 = arith.cmpi ne, %10, %c0_i32_9 : i32
    scf.if %11 {
      %c0_10 = arith.constant 0 : index
      %c0_11 = arith.constant 0 : index
      %12 = vector.load %arg7[%c0_10, %c0_11] : memref<16x256xf32, #tpu.memory_space<vmem>>, vector<16x256xf32>
      %c0_12 = arith.constant 0 : index
      %c0_13 = arith.constant 0 : index
      %13 = vector.load %arg5[%c0_12, %c0_13] : memref<1x256xf32, #tpu.memory_space<vmem>>, vector<1x256xf32>
      %14 = vector.broadcast %13 : vector<1x256xf32> to vector<16x256xf32>
      %15 = arith.addf %12, %14 : vector<16x256xf32>
      %cst_14 = arith.constant 0.000000e+00 : f32
      %16 = vector.broadcast %cst_14 : f32 to vector<16x256xf32>
      %17 = arith.maximumf %15, %16 : vector<16x256xf32>
      %18 = arith.truncf %17 : vector<16x256xf32> to vector<16x256xbf16>
      %c0_15 = arith.constant 0 : index
      %c0_16 = arith.constant 0 : index
      %19 = vector.load %arg6[%c0_15, %c0_16] : memref<16x256xbf16, #tpu.memory_space<vmem>>, vector<16x256xbf16>
      tpu.vector_store %arg6[%c0_15, %c0_16], %18 {strides = array<i32>} : memref<16x256xbf16, #tpu.memory_space<vmem>>, vector<16x256xbf16>,
    } else {
    }
    return
  }
  func.func @transform_0(%arg0: i32, %arg1: i32, %arg2: i32) -> (i32, i32) {
    %c0_i32 = arith.constant 0 : i32
    return %arg0, %arg2 : i32, i32
  }
  func.func @transform_1(%arg0: i32, %arg1: i32, %arg2: i32) -> (i32, i32) {
    %c0_i32 = arith.constant 0 : i32
    return %arg2, %arg1 : i32, i32
  }
  func.func @transform_2(%arg0: i32, %arg1: i32, %arg2: i32) -> (i32, i32) {
    %c0_i32 = arith.constant 0 : i32
    %c0_i32_0 = arith.constant 0 : i32
    return %c0_i32, %arg1 : i32, i32
  }
  func.func @transform_3(%arg0: i32, %arg1: i32, %arg2: i32) -> (i32, i32) {
    %c0_i32 = arith.constant 0 : i32
    return %arg0, %arg1 : i32, i32
  }
}

module attributes {stable_mosaic.version = 11 : i64} {
  func.func @_linear_kernel(%arg0: i32, %arg1: i32, %arg2: i32, %arg3: memref<16x128xbf16, #tpu.memory_space<vmem>>, %arg4: memref<128x384xbf16, #tpu.memory_space<vmem>>, %arg5: memref<1x384xf32, #tpu.memory_space<vmem>>, %arg6: memref<16x384xbf16, #tpu.memory_space<vmem>>, %arg7: memref<16x384xf32, #tpu.memory_space<vmem>>) attributes {dimension_semantics = [#tpu.dimension_semantics<parallel>, #tpu.dimension_semantics<parallel>, #tpu.dimension_semantics<arbitrary>], iteration_bounds = array<i64: 1, 1, 1>, scalar_prefetch = 0 : i64, scratch_operands = 1 : i64, tpu.core_type = #tpu.core_type<tc>, window_params = [{transform_indices = @transform_0, window_bounds = array<i64: 16, 128>}, {transform_indices = @transform_1, window_bounds = array<i64: 128, 384>}, {transform_indices = @transform_2, window_bounds = array<i64: 1, 384>}, {transform_indices = @transform_3, window_bounds = array<i64: 16, 384>}]} {
    %c0_i32 = arith.constant 0 : i32
    %0 = arith.cmpi eq, %arg2, %c0_i32 : i32
    %1 = arith.extui %0 : i1 to i32
    %c0_i32_0 = arith.constant 0 : i32
    %2 = arith.cmpi ne, %1, %c0_i32_0 : i32
    scf.if %2 {
      %cst_10 = arith.constant 0.000000e+00 : f32
      %12 = vector.broadcast %cst_10 : f32 to vector<16x384xf32>
      %c0_11 = arith.constant 0 : index
      %c0_12 = arith.constant 0 : index
      %13 = vector.load %arg7[%c0_11, %c0_12] : memref<16x384xf32, #tpu.memory_space<vmem>>, vector<16x384xf32>
      tpu.vector_store %arg7[%c0_11, %c0_12], %12 {strides = array<i32>} : memref<16x384xf32, #tpu.memory_space<vmem>>, vector<16x384xf32>,
    } else {
    }
    %c0 = arith.constant 0 : index
    %c0_1 = arith.constant 0 : index
    %3 = vector.load %arg7[%c0, %c0_1] : memref<16x384xf32, #tpu.memory_space<vmem>>, vector<16x384xf32>
    %c0_2 = arith.constant 0 : index
    %c0_3 = arith.constant 0 : index
    %4 = vector.load %arg3[%c0_2, %c0_3] : memref<16x128xbf16, #tpu.memory_space<vmem>>, vector<16x128xbf16>
    %c0_4 = arith.constant 0 : index
    %c0_5 = arith.constant 0 : index
    %5 = vector.load %arg4[%c0_4, %c0_5] : memref<128x384xbf16, #tpu.memory_space<vmem>>, vector<128x384xbf16>
    %cst = arith.constant dense<0.000000e+00> : vector<16x384xf32>
    %6 = tpu.matmul %4, %5, %cst {dimension_numbers = #tpu.dot_dimension_numbers<[1], [0], [0], [1], [0, 0, 1, 1], [], []>} : vector<16x128xbf16>, vector<128x384xbf16>, vector<16x384xf32> -> vector<16x384xf32>
    %7 = arith.addf %3, %6 : vector<16x384xf32>
    %c0_6 = arith.constant 0 : index
    %c0_7 = arith.constant 0 : index
    %8 = vector.load %arg7[%c0_6, %c0_7] : memref<16x384xf32, #tpu.memory_space<vmem>>, vector<16x384xf32>
    tpu.vector_store %arg7[%c0_6, %c0_7], %7 {strides = array<i32>} : memref<16x384xf32, #tpu.memory_space<vmem>>, vector<16x384xf32>,
    %c0_i32_8 = arith.constant 0 : i32
    %9 = arith.cmpi eq, %arg2, %c0_i32_8 : i32
    %10 = arith.extui %9 : i1 to i32
    %c0_i32_9 = arith.constant 0 : i32
    %11 = arith.cmpi ne, %10, %c0_i32_9 : i32
    scf.if %11 {
      %c0_10 = arith.constant 0 : index
      %c0_11 = arith.constant 0 : index
      %12 = vector.load %arg7[%c0_10, %c0_11] : memref<16x384xf32, #tpu.memory_space<vmem>>, vector<16x384xf32>
      %c0_12 = arith.constant 0 : index
      %c0_13 = arith.constant 0 : index
      %13 = vector.load %arg5[%c0_12, %c0_13] : memref<1x384xf32, #tpu.memory_space<vmem>>, vector<1x384xf32>
      %14 = vector.broadcast %13 : vector<1x384xf32> to vector<16x384xf32>
      %15 = arith.addf %12, %14 : vector<16x384xf32>
      %16 = arith.truncf %15 : vector<16x384xf32> to vector<16x384xbf16>
      %c0_14 = arith.constant 0 : index
      %c0_15 = arith.constant 0 : index
      %17 = vector.load %arg6[%c0_14, %c0_15] : memref<16x384xbf16, #tpu.memory_space<vmem>>, vector<16x384xbf16>
      tpu.vector_store %arg6[%c0_14, %c0_15], %16 {strides = array<i32>} : memref<16x384xbf16, #tpu.memory_space<vmem>>, vector<16x384xbf16>,
    } else {
    }
    return
  }
  func.func @transform_0(%arg0: i32, %arg1: i32, %arg2: i32) -> (i32, i32) {
    %c0_i32 = arith.constant 0 : i32
    return %arg0, %arg2 : i32, i32
  }
  func.func @transform_1(%arg0: i32, %arg1: i32, %arg2: i32) -> (i32, i32) {
    %c0_i32 = arith.constant 0 : i32
    return %arg2, %arg1 : i32, i32
  }
  func.func @transform_2(%arg0: i32, %arg1: i32, %arg2: i32) -> (i32, i32) {
    %c0_i32 = arith.constant 0 : i32
    %c0_i32_0 = arith.constant 0 : i32
    return %c0_i32, %arg1 : i32, i32
  }
  func.func @transform_3(%arg0: i32, %arg1: i32, %arg2: i32) -> (i32, i32) {
    %c0_i32 = arith.constant 0 : i32
    return %arg0, %arg1 : i32, i32
  }
}

module attributes {stable_mosaic.version = 11 : i64} {
  func.func @_linear_add_ln_kernel(%arg0: i32, %arg1: i32, %arg2: memref<16x256xbf16, #tpu.memory_space<vmem>>, %arg3: memref<256x128xbf16, #tpu.memory_space<vmem>>, %arg4: memref<1x128xf32, #tpu.memory_space<vmem>>, %arg5: memref<16x128xbf16, #tpu.memory_space<vmem>>, %arg6: memref<1x128xf32, #tpu.memory_space<vmem>>, %arg7: memref<1x128xf32, #tpu.memory_space<vmem>>, %arg8: memref<16x128xbf16, #tpu.memory_space<vmem>>, %arg9: memref<16x128xf32, #tpu.memory_space<vmem>>) attributes {dimension_semantics = [#tpu.dimension_semantics<parallel>, #tpu.dimension_semantics<arbitrary>], iteration_bounds = array<i64: 1, 1>, scalar_prefetch = 0 : i64, scratch_operands = 1 : i64, tpu.core_type = #tpu.core_type<tc>, window_params = [{transform_indices = @transform_0, window_bounds = array<i64: 16, 256>}, {transform_indices = @transform_1, window_bounds = array<i64: 256, 128>}, {pipeline_mode = #tpu.pipeline_mode<synchronous>, transform_indices = @transform_2, window_bounds = array<i64: 1, 128>}, {transform_indices = @transform_3, window_bounds = array<i64: 16, 128>}, {pipeline_mode = #tpu.pipeline_mode<synchronous>, transform_indices = @transform_4, window_bounds = array<i64: 1, 128>}, {pipeline_mode = #tpu.pipeline_mode<synchronous>, transform_indices = @transform_5, window_bounds = array<i64: 1, 128>}, {transform_indices = @transform_6, window_bounds = array<i64: 16, 128>}]} {
    %c0_i32 = arith.constant 0 : i32
    %0 = arith.cmpi eq, %arg1, %c0_i32 : i32
    %1 = arith.extui %0 : i1 to i32
    %c0_i32_0 = arith.constant 0 : i32
    %2 = arith.cmpi ne, %1, %c0_i32_0 : i32
    scf.if %2 {
      %cst_10 = arith.constant 0.000000e+00 : f32
      %12 = vector.broadcast %cst_10 : f32 to vector<16x128xf32>
      %c0_11 = arith.constant 0 : index
      %c0_12 = arith.constant 0 : index
      %13 = vector.load %arg9[%c0_11, %c0_12] : memref<16x128xf32, #tpu.memory_space<vmem>>, vector<16x128xf32>
      tpu.vector_store %arg9[%c0_11, %c0_12], %12 {strides = array<i32>} : memref<16x128xf32, #tpu.memory_space<vmem>>, vector<16x128xf32>,
    } else {
    }
    %c0 = arith.constant 0 : index
    %c0_1 = arith.constant 0 : index
    %3 = vector.load %arg9[%c0, %c0_1] : memref<16x128xf32, #tpu.memory_space<vmem>>, vector<16x128xf32>
    %c0_2 = arith.constant 0 : index
    %c0_3 = arith.constant 0 : index
    %4 = vector.load %arg2[%c0_2, %c0_3] : memref<16x256xbf16, #tpu.memory_space<vmem>>, vector<16x256xbf16>
    %c0_4 = arith.constant 0 : index
    %c0_5 = arith.constant 0 : index
    %5 = vector.load %arg3[%c0_4, %c0_5] : memref<256x128xbf16, #tpu.memory_space<vmem>>, vector<256x128xbf16>
    %cst = arith.constant dense<0.000000e+00> : vector<16x128xf32>
    %6 = tpu.matmul %4, %5, %cst {dimension_numbers = #tpu.dot_dimension_numbers<[1], [0], [0], [1], [0, 0, 1, 1], [], []>} : vector<16x256xbf16>, vector<256x128xbf16>, vector<16x128xf32> -> vector<16x128xf32>
    %7 = arith.addf %3, %6 : vector<16x128xf32>
    %c0_6 = arith.constant 0 : index
    %c0_7 = arith.constant 0 : index
    %8 = vector.load %arg9[%c0_6, %c0_7] : memref<16x128xf32, #tpu.memory_space<vmem>>, vector<16x128xf32>
    tpu.vector_store %arg9[%c0_6, %c0_7], %7 {strides = array<i32>} : memref<16x128xf32, #tpu.memory_space<vmem>>, vector<16x128xf32>,
    %c0_i32_8 = arith.constant 0 : i32
    %9 = arith.cmpi eq, %arg1, %c0_i32_8 : i32
    %10 = arith.extui %9 : i1 to i32
    %c0_i32_9 = arith.constant 0 : i32
    %11 = arith.cmpi ne, %10, %c0_i32_9 : i32
    scf.if %11 {
      %c0_10 = arith.constant 0 : index
      %c0_11 = arith.constant 0 : index
      %12 = vector.load %arg9[%c0_10, %c0_11] : memref<16x128xf32, #tpu.memory_space<vmem>>, vector<16x128xf32>
      %c0_12 = arith.constant 0 : index
      %c0_13 = arith.constant 0 : index
      %13 = vector.load %arg4[%c0_12, %c0_13] : memref<1x128xf32, #tpu.memory_space<vmem>>, vector<1x128xf32>
      %14 = vector.broadcast %13 : vector<1x128xf32> to vector<16x128xf32>
      %15 = arith.addf %12, %14 : vector<16x128xf32>
      %c0_14 = arith.constant 0 : index
      %c0_15 = arith.constant 0 : index
      %16 = vector.load %arg5[%c0_14, %c0_15] : memref<16x128xbf16, #tpu.memory_space<vmem>>, vector<16x128xbf16>
      %17 = arith.extf %16 : vector<16x128xbf16> to vector<16x128xf32>
      %18 = arith.addf %15, %17 : vector<16x128xf32>
      %cst_16 = arith.constant dense<0.000000e+00> : vector<16xf32>
      %19 = vector.multi_reduction <add>, %18, %cst_16 [1] : vector<16x128xf32> to vector<16xf32>
      %20 = vector.shape_cast %19 : vector<16xf32> to vector<16x1xf32>
      %cst_17 = arith.constant 1.280000e+02 : f32
      %21 = vector.broadcast %cst_17 : f32 to vector<16x1xf32>
      %22 = arith.divf %20, %21 : vector<16x1xf32>
      %23 = vector.broadcast %22 : vector<16x1xf32> to vector<16x128xf32>
      %24 = arith.subf %18, %23 : vector<16x128xf32>
      %25 = arith.mulf %24, %24 : vector<16x128xf32>
      %cst_18 = arith.constant dense<0.000000e+00> : vector<16xf32>
      %26 = vector.multi_reduction <add>, %25, %cst_18 [1] : vector<16x128xf32> to vector<16xf32>
      %27 = vector.shape_cast %26 : vector<16xf32> to vector<16x1xf32>
      %cst_19 = arith.constant 1.280000e+02 : f32
      %28 = vector.broadcast %cst_19 : f32 to vector<16x1xf32>
      %29 = arith.divf %27, %28 : vector<16x1xf32>
      %30 = vector.broadcast %22 : vector<16x1xf32> to vector<16x128xf32>
      %31 = arith.subf %18, %30 : vector<16x128xf32>
      %cst_20 = arith.constant 9.99999974E-6 : f32
      %32 = vector.broadcast %cst_20 : f32 to vector<16x1xf32>
      %33 = arith.addf %29, %32 : vector<16x1xf32>
      %34 = math.rsqrt %33 : vector<16x1xf32>
      %35 = vector.broadcast %34 : vector<16x1xf32> to vector<16x128xf32>
      %36 = arith.mulf %31, %35 : vector<16x128xf32>
      %c0_21 = arith.constant 0 : index
      %c0_22 = arith.constant 0 : index
      %37 = vector.load %arg6[%c0_21, %c0_22] : memref<1x128xf32, #tpu.memory_space<vmem>>, vector<1x128xf32>
      %38 = vector.broadcast %37 : vector<1x128xf32> to vector<16x128xf32>
      %39 = arith.mulf %36, %38 : vector<16x128xf32>
      %c0_23 = arith.constant 0 : index
      %c0_24 = arith.constant 0 : index
      %40 = vector.load %arg7[%c0_23, %c0_24] : memref<1x128xf32, #tpu.memory_space<vmem>>, vector<1x128xf32>
      %41 = vector.broadcast %40 : vector<1x128xf32> to vector<16x128xf32>
      %42 = arith.addf %39, %41 : vector<16x128xf32>
      %43 = arith.truncf %42 : vector<16x128xf32> to vector<16x128xbf16>
      %c0_25 = arith.constant 0 : index
      %c0_26 = arith.constant 0 : index
      %44 = vector.load %arg8[%c0_25, %c0_26] : memref<16x128xbf16, #tpu.memory_space<vmem>>, vector<16x128xbf16>
      tpu.vector_store %arg8[%c0_25, %c0_26], %43 {strides = array<i32>} : memref<16x128xbf16, #tpu.memory_space<vmem>>, vector<16x128xbf16>,
    } else {
    }
    return
  }
  func.func @transform_0(%arg0: i32, %arg1: i32) -> (i32, i32) {
    %c0_i32 = arith.constant 0 : i32
    return %arg0, %arg1 : i32, i32
  }
  func.func @transform_1(%arg0: i32, %arg1: i32) -> (i32, i32) {
    %c0_i32 = arith.constant 0 : i32
    %c0_i32_0 = arith.constant 0 : i32
    return %arg1, %c0_i32 : i32, i32
  }
  func.func @transform_2(%arg0: i32, %arg1: i32) -> (i32, i32) {
    %c0_i32 = arith.constant 0 : i32
    %c0_i32_0 = arith.constant 0 : i32
    %c0_i32_1 = arith.constant 0 : i32
    return %c0_i32, %c0_i32_0 : i32, i32
  }
  func.func @transform_3(%arg0: i32, %arg1: i32) -> (i32, i32) {
    %c0_i32 = arith.constant 0 : i32
    %c0_i32_0 = arith.constant 0 : i32
    return %arg0, %c0_i32 : i32, i32
  }
  func.func @transform_4(%arg0: i32, %arg1: i32) -> (i32, i32) {
    %c0_i32 = arith.constant 0 : i32
    %c0_i32_0 = arith.constant 0 : i32
    %c0_i32_1 = arith.constant 0 : i32
    return %c0_i32, %c0_i32_0 : i32, i32
  }
  func.func @transform_5(%arg0: i32, %arg1: i32) -> (i32, i32) {
    %c0_i32 = arith.constant 0 : i32
    %c0_i32_0 = arith.constant 0 : i32
    %c0_i32_1 = arith.constant 0 : i32
    return %c0_i32, %c0_i32_0 : i32, i32
  }
  func.func @transform_6(%arg0: i32, %arg1: i32) -> (i32, i32) {
    %c0_i32 = arith.constant 0 : i32
    %c0_i32_0 = arith.constant 0 : i32
    return %arg0, %c0_i32 : i32, i32
  }
}

module attributes {stable_mosaic.version = 11 : i64} {
  func.func @_linear_kernel(%arg0: i32, %arg1: i32, %arg2: i32, %arg3: memref<16x128xbf16, #tpu.memory_space<vmem>>, %arg4: memref<128x256xbf16, #tpu.memory_space<vmem>>, %arg5: memref<1x256xf32, #tpu.memory_space<vmem>>, %arg6: memref<16x256xbf16, #tpu.memory_space<vmem>>, %arg7: memref<16x256xf32, #tpu.memory_space<vmem>>) attributes {dimension_semantics = [#tpu.dimension_semantics<parallel>, #tpu.dimension_semantics<parallel>, #tpu.dimension_semantics<arbitrary>], iteration_bounds = array<i64: 1, 1, 1>, scalar_prefetch = 0 : i64, scratch_operands = 1 : i64, tpu.core_type = #tpu.core_type<tc>, window_params = [{transform_indices = @transform_0, window_bounds = array<i64: 16, 128>}, {transform_indices = @transform_1, window_bounds = array<i64: 128, 256>}, {transform_indices = @transform_2, window_bounds = array<i64: 1, 256>}, {transform_indices = @transform_3, window_bounds = array<i64: 16, 256>}]} {
    %c0_i32 = arith.constant 0 : i32
    %0 = arith.cmpi eq, %arg2, %c0_i32 : i32
    %1 = arith.extui %0 : i1 to i32
    %c0_i32_0 = arith.constant 0 : i32
    %2 = arith.cmpi ne, %1, %c0_i32_0 : i32
    scf.if %2 {
      %cst_10 = arith.constant 0.000000e+00 : f32
      %12 = vector.broadcast %cst_10 : f32 to vector<16x256xf32>
      %c0_11 = arith.constant 0 : index
      %c0_12 = arith.constant 0 : index
      %13 = vector.load %arg7[%c0_11, %c0_12] : memref<16x256xf32, #tpu.memory_space<vmem>>, vector<16x256xf32>
      tpu.vector_store %arg7[%c0_11, %c0_12], %12 {strides = array<i32>} : memref<16x256xf32, #tpu.memory_space<vmem>>, vector<16x256xf32>,
    } else {
    }
    %c0 = arith.constant 0 : index
    %c0_1 = arith.constant 0 : index
    %3 = vector.load %arg7[%c0, %c0_1] : memref<16x256xf32, #tpu.memory_space<vmem>>, vector<16x256xf32>
    %c0_2 = arith.constant 0 : index
    %c0_3 = arith.constant 0 : index
    %4 = vector.load %arg3[%c0_2, %c0_3] : memref<16x128xbf16, #tpu.memory_space<vmem>>, vector<16x128xbf16>
    %c0_4 = arith.constant 0 : index
    %c0_5 = arith.constant 0 : index
    %5 = vector.load %arg4[%c0_4, %c0_5] : memref<128x256xbf16, #tpu.memory_space<vmem>>, vector<128x256xbf16>
    %cst = arith.constant dense<0.000000e+00> : vector<16x256xf32>
    %6 = tpu.matmul %4, %5, %cst {dimension_numbers = #tpu.dot_dimension_numbers<[1], [0], [0], [1], [0, 0, 1, 1], [], []>} : vector<16x128xbf16>, vector<128x256xbf16>, vector<16x256xf32> -> vector<16x256xf32>
    %7 = arith.addf %3, %6 : vector<16x256xf32>
    %c0_6 = arith.constant 0 : index
    %c0_7 = arith.constant 0 : index
    %8 = vector.load %arg7[%c0_6, %c0_7] : memref<16x256xf32, #tpu.memory_space<vmem>>, vector<16x256xf32>
    tpu.vector_store %arg7[%c0_6, %c0_7], %7 {strides = array<i32>} : memref<16x256xf32, #tpu.memory_space<vmem>>, vector<16x256xf32>,
    %c0_i32_8 = arith.constant 0 : i32
    %9 = arith.cmpi eq, %arg2, %c0_i32_8 : i32
    %10 = arith.extui %9 : i1 to i32
    %c0_i32_9 = arith.constant 0 : i32
    %11 = arith.cmpi ne, %10, %c0_i32_9 : i32
    scf.if %11 {
      %c0_10 = arith.constant 0 : index
      %c0_11 = arith.constant 0 : index
      %12 = vector.load %arg7[%c0_10, %c0_11] : memref<16x256xf32, #tpu.memory_space<vmem>>, vector<16x256xf32>
      %c0_12 = arith.constant 0 : index
      %c0_13 = arith.constant 0 : index
      %13 = vector.load %arg5[%c0_12, %c0_13] : memref<1x256xf32, #tpu.memory_space<vmem>>, vector<1x256xf32>
      %14 = vector.broadcast %13 : vector<1x256xf32> to vector<16x256xf32>
      %15 = arith.addf %12, %14 : vector<16x256xf32>
      %16 = arith.truncf %15 : vector<16x256xf32> to vector<16x256xbf16>
      %c0_14 = arith.constant 0 : index
      %c0_15 = arith.constant 0 : index
      %17 = vector.load %arg6[%c0_14, %c0_15] : memref<16x256xbf16, #tpu.memory_space<vmem>>, vector<16x256xbf16>
      tpu.vector_store %arg6[%c0_14, %c0_15], %16 {strides = array<i32>} : memref<16x256xbf16, #tpu.memory_space<vmem>>, vector<16x256xbf16>,
    } else {
    }
    return
  }
  func.func @transform_0(%arg0: i32, %arg1: i32, %arg2: i32) -> (i32, i32) {
    %c0_i32 = arith.constant 0 : i32
    return %arg0, %arg2 : i32, i32
  }
  func.func @transform_1(%arg0: i32, %arg1: i32, %arg2: i32) -> (i32, i32) {
    %c0_i32 = arith.constant 0 : i32
    return %arg2, %arg1 : i32, i32
  }
  func.func @transform_2(%arg0: i32, %arg1: i32, %arg2: i32) -> (i32, i32) {
    %c0_i32 = arith.constant 0 : i32
    %c0_i32_0 = arith.constant 0 : i32
    return %c0_i32, %arg1 : i32, i32
  }
  func.func @transform_3(%arg0: i32, %arg1: i32, %arg2: i32) -> (i32, i32) {
    %c0_i32 = arith.constant 0 : i32
    return %arg0, %arg1 : i32, i32
  }
}

module attributes {stable_mosaic.version = 11 : i64} {
  func.func @_flash_attn_kernel(%arg0: i32, %arg1: i32, %arg2: i32, %arg3: memref<1x8x128xbf16, #tpu.memory_space<vmem>>, %arg4: memref<1x8x128xbf16, #tpu.memory_space<vmem>>, %arg5: memref<1x8x128xbf16, #tpu.memory_space<vmem>>, %arg6: memref<1x1x8xf32, #tpu.memory_space<vmem>>, %arg7: memref<1x8x128xbf16, #tpu.memory_space<vmem>>, %arg8: memref<4x8x1xf32, #tpu.memory_space<vmem>>, %arg9: memref<4x8x1xf32, #tpu.memory_space<vmem>>, %arg10: memref<4x8x32xf32, #tpu.memory_space<vmem>>) attributes {dimension_semantics = [#tpu.dimension_semantics<parallel>, #tpu.dimension_semantics<parallel>, #tpu.dimension_semantics<arbitrary>], iteration_bounds = array<i64: 2, 1, 1>, scalar_prefetch = 0 : i64, scratch_operands = 3 : i64, tpu.core_type = #tpu.core_type<tc>, window_params = [{transform_indices = @transform_0, window_bounds = array<i64: 1, 8, 128>}, {transform_indices = @transform_1, window_bounds = array<i64: 1, 8, 128>}, {transform_indices = @transform_2, window_bounds = array<i64: 1, 8, 128>}, {transform_indices = @transform_3, window_bounds = array<i64: 1, 1, 8>}, {transform_indices = @transform_4, window_bounds = array<i64: 1, 8, 128>}]} {
    %c0_i32 = arith.constant 0 : i32
    %0 = arith.cmpi eq, %arg2, %c0_i32 : i32
    %1 = arith.extui %0 : i1 to i32
    %c0_i32_0 = arith.constant 0 : i32
    %2 = arith.cmpi ne, %1, %c0_i32_0 : i32
    scf.if %2 {
      %cst = arith.constant 0xFF800000 : f32
      %13 = vector.broadcast %cst : f32 to vector<4x8x1xf32>
      %c0 = arith.constant 0 : index
      %c0_6 = arith.constant 0 : index
      %c0_7 = arith.constant 0 : index
      %14 = vector.load %arg8[%c0, %c0_6, %c0_7] : memref<4x8x1xf32, #tpu.memory_space<vmem>>, vector<4x8x1xf32>
      tpu.vector_store %arg8[%c0, %c0_6, %c0_7], %13 {strides = array<i32>} : memref<4x8x1xf32, #tpu.memory_space<vmem>>, vector<4x8x1xf32>,
      %cst_8 = arith.constant 0.000000e+00 : f32
      %15 = vector.broadcast %cst_8 : f32 to vector<4x8x1xf32>
      %c0_9 = arith.constant 0 : index
      %c0_10 = arith.constant 0 : index
      %c0_11 = arith.constant 0 : index
      %16 = vector.load %arg9[%c0_9, %c0_10, %c0_11] : memref<4x8x1xf32, #tpu.memory_space<vmem>>, vector<4x8x1xf32>
      tpu.vector_store %arg9[%c0_9, %c0_10, %c0_11], %15 {strides = array<i32>} : memref<4x8x1xf32, #tpu.memory_space<vmem>>, vector<4x8x1xf32>,
      %cst_12 = arith.constant 0.000000e+00 : f32
      %17 = vector.broadcast %cst_12 : f32 to vector<4x8x32xf32>
      %c0_13 = arith.constant 0 : index
      %c0_14 = arith.constant 0 : index
      %c0_15 = arith.constant 0 : index
      %18 = vector.load %arg10[%c0_13, %c0_14, %c0_15] : memref<4x8x32xf32, #tpu.memory_space<vmem>>, vector<4x8x32xf32>
      tpu.vector_store %arg10[%c0_13, %c0_14, %c0_15], %17 {strides = array<i32>} : memref<4x8x32xf32, #tpu.memory_space<vmem>>, vector<4x8x32xf32>,
    } else {
    }
    %c8_i32 = arith.constant 8 : i32
    %3 = arith.muli %arg2, %c8_i32 : i32
    %c8_i32_1 = arith.constant 8 : i32
    %4 = arith.muli %arg1, %c8_i32_1 : i32
    %c8_i32_2 = arith.constant 8 : i32
    %5 = arith.addi %4, %c8_i32_2 : i32
    %c1_i32 = arith.constant 1 : i32
    %6 = arith.subi %5, %c1_i32 : i32
    %7 = arith.cmpi sle, %3, %6 : i32
    %8 = arith.extui %7 : i1 to i32
    %c0_i32_3 = arith.constant 0 : i32
    %9 = arith.cmpi ne, %8, %c0_i32_3 : i32
    scf.if %9 {
      %c0 = arith.constant 0 : index
      %c0_6 = arith.constant 0 : index
      %c0_7 = arith.constant 0 : index
      %13 = vector.load %arg3[%c0, %c0_6, %c0_7] : memref<1x8x128xbf16, #tpu.memory_space<vmem>>, vector<1x8x128xbf16>
      %14 = vector.shape_cast %13 : vector<1x8x128xbf16> to vector<8x128xbf16>
      %c0_8 = arith.constant 0 : index
      %c0_9 = arith.constant 0 : index
      %c0_10 = arith.constant 0 : index
      %15 = vector.load %arg4[%c0_8, %c0_9, %c0_10] : memref<1x8x128xbf16, #tpu.memory_space<vmem>>, vector<1x8x128xbf16>
      %16 = vector.shape_cast %15 : vector<1x8x128xbf16> to vector<8x128xbf16>
      %c0_11 = arith.constant 0 : index
      %c0_12 = arith.constant 0 : index
      %c0_13 = arith.constant 0 : index
      %17 = vector.load %arg5[%c0_11, %c0_12, %c0_13] : memref<1x8x128xbf16, #tpu.memory_space<vmem>>, vector<1x8x128xbf16>
      %18 = vector.shape_cast %17 : vector<1x8x128xbf16> to vector<8x128xbf16>
      %c0_14 = arith.constant 0 : index
      %c0_15 = arith.constant 0 : index
      %c0_16 = arith.constant 0 : index
      %19 = vector.load %arg6[%c0_14, %c0_15, %c0_16] : memref<1x1x8xf32, #tpu.memory_space<vmem>>, vector<1x1x8xf32>
      %20 = vector.shape_cast %19 : vector<1x1x8xf32> to vector<1x8xf32>
      %cst = arith.constant 5.000000e-01 : f32
      %21 = vector.broadcast %cst : f32 to vector<1x8xf32>
      %22 = arith.cmpf ogt, %20, %21 : vector<1x8xf32>
      %cst_17 = arith.constant -1.000000e+09 : f32
      %cst_18 = arith.constant 0.000000e+00 : f32
      %23 = vector.broadcast %cst_17 : f32 to vector<1x8xf32>
      %24 = vector.broadcast %cst_18 : f32 to vector<1x8xf32>
      %25 = arith.select %22, %23, %24 : vector<1x8xi1>, vector<1x8xf32>
      %26 = vector.shape_cast %25 : vector<1x8xf32> to vector<1x8xf32>
      %27 = vector.broadcast %26 : vector<1x8xf32> to vector<8x8xf32>
      %c8_i32_19 = arith.constant 8 : i32
      %28 = arith.muli %arg1, %c8_i32_19 : i32
      %29 = tpu.iota {dimensions = array<i32: 0>} : vector<8x8xi32>
      %30 = vector.broadcast %28 : i32 to vector<8x8xi32>
      %31 = arith.addi %30, %29 : vector<8x8xi32>
      %c8_i32_20 = arith.constant 8 : i32
      %32 = arith.muli %arg2, %c8_i32_20 : i32
      %33 = tpu.iota {dimensions = array<i32: 1>} : vector<8x8xi32>
      %34 = vector.broadcast %32 : i32 to vector<8x8xi32>
      %35 = arith.addi %34, %33 : vector<8x8xi32>
      %36 = arith.cmpi sgt, %35, %31 : vector<8x8xi32>
      %cst_21 = arith.constant -1.000000e+09 : f32
      %37 = vector.broadcast %cst_21 : f32 to vector<8x8xf32>
      %38 = arith.select %36, %37, %27 : vector<8x8xi1>, vector<8x8xf32>
      %39 = vector.extract_strided_slice %14 {offsets = [0, 0], sizes = [8, 32], strides = [1, 1]} : vector<8x128xbf16> to vector<8x32xbf16>
      %40 = vector.extract_strided_slice %16 {offsets = [0, 0], sizes = [8, 32], strides = [1, 1]} : vector<8x128xbf16> to vector<8x32xbf16>
      %41 = vector.extract_strided_slice %18 {offsets = [0, 0], sizes = [8, 32], strides = [1, 1]} : vector<8x128xbf16> to vector<8x32xbf16>
      %cst_22 = arith.constant dense<0.000000e+00> : vector<8x8xf32>
      %42 = tpu.matmul %39, %40, %cst_22 {dimension_numbers = #tpu.dot_dimension_numbers<[1], [1], [0], [0], [0, 0, 1, 0], [], []>} : vector<8x32xbf16>, vector<8x32xbf16>, vector<8x8xf32> -> vector<8x8xf32>
      %43 = arith.addf %42, %38 : vector<8x8xf32>
      %c0_23 = arith.constant 0 : index
      %c0_24 = arith.constant 0 : index
      %c0_25 = arith.constant 0 : index
      %44 = vector.load %arg8[%c0_23, %c0_24, %c0_25] : memref<4x8x1xf32, #tpu.memory_space<vmem>>, vector<1x8x1xf32>
      %45 = vector.shape_cast %44 : vector<1x8x1xf32> to vector<8x1xf32>
      %cst_26 = arith.constant dense<0xFF800000> : vector<8xf32>
      %46 = vector.multi_reduction <maximumf>, %43, %cst_26 [1] : vector<8x8xf32> to vector<8xf32>
      %47 = vector.shape_cast %46 : vector<8xf32> to vector<8x1xf32>
      %48 = arith.maximumf %45, %47 : vector<8x1xf32>
      %49 = arith.subf %45, %48 : vector<8x1xf32>
      %50 = math.exp %49 : vector<8x1xf32>
      %51 = vector.broadcast %48 : vector<8x1xf32> to vector<8x8xf32>
      %52 = arith.subf %43, %51 : vector<8x8xf32>
      %53 = math.exp %52 : vector<8x8xf32>
      %c0_27 = arith.constant 0 : index
      %c0_28 = arith.constant 0 : index
      %c0_29 = arith.constant 0 : index
      %54 = vector.load %arg9[%c0_27, %c0_28, %c0_29] : memref<4x8x1xf32, #tpu.memory_space<vmem>>, vector<1x8x1xf32>
      %55 = vector.shape_cast %54 : vector<1x8x1xf32> to vector<8x1xf32>
      %56 = arith.mulf %50, %55 : vector<8x1xf32>
      %cst_30 = arith.constant dense<0.000000e+00> : vector<8xf32>
      %57 = vector.multi_reduction <add>, %53, %cst_30 [1] : vector<8x8xf32> to vector<8xf32>
      %58 = vector.shape_cast %57 : vector<8xf32> to vector<8x1xf32>
      %59 = arith.addf %56, %58 : vector<8x1xf32>
      %c0_31 = arith.constant 0 : index
      %c0_32 = arith.constant 0 : index
      %c0_33 = arith.constant 0 : index
      %60 = vector.load %arg9[%c0_31, %c0_32, %c0_33] : memref<4x8x1xf32, #tpu.memory_space<vmem>>, vector<1x8x1xf32>
      %61 = vector.shape_cast %60 : vector<1x8x1xf32> to vector<8x1xf32>
      %62 = vector.shape_cast %59 : vector<8x1xf32> to vector<1x8x1xf32>
      tpu.vector_store %arg9[%c0_31, %c0_32, %c0_33], %62 {strides = array<i32>} : memref<4x8x1xf32, #tpu.memory_space<vmem>>, vector<1x8x1xf32>,
      %63 = arith.truncf %53 : vector<8x8xf32> to vector<8x8xbf16>
      %cst_34 = arith.constant dense<0.000000e+00> : vector<8x32xf32>
      %64 = tpu.matmul %63, %41, %cst_34 {dimension_numbers = #tpu.dot_dimension_numbers<[1], [0], [0], [1], [0, 0, 1, 1], [], []>} : vector<8x8xbf16>, vector<8x32xbf16>, vector<8x32xf32> -> vector<8x32xf32>
      %c0_35 = arith.constant 0 : index
      %c0_36 = arith.constant 0 : index
      %c0_37 = arith.constant 0 : index
      %65 = vector.load %arg10[%c0_35, %c0_36, %c0_37] : memref<4x8x32xf32, #tpu.memory_space<vmem>>, vector<1x8x32xf32>
      %66 = vector.shape_cast %65 : vector<1x8x32xf32> to vector<8x32xf32>
      %67 = vector.broadcast %50 : vector<8x1xf32> to vector<8x32xf32>
      %68 = arith.mulf %67, %66 : vector<8x32xf32>
      %69 = arith.addf %68, %64 : vector<8x32xf32>
      %c0_38 = arith.constant 0 : index
      %c0_39 = arith.constant 0 : index
      %c0_40 = arith.constant 0 : index
      %70 = vector.load %arg10[%c0_38, %c0_39, %c0_40] : memref<4x8x32xf32, #tpu.memory_space<vmem>>, vector<1x8x32xf32>
      %71 = vector.shape_cast %70 : vector<1x8x32xf32> to vector<8x32xf32>
      %72 = vector.shape_cast %69 : vector<8x32xf32> to vector<1x8x32xf32>
      tpu.vector_store %arg10[%c0_38, %c0_39, %c0_40], %72 {strides = array<i32>} : memref<4x8x32xf32, #tpu.memory_space<vmem>>, vector<1x8x32xf32>,
      %c0_41 = arith.constant 0 : index
      %c0_42 = arith.constant 0 : index
      %c0_43 = arith.constant 0 : index
      %73 = vector.load %arg8[%c0_41, %c0_42, %c0_43] : memref<4x8x1xf32, #tpu.memory_space<vmem>>, vector<1x8x1xf32>
      %74 = vector.shape_cast %73 : vector<1x8x1xf32> to vector<8x1xf32>
      %75 = vector.shape_cast %48 : vector<8x1xf32> to vector<1x8x1xf32>
      tpu.vector_store %arg8[%c0_41, %c0_42, %c0_43], %75 {strides = array<i32>} : memref<4x8x1xf32, #tpu.memory_space<vmem>>, vector<1x8x1xf32>,
      %76 = vector.extract_strided_slice %14 {offsets = [0, 32], sizes = [8, 32], strides = [1, 1]} : vector<8x128xbf16> to vector<8x32xbf16>
      %77 = vector.extract_strided_slice %16 {offsets = [0, 32], sizes = [8, 32], strides = [1, 1]} : vector<8x128xbf16> to vector<8x32xbf16>
      %78 = vector.extract_strided_slice %18 {offsets = [0, 32], sizes = [8, 32], strides = [1, 1]} : vector<8x128xbf16> to vector<8x32xbf16>
      %cst_44 = arith.constant dense<0.000000e+00> : vector<8x8xf32>
      %79 = tpu.matmul %76, %77, %cst_44 {dimension_numbers = #tpu.dot_dimension_numbers<[1], [1], [0], [0], [0, 0, 1, 0], [], []>} : vector<8x32xbf16>, vector<8x32xbf16>, vector<8x8xf32> -> vector<8x8xf32>
      %80 = arith.addf %79, %38 : vector<8x8xf32>
      %c1 = arith.constant 1 : index
      %c0_45 = arith.constant 0 : index
      %c0_46 = arith.constant 0 : index
      %81 = vector.load %arg8[%c1, %c0_45, %c0_46] : memref<4x8x1xf32, #tpu.memory_space<vmem>>, vector<1x8x1xf32>
      %82 = vector.shape_cast %81 : vector<1x8x1xf32> to vector<8x1xf32>
      %cst_47 = arith.constant dense<0xFF800000> : vector<8xf32>
      %83 = vector.multi_reduction <maximumf>, %80, %cst_47 [1] : vector<8x8xf32> to vector<8xf32>
      %84 = vector.shape_cast %83 : vector<8xf32> to vector<8x1xf32>
      %85 = arith.maximumf %82, %84 : vector<8x1xf32>
      %86 = arith.subf %82, %85 : vector<8x1xf32>
      %87 = math.exp %86 : vector<8x1xf32>
      %88 = vector.broadcast %85 : vector<8x1xf32> to vector<8x8xf32>
      %89 = arith.subf %80, %88 : vector<8x8xf32>
      %90 = math.exp %89 : vector<8x8xf32>
      %c1_48 = arith.constant 1 : index
      %c0_49 = arith.constant 0 : index
      %c0_50 = arith.constant 0 : index
      %91 = vector.load %arg9[%c1_48, %c0_49, %c0_50] : memref<4x8x1xf32, #tpu.memory_space<vmem>>, vector<1x8x1xf32>
      %92 = vector.shape_cast %91 : vector<1x8x1xf32> to vector<8x1xf32>
      %93 = arith.mulf %87, %92 : vector<8x1xf32>
      %cst_51 = arith.constant dense<0.000000e+00> : vector<8xf32>
      %94 = vector.multi_reduction <add>, %90, %cst_51 [1] : vector<8x8xf32> to vector<8xf32>
      %95 = vector.shape_cast %94 : vector<8xf32> to vector<8x1xf32>
      %96 = arith.addf %93, %95 : vector<8x1xf32>
      %c1_52 = arith.constant 1 : index
      %c0_53 = arith.constant 0 : index
      %c0_54 = arith.constant 0 : index
      %97 = vector.load %arg9[%c1_52, %c0_53, %c0_54] : memref<4x8x1xf32, #tpu.memory_space<vmem>>, vector<1x8x1xf32>
      %98 = vector.shape_cast %97 : vector<1x8x1xf32> to vector<8x1xf32>
      %99 = vector.shape_cast %96 : vector<8x1xf32> to vector<1x8x1xf32>
      tpu.vector_store %arg9[%c1_52, %c0_53, %c0_54], %99 {strides = array<i32>} : memref<4x8x1xf32, #tpu.memory_space<vmem>>, vector<1x8x1xf32>,
      %100 = arith.truncf %90 : vector<8x8xf32> to vector<8x8xbf16>
      %cst_55 = arith.constant dense<0.000000e+00> : vector<8x32xf32>
      %101 = tpu.matmul %100, %78, %cst_55 {dimension_numbers = #tpu.dot_dimension_numbers<[1], [0], [0], [1], [0, 0, 1, 1], [], []>} : vector<8x8xbf16>, vector<8x32xbf16>, vector<8x32xf32> -> vector<8x32xf32>
      %c1_56 = arith.constant 1 : index
      %c0_57 = arith.constant 0 : index
      %c0_58 = arith.constant 0 : index
      %102 = vector.load %arg10[%c1_56, %c0_57, %c0_58] : memref<4x8x32xf32, #tpu.memory_space<vmem>>, vector<1x8x32xf32>
      %103 = vector.shape_cast %102 : vector<1x8x32xf32> to vector<8x32xf32>
      %104 = vector.broadcast %87 : vector<8x1xf32> to vector<8x32xf32>
      %105 = arith.mulf %104, %103 : vector<8x32xf32>
      %106 = arith.addf %105, %101 : vector<8x32xf32>
      %c1_59 = arith.constant 1 : index
      %c0_60 = arith.constant 0 : index
      %c0_61 = arith.constant 0 : index
      %107 = vector.load %arg10[%c1_59, %c0_60, %c0_61] : memref<4x8x32xf32, #tpu.memory_space<vmem>>, vector<1x8x32xf32>
      %108 = vector.shape_cast %107 : vector<1x8x32xf32> to vector<8x32xf32>
      %109 = vector.shape_cast %106 : vector<8x32xf32> to vector<1x8x32xf32>
      tpu.vector_store %arg10[%c1_59, %c0_60, %c0_61], %109 {strides = array<i32>} : memref<4x8x32xf32, #tpu.memory_space<vmem>>, vector<1x8x32xf32>,
      %c1_62 = arith.constant 1 : index
      %c0_63 = arith.constant 0 : index
      %c0_64 = arith.constant 0 : index
      %110 = vector.load %arg8[%c1_62, %c0_63, %c0_64] : memref<4x8x1xf32, #tpu.memory_space<vmem>>, vector<1x8x1xf32>
      %111 = vector.shape_cast %110 : vector<1x8x1xf32> to vector<8x1xf32>
      %112 = vector.shape_cast %85 : vector<8x1xf32> to vector<1x8x1xf32>
      tpu.vector_store %arg8[%c1_62, %c0_63, %c0_64], %112 {strides = array<i32>} : memref<4x8x1xf32, #tpu.memory_space<vmem>>, vector<1x8x1xf32>,
      %113 = vector.extract_strided_slice %14 {offsets = [0, 64], sizes = [8, 32], strides = [1, 1]} : vector<8x128xbf16> to vector<8x32xbf16>
      %114 = vector.extract_strided_slice %16 {offsets = [0, 64], sizes = [8, 32], strides = [1, 1]} : vector<8x128xbf16> to vector<8x32xbf16>
      %115 = vector.extract_strided_slice %18 {offsets = [0, 64], sizes = [8, 32], strides = [1, 1]} : vector<8x128xbf16> to vector<8x32xbf16>
      %cst_65 = arith.constant dense<0.000000e+00> : vector<8x8xf32>
      %116 = tpu.matmul %113, %114, %cst_65 {dimension_numbers = #tpu.dot_dimension_numbers<[1], [1], [0], [0], [0, 0, 1, 0], [], []>} : vector<8x32xbf16>, vector<8x32xbf16>, vector<8x8xf32> -> vector<8x8xf32>
      %117 = arith.addf %116, %38 : vector<8x8xf32>
      %c2 = arith.constant 2 : index
      %c0_66 = arith.constant 0 : index
      %c0_67 = arith.constant 0 : index
      %118 = vector.load %arg8[%c2, %c0_66, %c0_67] : memref<4x8x1xf32, #tpu.memory_space<vmem>>, vector<1x8x1xf32>
      %119 = vector.shape_cast %118 : vector<1x8x1xf32> to vector<8x1xf32>
      %cst_68 = arith.constant dense<0xFF800000> : vector<8xf32>
      %120 = vector.multi_reduction <maximumf>, %117, %cst_68 [1] : vector<8x8xf32> to vector<8xf32>
      %121 = vector.shape_cast %120 : vector<8xf32> to vector<8x1xf32>
      %122 = arith.maximumf %119, %121 : vector<8x1xf32>
      %123 = arith.subf %119, %122 : vector<8x1xf32>
      %124 = math.exp %123 : vector<8x1xf32>
      %125 = vector.broadcast %122 : vector<8x1xf32> to vector<8x8xf32>
      %126 = arith.subf %117, %125 : vector<8x8xf32>
      %127 = math.exp %126 : vector<8x8xf32>
      %c2_69 = arith.constant 2 : index
      %c0_70 = arith.constant 0 : index
      %c0_71 = arith.constant 0 : index
      %128 = vector.load %arg9[%c2_69, %c0_70, %c0_71] : memref<4x8x1xf32, #tpu.memory_space<vmem>>, vector<1x8x1xf32>
      %129 = vector.shape_cast %128 : vector<1x8x1xf32> to vector<8x1xf32>
      %130 = arith.mulf %124, %129 : vector<8x1xf32>
      %cst_72 = arith.constant dense<0.000000e+00> : vector<8xf32>
      %131 = vector.multi_reduction <add>, %127, %cst_72 [1] : vector<8x8xf32> to vector<8xf32>
      %132 = vector.shape_cast %131 : vector<8xf32> to vector<8x1xf32>
      %133 = arith.addf %130, %132 : vector<8x1xf32>
      %c2_73 = arith.constant 2 : index
      %c0_74 = arith.constant 0 : index
      %c0_75 = arith.constant 0 : index
      %134 = vector.load %arg9[%c2_73, %c0_74, %c0_75] : memref<4x8x1xf32, #tpu.memory_space<vmem>>, vector<1x8x1xf32>
      %135 = vector.shape_cast %134 : vector<1x8x1xf32> to vector<8x1xf32>
      %136 = vector.shape_cast %133 : vector<8x1xf32> to vector<1x8x1xf32>
      tpu.vector_store %arg9[%c2_73, %c0_74, %c0_75], %136 {strides = array<i32>} : memref<4x8x1xf32, #tpu.memory_space<vmem>>, vector<1x8x1xf32>,
      %137 = arith.truncf %127 : vector<8x8xf32> to vector<8x8xbf16>
      %cst_76 = arith.constant dense<0.000000e+00> : vector<8x32xf32>
      %138 = tpu.matmul %137, %115, %cst_76 {dimension_numbers = #tpu.dot_dimension_numbers<[1], [0], [0], [1], [0, 0, 1, 1], [], []>} : vector<8x8xbf16>, vector<8x32xbf16>, vector<8x32xf32> -> vector<8x32xf32>
      %c2_77 = arith.constant 2 : index
      %c0_78 = arith.constant 0 : index
      %c0_79 = arith.constant 0 : index
      %139 = vector.load %arg10[%c2_77, %c0_78, %c0_79] : memref<4x8x32xf32, #tpu.memory_space<vmem>>, vector<1x8x32xf32>
      %140 = vector.shape_cast %139 : vector<1x8x32xf32> to vector<8x32xf32>
      %141 = vector.broadcast %124 : vector<8x1xf32> to vector<8x32xf32>
      %142 = arith.mulf %141, %140 : vector<8x32xf32>
      %143 = arith.addf %142, %138 : vector<8x32xf32>
      %c2_80 = arith.constant 2 : index
      %c0_81 = arith.constant 0 : index
      %c0_82 = arith.constant 0 : index
      %144 = vector.load %arg10[%c2_80, %c0_81, %c0_82] : memref<4x8x32xf32, #tpu.memory_space<vmem>>, vector<1x8x32xf32>
      %145 = vector.shape_cast %144 : vector<1x8x32xf32> to vector<8x32xf32>
      %146 = vector.shape_cast %143 : vector<8x32xf32> to vector<1x8x32xf32>
      tpu.vector_store %arg10[%c2_80, %c0_81, %c0_82], %146 {strides = array<i32>} : memref<4x8x32xf32, #tpu.memory_space<vmem>>, vector<1x8x32xf32>,
      %c2_83 = arith.constant 2 : index
      %c0_84 = arith.constant 0 : index
      %c0_85 = arith.constant 0 : index
      %147 = vector.load %arg8[%c2_83, %c0_84, %c0_85] : memref<4x8x1xf32, #tpu.memory_space<vmem>>, vector<1x8x1xf32>
      %148 = vector.shape_cast %147 : vector<1x8x1xf32> to vector<8x1xf32>
      %149 = vector.shape_cast %122 : vector<8x1xf32> to vector<1x8x1xf32>
      tpu.vector_store %arg8[%c2_83, %c0_84, %c0_85], %149 {strides = array<i32>} : memref<4x8x1xf32, #tpu.memory_space<vmem>>, vector<1x8x1xf32>,
      %150 = vector.extract_strided_slice %14 {offsets = [0, 96], sizes = [8, 32], strides = [1, 1]} : vector<8x128xbf16> to vector<8x32xbf16>
      %151 = vector.extract_strided_slice %16 {offsets = [0, 96], sizes = [8, 32], strides = [1, 1]} : vector<8x128xbf16> to vector<8x32xbf16>
      %152 = vector.extract_strided_slice %18 {offsets = [0, 96], sizes = [8, 32], strides = [1, 1]} : vector<8x128xbf16> to vector<8x32xbf16>
      %cst_86 = arith.constant dense<0.000000e+00> : vector<8x8xf32>
      %153 = tpu.matmul %150, %151, %cst_86 {dimension_numbers = #tpu.dot_dimension_numbers<[1], [1], [0], [0], [0, 0, 1, 0], [], []>} : vector<8x32xbf16>, vector<8x32xbf16>, vector<8x8xf32> -> vector<8x8xf32>
      %154 = arith.addf %153, %38 : vector<8x8xf32>
      %c3 = arith.constant 3 : index
      %c0_87 = arith.constant 0 : index
      %c0_88 = arith.constant 0 : index
      %155 = vector.load %arg8[%c3, %c0_87, %c0_88] : memref<4x8x1xf32, #tpu.memory_space<vmem>>, vector<1x8x1xf32>
      %156 = vector.shape_cast %155 : vector<1x8x1xf32> to vector<8x1xf32>
      %cst_89 = arith.constant dense<0xFF800000> : vector<8xf32>
      %157 = vector.multi_reduction <maximumf>, %154, %cst_89 [1] : vector<8x8xf32> to vector<8xf32>
      %158 = vector.shape_cast %157 : vector<8xf32> to vector<8x1xf32>
      %159 = arith.maximumf %156, %158 : vector<8x1xf32>
      %160 = arith.subf %156, %159 : vector<8x1xf32>
      %161 = math.exp %160 : vector<8x1xf32>
      %162 = vector.broadcast %159 : vector<8x1xf32> to vector<8x8xf32>
      %163 = arith.subf %154, %162 : vector<8x8xf32>
      %164 = math.exp %163 : vector<8x8xf32>
      %c3_90 = arith.constant 3 : index
      %c0_91 = arith.constant 0 : index
      %c0_92 = arith.constant 0 : index
      %165 = vector.load %arg9[%c3_90, %c0_91, %c0_92] : memref<4x8x1xf32, #tpu.memory_space<vmem>>, vector<1x8x1xf32>
      %166 = vector.shape_cast %165 : vector<1x8x1xf32> to vector<8x1xf32>
      %167 = arith.mulf %161, %166 : vector<8x1xf32>
      %cst_93 = arith.constant dense<0.000000e+00> : vector<8xf32>
      %168 = vector.multi_reduction <add>, %164, %cst_93 [1] : vector<8x8xf32> to vector<8xf32>
      %169 = vector.shape_cast %168 : vector<8xf32> to vector<8x1xf32>
      %170 = arith.addf %167, %169 : vector<8x1xf32>
      %c3_94 = arith.constant 3 : index
      %c0_95 = arith.constant 0 : index
      %c0_96 = arith.constant 0 : index
      %171 = vector.load %arg9[%c3_94, %c0_95, %c0_96] : memref<4x8x1xf32, #tpu.memory_space<vmem>>, vector<1x8x1xf32>
      %172 = vector.shape_cast %171 : vector<1x8x1xf32> to vector<8x1xf32>
      %173 = vector.shape_cast %170 : vector<8x1xf32> to vector<1x8x1xf32>
      tpu.vector_store %arg9[%c3_94, %c0_95, %c0_96], %173 {strides = array<i32>} : memref<4x8x1xf32, #tpu.memory_space<vmem>>, vector<1x8x1xf32>,
      %174 = arith.truncf %164 : vector<8x8xf32> to vector<8x8xbf16>
      %cst_97 = arith.constant dense<0.000000e+00> : vector<8x32xf32>
      %175 = tpu.matmul %174, %152, %cst_97 {dimension_numbers = #tpu.dot_dimension_numbers<[1], [0], [0], [1], [0, 0, 1, 1], [], []>} : vector<8x8xbf16>, vector<8x32xbf16>, vector<8x32xf32> -> vector<8x32xf32>
      %c3_98 = arith.constant 3 : index
      %c0_99 = arith.constant 0 : index
      %c0_100 = arith.constant 0 : index
      %176 = vector.load %arg10[%c3_98, %c0_99, %c0_100] : memref<4x8x32xf32, #tpu.memory_space<vmem>>, vector<1x8x32xf32>
      %177 = vector.shape_cast %176 : vector<1x8x32xf32> to vector<8x32xf32>
      %178 = vector.broadcast %161 : vector<8x1xf32> to vector<8x32xf32>
      %179 = arith.mulf %178, %177 : vector<8x32xf32>
      %180 = arith.addf %179, %175 : vector<8x32xf32>
      %c3_101 = arith.constant 3 : index
      %c0_102 = arith.constant 0 : index
      %c0_103 = arith.constant 0 : index
      %181 = vector.load %arg10[%c3_101, %c0_102, %c0_103] : memref<4x8x32xf32, #tpu.memory_space<vmem>>, vector<1x8x32xf32>
      %182 = vector.shape_cast %181 : vector<1x8x32xf32> to vector<8x32xf32>
      %183 = vector.shape_cast %180 : vector<8x32xf32> to vector<1x8x32xf32>
      tpu.vector_store %arg10[%c3_101, %c0_102, %c0_103], %183 {strides = array<i32>} : memref<4x8x32xf32, #tpu.memory_space<vmem>>, vector<1x8x32xf32>,
      %c3_104 = arith.constant 3 : index
      %c0_105 = arith.constant 0 : index
      %c0_106 = arith.constant 0 : index
      %184 = vector.load %arg8[%c3_104, %c0_105, %c0_106] : memref<4x8x1xf32, #tpu.memory_space<vmem>>, vector<1x8x1xf32>
      %185 = vector.shape_cast %184 : vector<1x8x1xf32> to vector<8x1xf32>
      %186 = vector.shape_cast %159 : vector<8x1xf32> to vector<1x8x1xf32>
      tpu.vector_store %arg8[%c3_104, %c0_105, %c0_106], %186 {strides = array<i32>} : memref<4x8x1xf32, #tpu.memory_space<vmem>>, vector<1x8x1xf32>,
    } else {
    }
    %c0_i32_4 = arith.constant 0 : i32
    %10 = arith.cmpi eq, %arg2, %c0_i32_4 : i32
    %11 = arith.extui %10 : i1 to i32
    %c0_i32_5 = arith.constant 0 : i32
    %12 = arith.cmpi ne, %11, %c0_i32_5 : i32
    scf.if %12 {
      %c0 = arith.constant 0 : index
      %c0_6 = arith.constant 0 : index
      %c0_7 = arith.constant 0 : index
      %13 = vector.load %arg9[%c0, %c0_6, %c0_7] : memref<4x8x1xf32, #tpu.memory_space<vmem>>, vector<1x8x1xf32>
      %14 = vector.shape_cast %13 : vector<1x8x1xf32> to vector<8x1xf32>
      %15 = tpu.reciprocal %14 {approx = true} : vector<8x1xf32> -> vector<8x1xf32>
      %c0_8 = arith.constant 0 : index
      %c0_9 = arith.constant 0 : index
      %c0_10 = arith.constant 0 : index
      %16 = vector.load %arg10[%c0_8, %c0_9, %c0_10] : memref<4x8x32xf32, #tpu.memory_space<vmem>>, vector<1x8x32xf32>
      %17 = vector.shape_cast %16 : vector<1x8x32xf32> to vector<8x32xf32>
      %18 = vector.broadcast %15 : vector<8x1xf32> to vector<8x32xf32>
      %19 = arith.mulf %17, %18 : vector<8x32xf32>
      %20 = arith.truncf %19 : vector<8x32xf32> to vector<8x32xbf16>
      %c0_11 = arith.constant 0 : index
      %c0_12 = arith.constant 0 : index
      %c0_13 = arith.constant 0 : index
      %21 = vector.load %arg7[%c0_11, %c0_12, %c0_13] : memref<1x8x128xbf16, #tpu.memory_space<vmem>>, vector<1x8x32xbf16>
      %22 = vector.shape_cast %21 : vector<1x8x32xbf16> to vector<8x32xbf16>
      %23 = vector.shape_cast %20 : vector<8x32xbf16> to vector<1x8x32xbf16>
      tpu.vector_store %arg7[%c0_11, %c0_12, %c0_13], %23 {strides = array<i32>} : memref<1x8x128xbf16, #tpu.memory_space<vmem>>, vector<1x8x32xbf16>,
      %c1 = arith.constant 1 : index
      %c0_14 = arith.constant 0 : index
      %c0_15 = arith.constant 0 : index
      %24 = vector.load %arg9[%c1, %c0_14, %c0_15] : memref<4x8x1xf32, #tpu.memory_space<vmem>>, vector<1x8x1xf32>
      %25 = vector.shape_cast %24 : vector<1x8x1xf32> to vector<8x1xf32>
      %26 = tpu.reciprocal %25 {approx = true} : vector<8x1xf32> -> vector<8x1xf32>
      %c1_16 = arith.constant 1 : index
      %c0_17 = arith.constant 0 : index
      %c0_18 = arith.constant 0 : index
      %27 = vector.load %arg10[%c1_16, %c0_17, %c0_18] : memref<4x8x32xf32, #tpu.memory_space<vmem>>, vector<1x8x32xf32>
      %28 = vector.shape_cast %27 : vector<1x8x32xf32> to vector<8x32xf32>
      %29 = vector.broadcast %26 : vector<8x1xf32> to vector<8x32xf32>
      %30 = arith.mulf %28, %29 : vector<8x32xf32>
      %31 = arith.truncf %30 : vector<8x32xf32> to vector<8x32xbf16>
      %c0_19 = arith.constant 0 : index
      %c0_20 = arith.constant 0 : index
      %c32 = arith.constant 32 : index
      %32 = vector.load %arg7[%c0_19, %c0_20, %c32] : memref<1x8x128xbf16, #tpu.memory_space<vmem>>, vector<1x8x32xbf16>
      %33 = vector.shape_cast %32 : vector<1x8x32xbf16> to vector<8x32xbf16>
      %34 = vector.shape_cast %31 : vector<8x32xbf16> to vector<1x8x32xbf16>
      tpu.vector_store %arg7[%c0_19, %c0_20, %c32], %34 {strides = array<i32>} : memref<1x8x128xbf16, #tpu.memory_space<vmem>>, vector<1x8x32xbf16>,
      %c2 = arith.constant 2 : index
      %c0_21 = arith.constant 0 : index
      %c0_22 = arith.constant 0 : index
      %35 = vector.load %arg9[%c2, %c0_21, %c0_22] : memref<4x8x1xf32, #tpu.memory_space<vmem>>, vector<1x8x1xf32>
      %36 = vector.shape_cast %35 : vector<1x8x1xf32> to vector<8x1xf32>
      %37 = tpu.reciprocal %36 {approx = true} : vector<8x1xf32> -> vector<8x1xf32>
      %c2_23 = arith.constant 2 : index
      %c0_24 = arith.constant 0 : index
      %c0_25 = arith.constant 0 : index
      %38 = vector.load %arg10[%c2_23, %c0_24, %c0_25] : memref<4x8x32xf32, #tpu.memory_space<vmem>>, vector<1x8x32xf32>
      %39 = vector.shape_cast %38 : vector<1x8x32xf32> to vector<8x32xf32>
      %40 = vector.broadcast %37 : vector<8x1xf32> to vector<8x32xf32>
      %41 = arith.mulf %39, %40 : vector<8x32xf32>
      %42 = arith.truncf %41 : vector<8x32xf32> to vector<8x32xbf16>
      %c0_26 = arith.constant 0 : index
      %c0_27 = arith.constant 0 : index
      %c64 = arith.constant 64 : index
      %43 = vector.load %arg7[%c0_26, %c0_27, %c64] : memref<1x8x128xbf16, #tpu.memory_space<vmem>>, vector<1x8x32xbf16>
      %44 = vector.shape_cast %43 : vector<1x8x32xbf16> to vector<8x32xbf16>
      %45 = vector.shape_cast %42 : vector<8x32xbf16> to vector<1x8x32xbf16>
      tpu.vector_store %arg7[%c0_26, %c0_27, %c64], %45 {strides = array<i32>} : memref<1x8x128xbf16, #tpu.memory_space<vmem>>, vector<1x8x32xbf16>,
      %c3 = arith.constant 3 : index
      %c0_28 = arith.constant 0 : index
      %c0_29 = arith.constant 0 : index
      %46 = vector.load %arg9[%c3, %c0_28, %c0_29] : memref<4x8x1xf32, #tpu.memory_space<vmem>>, vector<1x8x1xf32>
      %47 = vector.shape_cast %46 : vector<1x8x1xf32> to vector<8x1xf32>
      %48 = tpu.reciprocal %47 {approx = true} : vector<8x1xf32> -> vector<8x1xf32>
      %c3_30 = arith.constant 3 : index
      %c0_31 = arith.constant 0 : index
      %c0_32 = arith.constant 0 : index
      %49 = vector.load %arg10[%c3_30, %c0_31, %c0_32] : memref<4x8x32xf32, #tpu.memory_space<vmem>>, vector<1x8x32xf32>
      %50 = vector.shape_cast %49 : vector<1x8x32xf32> to vector<8x32xf32>
      %51 = vector.broadcast %48 : vector<8x1xf32> to vector<8x32xf32>
      %52 = arith.mulf %50, %51 : vector<8x32xf32>
      %53 = arith.truncf %52 : vector<8x32xf32> to vector<8x32xbf16>
      %c0_33 = arith.constant 0 : index
      %c0_34 = arith.constant 0 : index
      %c96 = arith.constant 96 : index
      %54 = vector.load %arg7[%c0_33, %c0_34, %c96] : memref<1x8x128xbf16, #tpu.memory_space<vmem>>, vector<1x8x32xbf16>
      %55 = vector.shape_cast %54 : vector<1x8x32xbf16> to vector<8x32xbf16>
      %56 = vector.shape_cast %53 : vector<8x32xbf16> to vector<1x8x32xbf16>
      tpu.vector_store %arg7[%c0_33, %c0_34, %c96], %56 {strides = array<i32>} : memref<1x8x128xbf16, #tpu.memory_space<vmem>>, vector<1x8x32xbf16>,
    } else {
    }
    return
  }
  func.func @transform_0(%arg0: i32, %arg1: i32, %arg2: i32) -> (i32, i32, i32) {
    %c0_i32 = arith.constant 0 : i32
    %c0_i32_0 = arith.constant 0 : i32
    return %arg0, %arg1, %c0_i32 : i32, i32, i32
  }
  func.func @transform_1(%arg0: i32, %arg1: i32, %arg2: i32) -> (i32, i32, i32) {
    %c1_i32 = arith.constant 1 : i32
    %c0_i32 = arith.constant 0 : i32
    return %arg0, %arg2, %c1_i32 : i32, i32, i32
  }
  func.func @transform_2(%arg0: i32, %arg1: i32, %arg2: i32) -> (i32, i32, i32) {
    %c2_i32 = arith.constant 2 : i32
    %c0_i32 = arith.constant 0 : i32
    return %arg0, %arg2, %c2_i32 : i32, i32, i32
  }
  func.func @transform_3(%arg0: i32, %arg1: i32, %arg2: i32) -> (i32, i32, i32) {
    %c0_i32 = arith.constant 0 : i32
    %c0_i32_0 = arith.constant 0 : i32
    return %arg0, %c0_i32, %arg2 : i32, i32, i32
  }
  func.func @transform_4(%arg0: i32, %arg1: i32, %arg2: i32) -> (i32, i32, i32) {
    %c0_i32 = arith.constant 0 : i32
    %c0_i32_0 = arith.constant 0 : i32
    return %arg0, %arg1, %c0_i32 : i32, i32, i32
  }
}

module attributes {stable_mosaic.version = 11 : i64} {
  func.func @_linear_add_ln_kernel(%arg0: i32, %arg1: i32, %arg2: memref<16x128xbf16, #tpu.memory_space<vmem>>, %arg3: memref<128x128xbf16, #tpu.memory_space<vmem>>, %arg4: memref<1x128xf32, #tpu.memory_space<vmem>>, %arg5: memref<16x128xbf16, #tpu.memory_space<vmem>>, %arg6: memref<1x128xf32, #tpu.memory_space<vmem>>, %arg7: memref<1x128xf32, #tpu.memory_space<vmem>>, %arg8: memref<16x128xbf16, #tpu.memory_space<vmem>>, %arg9: memref<16x128xf32, #tpu.memory_space<vmem>>) attributes {dimension_semantics = [#tpu.dimension_semantics<parallel>, #tpu.dimension_semantics<arbitrary>], iteration_bounds = array<i64: 1, 1>, scalar_prefetch = 0 : i64, scratch_operands = 1 : i64, tpu.core_type = #tpu.core_type<tc>, window_params = [{transform_indices = @transform_0, window_bounds = array<i64: 16, 128>}, {transform_indices = @transform_1, window_bounds = array<i64: 128, 128>}, {pipeline_mode = #tpu.pipeline_mode<synchronous>, transform_indices = @transform_2, window_bounds = array<i64: 1, 128>}, {transform_indices = @transform_3, window_bounds = array<i64: 16, 128>}, {pipeline_mode = #tpu.pipeline_mode<synchronous>, transform_indices = @transform_4, window_bounds = array<i64: 1, 128>}, {pipeline_mode = #tpu.pipeline_mode<synchronous>, transform_indices = @transform_5, window_bounds = array<i64: 1, 128>}, {transform_indices = @transform_6, window_bounds = array<i64: 16, 128>}]} {
    %c0_i32 = arith.constant 0 : i32
    %0 = arith.cmpi eq, %arg1, %c0_i32 : i32
    %1 = arith.extui %0 : i1 to i32
    %c0_i32_0 = arith.constant 0 : i32
    %2 = arith.cmpi ne, %1, %c0_i32_0 : i32
    scf.if %2 {
      %cst_10 = arith.constant 0.000000e+00 : f32
      %12 = vector.broadcast %cst_10 : f32 to vector<16x128xf32>
      %c0_11 = arith.constant 0 : index
      %c0_12 = arith.constant 0 : index
      %13 = vector.load %arg9[%c0_11, %c0_12] : memref<16x128xf32, #tpu.memory_space<vmem>>, vector<16x128xf32>
      tpu.vector_store %arg9[%c0_11, %c0_12], %12 {strides = array<i32>} : memref<16x128xf32, #tpu.memory_space<vmem>>, vector<16x128xf32>,
    } else {
    }
    %c0 = arith.constant 0 : index
    %c0_1 = arith.constant 0 : index
    %3 = vector.load %arg9[%c0, %c0_1] : memref<16x128xf32, #tpu.memory_space<vmem>>, vector<16x128xf32>
    %c0_2 = arith.constant 0 : index
    %c0_3 = arith.constant 0 : index
    %4 = vector.load %arg2[%c0_2, %c0_3] : memref<16x128xbf16, #tpu.memory_space<vmem>>, vector<16x128xbf16>
    %c0_4 = arith.constant 0 : index
    %c0_5 = arith.constant 0 : index
    %5 = vector.load %arg3[%c0_4, %c0_5] : memref<128x128xbf16, #tpu.memory_space<vmem>>, vector<128x128xbf16>
    %cst = arith.constant dense<0.000000e+00> : vector<16x128xf32>
    %6 = tpu.matmul %4, %5, %cst {dimension_numbers = #tpu.dot_dimension_numbers<[1], [0], [0], [1], [0, 0, 1, 1], [], []>} : vector<16x128xbf16>, vector<128x128xbf16>, vector<16x128xf32> -> vector<16x128xf32>
    %7 = arith.addf %3, %6 : vector<16x128xf32>
    %c0_6 = arith.constant 0 : index
    %c0_7 = arith.constant 0 : index
    %8 = vector.load %arg9[%c0_6, %c0_7] : memref<16x128xf32, #tpu.memory_space<vmem>>, vector<16x128xf32>
    tpu.vector_store %arg9[%c0_6, %c0_7], %7 {strides = array<i32>} : memref<16x128xf32, #tpu.memory_space<vmem>>, vector<16x128xf32>,
    %c0_i32_8 = arith.constant 0 : i32
    %9 = arith.cmpi eq, %arg1, %c0_i32_8 : i32
    %10 = arith.extui %9 : i1 to i32
    %c0_i32_9 = arith.constant 0 : i32
    %11 = arith.cmpi ne, %10, %c0_i32_9 : i32
    scf.if %11 {
      %c0_10 = arith.constant 0 : index
      %c0_11 = arith.constant 0 : index
      %12 = vector.load %arg9[%c0_10, %c0_11] : memref<16x128xf32, #tpu.memory_space<vmem>>, vector<16x128xf32>
      %c0_12 = arith.constant 0 : index
      %c0_13 = arith.constant 0 : index
      %13 = vector.load %arg4[%c0_12, %c0_13] : memref<1x128xf32, #tpu.memory_space<vmem>>, vector<1x128xf32>
      %14 = vector.broadcast %13 : vector<1x128xf32> to vector<16x128xf32>
      %15 = arith.addf %12, %14 : vector<16x128xf32>
      %c0_14 = arith.constant 0 : index
      %c0_15 = arith.constant 0 : index
      %16 = vector.load %arg5[%c0_14, %c0_15] : memref<16x128xbf16, #tpu.memory_space<vmem>>, vector<16x128xbf16>
      %17 = arith.extf %16 : vector<16x128xbf16> to vector<16x128xf32>
      %18 = arith.addf %15, %17 : vector<16x128xf32>
      %cst_16 = arith.constant dense<0.000000e+00> : vector<16xf32>
      %19 = vector.multi_reduction <add>, %18, %cst_16 [1] : vector<16x128xf32> to vector<16xf32>
      %20 = vector.shape_cast %19 : vector<16xf32> to vector<16x1xf32>
      %cst_17 = arith.constant 1.280000e+02 : f32
      %21 = vector.broadcast %cst_17 : f32 to vector<16x1xf32>
      %22 = arith.divf %20, %21 : vector<16x1xf32>
      %23 = vector.broadcast %22 : vector<16x1xf32> to vector<16x128xf32>
      %24 = arith.subf %18, %23 : vector<16x128xf32>
      %25 = arith.mulf %24, %24 : vector<16x128xf32>
      %cst_18 = arith.constant dense<0.000000e+00> : vector<16xf32>
      %26 = vector.multi_reduction <add>, %25, %cst_18 [1] : vector<16x128xf32> to vector<16xf32>
      %27 = vector.shape_cast %26 : vector<16xf32> to vector<16x1xf32>
      %cst_19 = arith.constant 1.280000e+02 : f32
      %28 = vector.broadcast %cst_19 : f32 to vector<16x1xf32>
      %29 = arith.divf %27, %28 : vector<16x1xf32>
      %30 = vector.broadcast %22 : vector<16x1xf32> to vector<16x128xf32>
      %31 = arith.subf %18, %30 : vector<16x128xf32>
      %cst_20 = arith.constant 9.99999974E-6 : f32
      %32 = vector.broadcast %cst_20 : f32 to vector<16x1xf32>
      %33 = arith.addf %29, %32 : vector<16x1xf32>
      %34 = math.rsqrt %33 : vector<16x1xf32>
      %35 = vector.broadcast %34 : vector<16x1xf32> to vector<16x128xf32>
      %36 = arith.mulf %31, %35 : vector<16x128xf32>
      %c0_21 = arith.constant 0 : index
      %c0_22 = arith.constant 0 : index
      %37 = vector.load %arg6[%c0_21, %c0_22] : memref<1x128xf32, #tpu.memory_space<vmem>>, vector<1x128xf32>
      %38 = vector.broadcast %37 : vector<1x128xf32> to vector<16x128xf32>
      %39 = arith.mulf %36, %38 : vector<16x128xf32>
      %c0_23 = arith.constant 0 : index
      %c0_24 = arith.constant 0 : index
      %40 = vector.load %arg7[%c0_23, %c0_24] : memref<1x128xf32, #tpu.memory_space<vmem>>, vector<1x128xf32>
      %41 = vector.broadcast %40 : vector<1x128xf32> to vector<16x128xf32>
      %42 = arith.addf %39, %41 : vector<16x128xf32>
      %43 = arith.truncf %42 : vector<16x128xf32> to vector<16x128xbf16>
      %c0_25 = arith.constant 0 : index
      %c0_26 = arith.constant 0 : index
      %44 = vector.load %arg8[%c0_25, %c0_26] : memref<16x128xbf16, #tpu.memory_space<vmem>>, vector<16x128xbf16>
      tpu.vector_store %arg8[%c0_25, %c0_26], %43 {strides = array<i32>} : memref<16x128xbf16, #tpu.memory_space<vmem>>, vector<16x128xbf16>,
    } else {
    }
    return
  }
  func.func @transform_0(%arg0: i32, %arg1: i32) -> (i32, i32) {
    %c0_i32 = arith.constant 0 : i32
    return %arg0, %arg1 : i32, i32
  }
  func.func @transform_1(%arg0: i32, %arg1: i32) -> (i32, i32) {
    %c0_i32 = arith.constant 0 : i32
    %c0_i32_0 = arith.constant 0 : i32
    return %arg1, %c0_i32 : i32, i32
  }
  func.func @transform_2(%arg0: i32, %arg1: i32) -> (i32, i32) {
    %c0_i32 = arith.constant 0 : i32
    %c0_i32_0 = arith.constant 0 : i32
    %c0_i32_1 = arith.constant 0 : i32
    return %c0_i32, %c0_i32_0 : i32, i32
  }
  func.func @transform_3(%arg0: i32, %arg1: i32) -> (i32, i32) {
    %c0_i32 = arith.constant 0 : i32
    %c0_i32_0 = arith.constant 0 : i32
    return %arg0, %c0_i32 : i32, i32
  }
  func.func @transform_4(%arg0: i32, %arg1: i32) -> (i32, i32) {
    %c0_i32 = arith.constant 0 : i32
    %c0_i32_0 = arith.constant 0 : i32
    %c0_i32_1 = arith.constant 0 : i32
    return %c0_i32, %c0_i32_0 : i32, i32
  }
  func.func @transform_5(%arg0: i32, %arg1: i32) -> (i32, i32) {
    %c0_i32 = arith.constant 0 : i32
    %c0_i32_0 = arith.constant 0 : i32
    %c0_i32_1 = arith.constant 0 : i32
    return %c0_i32, %c0_i32_0 : i32, i32
  }
  func.func @transform_6(%arg0: i32, %arg1: i32) -> (i32, i32) {
    %c0_i32 = arith.constant 0 : i32
    %c0_i32_0 = arith.constant 0 : i32
    return %arg0, %c0_i32 : i32, i32
  }
}

module attributes {stable_mosaic.version = 11 : i64} {
  func.func @_linear_kernel(%arg0: i32, %arg1: i32, %arg2: i32, %arg3: memref<16x128xbf16, #tpu.memory_space<vmem>>, %arg4: memref<128x128xbf16, #tpu.memory_space<vmem>>, %arg5: memref<1x128xf32, #tpu.memory_space<vmem>>, %arg6: memref<16x128xbf16, #tpu.memory_space<vmem>>, %arg7: memref<16x128xf32, #tpu.memory_space<vmem>>) attributes {dimension_semantics = [#tpu.dimension_semantics<parallel>, #tpu.dimension_semantics<parallel>, #tpu.dimension_semantics<arbitrary>], iteration_bounds = array<i64: 1, 1, 1>, scalar_prefetch = 0 : i64, scratch_operands = 1 : i64, tpu.core_type = #tpu.core_type<tc>, window_params = [{transform_indices = @transform_0, window_bounds = array<i64: 16, 128>}, {transform_indices = @transform_1, window_bounds = array<i64: 128, 128>}, {transform_indices = @transform_2, window_bounds = array<i64: 1, 128>}, {transform_indices = @transform_3, window_bounds = array<i64: 16, 128>}]} {
    %c0_i32 = arith.constant 0 : i32
    %0 = arith.cmpi eq, %arg2, %c0_i32 : i32
    %1 = arith.extui %0 : i1 to i32
    %c0_i32_0 = arith.constant 0 : i32
    %2 = arith.cmpi ne, %1, %c0_i32_0 : i32
    scf.if %2 {
      %cst_10 = arith.constant 0.000000e+00 : f32
      %12 = vector.broadcast %cst_10 : f32 to vector<16x128xf32>
      %c0_11 = arith.constant 0 : index
      %c0_12 = arith.constant 0 : index
      %13 = vector.load %arg7[%c0_11, %c0_12] : memref<16x128xf32, #tpu.memory_space<vmem>>, vector<16x128xf32>
      tpu.vector_store %arg7[%c0_11, %c0_12], %12 {strides = array<i32>} : memref<16x128xf32, #tpu.memory_space<vmem>>, vector<16x128xf32>,
    } else {
    }
    %c0 = arith.constant 0 : index
    %c0_1 = arith.constant 0 : index
    %3 = vector.load %arg7[%c0, %c0_1] : memref<16x128xf32, #tpu.memory_space<vmem>>, vector<16x128xf32>
    %c0_2 = arith.constant 0 : index
    %c0_3 = arith.constant 0 : index
    %4 = vector.load %arg3[%c0_2, %c0_3] : memref<16x128xbf16, #tpu.memory_space<vmem>>, vector<16x128xbf16>
    %c0_4 = arith.constant 0 : index
    %c0_5 = arith.constant 0 : index
    %5 = vector.load %arg4[%c0_4, %c0_5] : memref<128x128xbf16, #tpu.memory_space<vmem>>, vector<128x128xbf16>
    %cst = arith.constant dense<0.000000e+00> : vector<16x128xf32>
    %6 = tpu.matmul %4, %5, %cst {dimension_numbers = #tpu.dot_dimension_numbers<[1], [0], [0], [1], [0, 0, 1, 1], [], []>} : vector<16x128xbf16>, vector<128x128xbf16>, vector<16x128xf32> -> vector<16x128xf32>
    %7 = arith.addf %3, %6 : vector<16x128xf32>
    %c0_6 = arith.constant 0 : index
    %c0_7 = arith.constant 0 : index
    %8 = vector.load %arg7[%c0_6, %c0_7] : memref<16x128xf32, #tpu.memory_space<vmem>>, vector<16x128xf32>
    tpu.vector_store %arg7[%c0_6, %c0_7], %7 {strides = array<i32>} : memref<16x128xf32, #tpu.memory_space<vmem>>, vector<16x128xf32>,
    %c0_i32_8 = arith.constant 0 : i32
    %9 = arith.cmpi eq, %arg2, %c0_i32_8 : i32
    %10 = arith.extui %9 : i1 to i32
    %c0_i32_9 = arith.constant 0 : i32
    %11 = arith.cmpi ne, %10, %c0_i32_9 : i32
    scf.if %11 {
      %c0_10 = arith.constant 0 : index
      %c0_11 = arith.constant 0 : index
      %12 = vector.load %arg7[%c0_10, %c0_11] : memref<16x128xf32, #tpu.memory_space<vmem>>, vector<16x128xf32>
      %c0_12 = arith.constant 0 : index
      %c0_13 = arith.constant 0 : index
      %13 = vector.load %arg5[%c0_12, %c0_13] : memref<1x128xf32, #tpu.memory_space<vmem>>, vector<1x128xf32>
      %14 = vector.broadcast %13 : vector<1x128xf32> to vector<16x128xf32>
      %15 = arith.addf %12, %14 : vector<16x128xf32>
      %16 = arith.truncf %15 : vector<16x128xf32> to vector<16x128xbf16>
      %c0_14 = arith.constant 0 : index
      %c0_15 = arith.constant 0 : index
      %17 = vector.load %arg6[%c0_14, %c0_15] : memref<16x128xbf16, #tpu.memory_space<vmem>>, vector<16x128xbf16>
      tpu.vector_store %arg6[%c0_14, %c0_15], %16 {strides = array<i32>} : memref<16x128xbf16, #tpu.memory_space<vmem>>, vector<16x128xbf16>,
    } else {
    }
    return
  }
  func.func @transform_0(%arg0: i32, %arg1: i32, %arg2: i32) -> (i32, i32) {
    %c0_i32 = arith.constant 0 : i32
    return %arg0, %arg2 : i32, i32
  }
  func.func @transform_1(%arg0: i32, %arg1: i32, %arg2: i32) -> (i32, i32) {
    %c0_i32 = arith.constant 0 : i32
    return %arg2, %arg1 : i32, i32
  }
  func.func @transform_2(%arg0: i32, %arg1: i32, %arg2: i32) -> (i32, i32) {
    %c0_i32 = arith.constant 0 : i32
    %c0_i32_0 = arith.constant 0 : i32
    return %c0_i32, %arg1 : i32, i32
  }
  func.func @transform_3(%arg0: i32, %arg1: i32, %arg2: i32) -> (i32, i32) {
    %c0_i32 = arith.constant 0 : i32
    return %arg0, %arg1 : i32, i32
  }
}

module attributes {stable_mosaic.version = 11 : i64} {
  func.func @_flash_attn_kernel(%arg0: i32, %arg1: i32, %arg2: i32, %arg3: memref<1x8x128xbf16, #tpu.memory_space<vmem>>, %arg4: memref<1x8x128xbf16, #tpu.memory_space<vmem>>, %arg5: memref<1x8x128xbf16, #tpu.memory_space<vmem>>, %arg6: memref<1x1x8xf32, #tpu.memory_space<vmem>>, %arg7: memref<1x8x128xbf16, #tpu.memory_space<vmem>>, %arg8: memref<4x8x1xf32, #tpu.memory_space<vmem>>, %arg9: memref<4x8x1xf32, #tpu.memory_space<vmem>>, %arg10: memref<4x8x32xf32, #tpu.memory_space<vmem>>) attributes {dimension_semantics = [#tpu.dimension_semantics<parallel>, #tpu.dimension_semantics<parallel>, #tpu.dimension_semantics<arbitrary>], iteration_bounds = array<i64: 2, 1, 1>, scalar_prefetch = 0 : i64, scratch_operands = 3 : i64, tpu.core_type = #tpu.core_type<tc>, window_params = [{transform_indices = @transform_0, window_bounds = array<i64: 1, 8, 128>}, {transform_indices = @transform_1, window_bounds = array<i64: 1, 8, 128>}, {transform_indices = @transform_2, window_bounds = array<i64: 1, 8, 128>}, {transform_indices = @transform_3, window_bounds = array<i64: 1, 1, 8>}, {transform_indices = @transform_4, window_bounds = array<i64: 1, 8, 128>}]} {
    %c0_i32 = arith.constant 0 : i32
    %0 = arith.cmpi eq, %arg2, %c0_i32 : i32
    %1 = arith.extui %0 : i1 to i32
    %c0_i32_0 = arith.constant 0 : i32
    %2 = arith.cmpi ne, %1, %c0_i32_0 : i32
    scf.if %2 {
      %cst_101 = arith.constant 0xFF800000 : f32
      %169 = vector.broadcast %cst_101 : f32 to vector<4x8x1xf32>
      %c0_102 = arith.constant 0 : index
      %c0_103 = arith.constant 0 : index
      %c0_104 = arith.constant 0 : index
      %170 = vector.load %arg8[%c0_102, %c0_103, %c0_104] : memref<4x8x1xf32, #tpu.memory_space<vmem>>, vector<4x8x1xf32>
      tpu.vector_store %arg8[%c0_102, %c0_103, %c0_104], %169 {strides = array<i32>} : memref<4x8x1xf32, #tpu.memory_space<vmem>>, vector<4x8x1xf32>,
      %cst_105 = arith.constant 0.000000e+00 : f32
      %171 = vector.broadcast %cst_105 : f32 to vector<4x8x1xf32>
      %c0_106 = arith.constant 0 : index
      %c0_107 = arith.constant 0 : index
      %c0_108 = arith.constant 0 : index
      %172 = vector.load %arg9[%c0_106, %c0_107, %c0_108] : memref<4x8x1xf32, #tpu.memory_space<vmem>>, vector<4x8x1xf32>
      tpu.vector_store %arg9[%c0_106, %c0_107, %c0_108], %171 {strides = array<i32>} : memref<4x8x1xf32, #tpu.memory_space<vmem>>, vector<4x8x1xf32>,
      %cst_109 = arith.constant 0.000000e+00 : f32
      %173 = vector.broadcast %cst_109 : f32 to vector<4x8x32xf32>
      %c0_110 = arith.constant 0 : index
      %c0_111 = arith.constant 0 : index
      %c0_112 = arith.constant 0 : index
      %174 = vector.load %arg10[%c0_110, %c0_111, %c0_112] : memref<4x8x32xf32, #tpu.memory_space<vmem>>, vector<4x8x32xf32>
      tpu.vector_store %arg10[%c0_110, %c0_111, %c0_112], %173 {strides = array<i32>} : memref<4x8x32xf32, #tpu.memory_space<vmem>>, vector<4x8x32xf32>,
    } else {
    }
    %c0 = arith.constant 0 : index
    %c0_1 = arith.constant 0 : index
    %c0_2 = arith.constant 0 : index
    %3 = vector.load %arg3[%c0, %c0_1, %c0_2] : memref<1x8x128xbf16, #tpu.memory_space<vmem>>, vector<1x8x128xbf16>
    %4 = vector.shape_cast %3 : vector<1x8x128xbf16> to vector<8x128xbf16>
    %c0_3 = arith.constant 0 : index
    %c0_4 = arith.constant 0 : index
    %c0_5 = arith.constant 0 : index
    %5 = vector.load %arg4[%c0_3, %c0_4, %c0_5] : memref<1x8x128xbf16, #tpu.memory_space<vmem>>, vector<1x8x128xbf16>
    %6 = vector.shape_cast %5 : vector<1x8x128xbf16> to vector<8x128xbf16>
    %c0_6 = arith.constant 0 : index
    %c0_7 = arith.constant 0 : index
    %c0_8 = arith.constant 0 : index
    %7 = vector.load %arg5[%c0_6, %c0_7, %c0_8] : memref<1x8x128xbf16, #tpu.memory_space<vmem>>, vector<1x8x128xbf16>
    %8 = vector.shape_cast %7 : vector<1x8x128xbf16> to vector<8x128xbf16>
    %c0_9 = arith.constant 0 : index
    %c0_10 = arith.constant 0 : index
    %c0_11 = arith.constant 0 : index
    %9 = vector.load %arg6[%c0_9, %c0_10, %c0_11] : memref<1x1x8xf32, #tpu.memory_space<vmem>>, vector<1x1x8xf32>
    %10 = vector.shape_cast %9 : vector<1x1x8xf32> to vector<1x8xf32>
    %cst = arith.constant 5.000000e-01 : f32
    %11 = vector.broadcast %cst : f32 to vector<1x8xf32>
    %12 = arith.cmpf ogt, %10, %11 : vector<1x8xf32>
    %cst_12 = arith.constant -1.000000e+09 : f32
    %cst_13 = arith.constant 0.000000e+00 : f32
    %13 = vector.broadcast %cst_12 : f32 to vector<1x8xf32>
    %14 = vector.broadcast %cst_13 : f32 to vector<1x8xf32>
    %15 = arith.select %12, %13, %14 : vector<1x8xi1>, vector<1x8xf32>
    %16 = vector.shape_cast %15 : vector<1x8xf32> to vector<1x8xf32>
    %17 = vector.broadcast %16 : vector<1x8xf32> to vector<8x8xf32>
    %18 = vector.extract_strided_slice %4 {offsets = [0, 0], sizes = [8, 32], strides = [1, 1]} : vector<8x128xbf16> to vector<8x32xbf16>
    %19 = vector.extract_strided_slice %6 {offsets = [0, 0], sizes = [8, 32], strides = [1, 1]} : vector<8x128xbf16> to vector<8x32xbf16>
    %20 = vector.extract_strided_slice %8 {offsets = [0, 0], sizes = [8, 32], strides = [1, 1]} : vector<8x128xbf16> to vector<8x32xbf16>
    %cst_14 = arith.constant dense<0.000000e+00> : vector<8x8xf32>
    %21 = tpu.matmul %18, %19, %cst_14 {dimension_numbers = #tpu.dot_dimension_numbers<[1], [1], [0], [0], [0, 0, 1, 0], [], []>} : vector<8x32xbf16>, vector<8x32xbf16>, vector<8x8xf32> -> vector<8x8xf32>
    %22 = arith.addf %21, %17 : vector<8x8xf32>
    %c0_15 = arith.constant 0 : index
    %c0_16 = arith.constant 0 : index
    %c0_17 = arith.constant 0 : index
    %23 = vector.load %arg8[%c0_15, %c0_16, %c0_17] : memref<4x8x1xf32, #tpu.memory_space<vmem>>, vector<1x8x1xf32>
    %24 = vector.shape_cast %23 : vector<1x8x1xf32> to vector<8x1xf32>
    %cst_18 = arith.constant dense<0xFF800000> : vector<8xf32>
    %25 = vector.multi_reduction <maximumf>, %22, %cst_18 [1] : vector<8x8xf32> to vector<8xf32>
    %26 = vector.shape_cast %25 : vector<8xf32> to vector<8x1xf32>
    %27 = arith.maximumf %24, %26 : vector<8x1xf32>
    %28 = arith.subf %24, %27 : vector<8x1xf32>
    %29 = math.exp %28 : vector<8x1xf32>
    %30 = vector.broadcast %27 : vector<8x1xf32> to vector<8x8xf32>
    %31 = arith.subf %22, %30 : vector<8x8xf32>
    %32 = math.exp %31 : vector<8x8xf32>
    %c0_19 = arith.constant 0 : index
    %c0_20 = arith.constant 0 : index
    %c0_21 = arith.constant 0 : index
    %33 = vector.load %arg9[%c0_19, %c0_20, %c0_21] : memref<4x8x1xf32, #tpu.memory_space<vmem>>, vector<1x8x1xf32>
    %34 = vector.shape_cast %33 : vector<1x8x1xf32> to vector<8x1xf32>
    %35 = arith.mulf %29, %34 : vector<8x1xf32>
    %cst_22 = arith.constant dense<0.000000e+00> : vector<8xf32>
    %36 = vector.multi_reduction <add>, %32, %cst_22 [1] : vector<8x8xf32> to vector<8xf32>
    %37 = vector.shape_cast %36 : vector<8xf32> to vector<8x1xf32>
    %38 = arith.addf %35, %37 : vector<8x1xf32>
    %c0_23 = arith.constant 0 : index
    %c0_24 = arith.constant 0 : index
    %c0_25 = arith.constant 0 : index
    %39 = vector.load %arg9[%c0_23, %c0_24, %c0_25] : memref<4x8x1xf32, #tpu.memory_space<vmem>>, vector<1x8x1xf32>
    %40 = vector.shape_cast %39 : vector<1x8x1xf32> to vector<8x1xf32>
    %41 = vector.shape_cast %38 : vector<8x1xf32> to vector<1x8x1xf32>
    tpu.vector_store %arg9[%c0_23, %c0_24, %c0_25], %41 {strides = array<i32>} : memref<4x8x1xf32, #tpu.memory_space<vmem>>, vector<1x8x1xf32>,
    %42 = arith.truncf %32 : vector<8x8xf32> to vector<8x8xbf16>
    %cst_26 = arith.constant dense<0.000000e+00> : vector<8x32xf32>
    %43 = tpu.matmul %42, %20, %cst_26 {dimension_numbers = #tpu.dot_dimension_numbers<[1], [0], [0], [1], [0, 0, 1, 1], [], []>} : vector<8x8xbf16>, vector<8x32xbf16>, vector<8x32xf32> -> vector<8x32xf32>
    %c0_27 = arith.constant 0 : index
    %c0_28 = arith.constant 0 : index
    %c0_29 = arith.constant 0 : index
    %44 = vector.load %arg10[%c0_27, %c0_28, %c0_29] : memref<4x8x32xf32, #tpu.memory_space<vmem>>, vector<1x8x32xf32>
    %45 = vector.shape_cast %44 : vector<1x8x32xf32> to vector<8x32xf32>
    %46 = vector.broadcast %29 : vector<8x1xf32> to vector<8x32xf32>
    %47 = arith.mulf %46, %45 : vector<8x32xf32>
    %48 = arith.addf %47, %43 : vector<8x32xf32>
    %c0_30 = arith.constant 0 : index
    %c0_31 = arith.constant 0 : index
    %c0_32 = arith.constant 0 : index
    %49 = vector.load %arg10[%c0_30, %c0_31, %c0_32] : memref<4x8x32xf32, #tpu.memory_space<vmem>>, vector<1x8x32xf32>
    %50 = vector.shape_cast %49 : vector<1x8x32xf32> to vector<8x32xf32>
    %51 = vector.shape_cast %48 : vector<8x32xf32> to vector<1x8x32xf32>
    tpu.vector_store %arg10[%c0_30, %c0_31, %c0_32], %51 {strides = array<i32>} : memref<4x8x32xf32, #tpu.memory_space<vmem>>, vector<1x8x32xf32>,
    %c0_33 = arith.constant 0 : index
    %c0_34 = arith.constant 0 : index
    %c0_35 = arith.constant 0 : index
    %52 = vector.load %arg8[%c0_33, %c0_34, %c0_35] : memref<4x8x1xf32, #tpu.memory_space<vmem>>, vector<1x8x1xf32>
    %53 = vector.shape_cast %52 : vector<1x8x1xf32> to vector<8x1xf32>
    %54 = vector.shape_cast %27 : vector<8x1xf32> to vector<1x8x1xf32>
    tpu.vector_store %arg8[%c0_33, %c0_34, %c0_35], %54 {strides = array<i32>} : memref<4x8x1xf32, #tpu.memory_space<vmem>>, vector<1x8x1xf32>,
    %55 = vector.extract_strided_slice %4 {offsets = [0, 32], sizes = [8, 32], strides = [1, 1]} : vector<8x128xbf16> to vector<8x32xbf16>
    %56 = vector.extract_strided_slice %6 {offsets = [0, 32], sizes = [8, 32], strides = [1, 1]} : vector<8x128xbf16> to vector<8x32xbf16>
    %57 = vector.extract_strided_slice %8 {offsets = [0, 32], sizes = [8, 32], strides = [1, 1]} : vector<8x128xbf16> to vector<8x32xbf16>
    %cst_36 = arith.constant dense<0.000000e+00> : vector<8x8xf32>
    %58 = tpu.matmul %55, %56, %cst_36 {dimension_numbers = #tpu.dot_dimension_numbers<[1], [1], [0], [0], [0, 0, 1, 0], [], []>} : vector<8x32xbf16>, vector<8x32xbf16>, vector<8x8xf32> -> vector<8x8xf32>
    %59 = arith.addf %58, %17 : vector<8x8xf32>
    %c1 = arith.constant 1 : index
    %c0_37 = arith.constant 0 : index
    %c0_38 = arith.constant 0 : index
    %60 = vector.load %arg8[%c1, %c0_37, %c0_38] : memref<4x8x1xf32, #tpu.memory_space<vmem>>, vector<1x8x1xf32>
    %61 = vector.shape_cast %60 : vector<1x8x1xf32> to vector<8x1xf32>
    %cst_39 = arith.constant dense<0xFF800000> : vector<8xf32>
    %62 = vector.multi_reduction <maximumf>, %59, %cst_39 [1] : vector<8x8xf32> to vector<8xf32>
    %63 = vector.shape_cast %62 : vector<8xf32> to vector<8x1xf32>
    %64 = arith.maximumf %61, %63 : vector<8x1xf32>
    %65 = arith.subf %61, %64 : vector<8x1xf32>
    %66 = math.exp %65 : vector<8x1xf32>
    %67 = vector.broadcast %64 : vector<8x1xf32> to vector<8x8xf32>
    %68 = arith.subf %59, %67 : vector<8x8xf32>
    %69 = math.exp %68 : vector<8x8xf32>
    %c1_40 = arith.constant 1 : index
    %c0_41 = arith.constant 0 : index
    %c0_42 = arith.constant 0 : index
    %70 = vector.load %arg9[%c1_40, %c0_41, %c0_42] : memref<4x8x1xf32, #tpu.memory_space<vmem>>, vector<1x8x1xf32>
    %71 = vector.shape_cast %70 : vector<1x8x1xf32> to vector<8x1xf32>
    %72 = arith.mulf %66, %71 : vector<8x1xf32>
    %cst_43 = arith.constant dense<0.000000e+00> : vector<8xf32>
    %73 = vector.multi_reduction <add>, %69, %cst_43 [1] : vector<8x8xf32> to vector<8xf32>
    %74 = vector.shape_cast %73 : vector<8xf32> to vector<8x1xf32>
    %75 = arith.addf %72, %74 : vector<8x1xf32>
    %c1_44 = arith.constant 1 : index
    %c0_45 = arith.constant 0 : index
    %c0_46 = arith.constant 0 : index
    %76 = vector.load %arg9[%c1_44, %c0_45, %c0_46] : memref<4x8x1xf32, #tpu.memory_space<vmem>>, vector<1x8x1xf32>
    %77 = vector.shape_cast %76 : vector<1x8x1xf32> to vector<8x1xf32>
    %78 = vector.shape_cast %75 : vector<8x1xf32> to vector<1x8x1xf32>
    tpu.vector_store %arg9[%c1_44, %c0_45, %c0_46], %78 {strides = array<i32>} : memref<4x8x1xf32, #tpu.memory_space<vmem>>, vector<1x8x1xf32>,
    %79 = arith.truncf %69 : vector<8x8xf32> to vector<8x8xbf16>
    %cst_47 = arith.constant dense<0.000000e+00> : vector<8x32xf32>
    %80 = tpu.matmul %79, %57, %cst_47 {dimension_numbers = #tpu.dot_dimension_numbers<[1], [0], [0], [1], [0, 0, 1, 1], [], []>} : vector<8x8xbf16>, vector<8x32xbf16>, vector<8x32xf32> -> vector<8x32xf32>
    %c1_48 = arith.constant 1 : index
    %c0_49 = arith.constant 0 : index
    %c0_50 = arith.constant 0 : index
    %81 = vector.load %arg10[%c1_48, %c0_49, %c0_50] : memref<4x8x32xf32, #tpu.memory_space<vmem>>, vector<1x8x32xf32>
    %82 = vector.shape_cast %81 : vector<1x8x32xf32> to vector<8x32xf32>
    %83 = vector.broadcast %66 : vector<8x1xf32> to vector<8x32xf32>
    %84 = arith.mulf %83, %82 : vector<8x32xf32>
    %85 = arith.addf %84, %80 : vector<8x32xf32>
    %c1_51 = arith.constant 1 : index
    %c0_52 = arith.constant 0 : index
    %c0_53 = arith.constant 0 : index
    %86 = vector.load %arg10[%c1_51, %c0_52, %c0_53] : memref<4x8x32xf32, #tpu.memory_space<vmem>>, vector<1x8x32xf32>
    %87 = vector.shape_cast %86 : vector<1x8x32xf32> to vector<8x32xf32>
    %88 = vector.shape_cast %85 : vector<8x32xf32> to vector<1x8x32xf32>
    tpu.vector_store %arg10[%c1_51, %c0_52, %c0_53], %88 {strides = array<i32>} : memref<4x8x32xf32, #tpu.memory_space<vmem>>, vector<1x8x32xf32>,
    %c1_54 = arith.constant 1 : index
    %c0_55 = arith.constant 0 : index
    %c0_56 = arith.constant 0 : index
    %89 = vector.load %arg8[%c1_54, %c0_55, %c0_56] : memref<4x8x1xf32, #tpu.memory_space<vmem>>, vector<1x8x1xf32>
    %90 = vector.shape_cast %89 : vector<1x8x1xf32> to vector<8x1xf32>
    %91 = vector.shape_cast %64 : vector<8x1xf32> to vector<1x8x1xf32>
    tpu.vector_store %arg8[%c1_54, %c0_55, %c0_56], %91 {strides = array<i32>} : memref<4x8x1xf32, #tpu.memory_space<vmem>>, vector<1x8x1xf32>,
    %92 = vector.extract_strided_slice %4 {offsets = [0, 64], sizes = [8, 32], strides = [1, 1]} : vector<8x128xbf16> to vector<8x32xbf16>
    %93 = vector.extract_strided_slice %6 {offsets = [0, 64], sizes = [8, 32], strides = [1, 1]} : vector<8x128xbf16> to vector<8x32xbf16>
    %94 = vector.extract_strided_slice %8 {offsets = [0, 64], sizes = [8, 32], strides = [1, 1]} : vector<8x128xbf16> to vector<8x32xbf16>
    %cst_57 = arith.constant dense<0.000000e+00> : vector<8x8xf32>
    %95 = tpu.matmul %92, %93, %cst_57 {dimension_numbers = #tpu.dot_dimension_numbers<[1], [1], [0], [0], [0, 0, 1, 0], [], []>} : vector<8x32xbf16>, vector<8x32xbf16>, vector<8x8xf32> -> vector<8x8xf32>
    %96 = arith.addf %95, %17 : vector<8x8xf32>
    %c2 = arith.constant 2 : index
    %c0_58 = arith.constant 0 : index
    %c0_59 = arith.constant 0 : index
    %97 = vector.load %arg8[%c2, %c0_58, %c0_59] : memref<4x8x1xf32, #tpu.memory_space<vmem>>, vector<1x8x1xf32>
    %98 = vector.shape_cast %97 : vector<1x8x1xf32> to vector<8x1xf32>
    %cst_60 = arith.constant dense<0xFF800000> : vector<8xf32>
    %99 = vector.multi_reduction <maximumf>, %96, %cst_60 [1] : vector<8x8xf32> to vector<8xf32>
    %100 = vector.shape_cast %99 : vector<8xf32> to vector<8x1xf32>
    %101 = arith.maximumf %98, %100 : vector<8x1xf32>
    %102 = arith.subf %98, %101 : vector<8x1xf32>
    %103 = math.exp %102 : vector<8x1xf32>
    %104 = vector.broadcast %101 : vector<8x1xf32> to vector<8x8xf32>
    %105 = arith.subf %96, %104 : vector<8x8xf32>
    %106 = math.exp %105 : vector<8x8xf32>
    %c2_61 = arith.constant 2 : index
    %c0_62 = arith.constant 0 : index
    %c0_63 = arith.constant 0 : index
    %107 = vector.load %arg9[%c2_61, %c0_62, %c0_63] : memref<4x8x1xf32, #tpu.memory_space<vmem>>, vector<1x8x1xf32>
    %108 = vector.shape_cast %107 : vector<1x8x1xf32> to vector<8x1xf32>
    %109 = arith.mulf %103, %108 : vector<8x1xf32>
    %cst_64 = arith.constant dense<0.000000e+00> : vector<8xf32>
    %110 = vector.multi_reduction <add>, %106, %cst_64 [1] : vector<8x8xf32> to vector<8xf32>
    %111 = vector.shape_cast %110 : vector<8xf32> to vector<8x1xf32>
    %112 = arith.addf %109, %111 : vector<8x1xf32>
    %c2_65 = arith.constant 2 : index
    %c0_66 = arith.constant 0 : index
    %c0_67 = arith.constant 0 : index
    %113 = vector.load %arg9[%c2_65, %c0_66, %c0_67] : memref<4x8x1xf32, #tpu.memory_space<vmem>>, vector<1x8x1xf32>
    %114 = vector.shape_cast %113 : vector<1x8x1xf32> to vector<8x1xf32>
    %115 = vector.shape_cast %112 : vector<8x1xf32> to vector<1x8x1xf32>
    tpu.vector_store %arg9[%c2_65, %c0_66, %c0_67], %115 {strides = array<i32>} : memref<4x8x1xf32, #tpu.memory_space<vmem>>, vector<1x8x1xf32>,
    %116 = arith.truncf %106 : vector<8x8xf32> to vector<8x8xbf16>
    %cst_68 = arith.constant dense<0.000000e+00> : vector<8x32xf32>
    %117 = tpu.matmul %116, %94, %cst_68 {dimension_numbers = #tpu.dot_dimension_numbers<[1], [0], [0], [1], [0, 0, 1, 1], [], []>} : vector<8x8xbf16>, vector<8x32xbf16>, vector<8x32xf32> -> vector<8x32xf32>
    %c2_69 = arith.constant 2 : index
    %c0_70 = arith.constant 0 : index
    %c0_71 = arith.constant 0 : index
    %118 = vector.load %arg10[%c2_69, %c0_70, %c0_71] : memref<4x8x32xf32, #tpu.memory_space<vmem>>, vector<1x8x32xf32>
    %119 = vector.shape_cast %118 : vector<1x8x32xf32> to vector<8x32xf32>
    %120 = vector.broadcast %103 : vector<8x1xf32> to vector<8x32xf32>
    %121 = arith.mulf %120, %119 : vector<8x32xf32>
    %122 = arith.addf %121, %117 : vector<8x32xf32>
    %c2_72 = arith.constant 2 : index
    %c0_73 = arith.constant 0 : index
    %c0_74 = arith.constant 0 : index
    %123 = vector.load %arg10[%c2_72, %c0_73, %c0_74] : memref<4x8x32xf32, #tpu.memory_space<vmem>>, vector<1x8x32xf32>
    %124 = vector.shape_cast %123 : vector<1x8x32xf32> to vector<8x32xf32>
    %125 = vector.shape_cast %122 : vector<8x32xf32> to vector<1x8x32xf32>
    tpu.vector_store %arg10[%c2_72, %c0_73, %c0_74], %125 {strides = array<i32>} : memref<4x8x32xf32, #tpu.memory_space<vmem>>, vector<1x8x32xf32>,
    %c2_75 = arith.constant 2 : index
    %c0_76 = arith.constant 0 : index
    %c0_77 = arith.constant 0 : index
    %126 = vector.load %arg8[%c2_75, %c0_76, %c0_77] : memref<4x8x1xf32, #tpu.memory_space<vmem>>, vector<1x8x1xf32>
    %127 = vector.shape_cast %126 : vector<1x8x1xf32> to vector<8x1xf32>
    %128 = vector.shape_cast %101 : vector<8x1xf32> to vector<1x8x1xf32>
    tpu.vector_store %arg8[%c2_75, %c0_76, %c0_77], %128 {strides = array<i32>} : memref<4x8x1xf32, #tpu.memory_space<vmem>>, vector<1x8x1xf32>,
    %129 = vector.extract_strided_slice %4 {offsets = [0, 96], sizes = [8, 32], strides = [1, 1]} : vector<8x128xbf16> to vector<8x32xbf16>
    %130 = vector.extract_strided_slice %6 {offsets = [0, 96], sizes = [8, 32], strides = [1, 1]} : vector<8x128xbf16> to vector<8x32xbf16>
    %131 = vector.extract_strided_slice %8 {offsets = [0, 96], sizes = [8, 32], strides = [1, 1]} : vector<8x128xbf16> to vector<8x32xbf16>
    %cst_78 = arith.constant dense<0.000000e+00> : vector<8x8xf32>
    %132 = tpu.matmul %129, %130, %cst_78 {dimension_numbers = #tpu.dot_dimension_numbers<[1], [1], [0], [0], [0, 0, 1, 0], [], []>} : vector<8x32xbf16>, vector<8x32xbf16>, vector<8x8xf32> -> vector<8x8xf32>
    %133 = arith.addf %132, %17 : vector<8x8xf32>
    %c3 = arith.constant 3 : index
    %c0_79 = arith.constant 0 : index
    %c0_80 = arith.constant 0 : index
    %134 = vector.load %arg8[%c3, %c0_79, %c0_80] : memref<4x8x1xf32, #tpu.memory_space<vmem>>, vector<1x8x1xf32>
    %135 = vector.shape_cast %134 : vector<1x8x1xf32> to vector<8x1xf32>
    %cst_81 = arith.constant dense<0xFF800000> : vector<8xf32>
    %136 = vector.multi_reduction <maximumf>, %133, %cst_81 [1] : vector<8x8xf32> to vector<8xf32>
    %137 = vector.shape_cast %136 : vector<8xf32> to vector<8x1xf32>
    %138 = arith.maximumf %135, %137 : vector<8x1xf32>
    %139 = arith.subf %135, %138 : vector<8x1xf32>
    %140 = math.exp %139 : vector<8x1xf32>
    %141 = vector.broadcast %138 : vector<8x1xf32> to vector<8x8xf32>
    %142 = arith.subf %133, %141 : vector<8x8xf32>
    %143 = math.exp %142 : vector<8x8xf32>
    %c3_82 = arith.constant 3 : index
    %c0_83 = arith.constant 0 : index
    %c0_84 = arith.constant 0 : index
    %144 = vector.load %arg9[%c3_82, %c0_83, %c0_84] : memref<4x8x1xf32, #tpu.memory_space<vmem>>, vector<1x8x1xf32>
    %145 = vector.shape_cast %144 : vector<1x8x1xf32> to vector<8x1xf32>
    %146 = arith.mulf %140, %145 : vector<8x1xf32>
    %cst_85 = arith.constant dense<0.000000e+00> : vector<8xf32>
    %147 = vector.multi_reduction <add>, %143, %cst_85 [1] : vector<8x8xf32> to vector<8xf32>
    %148 = vector.shape_cast %147 : vector<8xf32> to vector<8x1xf32>
    %149 = arith.addf %146, %148 : vector<8x1xf32>
    %c3_86 = arith.constant 3 : index
    %c0_87 = arith.constant 0 : index
    %c0_88 = arith.constant 0 : index
    %150 = vector.load %arg9[%c3_86, %c0_87, %c0_88] : memref<4x8x1xf32, #tpu.memory_space<vmem>>, vector<1x8x1xf32>
    %151 = vector.shape_cast %150 : vector<1x8x1xf32> to vector<8x1xf32>
    %152 = vector.shape_cast %149 : vector<8x1xf32> to vector<1x8x1xf32>
    tpu.vector_store %arg9[%c3_86, %c0_87, %c0_88], %152 {strides = array<i32>} : memref<4x8x1xf32, #tpu.memory_space<vmem>>, vector<1x8x1xf32>,
    %153 = arith.truncf %143 : vector<8x8xf32> to vector<8x8xbf16>
    %cst_89 = arith.constant dense<0.000000e+00> : vector<8x32xf32>
    %154 = tpu.matmul %153, %131, %cst_89 {dimension_numbers = #tpu.dot_dimension_numbers<[1], [0], [0], [1], [0, 0, 1, 1], [], []>} : vector<8x8xbf16>, vector<8x32xbf16>, vector<8x32xf32> -> vector<8x32xf32>
    %c3_90 = arith.constant 3 : index
    %c0_91 = arith.constant 0 : index
    %c0_92 = arith.constant 0 : index
    %155 = vector.load %arg10[%c3_90, %c0_91, %c0_92] : memref<4x8x32xf32, #tpu.memory_space<vmem>>, vector<1x8x32xf32>
    %156 = vector.shape_cast %155 : vector<1x8x32xf32> to vector<8x32xf32>
    %157 = vector.broadcast %140 : vector<8x1xf32> to vector<8x32xf32>
    %158 = arith.mulf %157, %156 : vector<8x32xf32>
    %159 = arith.addf %158, %154 : vector<8x32xf32>
    %c3_93 = arith.constant 3 : index
    %c0_94 = arith.constant 0 : index
    %c0_95 = arith.constant 0 : index
    %160 = vector.load %arg10[%c3_93, %c0_94, %c0_95] : memref<4x8x32xf32, #tpu.memory_space<vmem>>, vector<1x8x32xf32>
    %161 = vector.shape_cast %160 : vector<1x8x32xf32> to vector<8x32xf32>
    %162 = vector.shape_cast %159 : vector<8x32xf32> to vector<1x8x32xf32>
    tpu.vector_store %arg10[%c3_93, %c0_94, %c0_95], %162 {strides = array<i32>} : memref<4x8x32xf32, #tpu.memory_space<vmem>>, vector<1x8x32xf32>,
    %c3_96 = arith.constant 3 : index
    %c0_97 = arith.constant 0 : index
    %c0_98 = arith.constant 0 : index
    %163 = vector.load %arg8[%c3_96, %c0_97, %c0_98] : memref<4x8x1xf32, #tpu.memory_space<vmem>>, vector<1x8x1xf32>
    %164 = vector.shape_cast %163 : vector<1x8x1xf32> to vector<8x1xf32>
    %165 = vector.shape_cast %138 : vector<8x1xf32> to vector<1x8x1xf32>
    tpu.vector_store %arg8[%c3_96, %c0_97, %c0_98], %165 {strides = array<i32>} : memref<4x8x1xf32, #tpu.memory_space<vmem>>, vector<1x8x1xf32>,
    %c0_i32_99 = arith.constant 0 : i32
    %166 = arith.cmpi eq, %arg2, %c0_i32_99 : i32
    %167 = arith.extui %166 : i1 to i32
    %c0_i32_100 = arith.constant 0 : i32
    %168 = arith.cmpi ne, %167, %c0_i32_100 : i32
    scf.if %168 {
      %c0_101 = arith.constant 0 : index
      %c0_102 = arith.constant 0 : index
      %c0_103 = arith.constant 0 : index
      %169 = vector.load %arg9[%c0_101, %c0_102, %c0_103] : memref<4x8x1xf32, #tpu.memory_space<vmem>>, vector<1x8x1xf32>
      %170 = vector.shape_cast %169 : vector<1x8x1xf32> to vector<8x1xf32>
      %171 = tpu.reciprocal %170 {approx = true} : vector<8x1xf32> -> vector<8x1xf32>
      %c0_104 = arith.constant 0 : index
      %c0_105 = arith.constant 0 : index
      %c0_106 = arith.constant 0 : index
      %172 = vector.load %arg10[%c0_104, %c0_105, %c0_106] : memref<4x8x32xf32, #tpu.memory_space<vmem>>, vector<1x8x32xf32>
      %173 = vector.shape_cast %172 : vector<1x8x32xf32> to vector<8x32xf32>
      %174 = vector.broadcast %171 : vector<8x1xf32> to vector<8x32xf32>
      %175 = arith.mulf %173, %174 : vector<8x32xf32>
      %176 = arith.truncf %175 : vector<8x32xf32> to vector<8x32xbf16>
      %c0_107 = arith.constant 0 : index
      %c0_108 = arith.constant 0 : index
      %c0_109 = arith.constant 0 : index
      %177 = vector.load %arg7[%c0_107, %c0_108, %c0_109] : memref<1x8x128xbf16, #tpu.memory_space<vmem>>, vector<1x8x32xbf16>
      %178 = vector.shape_cast %177 : vector<1x8x32xbf16> to vector<8x32xbf16>
      %179 = vector.shape_cast %176 : vector<8x32xbf16> to vector<1x8x32xbf16>
      tpu.vector_store %arg7[%c0_107, %c0_108, %c0_109], %179 {strides = array<i32>} : memref<1x8x128xbf16, #tpu.memory_space<vmem>>, vector<1x8x32xbf16>,
      %c1_110 = arith.constant 1 : index
      %c0_111 = arith.constant 0 : index
      %c0_112 = arith.constant 0 : index
      %180 = vector.load %arg9[%c1_110, %c0_111, %c0_112] : memref<4x8x1xf32, #tpu.memory_space<vmem>>, vector<1x8x1xf32>
      %181 = vector.shape_cast %180 : vector<1x8x1xf32> to vector<8x1xf32>
      %182 = tpu.reciprocal %181 {approx = true} : vector<8x1xf32> -> vector<8x1xf32>
      %c1_113 = arith.constant 1 : index
      %c0_114 = arith.constant 0 : index
      %c0_115 = arith.constant 0 : index
      %183 = vector.load %arg10[%c1_113, %c0_114, %c0_115] : memref<4x8x32xf32, #tpu.memory_space<vmem>>, vector<1x8x32xf32>
      %184 = vector.shape_cast %183 : vector<1x8x32xf32> to vector<8x32xf32>
      %185 = vector.broadcast %182 : vector<8x1xf32> to vector<8x32xf32>
      %186 = arith.mulf %184, %185 : vector<8x32xf32>
      %187 = arith.truncf %186 : vector<8x32xf32> to vector<8x32xbf16>
      %c0_116 = arith.constant 0 : index
      %c0_117 = arith.constant 0 : index
      %c32 = arith.constant 32 : index
      %188 = vector.load %arg7[%c0_116, %c0_117, %c32] : memref<1x8x128xbf16, #tpu.memory_space<vmem>>, vector<1x8x32xbf16>
      %189 = vector.shape_cast %188 : vector<1x8x32xbf16> to vector<8x32xbf16>
      %190 = vector.shape_cast %187 : vector<8x32xbf16> to vector<1x8x32xbf16>
      tpu.vector_store %arg7[%c0_116, %c0_117, %c32], %190 {strides = array<i32>} : memref<1x8x128xbf16, #tpu.memory_space<vmem>>, vector<1x8x32xbf16>,
      %c2_118 = arith.constant 2 : index
      %c0_119 = arith.constant 0 : index
      %c0_120 = arith.constant 0 : index
      %191 = vector.load %arg9[%c2_118, %c0_119, %c0_120] : memref<4x8x1xf32, #tpu.memory_space<vmem>>, vector<1x8x1xf32>
      %192 = vector.shape_cast %191 : vector<1x8x1xf32> to vector<8x1xf32>
      %193 = tpu.reciprocal %192 {approx = true} : vector<8x1xf32> -> vector<8x1xf32>
      %c2_121 = arith.constant 2 : index
      %c0_122 = arith.constant 0 : index
      %c0_123 = arith.constant 0 : index
      %194 = vector.load %arg10[%c2_121, %c0_122, %c0_123] : memref<4x8x32xf32, #tpu.memory_space<vmem>>, vector<1x8x32xf32>
      %195 = vector.shape_cast %194 : vector<1x8x32xf32> to vector<8x32xf32>
      %196 = vector.broadcast %193 : vector<8x1xf32> to vector<8x32xf32>
      %197 = arith.mulf %195, %196 : vector<8x32xf32>
      %198 = arith.truncf %197 : vector<8x32xf32> to vector<8x32xbf16>
      %c0_124 = arith.constant 0 : index
      %c0_125 = arith.constant 0 : index
      %c64 = arith.constant 64 : index
      %199 = vector.load %arg7[%c0_124, %c0_125, %c64] : memref<1x8x128xbf16, #tpu.memory_space<vmem>>, vector<1x8x32xbf16>
      %200 = vector.shape_cast %199 : vector<1x8x32xbf16> to vector<8x32xbf16>
      %201 = vector.shape_cast %198 : vector<8x32xbf16> to vector<1x8x32xbf16>
      tpu.vector_store %arg7[%c0_124, %c0_125, %c64], %201 {strides = array<i32>} : memref<1x8x128xbf16, #tpu.memory_space<vmem>>, vector<1x8x32xbf16>,
      %c3_126 = arith.constant 3 : index
      %c0_127 = arith.constant 0 : index
      %c0_128 = arith.constant 0 : index
      %202 = vector.load %arg9[%c3_126, %c0_127, %c0_128] : memref<4x8x1xf32, #tpu.memory_space<vmem>>, vector<1x8x1xf32>
      %203 = vector.shape_cast %202 : vector<1x8x1xf32> to vector<8x1xf32>
      %204 = tpu.reciprocal %203 {approx = true} : vector<8x1xf32> -> vector<8x1xf32>
      %c3_129 = arith.constant 3 : index
      %c0_130 = arith.constant 0 : index
      %c0_131 = arith.constant 0 : index
      %205 = vector.load %arg10[%c3_129, %c0_130, %c0_131] : memref<4x8x32xf32, #tpu.memory_space<vmem>>, vector<1x8x32xf32>
      %206 = vector.shape_cast %205 : vector<1x8x32xf32> to vector<8x32xf32>
      %207 = vector.broadcast %204 : vector<8x1xf32> to vector<8x32xf32>
      %208 = arith.mulf %206, %207 : vector<8x32xf32>
      %209 = arith.truncf %208 : vector<8x32xf32> to vector<8x32xbf16>
      %c0_132 = arith.constant 0 : index
      %c0_133 = arith.constant 0 : index
      %c96 = arith.constant 96 : index
      %210 = vector.load %arg7[%c0_132, %c0_133, %c96] : memref<1x8x128xbf16, #tpu.memory_space<vmem>>, vector<1x8x32xbf16>
      %211 = vector.shape_cast %210 : vector<1x8x32xbf16> to vector<8x32xbf16>
      %212 = vector.shape_cast %209 : vector<8x32xbf16> to vector<1x8x32xbf16>
      tpu.vector_store %arg7[%c0_132, %c0_133, %c96], %212 {strides = array<i32>} : memref<1x8x128xbf16, #tpu.memory_space<vmem>>, vector<1x8x32xbf16>,
    } else {
    }
    return
  }
  func.func @transform_0(%arg0: i32, %arg1: i32, %arg2: i32) -> (i32, i32, i32) {
    %c0_i32 = arith.constant 0 : i32
    %c0_i32_0 = arith.constant 0 : i32
    return %arg0, %arg1, %c0_i32 : i32, i32, i32
  }
  func.func @transform_1(%arg0: i32, %arg1: i32, %arg2: i32) -> (i32, i32, i32) {
    %c0_i32 = arith.constant 0 : i32
    %c0_i32_0 = arith.constant 0 : i32
    return %arg0, %arg2, %c0_i32 : i32, i32, i32
  }
  func.func @transform_2(%arg0: i32, %arg1: i32, %arg2: i32) -> (i32, i32, i32) {
    %c1_i32 = arith.constant 1 : i32
    %c0_i32 = arith.constant 0 : i32
    return %arg0, %arg2, %c1_i32 : i32, i32, i32
  }
  func.func @transform_3(%arg0: i32, %arg1: i32, %arg2: i32) -> (i32, i32, i32) {
    %c0_i32 = arith.constant 0 : i32
    %c0_i32_0 = arith.constant 0 : i32
    return %arg0, %c0_i32, %arg2 : i32, i32, i32
  }
  func.func @transform_4(%arg0: i32, %arg1: i32, %arg2: i32) -> (i32, i32, i32) {
    %c0_i32 = arith.constant 0 : i32
    %c0_i32_0 = arith.constant 0 : i32
    return %arg0, %arg1, %c0_i32 : i32, i32, i32
  }
}

module attributes {stable_mosaic.version = 11 : i64} {
  func.func @_linear_add_ln_kernel(%arg0: i32, %arg1: i32, %arg2: memref<16x128xbf16, #tpu.memory_space<vmem>>, %arg3: memref<128x128xbf16, #tpu.memory_space<vmem>>, %arg4: memref<1x128xf32, #tpu.memory_space<vmem>>, %arg5: memref<16x128xbf16, #tpu.memory_space<vmem>>, %arg6: memref<1x128xf32, #tpu.memory_space<vmem>>, %arg7: memref<1x128xf32, #tpu.memory_space<vmem>>, %arg8: memref<16x128xbf16, #tpu.memory_space<vmem>>, %arg9: memref<16x128xf32, #tpu.memory_space<vmem>>) attributes {dimension_semantics = [#tpu.dimension_semantics<parallel>, #tpu.dimension_semantics<arbitrary>], iteration_bounds = array<i64: 1, 1>, scalar_prefetch = 0 : i64, scratch_operands = 1 : i64, tpu.core_type = #tpu.core_type<tc>, window_params = [{transform_indices = @transform_0, window_bounds = array<i64: 16, 128>}, {transform_indices = @transform_1, window_bounds = array<i64: 128, 128>}, {pipeline_mode = #tpu.pipeline_mode<synchronous>, transform_indices = @transform_2, window_bounds = array<i64: 1, 128>}, {transform_indices = @transform_3, window_bounds = array<i64: 16, 128>}, {pipeline_mode = #tpu.pipeline_mode<synchronous>, transform_indices = @transform_4, window_bounds = array<i64: 1, 128>}, {pipeline_mode = #tpu.pipeline_mode<synchronous>, transform_indices = @transform_5, window_bounds = array<i64: 1, 128>}, {transform_indices = @transform_6, window_bounds = array<i64: 16, 128>}]} {
    %c0_i32 = arith.constant 0 : i32
    %0 = arith.cmpi eq, %arg1, %c0_i32 : i32
    %1 = arith.extui %0 : i1 to i32
    %c0_i32_0 = arith.constant 0 : i32
    %2 = arith.cmpi ne, %1, %c0_i32_0 : i32
    scf.if %2 {
      %cst_10 = arith.constant 0.000000e+00 : f32
      %12 = vector.broadcast %cst_10 : f32 to vector<16x128xf32>
      %c0_11 = arith.constant 0 : index
      %c0_12 = arith.constant 0 : index
      %13 = vector.load %arg9[%c0_11, %c0_12] : memref<16x128xf32, #tpu.memory_space<vmem>>, vector<16x128xf32>
      tpu.vector_store %arg9[%c0_11, %c0_12], %12 {strides = array<i32>} : memref<16x128xf32, #tpu.memory_space<vmem>>, vector<16x128xf32>,
    } else {
    }
    %c0 = arith.constant 0 : index
    %c0_1 = arith.constant 0 : index
    %3 = vector.load %arg9[%c0, %c0_1] : memref<16x128xf32, #tpu.memory_space<vmem>>, vector<16x128xf32>
    %c0_2 = arith.constant 0 : index
    %c0_3 = arith.constant 0 : index
    %4 = vector.load %arg2[%c0_2, %c0_3] : memref<16x128xbf16, #tpu.memory_space<vmem>>, vector<16x128xbf16>
    %c0_4 = arith.constant 0 : index
    %c0_5 = arith.constant 0 : index
    %5 = vector.load %arg3[%c0_4, %c0_5] : memref<128x128xbf16, #tpu.memory_space<vmem>>, vector<128x128xbf16>
    %cst = arith.constant dense<0.000000e+00> : vector<16x128xf32>
    %6 = tpu.matmul %4, %5, %cst {dimension_numbers = #tpu.dot_dimension_numbers<[1], [0], [0], [1], [0, 0, 1, 1], [], []>} : vector<16x128xbf16>, vector<128x128xbf16>, vector<16x128xf32> -> vector<16x128xf32>
    %7 = arith.addf %3, %6 : vector<16x128xf32>
    %c0_6 = arith.constant 0 : index
    %c0_7 = arith.constant 0 : index
    %8 = vector.load %arg9[%c0_6, %c0_7] : memref<16x128xf32, #tpu.memory_space<vmem>>, vector<16x128xf32>
    tpu.vector_store %arg9[%c0_6, %c0_7], %7 {strides = array<i32>} : memref<16x128xf32, #tpu.memory_space<vmem>>, vector<16x128xf32>,
    %c0_i32_8 = arith.constant 0 : i32
    %9 = arith.cmpi eq, %arg1, %c0_i32_8 : i32
    %10 = arith.extui %9 : i1 to i32
    %c0_i32_9 = arith.constant 0 : i32
    %11 = arith.cmpi ne, %10, %c0_i32_9 : i32
    scf.if %11 {
      %c0_10 = arith.constant 0 : index
      %c0_11 = arith.constant 0 : index
      %12 = vector.load %arg9[%c0_10, %c0_11] : memref<16x128xf32, #tpu.memory_space<vmem>>, vector<16x128xf32>
      %c0_12 = arith.constant 0 : index
      %c0_13 = arith.constant 0 : index
      %13 = vector.load %arg4[%c0_12, %c0_13] : memref<1x128xf32, #tpu.memory_space<vmem>>, vector<1x128xf32>
      %14 = vector.broadcast %13 : vector<1x128xf32> to vector<16x128xf32>
      %15 = arith.addf %12, %14 : vector<16x128xf32>
      %c0_14 = arith.constant 0 : index
      %c0_15 = arith.constant 0 : index
      %16 = vector.load %arg5[%c0_14, %c0_15] : memref<16x128xbf16, #tpu.memory_space<vmem>>, vector<16x128xbf16>
      %17 = arith.extf %16 : vector<16x128xbf16> to vector<16x128xf32>
      %18 = arith.addf %15, %17 : vector<16x128xf32>
      %cst_16 = arith.constant dense<0.000000e+00> : vector<16xf32>
      %19 = vector.multi_reduction <add>, %18, %cst_16 [1] : vector<16x128xf32> to vector<16xf32>
      %20 = vector.shape_cast %19 : vector<16xf32> to vector<16x1xf32>
      %cst_17 = arith.constant 1.280000e+02 : f32
      %21 = vector.broadcast %cst_17 : f32 to vector<16x1xf32>
      %22 = arith.divf %20, %21 : vector<16x1xf32>
      %23 = vector.broadcast %22 : vector<16x1xf32> to vector<16x128xf32>
      %24 = arith.subf %18, %23 : vector<16x128xf32>
      %25 = arith.mulf %24, %24 : vector<16x128xf32>
      %cst_18 = arith.constant dense<0.000000e+00> : vector<16xf32>
      %26 = vector.multi_reduction <add>, %25, %cst_18 [1] : vector<16x128xf32> to vector<16xf32>
      %27 = vector.shape_cast %26 : vector<16xf32> to vector<16x1xf32>
      %cst_19 = arith.constant 1.280000e+02 : f32
      %28 = vector.broadcast %cst_19 : f32 to vector<16x1xf32>
      %29 = arith.divf %27, %28 : vector<16x1xf32>
      %30 = vector.broadcast %22 : vector<16x1xf32> to vector<16x128xf32>
      %31 = arith.subf %18, %30 : vector<16x128xf32>
      %cst_20 = arith.constant 9.99999974E-6 : f32
      %32 = vector.broadcast %cst_20 : f32 to vector<16x1xf32>
      %33 = arith.addf %29, %32 : vector<16x1xf32>
      %34 = math.rsqrt %33 : vector<16x1xf32>
      %35 = vector.broadcast %34 : vector<16x1xf32> to vector<16x128xf32>
      %36 = arith.mulf %31, %35 : vector<16x128xf32>
      %c0_21 = arith.constant 0 : index
      %c0_22 = arith.constant 0 : index
      %37 = vector.load %arg6[%c0_21, %c0_22] : memref<1x128xf32, #tpu.memory_space<vmem>>, vector<1x128xf32>
      %38 = vector.broadcast %37 : vector<1x128xf32> to vector<16x128xf32>
      %39 = arith.mulf %36, %38 : vector<16x128xf32>
      %c0_23 = arith.constant 0 : index
      %c0_24 = arith.constant 0 : index
      %40 = vector.load %arg7[%c0_23, %c0_24] : memref<1x128xf32, #tpu.memory_space<vmem>>, vector<1x128xf32>
      %41 = vector.broadcast %40 : vector<1x128xf32> to vector<16x128xf32>
      %42 = arith.addf %39, %41 : vector<16x128xf32>
      %43 = arith.truncf %42 : vector<16x128xf32> to vector<16x128xbf16>
      %c0_25 = arith.constant 0 : index
      %c0_26 = arith.constant 0 : index
      %44 = vector.load %arg8[%c0_25, %c0_26] : memref<16x128xbf16, #tpu.memory_space<vmem>>, vector<16x128xbf16>
      tpu.vector_store %arg8[%c0_25, %c0_26], %43 {strides = array<i32>} : memref<16x128xbf16, #tpu.memory_space<vmem>>, vector<16x128xbf16>,
    } else {
    }
    return
  }
  func.func @transform_0(%arg0: i32, %arg1: i32) -> (i32, i32) {
    %c0_i32 = arith.constant 0 : i32
    return %arg0, %arg1 : i32, i32
  }
  func.func @transform_1(%arg0: i32, %arg1: i32) -> (i32, i32) {
    %c0_i32 = arith.constant 0 : i32
    %c0_i32_0 = arith.constant 0 : i32
    return %arg1, %c0_i32 : i32, i32
  }
  func.func @transform_2(%arg0: i32, %arg1: i32) -> (i32, i32) {
    %c0_i32 = arith.constant 0 : i32
    %c0_i32_0 = arith.constant 0 : i32
    %c0_i32_1 = arith.constant 0 : i32
    return %c0_i32, %c0_i32_0 : i32, i32
  }
  func.func @transform_3(%arg0: i32, %arg1: i32) -> (i32, i32) {
    %c0_i32 = arith.constant 0 : i32
    %c0_i32_0 = arith.constant 0 : i32
    return %arg0, %c0_i32 : i32, i32
  }
  func.func @transform_4(%arg0: i32, %arg1: i32) -> (i32, i32) {
    %c0_i32 = arith.constant 0 : i32
    %c0_i32_0 = arith.constant 0 : i32
    %c0_i32_1 = arith.constant 0 : i32
    return %c0_i32, %c0_i32_0 : i32, i32
  }
  func.func @transform_5(%arg0: i32, %arg1: i32) -> (i32, i32) {
    %c0_i32 = arith.constant 0 : i32
    %c0_i32_0 = arith.constant 0 : i32
    %c0_i32_1 = arith.constant 0 : i32
    return %c0_i32, %c0_i32_0 : i32, i32
  }
  func.func @transform_6(%arg0: i32, %arg1: i32) -> (i32, i32) {
    %c0_i32 = arith.constant 0 : i32
    %c0_i32_0 = arith.constant 0 : i32
    return %arg0, %c0_i32 : i32, i32
  }
}

module attributes {stable_mosaic.version = 11 : i64} {
  func.func @_linear_kernel(%arg0: i32, %arg1: i32, %arg2: i32, %arg3: memref<16x128xbf16, #tpu.memory_space<vmem>>, %arg4: memref<128x32xbf16, #tpu.memory_space<vmem>>, %arg5: memref<1x32xf32, #tpu.memory_space<vmem>>, %arg6: memref<16x32xf32, #tpu.memory_space<vmem>>, %arg7: memref<16x32xf32, #tpu.memory_space<vmem>>) attributes {dimension_semantics = [#tpu.dimension_semantics<parallel>, #tpu.dimension_semantics<parallel>, #tpu.dimension_semantics<arbitrary>], iteration_bounds = array<i64: 1, 1, 1>, scalar_prefetch = 0 : i64, scratch_operands = 1 : i64, tpu.core_type = #tpu.core_type<tc>, window_params = [{transform_indices = @transform_0, window_bounds = array<i64: 16, 128>}, {transform_indices = @transform_1, window_bounds = array<i64: 128, 32>}, {transform_indices = @transform_2, window_bounds = array<i64: 1, 32>}, {transform_indices = @transform_3, window_bounds = array<i64: 16, 32>}]} {
    %c0_i32 = arith.constant 0 : i32
    %0 = arith.cmpi eq, %arg2, %c0_i32 : i32
    %1 = arith.extui %0 : i1 to i32
    %c0_i32_0 = arith.constant 0 : i32
    %2 = arith.cmpi ne, %1, %c0_i32_0 : i32
    scf.if %2 {
      %cst_10 = arith.constant 0.000000e+00 : f32
      %12 = vector.broadcast %cst_10 : f32 to vector<16x32xf32>
      %c0_11 = arith.constant 0 : index
      %c0_12 = arith.constant 0 : index
      %13 = vector.load %arg7[%c0_11, %c0_12] : memref<16x32xf32, #tpu.memory_space<vmem>>, vector<16x32xf32>
      tpu.vector_store %arg7[%c0_11, %c0_12], %12 {strides = array<i32>} : memref<16x32xf32, #tpu.memory_space<vmem>>, vector<16x32xf32>,
    } else {
    }
    %c0 = arith.constant 0 : index
    %c0_1 = arith.constant 0 : index
    %3 = vector.load %arg7[%c0, %c0_1] : memref<16x32xf32, #tpu.memory_space<vmem>>, vector<16x32xf32>
    %c0_2 = arith.constant 0 : index
    %c0_3 = arith.constant 0 : index
    %4 = vector.load %arg3[%c0_2, %c0_3] : memref<16x128xbf16, #tpu.memory_space<vmem>>, vector<16x128xbf16>
    %c0_4 = arith.constant 0 : index
    %c0_5 = arith.constant 0 : index
    %5 = vector.load %arg4[%c0_4, %c0_5] : memref<128x32xbf16, #tpu.memory_space<vmem>>, vector<128x32xbf16>
    %cst = arith.constant dense<0.000000e+00> : vector<16x32xf32>
    %6 = tpu.matmul %4, %5, %cst {dimension_numbers = #tpu.dot_dimension_numbers<[1], [0], [0], [1], [0, 0, 1, 1], [], []>} : vector<16x128xbf16>, vector<128x32xbf16>, vector<16x32xf32> -> vector<16x32xf32>
    %7 = arith.addf %3, %6 : vector<16x32xf32>
    %c0_6 = arith.constant 0 : index
    %c0_7 = arith.constant 0 : index
    %8 = vector.load %arg7[%c0_6, %c0_7] : memref<16x32xf32, #tpu.memory_space<vmem>>, vector<16x32xf32>
    tpu.vector_store %arg7[%c0_6, %c0_7], %7 {strides = array<i32>} : memref<16x32xf32, #tpu.memory_space<vmem>>, vector<16x32xf32>,
    %c0_i32_8 = arith.constant 0 : i32
    %9 = arith.cmpi eq, %arg2, %c0_i32_8 : i32
    %10 = arith.extui %9 : i1 to i32
    %c0_i32_9 = arith.constant 0 : i32
    %11 = arith.cmpi ne, %10, %c0_i32_9 : i32
    scf.if %11 {
      %c0_10 = arith.constant 0 : index
      %c0_11 = arith.constant 0 : index
      %12 = vector.load %arg7[%c0_10, %c0_11] : memref<16x32xf32, #tpu.memory_space<vmem>>, vector<16x32xf32>
      %c0_12 = arith.constant 0 : index
      %c0_13 = arith.constant 0 : index
      %13 = vector.load %arg5[%c0_12, %c0_13] : memref<1x32xf32, #tpu.memory_space<vmem>>, vector<1x32xf32>
      %14 = vector.broadcast %13 : vector<1x32xf32> to vector<16x32xf32>
      %15 = arith.addf %12, %14 : vector<16x32xf32>
      %c0_14 = arith.constant 0 : index
      %c0_15 = arith.constant 0 : index
      %16 = vector.load %arg6[%c0_14, %c0_15] : memref<16x32xf32, #tpu.memory_space<vmem>>, vector<16x32xf32>
      tpu.vector_store %arg6[%c0_14, %c0_15], %15 {strides = array<i32>} : memref<16x32xf32, #tpu.memory_space<vmem>>, vector<16x32xf32>,
    } else {
    }
    return
  }
  func.func @transform_0(%arg0: i32, %arg1: i32, %arg2: i32) -> (i32, i32) {
    %c0_i32 = arith.constant 0 : i32
    return %arg0, %arg2 : i32, i32
  }
  func.func @transform_1(%arg0: i32, %arg1: i32, %arg2: i32) -> (i32, i32) {
    %c0_i32 = arith.constant 0 : i32
    return %arg2, %arg1 : i32, i32
  }
  func.func @transform_2(%arg0: i32, %arg1: i32, %arg2: i32) -> (i32, i32) {
    %c0_i32 = arith.constant 0 : i32
    %c0_i32_0 = arith.constant 0 : i32
    return %c0_i32, %arg1 : i32, i32
  }
  func.func @transform_3(%arg0: i32, %arg1: i32, %arg2: i32) -> (i32, i32) {
    %c0_i32 = arith.constant 0 : i32
    return %arg0, %arg1 : i32, i32
  }
}

</mosaic_0001>

<llo_original>
// kernel: transformer_forward.31
$region0: #{transformer_forward.31}
  #allocation0 [shape = 'u32[]', space=smem, size = 0x4, offset = 0x4, fixed_abs, tag = 'smem constant byte address 0x4 - core index']
  #allocation1 [shape = 'u32[72,128]{1,0:T(1,128)}', space=vmem, size = 0x9000, scoped, tag = 'internal scratch']
  #allocation2 [shape = 'f32[16,128]{1,0:T(8,128)}', space=vmem, size = 0x2000, scoped, tag = 'scratch operand']
  %s0 = inlined_call_operand.vmem [shape: bf16[16,128], index: 0, kind: input, shape index: {}]
  %s1 = inlined_call_operand.vmem [shape: bf16[128,128], index: 1, kind: input, shape index: {}]
  %s2 = inlined_call_operand.vmem [shape: f32[1,128], index: 2, kind: input, shape index: {}]
  %s3 = inlined_call_operand.vmem [shape: bf16[16,128], index: 3, kind: input, shape index: {}]
  %s4 = inlined_call_operand.vmem [shape: f32[1,128], index: 4, kind: input, shape index: {}]
  %s5 = inlined_call_operand.vmem [shape: f32[1,128], index: 5, kind: input, shape index: {}]
  %s6 = inlined_call_operand.vmem [shape: bf16[16,128], index: 6, kind: output, shape index: {}]
  %s7 = sld [smem:[#allocation0]]
  $region42: #{transformer_forward.31} parent=0
    _
  %s9 = ssub.s32 1, %s7
  %s10 = scalar_select 0, %s9, %s7
  // Predicated region
  $region2: #{transformer_forward.31} parent=0 // pred_check
    _
  $region3: #{transformer_forward.31} parent=0 // pred_check_branch
    %12 = sbr.rel (0) target = $region5
  $region4: #{transformer_forward.31} parent=0 // pred_region
    _
  $region5: #{transformer_forward.31} parent=0 // pred_fallthru
    _
  // Predicated region
  $region6: #{transformer_forward.31} parent=0 // pred_check
    _
  $region7: #{transformer_forward.31} parent=0 // pred_check_branch
    %14 = sbr.rel (0) target = $region9
  $region8: #{transformer_forward.31} parent=0 // pred_region
    _
  $region9: #{transformer_forward.31} parent=0 // pred_fallthru
    _
  // Predicated region
  $region10: #{transformer_forward.31} parent=0 // pred_check
    _
  $region11: #{transformer_forward.31} parent=0 // pred_check_branch
    %16 = sbr.rel (0) target = $region13
  $region12: #{transformer_forward.31} parent=0 // pred_region
    _
  $region13: #{transformer_forward.31} parent=0 // pred_fallthru
    _
  // Predicated region
  $region14: #{transformer_forward.31} parent=0 // pred_check
    _
  $region15: #{transformer_forward.31} parent=0 // pred_check_branch
    %18 = sbr.rel (0) target = $region17
  $region16: #{transformer_forward.31} parent=0 // pred_region
    _
  $region17: #{transformer_forward.31} parent=0 // pred_fallthru
    _
  // Predicated region
  $region18: #{transformer_forward.31} parent=0 // pred_check
    _
  $region19: #{transformer_forward.31} parent=0 // pred_check_branch
    %20 = sbr.rel (0) target = $region21
  $region20: #{transformer_forward.31} parent=0 // pred_region
    _
  $region21: #{transformer_forward.31} parent=0 // pred_fallthru
    _
  // Predicated region
  $region22: #{transformer_forward.31} parent=0 // pred_check
    _
  $region23: #{transformer_forward.31} parent=0 // pred_check_branch
    %22 = sbr.rel (0) target = $region25
  $region24: #{transformer_forward.31} parent=0 // pred_region
    _
  $region25: #{transformer_forward.31} parent=0 // pred_fallthru
    _
  %p23 = scmp.eq.s32.totalorder 0, 0
  // Predicated region
  $region26: #{transformer_forward.31} parent=0 // pred_check
    %p24 = pneg %p23
  $region27: #{transformer_forward.31} parent=0 // pred_check_branch
    %26 = sbr.rel (%p24) target = $region29
  $region28: #{transformer_forward.31} parent=0 // pred_region
    %27 = vst [vmem:[#allocation2] sm:$0xff] 0.0
    %28 = vst [vmem:[#allocation2 + $0x8] sm:$0xff] 0.0
  $region29: #{transformer_forward.31} parent=0 // pred_fallthru
    _
  %v29 = vld [vmem:[#allocation2] sm:$0xff]
  %v30 = vld [vmem:[#allocation2 + $0x8] sm:$0xff]
  %v31 = vld [vmem:[%s0] sm:$0xf]
  %v32 = vld [vmem:[%s0 + $0x4] sm:$0xf]
  %v33 = vld [vmem:[%s1] sm:$0xf]
  %v34 = vld [vmem:[%s1 + $0x4] sm:$0xf]
  %v35 = vld [vmem:[%s1 + $0x8] sm:$0xf]
  %v36 = vld [vmem:[%s1 + $0xc] sm:$0xf]
  %v37 = vld [vmem:[%s1 + $0x10] sm:$0xf]
  %v38 = vld [vmem:[%s1 + $0x14] sm:$0xf]
  %v39 = vld [vmem:[%s1 + $0x18] sm:$0xf]
  %v40 = vld [vmem:[%s1 + $0x1c] sm:$0xf]
  %v41 = vld [vmem:[%s1 + $0x20] sm:$0xf]
  %v42 = vld [vmem:[%s1 + $0x24] sm:$0xf]
  %v43 = vld [vmem:[%s1 + $0x28] sm:$0xf]
  %v44 = vld [vmem:[%s1 + $0x2c] sm:$0xf]
  %v45 = vld [vmem:[%s1 + $0x30] sm:$0xf]
  %v46 = vld [vmem:[%s1 + $0x34] sm:$0xf]
  %v47 = vld [vmem:[%s1 + $0x38] sm:$0xf]
  %v48 = vld [vmem:[%s1 + $0x3c] sm:$0xf]
  %v51 = vunpack.c.l.b16 %v31
  %v52 = vunpack.c.l.b16 %v32
  %v53 = vpack.c.b16 %v52, %v51
  %v71 = vunpack.c.l.b16 %v33
  %v72 = vunpack.c.l.b16 %v34
  %v73 = vunpack.c.l.b16 %v35
  %v74 = vunpack.c.l.b16 %v36
  %v75 = vunpack.c.l.b16 %v37
  %v76 = vunpack.c.l.b16 %v38
  %v77 = vunpack.c.l.b16 %v39
  %v78 = vunpack.c.l.b16 %v40
  %v79 = vunpack.c.l.b16 %v41
  %v80 = vunpack.c.l.b16 %v42
  %v81 = vunpack.c.l.b16 %v43
  %v82 = vunpack.c.l.b16 %v44
  %v83 = vunpack.c.l.b16 %v45
  %v84 = vunpack.c.l.b16 %v46
  %v85 = vunpack.c.l.b16 %v47
  %v86 = vunpack.c.l.b16 %v48
  %v87 = vpack.c.b16 %v72, %v71
  %v88 = vpack.c.b16 %v74, %v73
  %v89 = vpack.c.b16 %v76, %v75
  %v90 = vpack.c.b16 %v78, %v77
  %v91 = vpack.c.b16 %v80, %v79
  %v92 = vpack.c.b16 %v82, %v81
  %v93 = vpack.c.b16 %v84, %v83
  %v94 = vpack.c.b16 %v86, %v85
  %103 = vmatpush.bf16.msra.mxu0 %v94
  %104 = vmatpush.bf16.msra.mxu0 %v93
  %105 = vmatpush.bf16.msra.mxu0 %v92
  %106 = vmatpush.bf16.msra.mxu0 %v91
  %107 = vmatpush.bf16.msra.mxu0 %v90
  %108 = vmatpush.bf16.msra.mxu0 %v89
  %109 = vmatpush.bf16.msra.mxu0 %v88
  %110 = vmatpush.bf16.msra.mxu0 %v87
  %111 = vmatmul.bf16.gmra.mxu0 %v53
  %v112 = vpop.f32.mrf.mxu0
  %v113 = vadd.f32 0.0, %v112
  %v114 = vpop.f32.mrf.mxu0
  %v115 = vadd.f32 0.0, %v114
  %116 = vdwg.mxu0
  %v117 = vadd.f32 %v29, %v113
  %v118 = vadd.f32 %v30, %v115
  %119 = vst [vmem:[#allocation2] sm:$0xff] %v117
  %120 = vst [vmem:[#allocation2 + $0x8] sm:$0xff] %v118
  // Predicated region
  $region30: #{transformer_forward.31} parent=0 // pred_check
    %p121 = pneg %p23
  $region31: #{transformer_forward.31} parent=0 // pred_check_branch
    %123 = sbr.rel (%p121) target = $region33
  $region32: #{transformer_forward.31} parent=0 // pred_region
    %v124 = vld [vmem:[#allocation2] sm:$0xff]
    %v125 = vld [vmem:[#allocation2 + $0x8] sm:$0xff]
    %v126 = vld [vmem:[%s2] sm:$0x1]
    %v128 = vperm.slane %v126, 0
    %v130 = vadd.f32 %v124, %v128
    %v131 = vadd.f32 %v125, %v128
    %v132 = vld [vmem:[%s3] sm:$0xf]
    %v133 = vld [vmem:[%s3 + $0x4] sm:$0xf]
    %v134 = vunpack.c.l.bf16 %v132
    %v135 = vunpack.c.l.bf16 %v133
    %v136 = vadd.f32 %v130, %v134
    %v137 = vadd.f32 %v131, %v135
    %138 = vadd.xlane.f32.xlu0 %v136
    %v139 = vpop.xlane.xlu0 %138
    %140 = vadd.xlane.f32.xlu0 %v137
    %v141 = vpop.xlane.xlu0 %140
    %v142 = vrcp.pop 128.0
    %v143 = vmul.f32 128.0, %v142
    %v144 = vsub.f32 1.0, %v143
    %v145 = vmul.f32 %v142, %v144
    %v146 = vadd.f32 %v142, %v145
    %vm147 = vweird.f32 %v142
    %v148 = vsel %vm147, %v142, %v146
    %v149 = vmul.f32 %v139, %v148
    %v150 = vmul.f32 %v141, %v148
    %v151 = vsub.f32 %v136, %v149
    %v152 = vsub.f32 %v137, %v150
    %v153 = vmul.f32 %v151, %v151
    %v154 = vmul.f32 %v152, %v152
    %155 = vadd.xlane.f32.xlu0 %v153
    %v156 = vpop.xlane.xlu0 %155
    %157 = vadd.xlane.f32.xlu0 %v154
    %v158 = vpop.xlane.xlu0 %157
    %v159 = vmul.f32 %v156, %v148
    %v160 = vmul.f32 %v158, %v148
    %v161 = vadd.f32 %v159, 1e-05
    %v162 = vadd.f32 %v160, 1e-05
    %v163 = vrsqrt.pop %v161
    %v164 = vmul.f32 %v163, %v161
    %v165 = vmul.f32 %v164, %v163
    %v166 = vmul.f32 0.5, %v165
    %v167 = vsub.f32 1.5, %v166
    %v168 = vmul.f32 %v163, %v167
    %vm169 = vweird.f32 %v161
    %vm170 = vweird.f32 %v163
    %vm171 = vmor %vm169, %vm170
    %v172 = vsel %vm171, %v163, %v168
    %v173 = vrsqrt.pop %v162
    %v174 = vmul.f32 %v173, %v162
    %v175 = vmul.f32 %v174, %v173
    %v176 = vmul.f32 0.5, %v175
    %v177 = vsub.f32 1.5, %v176
    %v178 = vmul.f32 %v173, %v177
    %vm179 = vweird.f32 %v162
    %vm180 = vweird.f32 %v173
    %vm181 = vmor %vm179, %vm180
    %v182 = vsel %vm181, %v173, %v178
    %v183 = vmul.f32 %v151, %v172
    %v184 = vmul.f32 %v152, %v182
    %v185 = vld [vmem:[%s4] sm:$0x1]
    %v187 = vperm.slane %v185, 0
    %v189 = vmul.f32 %v183, %v187
    %v190 = vmul.f32 %v184, %v187
    %v191 = vld [vmem:[%s5] sm:$0x1]
    %v193 = vperm.slane %v191, 0
    %v195 = vadd.f32 %v189, %v193
    %v196 = vadd.f32 %v190, %v193
    %v197 = vpack.c.bf16 %v195, %v195
    %v198 = vpack.c.bf16 %v196, %v196
    %199 = vst [vmem:[%s6] sm:$0xf] %v197
    %200 = vst [vmem:[%s6 + $0x4] sm:$0xf] %v198
  $region33: #{transformer_forward.31} parent=0 // pred_fallthru
    _
  // Predicated region
  $region34: #{transformer_forward.31} parent=0 // pred_check
    _
  $region35: #{transformer_forward.31} parent=0 // pred_check_branch
    %202 = sbr.rel (0) target = $region37
  $region36: #{transformer_forward.31} parent=0 // pred_region
    _
  $region37: #{transformer_forward.31} parent=0 // pred_fallthru
    _
  // Predicated region
  $region38: #{transformer_forward.31} parent=0 // pred_check
    _
  $region39: #{transformer_forward.31} parent=0 // pred_check_branch
    %204 = sbr.rel (0) target = $region41
  $region40: #{transformer_forward.31} parent=0 // pred_region
    _
  $region41: #{transformer_forward.31} parent=0 // pred_fallthru
    _

// kernel: transformer_forward.32
$region0: #{transformer_forward.32}
  #allocation0 [shape = 'u32[]', space=smem, size = 0x4, offset = 0x4, fixed_abs, tag = 'smem constant byte address 0x4 - core index']
  #allocation1 [shape = 'u32[72,128]{1,0:T(1,128)}', space=vmem, size = 0x9000, scoped, tag = 'internal scratch']
  #allocation2 [shape = 'f32[16,256]{1,0:T(8,128)}', space=vmem, size = 0x4000, scoped, tag = 'scratch operand']
  %s0 = inlined_call_operand.vmem [shape: bf16[16,128], index: 0, kind: input, shape index: {}]
  %s1 = inlined_call_operand.hbm [shape: bf16[128,256], index: 1, kind: input, shape index: {}]
  %s2 = inlined_call_operand.vmem [shape: f32[1,256], index: 2, kind: input, shape index: {}]
  %s3 = inlined_call_operand.vmem [shape: bf16[16,256], index: 3, kind: output, shape index: {}]
  %s4 = sld [smem:[#allocation0]]
  $region34: #{transformer_forward.32} parent=0
    _
  %s6 = ssub.s32 1, %s4
  %s7 = scalar_select 0, %s6, %s4
  $region1: #{transformer_forward.32} parent=0
    #allocation3 [shape = 'u8[65536]{0}', space=vmem, size = 0x10000, scoped, tag = 'input window, operand 1, single buffered']
    #allocation4 [shape = 's32[1]{0}', space=sflag, size = 0x4, scoped, tag = 'scoped memory for transformer_forward.32']
    %8 = vsyncpa [#allocation4], 0
    // Predicated region
    $region2: #{transformer_forward.32} parent=1 // pred_check
      _
    $region3: #{transformer_forward.32} parent=1 // pred_check_branch
      %10 = sbr.rel (0) target = $region5
    $region4: #{transformer_forward.32} parent=1 // pred_region
      _
    $region5: #{transformer_forward.32} parent=1 // pred_fallthru
      _
    // Predicated region
    $region6: #{transformer_forward.32} parent=1 // pred_check
      _
    $region7: #{transformer_forward.32} parent=1 // pred_check_branch
      %12 = sbr.rel (0) target = $region9
    $region8: #{transformer_forward.32} parent=1 // pred_region
      %14 = vsyncadd [#allocation4], 0
      %s15 = sshll.u32 %s1, 4
      %s16 = int_to_ptr.hbm [resolvable:$true] %s15
      %s17 = sshll.u32 [#allocation3], 4
      %s18 = int_to_ptr.vmem [resolvable:$true] %s17
      %23 = dma.hbm_to_vmem [thread:$0]  %s16, 2048, %s18, [#allocation4], 128, 128, 8
    $region9: #{transformer_forward.32} parent=1 // pred_fallthru
      _
    // Predicated region
    $region10: #{transformer_forward.32} parent=1 // pred_check
      _
    $region11: #{transformer_forward.32} parent=1 // pred_check_branch
      %25 = sbr.rel (0) target = $region13
    $region12: #{transformer_forward.32} parent=1 // pred_region
      _
    $region13: #{transformer_forward.32} parent=1 // pred_fallthru
      _
    // Predicated region
    $region14: #{transformer_forward.32} parent=1 // pred_check
      _
    $region15: #{transformer_forward.32} parent=1 // pred_check_branch
      %27 = sbr.rel (0) target = $region17
    $region16: #{transformer_forward.32} parent=1 // pred_region
      %29 = dma.done [#allocation4], 2048
    $region17: #{transformer_forward.32} parent=1 // pred_fallthru
      _
    %p30 = scmp.eq.s32.totalorder 0, 0
    // Predicated region
    $region18: #{transformer_forward.32} parent=1 // pred_check
      %p31 = pneg %p30
    $region19: #{transformer_forward.32} parent=1 // pred_check_branch
      %33 = sbr.rel (%p31) target = $region21
    $region20: #{transformer_forward.32} parent=1 // pred_region
      %34 = vst [vmem:[#allocation2] sm:$0xff] 0.0
      %35 = vst [vmem:[#allocation2 + $0x8] sm:$0xff] 0.0
      %36 = vst [vmem:[#allocation2 + $0x10] sm:$0xff] 0.0
      %37 = vst [vmem:[#allocation2 + $0x18] sm:$0xff] 0.0
    $region21: #{transformer_forward.32} parent=1 // pred_fallthru
      _
    %v38 = vld [vmem:[#allocation2] sm:$0xff]
    %v39 = vld [vmem:[#allocation2 + $0x8] sm:$0xff]
    %v40 = vld [vmem:[#allocation2 + $0x10] sm:$0xff]
    %v41 = vld [vmem:[#allocation2 + $0x18] sm:$0xff]
    %v42 = vld [vmem:[%s0] sm:$0xf]
    %v43 = vld [vmem:[%s0 + $0x4] sm:$0xf]
    %v44 = vld [vmem:[#allocation3] sm:$0xff]
    %v45 = vld [vmem:[#allocation3 + $0x8] sm:$0xff]
    %v46 = vld [vmem:[#allocation3 + $0x10] sm:$0xff]
    %v47 = vld [vmem:[#allocation3 + $0x18] sm:$0xff]
    %v48 = vld [vmem:[#allocation3 + $0x20] sm:$0xff]
    %v49 = vld [vmem:[#allocation3 + $0x28] sm:$0xff]
    %v50 = vld [vmem:[#allocation3 + $0x30] sm:$0xff]
    %v51 = vld [vmem:[#allocation3 + $0x38] sm:$0xff]
    %v52 = vld [vmem:[#allocation3 + $0x40] sm:$0xff]
    %v53 = vld [vmem:[#allocation3 + $0x48] sm:$0xff]
    %v54 = vld [vmem:[#allocation3 + $0x50] sm:$0xff]
    %v55 = vld [vmem:[#allocation3 + $0x58] sm:$0xff]
    %v56 = vld [vmem:[#allocation3 + $0x60] sm:$0xff]
    %v57 = vld [vmem:[#allocation3 + $0x68] sm:$0xff]
    %v58 = vld [vmem:[#allocation3 + $0x70] sm:$0xff]
    %v59 = vld [vmem:[#allocation3 + $0x78] sm:$0xff]
    %v62 = vunpack.c.l.b16 %v42
    %v63 = vunpack.c.l.b16 %v43
    %v64 = vpack.c.b16 %v63, %v62
    %v82 = vunpack.c.l.b16 %v44
    %v83 = vunpack.c.h.b16 %v44
    %v84 = vunpack.c.l.b16 %v45
    %v85 = vunpack.c.h.b16 %v45
    %v86 = vunpack.c.l.b16 %v46
    %v87 = vunpack.c.h.b16 %v46
    %v88 = vunpack.c.l.b16 %v47
    %v89 = vunpack.c.h.b16 %v47
    %v90 = vunpack.c.l.b16 %v48
    %v91 = vunpack.c.h.b16 %v48
    %v92 = vunpack.c.l.b16 %v49
    %v93 = vunpack.c.h.b16 %v49
    %v94 = vunpack.c.l.b16 %v50
    %v95 = vunpack.c.h.b16 %v50
    %v96 = vunpack.c.l.b16 %v51
    %v97 = vunpack.c.h.b16 %v51
    %v98 = vunpack.c.l.b16 %v52
    %v99 = vunpack.c.h.b16 %v52
    %v100 = vunpack.c.l.b16 %v53
    %v101 = vunpack.c.h.b16 %v53
    %v102 = vunpack.c.l.b16 %v54
    %v103 = vunpack.c.h.b16 %v54
    %v104 = vunpack.c.l.b16 %v55
    %v105 = vunpack.c.h.b16 %v55
    %v106 = vunpack.c.l.b16 %v56
    %v107 = vunpack.c.h.b16 %v56
    %v108 = vunpack.c.l.b16 %v57
    %v109 = vunpack.c.h.b16 %v57
    %v110 = vunpack.c.l.b16 %v58
    %v111 = vunpack.c.h.b16 %v58
    %v112 = vunpack.c.l.b16 %v59
    %v113 = vunpack.c.h.b16 %v59
    %v114 = vpack.c.b16 %v84, %v82
    %v115 = vpack.c.b16 %v85, %v83
    %v116 = vpack.c.b16 %v88, %v86
    %v117 = vpack.c.b16 %v89, %v87
    %v118 = vpack.c.b16 %v92, %v90
    %v119 = vpack.c.b16 %v93, %v91
    %v120 = vpack.c.b16 %v96, %v94
    %v121 = vpack.c.b16 %v97, %v95
    %v122 = vpack.c.b16 %v100, %v98
    %v123 = vpack.c.b16 %v101, %v99
    %v124 = vpack.c.b16 %v104, %v102
    %v125 = vpack.c.b16 %v105, %v103
    %v126 = vpack.c.b16 %v108, %v106
    %v127 = vpack.c.b16 %v109, %v107
    %v128 = vpack.c.b16 %v112, %v110
    %v129 = vpack.c.b16 %v113, %v111
    %146 = vmatpush.bf16.msra.mxu0 %v128
    %147 = vmatpush.bf16.msra.mxu0 %v126
    %148 = vmatpush.bf16.msra.mxu0 %v124
    %149 = vmatpush.bf16.msra.mxu0 %v122
    %150 = vmatpush.bf16.msra.mxu0 %v120
    %151 = vmatpush.bf16.msra.mxu0 %v118
    %152 = vmatpush.bf16.msra.mxu0 %v116
    %153 = vmatpush.bf16.msra.mxu0 %v114
    %154 = vmatmul.bf16.gmra.mxu0 %v64
    %v155 = vpop.f32.mrf.mxu0
    %v156 = vadd.f32 0.0, %v155
    %v157 = vpop.f32.mrf.mxu0
    %v158 = vadd.f32 0.0, %v157
    %159 = vdwg.mxu0
    %160 = vmatpush.bf16.msra.mxu0 %v129
    %161 = vmatpush.bf16.msra.mxu0 %v127
    %162 = vmatpush.bf16.msra.mxu0 %v125
    %163 = vmatpush.bf16.msra.mxu0 %v123
    %164 = vmatpush.bf16.msra.mxu0 %v121
    %165 = vmatpush.bf16.msra.mxu0 %v119
    %166 = vmatpush.bf16.msra.mxu0 %v117
    %167 = vmatpush.bf16.msra.mxu0 %v115
    %168 = vmatmul.bf16.gmra.mxu0 %v64
    %v169 = vpop.f32.mrf.mxu0
    %v170 = vadd.f32 0.0, %v169
    %v171 = vpop.f32.mrf.mxu0
    %v172 = vadd.f32 0.0, %v171
    %173 = vdwg.mxu0
    %v174 = vadd.f32 %v38, %v156
    %v175 = vadd.f32 %v39, %v170
    %v176 = vadd.f32 %v40, %v158
    %v177 = vadd.f32 %v41, %v172
    %178 = vst [vmem:[#allocation2] sm:$0xff] %v174
    %179 = vst [vmem:[#allocation2 + $0x8] sm:$0xff] %v175
    %180 = vst [vmem:[#allocation2 + $0x10] sm:$0xff] %v176
    %181 = vst [vmem:[#allocation2 + $0x18] sm:$0xff] %v177
    // Predicated region
    $region22: #{transformer_forward.32} parent=1 // pred_check
      %p182 = pneg %p30
    $region23: #{transformer_forward.32} parent=1 // pred_check_branch
      %184 = sbr.rel (%p182) target = $region25
    $region24: #{transformer_forward.32} parent=1 // pred_region
      %v185 = vld [vmem:[#allocation2] sm:$0xff]
      %v186 = vld [vmem:[#allocation2 + $0x8] sm:$0xff]
      %v187 = vld [vmem:[#allocation2 + $0x10] sm:$0xff]
      %v188 = vld [vmem:[#allocation2 + $0x18] sm:$0xff]
      %v189 = vld [vmem:[%s2] sm:$0x3]
      %v191 = vperm.slane %v189, 0
      %v192 = vperm.slane %v189, 1
      %v195 = vadd.f32 %v185, %v191
      %v196 = vadd.f32 %v186, %v192
      %v197 = vadd.f32 %v187, %v191
      %v198 = vadd.f32 %v188, %v192
      %v199 = vmax.f32 %v195, 0.0
      %v200 = vmax.f32 %v196, 0.0
      %v201 = vmax.f32 %v197, 0.0
      %v202 = vmax.f32 %v198, 0.0
      %v203 = vpack.c.bf16 %v200, %v199
      %v204 = vpack.c.bf16 %v202, %v201
      %205 = vst [vmem:[%s3] sm:$0xff] %v203
      %206 = vst [vmem:[%s3 + $0x8] sm:$0xff] %v204
    $region25: #{transformer_forward.32} parent=1 // pred_fallthru
      _
    // Predicated region
    $region26: #{transformer_forward.32} parent=1 // pred_check
      _
    $region27: #{transformer_forward.32} parent=1 // pred_check_branch
      %208 = sbr.rel (0) target = $region29
    $region28: #{transformer_forward.32} parent=1 // pred_region
      _
    $region29: #{transformer_forward.32} parent=1 // pred_fallthru
      _
    // Predicated region
    $region30: #{transformer_forward.32} parent=1 // pred_check
      _
    $region31: #{transformer_forward.32} parent=1 // pred_check_branch
      %210 = sbr.rel (0) target = $region33
    $region32: #{transformer_forward.32} parent=1 // pred_region
      _
    $region33: #{transformer_forward.32} parent=1 // pred_fallthru
      _
    %211 = vsyncpa [#allocation4], 1

// kernel: transformer_forward.29
$region0: #{transformer_forward.29}
  #allocation0 [shape = 'u32[]', space=smem, size = 0x4, offset = 0x4, fixed_abs, tag = 'smem constant byte address 0x4 - core index']
  #allocation1 [shape = 'u32[72,128]{1,0:T(1,128)}', space=vmem, size = 0x9000, scoped, tag = 'internal scratch']
  #allocation2 [shape = 'f32[16,384]{1,0:T(8,128)}', space=vmem, size = 0x6000, scoped, tag = 'scratch operand']
  %s0 = inlined_call_operand.vmem [shape: bf16[16,128], index: 0, kind: input, shape index: {}]
  %s1 = inlined_call_operand.vmem [shape: bf16[128,384], index: 1, kind: input, shape index: {}]
  %s2 = inlined_call_operand.vmem [shape: f32[1,384], index: 2, kind: input, shape index: {}]
  %s3 = inlined_call_operand.vmem [shape: bf16[16,384], index: 3, kind: output, shape index: {}]
  %s4 = sld [smem:[#allocation0]]
  $region30: #{transformer_forward.29} parent=0
    _
  %s6 = ssub.s32 1, %s4
  %s7 = scalar_select 0, %s6, %s4
  // Predicated region
  $region2: #{transformer_forward.29} parent=0 // pred_check
    _
  $region3: #{transformer_forward.29} parent=0 // pred_check_branch
    %9 = sbr.rel (0) target = $region5
  $region4: #{transformer_forward.29} parent=0 // pred_region
    _
  $region5: #{transformer_forward.29} parent=0 // pred_fallthru
    _
  // Predicated region
  $region6: #{transformer_forward.29} parent=0 // pred_check
    _
  $region7: #{transformer_forward.29} parent=0 // pred_check_branch
    %11 = sbr.rel (0) target = $region9
  $region8: #{transformer_forward.29} parent=0 // pred_region
    _
  $region9: #{transformer_forward.29} parent=0 // pred_fallthru
    _
  // Predicated region
  $region10: #{transformer_forward.29} parent=0 // pred_check
    _
  $region11: #{transformer_forward.29} parent=0 // pred_check_branch
    %13 = sbr.rel (0) target = $region13
  $region12: #{transformer_forward.29} parent=0 // pred_region
    _
  $region13: #{transformer_forward.29} parent=0 // pred_fallthru
    _
  %p14 = scmp.eq.s32.totalorder 0, 0
  // Predicated region
  $region14: #{transformer_forward.29} parent=0 // pred_check
    %p15 = pneg %p14
  $region15: #{transformer_forward.29} parent=0 // pred_check_branch
    %17 = sbr.rel (%p15) target = $region17
  $region16: #{transformer_forward.29} parent=0 // pred_region
    %18 = vst [vmem:[#allocation2] sm:$0xff] 0.0
    %19 = vst [vmem:[#allocation2 + $0x8] sm:$0xff] 0.0
    %20 = vst [vmem:[#allocation2 + $0x10] sm:$0xff] 0.0
    %21 = vst [vmem:[#allocation2 + $0x18] sm:$0xff] 0.0
    %22 = vst [vmem:[#allocation2 + $0x20] sm:$0xff] 0.0
    %23 = vst [vmem:[#allocation2 + $0x28] sm:$0xff] 0.0
  $region17: #{transformer_forward.29} parent=0 // pred_fallthru
    _
  %v24 = vld [vmem:[#allocation2] sm:$0xff]
  %v25 = vld [vmem:[#allocation2 + $0x8] sm:$0xff]
  %v26 = vld [vmem:[#allocation2 + $0x10] sm:$0xff]
  %v27 = vld [vmem:[#allocation2 + $0x18] sm:$0xff]
  %v28 = vld [vmem:[#allocation2 + $0x20] sm:$0xff]
  %v29 = vld [vmem:[#allocation2 + $0x28] sm:$0xff]
  %v30 = vld [vmem:[%s0] sm:$0xf]
  %v31 = vld [vmem:[%s0 + $0x4] sm:$0xf]
  %v32 = vld [vmem:[%s1] sm:$0xff]
  %v33 = vld [vmem:[%s1 + $0x8] sm:$0xf]
  %v34 = vld [vmem:[%s1 + $0xc] sm:$0xff]
  %v35 = vld [vmem:[%s1 + $0x14] sm:$0xf]
  %v36 = vld [vmem:[%s1 + $0x18] sm:$0xff]
  %v37 = vld [vmem:[%s1 + $0x20] sm:$0xf]
  %v38 = vld [vmem:[%s1 + $0x24] sm:$0xff]
  %v39 = vld [vmem:[%s1 + $0x2c] sm:$0xf]
  %v40 = vld [vmem:[%s1 + $0x30] sm:$0xff]
  %v41 = vld [vmem:[%s1 + $0x38] sm:$0xf]
  %v42 = vld [vmem:[%s1 + $0x3c] sm:$0xff]
  %v43 = vld [vmem:[%s1 + $0x44] sm:$0xf]
  %v44 = vld [vmem:[%s1 + $0x48] sm:$0xff]
  %v45 = vld [vmem:[%s1 + $0x50] sm:$0xf]
  %v46 = vld [vmem:[%s1 + $0x54] sm:$0xff]
  %v47 = vld [vmem:[%s1 + $0x5c] sm:$0xf]
  %v48 = vld [vmem:[%s1 + $0x60] sm:$0xff]
  %v49 = vld [vmem:[%s1 + $0x68] sm:$0xf]
  %v50 = vld [vmem:[%s1 + $0x6c] sm:$0xff]
  %v51 = vld [vmem:[%s1 + $0x74] sm:$0xf]
  %v52 = vld [vmem:[%s1 + $0x78] sm:$0xff]
  %v53 = vld [vmem:[%s1 + $0x80] sm:$0xf]
  %v54 = vld [vmem:[%s1 + $0x84] sm:$0xff]
  %v55 = vld [vmem:[%s1 + $0x8c] sm:$0xf]
  %v56 = vld [vmem:[%s1 + $0x90] sm:$0xff]
  %v57 = vld [vmem:[%s1 + $0x98] sm:$0xf]
  %v58 = vld [vmem:[%s1 + $0x9c] sm:$0xff]
  %v59 = vld [vmem:[%s1 + $0xa4] sm:$0xf]
  %v60 = vld [vmem:[%s1 + $0xa8] sm:$0xff]
  %v61 = vld [vmem:[%s1 + $0xb0] sm:$0xf]
  %v62 = vld [vmem:[%s1 + $0xb4] sm:$0xff]
  %v63 = vld [vmem:[%s1 + $0xbc] sm:$0xf]
  %v66 = vunpack.c.l.b16 %v30
  %v67 = vunpack.c.l.b16 %v31
  %v68 = vpack.c.b16 %v67, %v66
  %v102 = vunpack.c.l.b16 %v32
  %v103 = vunpack.c.h.b16 %v32
  %v104 = vunpack.c.l.b16 %v33
  %v105 = vunpack.c.l.b16 %v34
  %v106 = vunpack.c.h.b16 %v34
  %v107 = vunpack.c.l.b16 %v35
  %v108 = vunpack.c.l.b16 %v36
  %v109 = vunpack.c.h.b16 %v36
  %v110 = vunpack.c.l.b16 %v37
  %v111 = vunpack.c.l.b16 %v38
  %v112 = vunpack.c.h.b16 %v38
  %v113 = vunpack.c.l.b16 %v39
  %v114 = vunpack.c.l.b16 %v40
  %v115 = vunpack.c.h.b16 %v40
  %v116 = vunpack.c.l.b16 %v41
  %v117 = vunpack.c.l.b16 %v42
  %v118 = vunpack.c.h.b16 %v42
  %v119 = vunpack.c.l.b16 %v43
  %v120 = vunpack.c.l.b16 %v44
  %v121 = vunpack.c.h.b16 %v44
  %v122 = vunpack.c.l.b16 %v45
  %v123 = vunpack.c.l.b16 %v46
  %v124 = vunpack.c.h.b16 %v46
  %v125 = vunpack.c.l.b16 %v47
  %v126 = vunpack.c.l.b16 %v48
  %v127 = vunpack.c.h.b16 %v48
  %v128 = vunpack.c.l.b16 %v49
  %v129 = vunpack.c.l.b16 %v50
  %v130 = vunpack.c.h.b16 %v50
  %v131 = vunpack.c.l.b16 %v51
  %v132 = vunpack.c.l.b16 %v52
  %v133 = vunpack.c.h.b16 %v52
  %v134 = vunpack.c.l.b16 %v53
  %v135 = vunpack.c.l.b16 %v54
  %v136 = vunpack.c.h.b16 %v54
  %v137 = vunpack.c.l.b16 %v55
  %v138 = vunpack.c.l.b16 %v56
  %v139 = vunpack.c.h.b16 %v56
  %v140 = vunpack.c.l.b16 %v57
  %v141 = vunpack.c.l.b16 %v58
  %v142 = vunpack.c.h.b16 %v58
  %v143 = vunpack.c.l.b16 %v59
  %v144 = vunpack.c.l.b16 %v60
  %v145 = vunpack.c.h.b16 %v60
  %v146 = vunpack.c.l.b16 %v61
  %v147 = vunpack.c.l.b16 %v62
  %v148 = vunpack.c.h.b16 %v62
  %v149 = vunpack.c.l.b16 %v63
  %v150 = vpack.c.b16 %v105, %v102
  %v151 = vpack.c.b16 %v106, %v103
  %v152 = vpack.c.b16 %v107, %v104
  %v153 = vpack.c.b16 %v111, %v108
  %v154 = vpack.c.b16 %v112, %v109
  %v155 = vpack.c.b16 %v113, %v110
  %v156 = vpack.c.b16 %v117, %v114
  %v157 = vpack.c.b16 %v118, %v115
  %v158 = vpack.c.b16 %v119, %v116
  %v159 = vpack.c.b16 %v123, %v120
  %v160 = vpack.c.b16 %v124, %v121
  %v161 = vpack.c.b16 %v125, %v122
  %v162 = vpack.c.b16 %v129, %v126
  %v163 = vpack.c.b16 %v130, %v127
  %v164 = vpack.c.b16 %v131, %v128
  %v165 = vpack.c.b16 %v135, %v132
  %v166 = vpack.c.b16 %v136, %v133
  %v167 = vpack.c.b16 %v137, %v134
  %v168 = vpack.c.b16 %v141, %v138
  %v169 = vpack.c.b16 %v142, %v139
  %v170 = vpack.c.b16 %v143, %v140
  %v171 = vpack.c.b16 %v147, %v144
  %v172 = vpack.c.b16 %v148, %v145
  %v173 = vpack.c.b16 %v149, %v146
  %198 = vmatpush.bf16.msra.mxu0 %v171
  %199 = vmatpush.bf16.msra.mxu0 %v168
  %200 = vmatpush.bf16.msra.mxu0 %v165
  %201 = vmatpush.bf16.msra.mxu0 %v162
  %202 = vmatpush.bf16.msra.mxu0 %v159
  %203 = vmatpush.bf16.msra.mxu0 %v156
  %204 = vmatpush.bf16.msra.mxu0 %v153
  %205 = vmatpush.bf16.msra.mxu0 %v150
  %206 = vmatmul.bf16.gmra.mxu0 %v68
  %v207 = vpop.f32.mrf.mxu0
  %v208 = vadd.f32 0.0, %v207
  %v209 = vpop.f32.mrf.mxu0
  %v210 = vadd.f32 0.0, %v209
  %211 = vdwg.mxu0
  %212 = vmatpush.bf16.msra.mxu0 %v172
  %213 = vmatpush.bf16.msra.mxu0 %v169
  %214 = vmatpush.bf16.msra.mxu0 %v166
  %215 = vmatpush.bf16.msra.mxu0 %v163
  %216 = vmatpush.bf16.msra.mxu0 %v160
  %217 = vmatpush.bf16.msra.mxu0 %v157
  %218 = vmatpush.bf16.msra.mxu0 %v154
  %219 = vmatpush.bf16.msra.mxu0 %v151
  %220 = vmatmul.bf16.gmra.mxu0 %v68
  %v221 = vpop.f32.mrf.mxu0
  %v222 = vadd.f32 0.0, %v221
  %v223 = vpop.f32.mrf.mxu0
  %v224 = vadd.f32 0.0, %v223
  %225 = vdwg.mxu0
  %226 = vmatpush.bf16.msra.mxu0 %v173
  %227 = vmatpush.bf16.msra.mxu0 %v170
  %228 = vmatpush.bf16.msra.mxu0 %v167
  %229 = vmatpush.bf16.msra.mxu0 %v164
  %230 = vmatpush.bf16.msra.mxu0 %v161
  %231 = vmatpush.bf16.msra.mxu0 %v158
  %232 = vmatpush.bf16.msra.mxu0 %v155
  %233 = vmatpush.bf16.msra.mxu0 %v152
  %234 = vmatmul.bf16.gmra.mxu0 %v68
  %v235 = vpop.f32.mrf.mxu0
  %v236 = vadd.f32 0.0, %v235
  %v237 = vpop.f32.mrf.mxu0
  %v238 = vadd.f32 0.0, %v237
  %239 = vdwg.mxu0
  %v240 = vadd.f32 %v24, %v208
  %v241 = vadd.f32 %v25, %v222
  %v242 = vadd.f32 %v26, %v236
  %v243 = vadd.f32 %v27, %v210
  %v244 = vadd.f32 %v28, %v224
  %v245 = vadd.f32 %v29, %v238
  %246 = vst [vmem:[#allocation2] sm:$0xff] %v240
  %247 = vst [vmem:[#allocation2 + $0x8] sm:$0xff] %v241
  %248 = vst [vmem:[#allocation2 + $0x10] sm:$0xff] %v242
  %249 = vst [vmem:[#allocation2 + $0x18] sm:$0xff] %v243
  %250 = vst [vmem:[#allocation2 + $0x20] sm:$0xff] %v244
  %251 = vst [vmem:[#allocation2 + $0x28] sm:$0xff] %v245
  // Predicated region
  $region18: #{transformer_forward.29} parent=0 // pred_check
    %p252 = pneg %p14
  $region19: #{transformer_forward.29} parent=0 // pred_check_branch
    %254 = sbr.rel (%p252) target = $region21
  $region20: #{transformer_forward.29} parent=0 // pred_region
    %v255 = vld [vmem:[#allocation2] sm:$0xff]
    %v256 = vld [vmem:[#allocation2 + $0x8] sm:$0xff]
    %v257 = vld [vmem:[#allocation2 + $0x10] sm:$0xff]
    %v258 = vld [vmem:[#allocation2 + $0x18] sm:$0xff]
    %v259 = vld [vmem:[#allocation2 + $0x20] sm:$0xff]
    %v260 = vld [vmem:[#allocation2 + $0x28] sm:$0xff]
    %v261 = vld [vmem:[%s2] sm:$0x7]
    %v263 = vperm.slane %v261, 0
    %v264 = vperm.slane %v261, 1
    %v265 = vperm.slane %v261, 2
    %v269 = vadd.f32 %v255, %v263
    %v270 = vadd.f32 %v256, %v264
    %v271 = vadd.f32 %v257, %v265
    %v272 = vadd.f32 %v258, %v263
    %v273 = vadd.f32 %v259, %v264
    %v274 = vadd.f32 %v260, %v265
    %v275 = vpack.c.bf16 %v270, %v269
    %v276 = vpack.c.bf16 %v271, %v271
    %v277 = vpack.c.bf16 %v273, %v272
    %v278 = vpack.c.bf16 %v274, %v274
    %279 = vst [vmem:[%s3] sm:$0xff] %v275
    %280 = vst [vmem:[%s3 + $0x8] sm:$0xf] %v276
    %281 = vst [vmem:[%s3 + $0xc] sm:$0xff] %v277
    %282 = vst [vmem:[%s3 + $0x14] sm:$0xf] %v278
  $region21: #{transformer_forward.29} parent=0 // pred_fallthru
    _
  // Predicated region
  $region22: #{transformer_forward.29} parent=0 // pred_check
    _
  $region23: #{transformer_forward.29} parent=0 // pred_check_branch
    %284 = sbr.rel (0) target = $region25
  $region24: #{transformer_forward.29} parent=0 // pred_region
    _
  $region25: #{transformer_forward.29} parent=0 // pred_fallthru
    _
  // Predicated region
  $region26: #{transformer_forward.29} parent=0 // pred_check
    _
  $region27: #{transformer_forward.29} parent=0 // pred_check_branch
    %286 = sbr.rel (0) target = $region29
  $region28: #{transformer_forward.29} parent=0 // pred_region
    _
  $region29: #{transformer_forward.29} parent=0 // pred_fallthru
    _

// kernel: transformer_forward.30
$region0: #{transformer_forward.30}
  #allocation0 [shape = 'u32[]', space=smem, size = 0x4, offset = 0x4, fixed_abs, tag = 'smem constant byte address 0x4 - core index']
  #allocation1 [shape = 'u32[72,128]{1,0:T(1,128)}', space=vmem, size = 0x9000, scoped, tag = 'internal scratch']
  #allocation2 [shape = 'f32[4,8,1]{2,1,0:T(8,128)}', space=vmem, size = 0x4000, scoped, tag = 'scratch operand']
  #allocation3 [shape = 'f32[4,8,1]{2,1,0:T(8,128)}', space=vmem, size = 0x4000, scoped, tag = 'scratch operand']
  #allocation4 [shape = 'f32[4,8,32]{2,1,0:T(8,128)}', space=vmem, size = 0x4000, scoped, tag = 'scratch operand']
  %s0 = inlined_call_operand.vmem [shape: bf16[2,8,384], index: 0, kind: input, shape index: {}, may-alias: {0,1,2}]
  %s1 = inlined_call_operand.vmem [shape: bf16[2,8,384], index: 1, kind: input, shape index: {}, may-alias: {0,1,2}]
  %s2 = inlined_call_operand.vmem [shape: bf16[2,8,384], index: 2, kind: input, shape index: {}, may-alias: {0,1,2}]
  %s3 = inlined_call_operand.vmem [shape: f32[2,1,8], index: 3, kind: input, shape index: {}]
  %s4 = inlined_call_operand.vmem [shape: bf16[2,8,128], index: 4, kind: output, shape index: {}]
  %s5 = sld [smem:[#allocation0]]
  $region57: #{transformer_forward.30} parent=0
    _
  %s7 = ssub.s32 1, %s5
  %s8 = scalar_select 0, %s7, %s5
  loop: start=0, step=1, limit=4
  $region2: #{transformer_forward.30} parent=0 // loop_pre_header
    _
  $region3: #{transformer_forward.30} parent=0 // loop_header
    %s10 = sphi 0, %s14
    %p11 = scmp.ge.s32.totalorder %s10, 4
    %s17 = sphi 0, %s36
    %s18 = sphi 0, %s32
    %s19 = sphi 0, %s28
    %s20 = sphi 0, %s17
    %s21 = sphi 0, %s18
    %s22 = sphi 0, %s19
    %s23 = sphi 0, %s20
    %s24 = sphi 0, %s21
    %s25 = sphi 0, %s22
    %s41 = sphi 0, %s43
    %s44 = sphi 0, %s41
    %s45 = sphi 0, %s44
    %s61 = sphi 0, %s45
    %s69 = sphi 0, %s71
    %s72 = sphi 0, %s69
    %s73 = sphi 0, %s72
    %s89 = sphi 0, %s73
    %s97 = sphi 0, %s99
    %s100 = sphi 0, %s97
    %s101 = sphi 0, %s100
    %s117 = sphi 0, %s101
    %s125 = sphi 0, %s127
    %s128 = sphi 0, %s125
    %s129 = sphi 0, %s128
    %s145 = sphi 0, %s129
    %s153 = sphi 0, %s155
    %s156 = sphi 0, %s153
    %s157 = sphi 0, %s156
    %s173 = sphi 0, %s157
  $region4: #{transformer_forward.30} parent=0 // loop_header_branch
    %13 = sbr.rel (%p11) target = $region8
  $region5: #{transformer_forward.30} parent=0 // loop_body
    %s15 = ssub.s32 %s10, 1
    %s16 = ssub.s32 %s10, 2
    %s26 = sadd.s32 1, %s19
    %p27 = scmp.ge.s32.totalorder %s26, 1
    %s28 = scalar_select %p27, 0, %s26
    %s29 = sadd.s32 1, %s18
    %s30 = scalar_select %p27, %s29, %s18
    %p31 = scmp.ge.s32.totalorder %s30, 1
    %s32 = scalar_select %p31, 0, %s30
    %s33 = sadd.s32 1, %s17
    %s34 = scalar_select %p31, %s33, %s17
    %p35 = scmp.ge.s32.totalorder %s34, 2
    %s36 = scalar_select %p35, 0, %s34
    %s37 = ssub.s32 %s17, %s36
    %s38 = ssub.s32 %s18, %s32
    %s39 = sor.u32 %s37, %s38
    %p40 = scmp.eq.s32.totalorder %s39, 0
    %s42 = sadd.s32 %s41, 1
    %s43 = scalar_select %p40, %s41, %s42
    %p46 = pneg %p40
    %p47 = scmp.eq.s32.totalorder %s10, 1
    %p48 = por %p46, %p47
    %p49 = scmp.ne.s32.totalorder %s41, %s44
    %p50 = scmp.eq.s32.totalorder %s10, 0
    %p51 = por %p49, %p50
    %p52 = scmp.ne.s32.totalorder %s41, %s44
    %p53 = scmp.eq.s32.totalorder %s15, 1
    %p54 = por %p52, %p53
    %p55 = scmp.ne.s32.totalorder %s44, %s45
    %p56 = scmp.eq.s32.totalorder %s15, 0
    %p57 = por %p55, %p56
    %p58 = scmp.ne.s32.totalorder %s44, %s45
    %p59 = scmp.eq.s32.totalorder %s16, 1
    %p60 = por %p58, %p59
    %p62 = scmp.ne.s32.totalorder %s45, %s61
    %p63 = scmp.eq.s32.totalorder %s16, 0
    %p64 = por %p62, %p63
    %s65 = ssub.s32 %s17, %s36
    %s66 = ssub.s32 %s19, %s28
    %s67 = sor.u32 %s65, %s66
    %p68 = scmp.eq.s32.totalorder %s67, 0
    %s70 = sadd.s32 %s69, 1
    %s71 = scalar_select %p68, %s69, %s70
    %p74 = pneg %p68
    %p75 = scmp.eq.s32.totalorder %s10, 1
    %p76 = por %p74, %p75
    %p77 = scmp.ne.s32.totalorder %s69, %s72
    %p78 = scmp.eq.s32.totalorder %s10, 0
    %p79 = por %p77, %p78
    %p80 = scmp.ne.s32.totalorder %s69, %s72
    %p81 = scmp.eq.s32.totalorder %s15, 1
    %p82 = por %p80, %p81
    %p83 = scmp.ne.s32.totalorder %s72, %s73
    %p84 = scmp.eq.s32.totalorder %s15, 0
    %p85 = por %p83, %p84
    %p86 = scmp.ne.s32.totalorder %s72, %s73
    %p87 = scmp.eq.s32.totalorder %s16, 1
    %p88 = por %p86, %p87
    %p90 = scmp.ne.s32.totalorder %s73, %s89
    %p91 = scmp.eq.s32.totalorder %s16, 0
    %p92 = por %p90, %p91
    %s93 = ssub.s32 %s17, %s36
    %s94 = ssub.s32 %s19, %s28
    %s95 = sor.u32 %s93, %s94
    %p96 = scmp.eq.s32.totalorder %s95, 0
    %s98 = sadd.s32 %s97, 1
    %s99 = scalar_select %p96, %s97, %s98
    %p102 = pneg %p96
    %p103 = scmp.eq.s32.totalorder %s10, 1
    %p104 = por %p102, %p103
    %p105 = scmp.ne.s32.totalorder %s97, %s100
    %p106 = scmp.eq.s32.totalorder %s10, 0
    %p107 = por %p105, %p106
    %p108 = scmp.ne.s32.totalorder %s97, %s100
    %p109 = scmp.eq.s32.totalorder %s15, 1
    %p110 = por %p108, %p109
    %p111 = scmp.ne.s32.totalorder %s100, %s101
    %p112 = scmp.eq.s32.totalorder %s15, 0
    %p113 = por %p111, %p112
    %p114 = scmp.ne.s32.totalorder %s100, %s101
    %p115 = scmp.eq.s32.totalorder %s16, 1
    %p116 = por %p114, %p115
    %p118 = scmp.ne.s32.totalorder %s101, %s117
    %p119 = scmp.eq.s32.totalorder %s16, 0
    %p120 = por %p118, %p119
    %s121 = ssub.s32 %s17, %s36
    %s122 = ssub.s32 %s19, %s28
    %s123 = sor.u32 %s121, %s122
    %p124 = scmp.eq.s32.totalorder %s123, 0
    %s126 = sadd.s32 %s125, 1
    %s127 = scalar_select %p124, %s125, %s126
    %p130 = pneg %p124
    %p131 = scmp.eq.s32.totalorder %s10, 1
    %p132 = por %p130, %p131
    %p133 = scmp.ne.s32.totalorder %s125, %s128
    %p134 = scmp.eq.s32.totalorder %s10, 0
    %p135 = por %p133, %p134
    %p136 = scmp.ne.s32.totalorder %s125, %s128
    %p137 = scmp.eq.s32.totalorder %s15, 1
    %p138 = por %p136, %p137
    %p139 = scmp.ne.s32.totalorder %s128, %s129
    %p140 = scmp.eq.s32.totalorder %s15, 0
    %p141 = por %p139, %p140
    %p142 = scmp.ne.s32.totalorder %s128, %s129
    %p143 = scmp.eq.s32.totalorder %s16, 1
    %p144 = por %p142, %p143
    %p146 = scmp.ne.s32.totalorder %s129, %s145
    %p147 = scmp.eq.s32.totalorder %s16, 0
    %p148 = por %p146, %p147
    %s149 = ssub.s32 %s17, %s36
    %s150 = ssub.s32 %s18, %s32
    %s151 = sor.u32 %s149, %s150
    %p152 = scmp.eq.s32.totalorder %s151, 0
    %s154 = sadd.s32 %s153, 1
    %s155 = scalar_select %p152, %s153, %s154
    %p158 = pneg %p152
    %p159 = scmp.eq.s32.totalorder %s10, 1
    %p160 = por %p158, %p159
    %p161 = scmp.ne.s32.totalorder %s153, %s156
    %p162 = scmp.eq.s32.totalorder %s10, 0
    %p163 = por %p161, %p162
    %p164 = scmp.ne.s32.totalorder %s153, %s156
    %p165 = scmp.eq.s32.totalorder %s15, 1
    %p166 = por %p164, %p165
    %p167 = scmp.ne.s32.totalorder %s156, %s157
    %p168 = scmp.eq.s32.totalorder %s15, 0
    %p169 = por %p167, %p168
    %p170 = scmp.ne.s32.totalorder %s156, %s157
    %p171 = scmp.eq.s32.totalorder %s16, 1
    %p172 = por %p170, %p171
    %p174 = scmp.ne.s32.totalorder %s157, %s173
    %p175 = scmp.eq.s32.totalorder %s16, 0
    %p176 = por %p174, %p175
    %p177 = scmp.le.s32.totalorder 1, %s10
    %p178 = scmp.lt.s32.totalorder %s10, 3
    %p179 = pnand %p177, %p178
    %p180 = pneg %p179
    // Predicated region
    $region9: #{transformer_forward.30} parent=5 // pred_check
      _
    $region10: #{transformer_forward.30} parent=5 // pred_check_branch
      %182 = sbr.rel (%p179) target = $region12
    $region11: #{transformer_forward.30} parent=5 // pred_region
      %s183 = ssub.s32 %s10, 1
    $region12: #{transformer_forward.30} parent=5 // pred_fallthru
      _
    %p184 = scmp.lt.s32.totalorder %s10, 2
    // Predicated region
    $region13: #{transformer_forward.30} parent=5 // pred_check
      %p185 = pneg %p184
    $region14: #{transformer_forward.30} parent=5 // pred_check_branch
      %187 = sbr.rel (%p185) target = $region16
    $region15: #{transformer_forward.30} parent=5 // pred_region
      // Predicated region
      $region17: #{transformer_forward.30} parent=15 // pred_check
        %p188 = pneg %p51
      $region18: #{transformer_forward.30} parent=15 // pred_check_branch
        %190 = sbr.rel (%p188) target = $region20
      $region19: #{transformer_forward.30} parent=15 // pred_region
        %p191 = scmp.lt.s32.totalorder %s17, 1
        %s192 = scalar_select %p191, %s17, 1
        %p193 = scmp.lt.s32.totalorder %s18, 0
        %s194 = scalar_select %p193, %s18, 0
        %s195 = smul.addr %s194, 3
        %s196 = smul.addr %s192, 3
        %s197 = sadd.s32 %s195, %s196
        %s198 = smul.addr %s197, 4
        %s199 = scalar_lea.vmem %s0, %s198
      $region20: #{transformer_forward.30} parent=15 // pred_fallthru
        _
      // Predicated region
      $region21: #{transformer_forward.30} parent=15 // pred_check
        %p200 = pneg %p79
      $region22: #{transformer_forward.30} parent=15 // pred_check_branch
        %202 = sbr.rel (%p200) target = $region24
      $region23: #{transformer_forward.30} parent=15 // pred_region
        %p203 = scmp.lt.s32.totalorder %s17, 1
        %s204 = scalar_select %p203, %s17, 1
        %p205 = scmp.lt.s32.totalorder %s19, 0
        %s206 = scalar_select %p205, %s19, 0
        %s207 = smul.addr %s206, 3
        %s208 = sadd.s32 1, %s207
        %s209 = smul.addr %s204, 3
        %s210 = sadd.s32 %s208, %s209
        %s211 = smul.addr %s210, 4
        %s212 = scalar_lea.vmem %s1, %s211
      $region24: #{transformer_forward.30} parent=15 // pred_fallthru
        _
      // Predicated region
      $region25: #{transformer_forward.30} parent=15 // pred_check
        %p213 = pneg %p107
      $region26: #{transformer_forward.30} parent=15 // pred_check_branch
        %215 = sbr.rel (%p213) target = $region28
      $region27: #{transformer_forward.30} parent=15 // pred_region
        %p216 = scmp.lt.s32.totalorder %s17, 1
        %s217 = scalar_select %p216, %s17, 1
        %p218 = scmp.lt.s32.totalorder %s19, 0
        %s219 = scalar_select %p218, %s19, 0
        %s220 = smul.addr %s219, 3
        %s221 = sadd.s32 2, %s220
        %s222 = smul.addr %s217, 3
        %s223 = sadd.s32 %s221, %s222
        %s224 = smul.addr %s223, 4
        %s225 = scalar_lea.vmem %s2, %s224
      $region28: #{transformer_forward.30} parent=15 // pred_fallthru
        _
      // Predicated region
      $region29: #{transformer_forward.30} parent=15 // pred_check
        %p226 = pneg %p135
      $region30: #{transformer_forward.30} parent=15 // pred_check_branch
        %228 = sbr.rel (%p226) target = $region32
      $region31: #{transformer_forward.30} parent=15 // pred_region
        %p229 = scmp.lt.s32.totalorder %s17, 1
        %s230 = scalar_select %p229, %s17, 1
        %p231 = scmp.lt.s32.totalorder %s19, 0
        %s232 = scalar_select %p231, %s19, 0
        %s233 = sadd.s32 %s232, %s230
        %s234 = scalar_lea.vmem %s3, %s233
      $region32: #{transformer_forward.30} parent=15 // pred_fallthru
        _
    $region16: #{transformer_forward.30} parent=5 // pred_fallthru
      _
    %p235 = scmp.le.s32.totalorder 1, %s10
    %p236 = scmp.lt.s32.totalorder %s10, 3
    %p237 = pnand %p235, %p236
    %p238 = pneg %p237
    // Predicated region
    $region33: #{transformer_forward.30} parent=5 // pred_check
      _
    $region34: #{transformer_forward.30} parent=5 // pred_check_branch
      %240 = sbr.rel (%p237) target = $region36
    $region35: #{transformer_forward.30} parent=5 // pred_region
      %s241 = ssub.s32 %s10, 1
      %p242 = scmp.lt.s32.totalorder %s20, 1
      %s243 = scalar_select %p242, %s20, 1
      %p244 = scmp.lt.s32.totalorder %s21, 0
      %s245 = scalar_select %p244, %s21, 0
      %s246 = smul.addr %s245, 3
      %s247 = smul.addr %s243, 3
      %s248 = sadd.s32 %s246, %s247
      %s249 = smul.addr %s248, 4
      %s250 = scalar_lea.vmem %s0, %s249
      %p251 = pneg %p57
      %p252 = pneg %p54
      %p253 = scmp.lt.s32.totalorder %s20, 1
      %s254 = scalar_select %p253, %s20, 1
      %p255 = scmp.lt.s32.totalorder %s22, 0
      %s256 = scalar_select %p255, %s22, 0
      %s257 = smul.addr %s256, 3
      %s258 = sadd.s32 1, %s257
      %s259 = smul.addr %s254, 3
      %s260 = sadd.s32 %s258, %s259
      %s261 = smul.addr %s260, 4
      %s262 = scalar_lea.vmem %s1, %s261
      %p263 = pneg %p85
      %p264 = pneg %p82
      %p265 = scmp.lt.s32.totalorder %s20, 1
      %s266 = scalar_select %p265, %s20, 1
      %p267 = scmp.lt.s32.totalorder %s22, 0
      %s268 = scalar_select %p267, %s22, 0
      %s269 = smul.addr %s268, 3
      %s270 = sadd.s32 2, %s269
      %s271 = smul.addr %s266, 3
      %s272 = sadd.s32 %s270, %s271
      %s273 = smul.addr %s272, 4
      %s274 = scalar_lea.vmem %s2, %s273
      %p275 = pneg %p113
      %p276 = pneg %p110
      %p277 = scmp.lt.s32.totalorder %s20, 1
      %s278 = scalar_select %p277, %s20, 1
      %p279 = scmp.lt.s32.totalorder %s22, 0
      %s280 = scalar_select %p279, %s22, 0
      %s281 = sadd.s32 %s280, %s278
      %s282 = scalar_lea.vmem %s3, %s281
      %p283 = pneg %p141
      %p284 = pneg %p138
      %p285 = pneg %p169
      %p286 = pneg %p166
      %p287 = scmp.lt.s32.totalorder %s20, 1
      %s288 = scalar_select %p287, %s20, 1
      %p289 = scmp.lt.s32.totalorder %s21, 0
      %s290 = scalar_select %p289, %s21, 0
      %s291 = sadd.s32 %s290, %s288
      %s292 = smul.addr %s291, 4
      %s293 = scalar_lea.vmem %s4, %s292
      %p294 = scmp.lt.s32.totalorder %s20, 1
      %s295 = scalar_select %p294, %s20, 1
      %p296 = scmp.lt.s32.totalorder %s21, 0
      %s297 = scalar_select %p296, %s21, 0
      %s298 = smul.addr %s297, 3
      %s299 = smul.addr %s295, 3
      %s300 = sadd.s32 %s298, %s299
      %s301 = smul.addr %s300, 4
      %s302 = scalar_lea.vmem %s0, %s301
      %p303 = scmp.lt.s32.totalorder %s20, 1
      %s304 = scalar_select %p303, %s20, 1
      %p305 = scmp.lt.s32.totalorder %s22, 0
      %s306 = scalar_select %p305, %s22, 0
      %s307 = smul.addr %s306, 3
      %s308 = sadd.s32 1, %s307
      %s309 = smul.addr %s304, 3
      %s310 = sadd.s32 %s308, %s309
      %s311 = smul.addr %s310, 4
      %s312 = scalar_lea.vmem %s1, %s311
      %p313 = scmp.lt.s32.totalorder %s20, 1
      %s314 = scalar_select %p313, %s20, 1
      %p315 = scmp.lt.s32.totalorder %s22, 0
      %s316 = scalar_select %p315, %s22, 0
      %s317 = smul.addr %s316, 3
      %s318 = sadd.s32 2, %s317
      %s319 = smul.addr %s314, 3
      %s320 = sadd.s32 %s318, %s319
      %s321 = smul.addr %s320, 4
      %s322 = scalar_lea.vmem %s2, %s321
      %p323 = scmp.lt.s32.totalorder %s20, 1
      %s324 = scalar_select %p323, %s20, 1
      %p325 = scmp.lt.s32.totalorder %s22, 0
      %s326 = scalar_select %p325, %s22, 0
      %s327 = sadd.s32 %s326, %s324
      %s328 = scalar_lea.vmem %s3, %s327
      %p329 = scmp.lt.s32.totalorder %s20, 1
      %s330 = scalar_select %p329, %s20, 1
      %p331 = scmp.lt.s32.totalorder %s21, 0
      %s332 = scalar_select %p331, %s21, 0
      %s333 = sadd.s32 %s332, %s330
      %s334 = smul.addr %s333, 4
      %s335 = scalar_lea.vmem %s4, %s334
      %p337 = scmp.eq.s32.totalorder %s22, 0
      // Predicated region
      $region37: #{transformer_forward.30} parent=35 // pred_check
        %p338 = pneg %p337
      $region38: #{transformer_forward.30} parent=35 // pred_check_branch
        %340 = sbr.rel (%p338) target = $region40
      $region39: #{transformer_forward.30} parent=35 // pred_region
        %vm341 = vcmask 7168
        %342 = vst.msk [vmem:[#allocation2] sm:$0xff] %vm341, -inf
        %343 = vst.msk [vmem:[#allocation2 + $0x8] sm:$0xff] %vm341, -inf
        %344 = vst.msk [vmem:[#allocation2 + $0x10] sm:$0xff] %vm341, -inf
        %345 = vst.msk [vmem:[#allocation2 + $0x18] sm:$0xff] %vm341, -inf
        %346 = vst.msk [vmem:[#allocation3] sm:$0xff] %vm341, 0.0
        %347 = vst.msk [vmem:[#allocation3 + $0x8] sm:$0xff] %vm341, 0.0
        %348 = vst.msk [vmem:[#allocation3 + $0x10] sm:$0xff] %vm341, 0.0
        %349 = vst.msk [vmem:[#allocation3 + $0x18] sm:$0xff] %vm341, 0.0
        %vm350 = vcmask 261120
        %351 = vst.msk [vmem:[#allocation4] sm:$0xff] %vm350, 0.0
        %352 = vst.msk [vmem:[#allocation4 + $0x8] sm:$0xff] %vm350, 0.0
        %353 = vst.msk [vmem:[#allocation4 + $0x10] sm:$0xff] %vm350, 0.0
        %354 = vst.msk [vmem:[#allocation4 + $0x18] sm:$0xff] %vm350, 0.0
      $region40: #{transformer_forward.30} parent=35 // pred_fallthru
        _
      %v355 = vld [vmem:[%s302] sm:$0xf]
      %v356 = vld [vmem:[%s312] sm:$0xf]
      %v357 = vld [vmem:[%s322] sm:$0xf]
      %v358 = vld [vmem:[%s328] sm:$0x1]
      %vm359 = vcmp.gt.f32.partialorder %v358, 0.5
      %v360 = vsel %vm359, -1e+09, 0.0
      %v362 = vperm.slane %v360, 0
      %vm364 = vcmask 261120
      %v366 = vsel %vm364, %v355, 0
      %v369 = vsel %vm364, %v356, 0
      %371 = vmatpush.bf16.xpose.msra.mxu0 0
      %372 = vmatpush.bf16.xpose.msra.mxu0 0
      %373 = vmatpush.bf16.xpose.msra.mxu0 0
      %374 = vmatpush.bf16.xpose.msra.mxu0 0
      %375 = vmatpush.bf16.xpose.msra.mxu0 0
      %376 = vmatpush.bf16.xpose.msra.mxu0 0
      %377 = vmatpush.bf16.xpose.msra.mxu0 0
      %378 = vmatpush.bf16.xpose.msra.mxu0 %v369
      %379 = vmatmul.bf16.gmra.mxu0 %v366
      %v380 = vpop.f32.mrf.mxu0
      %v381 = vadd.f32 %v362, %v380
      %v382 = vpop.f32.mrf.mxu0
      %383 = vdwg.mxu0
      %v384 = vld [vmem:[#allocation2] sm:$0xff]
      %vm385 = vcmask 64512
      %v386 = vsel %vm385, %v381, -inf
      %387 = vmax.xlane.f32.xlu0 %v386
      %v388 = vpop.xlane.xlu0 %387
      %v389 = vmax.f32 %v384, %v388
      %v390 = vsub.f32 %v384, %v389
      %v391 = vmul.f32 %v390, 1.442695
      %v392 = vpow.pop %v391
      %394 = vset.pattern.permute.xlu0 0
      %395 = vperm.xlu0 %394, %v389
      %v396 = vpop.permute.xlu0 %395
      %v398 = vsub.f32 %v381, %v396
      %v399 = vmul.f32 %v398, 1.442695
      %v400 = vpow.pop %v399
      %v401 = vld [vmem:[#allocation3] sm:$0xff]
      %v402 = vmul.f32 %v392, %v401
      %v403 = vsel %vm385, %v400, 0.0
      %404 = vadd.xlane.f32.xlu0 %v403
      %v405 = vpop.xlane.xlu0 %404
      %v406 = vadd.f32 %v402, %v405
      %vm407 = vcmask 7168
      %408 = vst.msk [vmem:[#allocation3] sm:$0xff] %vm407, %v406
      %v409 = vpack.c.bf16 %v400, %v400
      %v411 = vsel %vm385, %v409, 0
      %vm413 = vcmask 1043456
      %v415 = vsel %vm413, %v357, 0
      %417 = vmatpush.bf16.msra.mxu0 0
      %418 = vmatpush.bf16.msra.mxu0 0
      %419 = vmatpush.bf16.msra.mxu0 0
      %420 = vmatpush.bf16.msra.mxu0 0
      %421 = vmatpush.bf16.msra.mxu0 0
      %422 = vmatpush.bf16.msra.mxu0 0
      %423 = vmatpush.bf16.msra.mxu0 0
      %424 = vmatpush.bf16.msra.mxu0 %v415
      %425 = vmatmul.bf16.gmra.mxu0 %v411
      %v426 = vpop.f32.mrf.mxu0
      %v427 = vadd.f32 0.0, %v426
      %v428 = vpop.f32.mrf.mxu0
      %429 = vdwg.mxu0
      %v430 = vld [vmem:[#allocation4] sm:$0xff]
      %432 = vset.pattern.permute.xlu0 0
      %433 = vperm.xlu0 %432, %v392
      %v434 = vpop.permute.xlu0 %433
      %v436 = vmul.f32 %v434, %v430
      %v437 = vadd.f32 %v436, %v427
      %438 = vst.msk [vmem:[#allocation4] sm:$0xff] %vm364, %v437
      %439 = vst.msk [vmem:[#allocation2] sm:$0xff] %vm407, %v389
      %v441 = vunpack.c.l.b16 %v355
      %v442 = vpack.c.b16 %v441, %v441
      %443 = vrot.lane.b32.xlu0 %v442, 96
      %v444 = vpop.permute.xlu0 %443
      %v446 = vunpack.c.l.b16 %v356
      %v447 = vpack.c.b16 %v446, %v446
      %448 = vrot.lane.b32.xlu0 %v447, 96
      %v449 = vpop.permute.xlu0 %448
      %v451 = vsel %vm364, %v444, 0
      %v454 = vsel %vm364, %v449, 0
      %456 = vmatpush.bf16.xpose.msra.mxu0 0
      %457 = vmatpush.bf16.xpose.msra.mxu0 0
      %458 = vmatpush.bf16.xpose.msra.mxu0 0
      %459 = vmatpush.bf16.xpose.msra.mxu0 0
      %460 = vmatpush.bf16.xpose.msra.mxu0 0
      %461 = vmatpush.bf16.xpose.msra.mxu0 0
      %462 = vmatpush.bf16.xpose.msra.mxu0 0
      %463 = vmatpush.bf16.xpose.msra.mxu0 %v454
      %464 = vmatmul.bf16.gmra.mxu0 %v451
      %v465 = vpop.f32.mrf.mxu0
      %v466 = vadd.f32 %v362, %v465
      %v467 = vpop.f32.mrf.mxu0
      %468 = vdwg.mxu0
      %s469 = scalar_lea.vmem [#allocation2], 8
      %v470 = vld [vmem:[%s469] sm:$0xff]
      %v471 = vsel %vm385, %v466, -inf
      %472 = vmax.xlane.f32.xlu0 %v471
      %v473 = vpop.xlane.xlu0 %472
      %v474 = vmax.f32 %v470, %v473
      %v475 = vsub.f32 %v470, %v474
      %v476 = vmul.f32 %v475, 1.442695
      %v477 = vpow.pop %v476
      %479 = vset.pattern.permute.xlu0 0
      %480 = vperm.xlu0 %479, %v474
      %v481 = vpop.permute.xlu0 %480
      %v483 = vsub.f32 %v466, %v481
      %v484 = vmul.f32 %v483, 1.442695
      %v485 = vpow.pop %v484
      %s486 = scalar_lea.vmem [#allocation3], 8
      %v487 = vld [vmem:[%s486] sm:$0xff]
      %v488 = vmul.f32 %v477, %v487
      %v489 = vsel %vm385, %v485, 0.0
      %490 = vadd.xlane.f32.xlu0 %v489
      %v491 = vpop.xlane.xlu0 %490
      %v492 = vadd.f32 %v488, %v491
      %493 = vst.msk [vmem:[%s486] sm:$0xff] %vm407, %v492
      %v494 = vpack.c.bf16 %v485, %v485
      %v496 = vunpack.c.l.b16 %v357
      %v497 = vpack.c.b16 %v496, %v496
      %498 = vrot.lane.b32.xlu0 %v497, 96
      %v499 = vpop.permute.xlu0 %498
      %v501 = vsel %vm385, %v494, 0
      %v504 = vsel %vm413, %v499, 0
      %506 = vmatpush.bf16.msra.mxu0 0
      %507 = vmatpush.bf16.msra.mxu0 0
      %508 = vmatpush.bf16.msra.mxu0 0
      %509 = vmatpush.bf16.msra.mxu0 0
      %510 = vmatpush.bf16.msra.mxu0 0
      %511 = vmatpush.bf16.msra.mxu0 0
      %512 = vmatpush.bf16.msra.mxu0 0
      %513 = vmatpush.bf16.msra.mxu0 %v504
      %514 = vmatmul.bf16.gmra.mxu0 %v501
      %v515 = vpop.f32.mrf.mxu0
      %v516 = vadd.f32 0.0, %v515
      %v517 = vpop.f32.mrf.mxu0
      %518 = vdwg.mxu0
      %s519 = scalar_lea.vmem [#allocation4], 8
      %v520 = vld [vmem:[%s519] sm:$0xff]
      %522 = vset.pattern.permute.xlu0 0
      %523 = vperm.xlu0 %522, %v477
      %v524 = vpop.permute.xlu0 %523
      %v526 = vmul.f32 %v524, %v520
      %v527 = vadd.f32 %v526, %v516
      %528 = vst.msk [vmem:[%s519] sm:$0xff] %vm364, %v527
      %529 = vst.msk [vmem:[%s469] sm:$0xff] %vm407, %v474
      %530 = vrot.lane.b32.xlu0 %v442, 64
      %v531 = vpop.permute.xlu0 %530
      %532 = vrot.lane.b32.xlu0 %v447, 64
      %v533 = vpop.permute.xlu0 %532
      %v535 = vsel %vm364, %v531, 0
      %v538 = vsel %vm364, %v533, 0
      %540 = vmatpush.bf16.xpose.msra.mxu0 0
      %541 = vmatpush.bf16.xpose.msra.mxu0 0
      %542 = vmatpush.bf16.xpose.msra.mxu0 0
      %543 = vmatpush.bf16.xpose.msra.mxu0 0
      %544 = vmatpush.bf16.xpose.msra.mxu0 0
      %545 = vmatpush.bf16.xpose.msra.mxu0 0
      %546 = vmatpush.bf16.xpose.msra.mxu0 0
      %547 = vmatpush.bf16.xpose.msra.mxu0 %v538
      %548 = vmatmul.bf16.gmra.mxu0 %v535
      %v549 = vpop.f32.mrf.mxu0
      %v550 = vadd.f32 %v362, %v549
      %v551 = vpop.f32.mrf.mxu0
      %552 = vdwg.mxu0
      %s553 = scalar_lea.vmem [#allocation2], 16
      %v554 = vld [vmem:[%s553] sm:$0xff]
      %v555 = vsel %vm385, %v550, -inf
      %556 = vmax.xlane.f32.xlu0 %v555
      %v557 = vpop.xlane.xlu0 %556
      %v558 = vmax.f32 %v554, %v557
      %v559 = vsub.f32 %v554, %v558
      %v560 = vmul.f32 %v559, 1.442695
      %v561 = vpow.pop %v560
      %563 = vset.pattern.permute.xlu0 0
      %564 = vperm.xlu0 %563, %v558
      %v565 = vpop.permute.xlu0 %564
      %v567 = vsub.f32 %v550, %v565
      %v568 = vmul.f32 %v567, 1.442695
      %v569 = vpow.pop %v568
      %s570 = scalar_lea.vmem [#allocation3], 16
      %v571 = vld [vmem:[%s570] sm:$0xff]
      %v572 = vmul.f32 %v561, %v571
      %v573 = vsel %vm385, %v569, 0.0
      %574 = vadd.xlane.f32.xlu0 %v573
      %v575 = vpop.xlane.xlu0 %574
      %v576 = vadd.f32 %v572, %v575
      %577 = vst.msk [vmem:[%s570] sm:$0xff] %vm407, %v576
      %v578 = vpack.c.bf16 %v569, %v569
      %579 = vrot.lane.b32.xlu0 %v497, 64
      %v580 = vpop.permute.xlu0 %579
      %v582 = vsel %vm385, %v578, 0
      %v585 = vsel %vm413, %v580, 0
      %587 = vmatpush.bf16.msra.mxu0 0
      %588 = vmatpush.bf16.msra.mxu0 0
      %589 = vmatpush.bf16.msra.mxu0 0
      %590 = vmatpush.bf16.msra.mxu0 0
      %591 = vmatpush.bf16.msra.mxu0 0
      %592 = vmatpush.bf16.msra.mxu0 0
      %593 = vmatpush.bf16.msra.mxu0 0
      %594 = vmatpush.bf16.msra.mxu0 %v585
      %595 = vmatmul.bf16.gmra.mxu0 %v582
      %v596 = vpop.f32.mrf.mxu0
      %v597 = vadd.f32 0.0, %v596
      %v598 = vpop.f32.mrf.mxu0
      %599 = vdwg.mxu0
      %s600 = scalar_lea.vmem [#allocation4], 16
      %v601 = vld [vmem:[%s600] sm:$0xff]
      %603 = vset.pattern.permute.xlu0 0
      %604 = vperm.xlu0 %603, %v561
      %v605 = vpop.permute.xlu0 %604
      %v607 = vmul.f32 %v605, %v601
      %v608 = vadd.f32 %v607, %v597
      %609 = vst.msk [vmem:[%s600] sm:$0xff] %vm364, %v608
      %610 = vst.msk [vmem:[%s553] sm:$0xff] %vm407, %v558
      %611 = vrot.lane.b32.xlu0 %v442, 32
      %v612 = vpop.permute.xlu0 %611
      %613 = vrot.lane.b32.xlu0 %v447, 32
      %v614 = vpop.permute.xlu0 %613
      %v616 = vsel %vm364, %v612, 0
      %v619 = vsel %vm364, %v614, 0
      %621 = vmatpush.bf16.xpose.msra.mxu0 0
      %622 = vmatpush.bf16.xpose.msra.mxu0 0
      %623 = vmatpush.bf16.xpose.msra.mxu0 0
      %624 = vmatpush.bf16.xpose.msra.mxu0 0
      %625 = vmatpush.bf16.xpose.msra.mxu0 0
      %626 = vmatpush.bf16.xpose.msra.mxu0 0
      %627 = vmatpush.bf16.xpose.msra.mxu0 0
      %628 = vmatpush.bf16.xpose.msra.mxu0 %v619
      %629 = vmatmul.bf16.gmra.mxu0 %v616
      %v630 = vpop.f32.mrf.mxu0
      %v631 = vadd.f32 %v362, %v630
      %v632 = vpop.f32.mrf.mxu0
      %633 = vdwg.mxu0
      %s634 = scalar_lea.vmem [#allocation2], 24
      %v635 = vld [vmem:[%s634] sm:$0xff]
      %v636 = vsel %vm385, %v631, -inf
      %637 = vmax.xlane.f32.xlu0 %v636
      %v638 = vpop.xlane.xlu0 %637
      %v639 = vmax.f32 %v635, %v638
      %v640 = vsub.f32 %v635, %v639
      %v641 = vmul.f32 %v640, 1.442695
      %v642 = vpow.pop %v641
      %644 = vset.pattern.permute.xlu0 0
      %645 = vperm.xlu0 %644, %v639
      %v646 = vpop.permute.xlu0 %645
      %v648 = vsub.f32 %v631, %v646
      %v649 = vmul.f32 %v648, 1.442695
      %v650 = vpow.pop %v649
      %s651 = scalar_lea.vmem [#allocation3], 24
      %v652 = vld [vmem:[%s651] sm:$0xff]
      %v653 = vmul.f32 %v642, %v652
      %v654 = vsel %vm385, %v650, 0.0
      %655 = vadd.xlane.f32.xlu0 %v654
      %v656 = vpop.xlane.xlu0 %655
      %v657 = vadd.f32 %v653, %v656
      %658 = vst.msk [vmem:[%s651] sm:$0xff] %vm407, %v657
      %v659 = vpack.c.bf16 %v650, %v650
      %660 = vrot.lane.b32.xlu0 %v497, 32
      %v661 = vpop.permute.xlu0 %660
      %v663 = vsel %vm385, %v659, 0
      %v666 = vsel %vm413, %v661, 0
      %668 = vmatpush.bf16.msra.mxu0 0
      %669 = vmatpush.bf16.msra.mxu0 0
      %670 = vmatpush.bf16.msra.mxu0 0
      %671 = vmatpush.bf16.msra.mxu0 0
      %672 = vmatpush.bf16.msra.mxu0 0
      %673 = vmatpush.bf16.msra.mxu0 0
      %674 = vmatpush.bf16.msra.mxu0 0
      %675 = vmatpush.bf16.msra.mxu0 %v666
      %676 = vmatmul.bf16.gmra.mxu0 %v663
      %v677 = vpop.f32.mrf.mxu0
      %v678 = vadd.f32 0.0, %v677
      %v679 = vpop.f32.mrf.mxu0
      %680 = vdwg.mxu0
      %s681 = scalar_lea.vmem [#allocation4], 24
      %v682 = vld [vmem:[%s681] sm:$0xff]
      %684 = vset.pattern.permute.xlu0 0
      %685 = vperm.xlu0 %684, %v642
      %v686 = vpop.permute.xlu0 %685
      %v688 = vmul.f32 %v686, %v682
      %v689 = vadd.f32 %v688, %v678
      %690 = vst.msk [vmem:[%s681] sm:$0xff] %vm364, %v689
      %691 = vst.msk [vmem:[%s634] sm:$0xff] %vm407, %v639
      // Predicated region
      $region41: #{transformer_forward.30} parent=35 // pred_check
        %p692 = pneg %p337
      $region42: #{transformer_forward.30} parent=35 // pred_check_branch
        %694 = sbr.rel (%p692) target = $region44
      $region43: #{transformer_forward.30} parent=35 // pred_region
        %v695 = vld [vmem:[#allocation3] sm:$0xff]
        %v696 = vrcp.pop %v695
        %v697 = vld [vmem:[#allocation4] sm:$0xff]
        %699 = vset.pattern.permute.xlu0 0
        %700 = vperm.xlu0 %699, %v696
        %v701 = vpop.permute.xlu0 %700
        %v703 = vmul.f32 %v697, %v701
        %v704 = vpack.c.bf16 %v703, %v703
        %vm705 = vcmask 257024
        %706 = vst.msk [vmem:[%s335] sm:$0xf] %vm705, %v704
        %v707 = vld [vmem:[%s486] sm:$0xff]
        %v708 = vrcp.pop %v707
        %v709 = vld [vmem:[%s519] sm:$0xff]
        %711 = vset.pattern.permute.xlu0 0
        %712 = vperm.xlu0 %711, %v708
        %v713 = vpop.permute.xlu0 %712
        %v715 = vmul.f32 %v709, %v713
        %v716 = vpack.c.bf16 %v715, %v715
        %718 = vrot.lane.b32.xlu0 %v716, 32
        %v719 = vpop.permute.xlu0 %718
        %vm721 = vcmask 519424
        %722 = vst.msk [vmem:[%s335] sm:$0xf] %vm721, %v719
        %v723 = vld [vmem:[%s570] sm:$0xff]
        %v724 = vrcp.pop %v723
        %v725 = vld [vmem:[%s600] sm:$0xff]
        %727 = vset.pattern.permute.xlu0 0
        %728 = vperm.xlu0 %727, %v724
        %v729 = vpop.permute.xlu0 %728
        %v731 = vmul.f32 %v725, %v729
        %v732 = vpack.c.bf16 %v731, %v731
        %734 = vrot.lane.b32.xlu0 %v732, 64
        %v735 = vpop.permute.xlu0 %734
        %vm737 = vcmask 781824
        %738 = vst.msk [vmem:[%s335] sm:$0xf] %vm737, %v735
        %v739 = vld [vmem:[%s651] sm:$0xff]
        %v740 = vrcp.pop %v739
        %v741 = vld [vmem:[%s681] sm:$0xff]
        %743 = vset.pattern.permute.xlu0 0
        %744 = vperm.xlu0 %743, %v740
        %v745 = vpop.permute.xlu0 %744
        %v747 = vmul.f32 %v741, %v745
        %v748 = vpack.c.bf16 %v747, %v747
        %750 = vrot.lane.b32.xlu0 %v748, 96
        %v751 = vpop.permute.xlu0 %750
        %vm753 = vcmask 1044224
        %754 = vst.msk [vmem:[%s335] sm:$0xf] %vm753, %v751
      $region44: #{transformer_forward.30} parent=35 // pred_fallthru
        _
      %p755 = scmp.lt.s32.totalorder %s20, 1
      %s756 = scalar_select %p755, %s20, 1
      %p757 = scmp.lt.s32.totalorder %s21, 0
      %s758 = scalar_select %p757, %s21, 0
      %s759 = sadd.s32 %s758, %s756
      %s760 = smul.addr %s759, 4
      %s761 = scalar_lea.vmem %s4, %s760
      // Predicated region
      $region45: #{transformer_forward.30} parent=35 // pred_check
        %p762 = pneg %p166
      $region46: #{transformer_forward.30} parent=35 // pred_check_branch
        %764 = sbr.rel (%p762) target = $region48
      $region47: #{transformer_forward.30} parent=35 // pred_region
        _
      $region48: #{transformer_forward.30} parent=35 // pred_fallthru
        _
    $region36: #{transformer_forward.30} parent=5 // pred_fallthru
      _
    %p765 = scmp.le.s32.totalorder 2, %s10
    // Predicated region
    $region49: #{transformer_forward.30} parent=5 // pred_check
      %p766 = pneg %p765
    $region50: #{transformer_forward.30} parent=5 // pred_check_branch
      %768 = sbr.rel (%p766) target = $region52
    $region51: #{transformer_forward.30} parent=5 // pred_region
      %s769 = ssub.s32 %s10, 2
      // Predicated region
      $region53: #{transformer_forward.30} parent=51 // pred_check
        %p770 = pneg %p172
      $region54: #{transformer_forward.30} parent=51 // pred_check_branch
        %772 = sbr.rel (%p770) target = $region56
      $region55: #{transformer_forward.30} parent=51 // pred_region
        %p773 = scmp.lt.s32.totalorder %s23, 1
        %s774 = scalar_select %p773, %s23, 1
        %p775 = scmp.lt.s32.totalorder %s24, 0
        %s776 = scalar_select %p775, %s24, 0
        %s777 = sadd.s32 %s776, %s774
        %s778 = smul.addr %s777, 4
        %s779 = scalar_lea.vmem %s4, %s778
      $region56: #{transformer_forward.30} parent=51 // pred_fallthru
        _
    $region52: #{transformer_forward.30} parent=5 // pred_fallthru
      _
  $region6: #{transformer_forward.30} parent=0 // loop_footer
    %s14 = sadd.s32 1, %s10
  $region7: #{transformer_forward.30} parent=0 // loop_footer_branch
    %9 = sbr.rel target = $region3
  $region8: #{transformer_forward.30} parent=0 // loop_exit
    _

// kernel: transformer_forward.52
$region0: #{transformer_forward.52}
  #allocation0 [shape = 'u32[]', space=smem, size = 0x4, offset = 0x4, fixed_abs, tag = 'smem constant byte address 0x4 - core index']
  #allocation1 [shape = 'u32[72,128]{1,0:T(1,128)}', space=vmem, size = 0x9000, scoped, tag = 'internal scratch']
  #allocation2 [shape = 'f32[16,256]{1,0:T(8,128)}', space=vmem, size = 0x4000, scoped, tag = 'scratch operand']
  %s0 = inlined_call_operand.vmem [shape: bf16[16,128], index: 0, kind: input, shape index: {}]
  %s1 = inlined_call_operand.hbm [shape: bf16[128,256], index: 1, kind: input, shape index: {}]
  %s2 = inlined_call_operand.vmem [shape: f32[1,256], index: 2, kind: input, shape index: {}]
  %s3 = inlined_call_operand.vmem [shape: bf16[16,256], index: 3, kind: output, shape index: {}]
  %s4 = sld [smem:[#allocation0]]
  $region34: #{transformer_forward.52} parent=0
    _
  %s6 = ssub.s32 1, %s4
  %s7 = scalar_select 0, %s6, %s4
  $region1: #{transformer_forward.52} parent=0
    #allocation3 [shape = 'u8[65536]{0}', space=vmem, size = 0x10000, scoped, tag = 'input window, operand 1, single buffered']
    #allocation4 [shape = 's32[1]{0}', space=sflag, size = 0x4, scoped, tag = 'scoped memory for transformer_forward.52']
    %8 = vsyncpa [#allocation4], 0
    // Predicated region
    $region2: #{transformer_forward.52} parent=1 // pred_check
      _
    $region3: #{transformer_forward.52} parent=1 // pred_check_branch
      %10 = sbr.rel (0) target = $region5
    $region4: #{transformer_forward.52} parent=1 // pred_region
      _
    $region5: #{transformer_forward.52} parent=1 // pred_fallthru
      _
    // Predicated region
    $region6: #{transformer_forward.52} parent=1 // pred_check
      _
    $region7: #{transformer_forward.52} parent=1 // pred_check_branch
      %12 = sbr.rel (0) target = $region9
    $region8: #{transformer_forward.52} parent=1 // pred_region
      %14 = vsyncadd [#allocation4], 0
      %s15 = sshll.u32 %s1, 4
      %s16 = int_to_ptr.hbm [resolvable:$true] %s15
      %s17 = sshll.u32 [#allocation3], 4
      %s18 = int_to_ptr.vmem [resolvable:$true] %s17
      %23 = dma.hbm_to_vmem [thread:$0]  %s16, 2048, %s18, [#allocation4], 128, 128, 8
    $region9: #{transformer_forward.52} parent=1 // pred_fallthru
      _
    // Predicated region
    $region10: #{transformer_forward.52} parent=1 // pred_check
      _
    $region11: #{transformer_forward.52} parent=1 // pred_check_branch
      %25 = sbr.rel (0) target = $region13
    $region12: #{transformer_forward.52} parent=1 // pred_region
      _
    $region13: #{transformer_forward.52} parent=1 // pred_fallthru
      _
    // Predicated region
    $region14: #{transformer_forward.52} parent=1 // pred_check
      _
    $region15: #{transformer_forward.52} parent=1 // pred_check_branch
      %27 = sbr.rel (0) target = $region17
    $region16: #{transformer_forward.52} parent=1 // pred_region
      %29 = dma.done [#allocation4], 2048
    $region17: #{transformer_forward.52} parent=1 // pred_fallthru
      _
    %p30 = scmp.eq.s32.totalorder 0, 0
    // Predicated region
    $region18: #{transformer_forward.52} parent=1 // pred_check
      %p31 = pneg %p30
    $region19: #{transformer_forward.52} parent=1 // pred_check_branch
      %33 = sbr.rel (%p31) target = $region21
    $region20: #{transformer_forward.52} parent=1 // pred_region
      %34 = vst [vmem:[#allocation2] sm:$0xff] 0.0
      %35 = vst [vmem:[#allocation2 + $0x8] sm:$0xff] 0.0
      %36 = vst [vmem:[#allocation2 + $0x10] sm:$0xff] 0.0
      %37 = vst [vmem:[#allocation2 + $0x18] sm:$0xff] 0.0
    $region21: #{transformer_forward.52} parent=1 // pred_fallthru
      _
    %v38 = vld [vmem:[#allocation2] sm:$0xff]
    %v39 = vld [vmem:[#allocation2 + $0x8] sm:$0xff]
    %v40 = vld [vmem:[#allocation2 + $0x10] sm:$0xff]
    %v41 = vld [vmem:[#allocation2 + $0x18] sm:$0xff]
    %v42 = vld [vmem:[%s0] sm:$0xf]
    %v43 = vld [vmem:[%s0 + $0x4] sm:$0xf]
    %v44 = vld [vmem:[#allocation3] sm:$0xff]
    %v45 = vld [vmem:[#allocation3 + $0x8] sm:$0xff]
    %v46 = vld [vmem:[#allocation3 + $0x10] sm:$0xff]
    %v47 = vld [vmem:[#allocation3 + $0x18] sm:$0xff]
    %v48 = vld [vmem:[#allocation3 + $0x20] sm:$0xff]
    %v49 = vld [vmem:[#allocation3 + $0x28] sm:$0xff]
    %v50 = vld [vmem:[#allocation3 + $0x30] sm:$0xff]
    %v51 = vld [vmem:[#allocation3 + $0x38] sm:$0xff]
    %v52 = vld [vmem:[#allocation3 + $0x40] sm:$0xff]
    %v53 = vld [vmem:[#allocation3 + $0x48] sm:$0xff]
    %v54 = vld [vmem:[#allocation3 + $0x50] sm:$0xff]
    %v55 = vld [vmem:[#allocation3 + $0x58] sm:$0xff]
    %v56 = vld [vmem:[#allocation3 + $0x60] sm:$0xff]
    %v57 = vld [vmem:[#allocation3 + $0x68] sm:$0xff]
    %v58 = vld [vmem:[#allocation3 + $0x70] sm:$0xff]
    %v59 = vld [vmem:[#allocation3 + $0x78] sm:$0xff]
    %v62 = vunpack.c.l.b16 %v42
    %v63 = vunpack.c.l.b16 %v43
    %v64 = vpack.c.b16 %v63, %v62
    %v82 = vunpack.c.l.b16 %v44
    %v83 = vunpack.c.h.b16 %v44
    %v84 = vunpack.c.l.b16 %v45
    %v85 = vunpack.c.h.b16 %v45
    %v86 = vunpack.c.l.b16 %v46
    %v87 = vunpack.c.h.b16 %v46
    %v88 = vunpack.c.l.b16 %v47
    %v89 = vunpack.c.h.b16 %v47
    %v90 = vunpack.c.l.b16 %v48
    %v91 = vunpack.c.h.b16 %v48
    %v92 = vunpack.c.l.b16 %v49
    %v93 = vunpack.c.h.b16 %v49
    %v94 = vunpack.c.l.b16 %v50
    %v95 = vunpack.c.h.b16 %v50
    %v96 = vunpack.c.l.b16 %v51
    %v97 = vunpack.c.h.b16 %v51
    %v98 = vunpack.c.l.b16 %v52
    %v99 = vunpack.c.h.b16 %v52
    %v100 = vunpack.c.l.b16 %v53
    %v101 = vunpack.c.h.b16 %v53
    %v102 = vunpack.c.l.b16 %v54
    %v103 = vunpack.c.h.b16 %v54
    %v104 = vunpack.c.l.b16 %v55
    %v105 = vunpack.c.h.b16 %v55
    %v106 = vunpack.c.l.b16 %v56
    %v107 = vunpack.c.h.b16 %v56
    %v108 = vunpack.c.l.b16 %v57
    %v109 = vunpack.c.h.b16 %v57
    %v110 = vunpack.c.l.b16 %v58
    %v111 = vunpack.c.h.b16 %v58
    %v112 = vunpack.c.l.b16 %v59
    %v113 = vunpack.c.h.b16 %v59
    %v114 = vpack.c.b16 %v84, %v82
    %v115 = vpack.c.b16 %v85, %v83
    %v116 = vpack.c.b16 %v88, %v86
    %v117 = vpack.c.b16 %v89, %v87
    %v118 = vpack.c.b16 %v92, %v90
    %v119 = vpack.c.b16 %v93, %v91
    %v120 = vpack.c.b16 %v96, %v94
    %v121 = vpack.c.b16 %v97, %v95
    %v122 = vpack.c.b16 %v100, %v98
    %v123 = vpack.c.b16 %v101, %v99
    %v124 = vpack.c.b16 %v104, %v102
    %v125 = vpack.c.b16 %v105, %v103
    %v126 = vpack.c.b16 %v108, %v106
    %v127 = vpack.c.b16 %v109, %v107
    %v128 = vpack.c.b16 %v112, %v110
    %v129 = vpack.c.b16 %v113, %v111
    %146 = vmatpush.bf16.msra.mxu0 %v128
    %147 = vmatpush.bf16.msra.mxu0 %v126
    %148 = vmatpush.bf16.msra.mxu0 %v124
    %149 = vmatpush.bf16.msra.mxu0 %v122
    %150 = vmatpush.bf16.msra.mxu0 %v120
    %151 = vmatpush.bf16.msra.mxu0 %v118
    %152 = vmatpush.bf16.msra.mxu0 %v116
    %153 = vmatpush.bf16.msra.mxu0 %v114
    %154 = vmatmul.bf16.gmra.mxu0 %v64
    %v155 = vpop.f32.mrf.mxu0
    %v156 = vadd.f32 0.0, %v155
    %v157 = vpop.f32.mrf.mxu0
    %v158 = vadd.f32 0.0, %v157
    %159 = vdwg.mxu0
    %160 = vmatpush.bf16.msra.mxu0 %v129
    %161 = vmatpush.bf16.msra.mxu0 %v127
    %162 = vmatpush.bf16.msra.mxu0 %v125
    %163 = vmatpush.bf16.msra.mxu0 %v123
    %164 = vmatpush.bf16.msra.mxu0 %v121
    %165 = vmatpush.bf16.msra.mxu0 %v119
    %166 = vmatpush.bf16.msra.mxu0 %v117
    %167 = vmatpush.bf16.msra.mxu0 %v115
    %168 = vmatmul.bf16.gmra.mxu0 %v64
    %v169 = vpop.f32.mrf.mxu0
    %v170 = vadd.f32 0.0, %v169
    %v171 = vpop.f32.mrf.mxu0
    %v172 = vadd.f32 0.0, %v171
    %173 = vdwg.mxu0
    %v174 = vadd.f32 %v38, %v156
    %v175 = vadd.f32 %v39, %v170
    %v176 = vadd.f32 %v40, %v158
    %v177 = vadd.f32 %v41, %v172
    %178 = vst [vmem:[#allocation2] sm:$0xff] %v174
    %179 = vst [vmem:[#allocation2 + $0x8] sm:$0xff] %v175
    %180 = vst [vmem:[#allocation2 + $0x10] sm:$0xff] %v176
    %181 = vst [vmem:[#allocation2 + $0x18] sm:$0xff] %v177
    // Predicated region
    $region22: #{transformer_forward.52} parent=1 // pred_check
      %p182 = pneg %p30
    $region23: #{transformer_forward.52} parent=1 // pred_check_branch
      %184 = sbr.rel (%p182) target = $region25
    $region24: #{transformer_forward.52} parent=1 // pred_region
      %v185 = vld [vmem:[#allocation2] sm:$0xff]
      %v186 = vld [vmem:[#allocation2 + $0x8] sm:$0xff]
      %v187 = vld [vmem:[#allocation2 + $0x10] sm:$0xff]
      %v188 = vld [vmem:[#allocation2 + $0x18] sm:$0xff]
      %v189 = vld [vmem:[%s2] sm:$0x3]
      %v191 = vperm.slane %v189, 0
      %v192 = vperm.slane %v189, 1
      %v195 = vadd.f32 %v185, %v191
      %v196 = vadd.f32 %v186, %v192
      %v197 = vadd.f32 %v187, %v191
      %v198 = vadd.f32 %v188, %v192
      %v199 = vpack.c.bf16 %v196, %v195
      %v200 = vpack.c.bf16 %v198, %v197
      %201 = vst [vmem:[%s3] sm:$0xff] %v199
      %202 = vst [vmem:[%s3 + $0x8] sm:$0xff] %v200
    $region25: #{transformer_forward.52} parent=1 // pred_fallthru
      _
    // Predicated region
    $region26: #{transformer_forward.52} parent=1 // pred_check
      _
    $region27: #{transformer_forward.52} parent=1 // pred_check_branch
      %204 = sbr.rel (0) target = $region29
    $region28: #{transformer_forward.52} parent=1 // pred_region
      _
    $region29: #{transformer_forward.52} parent=1 // pred_fallthru
      _
    // Predicated region
    $region30: #{transformer_forward.52} parent=1 // pred_check
      _
    $region31: #{transformer_forward.52} parent=1 // pred_check_branch
      %206 = sbr.rel (0) target = $region33
    $region32: #{transformer_forward.52} parent=1 // pred_region
      _
    $region33: #{transformer_forward.52} parent=1 // pred_fallthru
      _
    %207 = vsyncpa [#allocation4], 1

// kernel: transformer_forward.34
$region0: #{transformer_forward.34}
  #allocation0 [shape = 'u32[]', space=smem, size = 0x4, offset = 0x4, fixed_abs, tag = 'smem constant byte address 0x4 - core index']
  #allocation1 [shape = 'u32[72,128]{1,0:T(1,128)}', space=vmem, size = 0x9000, scoped, tag = 'internal scratch']
  #allocation2 [shape = 'f32[16,384]{1,0:T(8,128)}', space=vmem, size = 0x6000, scoped, tag = 'scratch operand']
  %s0 = inlined_call_operand.vmem [shape: bf16[16,128], index: 0, kind: input, shape index: {}]
  %s1 = inlined_call_operand.hbm [shape: bf16[128,384], index: 1, kind: input, shape index: {}]
  %s2 = inlined_call_operand.vmem [shape: f32[1,384], index: 2, kind: input, shape index: {}]
  %s3 = inlined_call_operand.vmem [shape: bf16[16,384], index: 3, kind: output, shape index: {}]
  %s4 = sld [smem:[#allocation0]]
  $region34: #{transformer_forward.34} parent=0
    _
  %s6 = ssub.s32 1, %s4
  %s7 = scalar_select 0, %s6, %s4
  $region1: #{transformer_forward.34} parent=0
    #allocation3 [shape = 'u8[98304]{0}', space=vmem, size = 0x18000, scoped, tag = 'input window, operand 1, single buffered']
    #allocation4 [shape = 's32[1]{0}', space=sflag, size = 0x4, scoped, tag = 'scoped memory for transformer_forward.34']
    %8 = vsyncpa [#allocation4], 0
    // Predicated region
    $region2: #{transformer_forward.34} parent=1 // pred_check
      _
    $region3: #{transformer_forward.34} parent=1 // pred_check_branch
      %10 = sbr.rel (0) target = $region5
    $region4: #{transformer_forward.34} parent=1 // pred_region
      _
    $region5: #{transformer_forward.34} parent=1 // pred_fallthru
      _
    // Predicated region
    $region6: #{transformer_forward.34} parent=1 // pred_check
      _
    $region7: #{transformer_forward.34} parent=1 // pred_check_branch
      %12 = sbr.rel (0) target = $region9
    $region8: #{transformer_forward.34} parent=1 // pred_region
      %14 = vsyncadd [#allocation4], 0
      %s15 = sshll.u32 %s1, 4
      %s16 = int_to_ptr.hbm [resolvable:$true] %s15
      %s17 = sshll.u32 [#allocation3], 4
      %s18 = int_to_ptr.vmem [resolvable:$true] %s17
      %23 = dma.hbm_to_vmem [thread:$0]  %s16, 3072, %s18, [#allocation4], 192, 192, 12
    $region9: #{transformer_forward.34} parent=1 // pred_fallthru
      _
    // Predicated region
    $region10: #{transformer_forward.34} parent=1 // pred_check
      _
    $region11: #{transformer_forward.34} parent=1 // pred_check_branch
      %25 = sbr.rel (0) target = $region13
    $region12: #{transformer_forward.34} parent=1 // pred_region
      _
    $region13: #{transformer_forward.34} parent=1 // pred_fallthru
      _
    // Predicated region
    $region14: #{transformer_forward.34} parent=1 // pred_check
      _
    $region15: #{transformer_forward.34} parent=1 // pred_check_branch
      %27 = sbr.rel (0) target = $region17
    $region16: #{transformer_forward.34} parent=1 // pred_region
      %29 = dma.done [#allocation4], 3072
    $region17: #{transformer_forward.34} parent=1 // pred_fallthru
      _
    %p30 = scmp.eq.s32.totalorder 0, 0
    // Predicated region
    $region18: #{transformer_forward.34} parent=1 // pred_check
      %p31 = pneg %p30
    $region19: #{transformer_forward.34} parent=1 // pred_check_branch
      %33 = sbr.rel (%p31) target = $region21
    $region20: #{transformer_forward.34} parent=1 // pred_region
      %34 = vst [vmem:[#allocation2] sm:$0xff] 0.0
      %35 = vst [vmem:[#allocation2 + $0x8] sm:$0xff] 0.0
      %36 = vst [vmem:[#allocation2 + $0x10] sm:$0xff] 0.0
      %37 = vst [vmem:[#allocation2 + $0x18] sm:$0xff] 0.0
      %38 = vst [vmem:[#allocation2 + $0x20] sm:$0xff] 0.0
      %39 = vst [vmem:[#allocation2 + $0x28] sm:$0xff] 0.0
    $region21: #{transformer_forward.34} parent=1 // pred_fallthru
      _
    %v40 = vld [vmem:[#allocation2] sm:$0xff]
    %v41 = vld [vmem:[#allocation2 + $0x8] sm:$0xff]
    %v42 = vld [vmem:[#allocation2 + $0x10] sm:$0xff]
    %v43 = vld [vmem:[#allocation2 + $0x18] sm:$0xff]
    %v44 = vld [vmem:[#allocation2 + $0x20] sm:$0xff]
    %v45 = vld [vmem:[#allocation2 + $0x28] sm:$0xff]
    %v46 = vld [vmem:[%s0] sm:$0xf]
    %v47 = vld [vmem:[%s0 + $0x4] sm:$0xf]
    %v48 = vld [vmem:[#allocation3] sm:$0xff]
    %v49 = vld [vmem:[#allocation3 + $0x8] sm:$0xf]
    %v50 = vld [vmem:[#allocation3 + $0xc] sm:$0xff]
    %v51 = vld [vmem:[#allocation3 + $0x14] sm:$0xf]
    %v52 = vld [vmem:[#allocation3 + $0x18] sm:$0xff]
    %v53 = vld [vmem:[#allocation3 + $0x20] sm:$0xf]
    %v54 = vld [vmem:[#allocation3 + $0x24] sm:$0xff]
    %v55 = vld [vmem:[#allocation3 + $0x2c] sm:$0xf]
    %v56 = vld [vmem:[#allocation3 + $0x30] sm:$0xff]
    %v57 = vld [vmem:[#allocation3 + $0x38] sm:$0xf]
    %v58 = vld [vmem:[#allocation3 + $0x3c] sm:$0xff]
    %v59 = vld [vmem:[#allocation3 + $0x44] sm:$0xf]
    %v60 = vld [vmem:[#allocation3 + $0x48] sm:$0xff]
    %v61 = vld [vmem:[#allocation3 + $0x50] sm:$0xf]
    %v62 = vld [vmem:[#allocation3 + $0x54] sm:$0xff]
    %v63 = vld [vmem:[#allocation3 + $0x5c] sm:$0xf]
    %v64 = vld [vmem:[#allocation3 + $0x60] sm:$0xff]
    %v65 = vld [vmem:[#allocation3 + $0x68] sm:$0xf]
    %v66 = vld [vmem:[#allocation3 + $0x6c] sm:$0xff]
    %v67 = vld [vmem:[#allocation3 + $0x74] sm:$0xf]
    %v68 = vld [vmem:[#allocation3 + $0x78] sm:$0xff]
    %v69 = vld [vmem:[#allocation3 + $0x80] sm:$0xf]
    %v70 = vld [vmem:[#allocation3 + $0x84] sm:$0xff]
    %v71 = vld [vmem:[#allocation3 + $0x8c] sm:$0xf]
    %v72 = vld [vmem:[#allocation3 + $0x90] sm:$0xff]
    %v73 = vld [vmem:[#allocation3 + $0x98] sm:$0xf]
    %v74 = vld [vmem:[#allocation3 + $0x9c] sm:$0xff]
    %v75 = vld [vmem:[#allocation3 + $0xa4] sm:$0xf]
    %v76 = vld [vmem:[#allocation3 + $0xa8] sm:$0xff]
    %v77 = vld [vmem:[#allocation3 + $0xb0] sm:$0xf]
    %v78 = vld [vmem:[#allocation3 + $0xb4] sm:$0xff]
    %v79 = vld [vmem:[#allocation3 + $0xbc] sm:$0xf]
    %v82 = vunpack.c.l.b16 %v46
    %v83 = vunpack.c.l.b16 %v47
    %v84 = vpack.c.b16 %v83, %v82
    %v118 = vunpack.c.l.b16 %v48
    %v119 = vunpack.c.h.b16 %v48
    %v120 = vunpack.c.l.b16 %v49
    %v121 = vunpack.c.l.b16 %v50
    %v122 = vunpack.c.h.b16 %v50
    %v123 = vunpack.c.l.b16 %v51
    %v124 = vunpack.c.l.b16 %v52
    %v125 = vunpack.c.h.b16 %v52
    %v126 = vunpack.c.l.b16 %v53
    %v127 = vunpack.c.l.b16 %v54
    %v128 = vunpack.c.h.b16 %v54
    %v129 = vunpack.c.l.b16 %v55
    %v130 = vunpack.c.l.b16 %v56
    %v131 = vunpack.c.h.b16 %v56
    %v132 = vunpack.c.l.b16 %v57
    %v133 = vunpack.c.l.b16 %v58
    %v134 = vunpack.c.h.b16 %v58
    %v135 = vunpack.c.l.b16 %v59
    %v136 = vunpack.c.l.b16 %v60
    %v137 = vunpack.c.h.b16 %v60
    %v138 = vunpack.c.l.b16 %v61
    %v139 = vunpack.c.l.b16 %v62
    %v140 = vunpack.c.h.b16 %v62
    %v141 = vunpack.c.l.b16 %v63
    %v142 = vunpack.c.l.b16 %v64
    %v143 = vunpack.c.h.b16 %v64
    %v144 = vunpack.c.l.b16 %v65
    %v145 = vunpack.c.l.b16 %v66
    %v146 = vunpack.c.h.b16 %v66
    %v147 = vunpack.c.l.b16 %v67
    %v148 = vunpack.c.l.b16 %v68
    %v149 = vunpack.c.h.b16 %v68
    %v150 = vunpack.c.l.b16 %v69
    %v151 = vunpack.c.l.b16 %v70
    %v152 = vunpack.c.h.b16 %v70
    %v153 = vunpack.c.l.b16 %v71
    %v154 = vunpack.c.l.b16 %v72
    %v155 = vunpack.c.h.b16 %v72
    %v156 = vunpack.c.l.b16 %v73
    %v157 = vunpack.c.l.b16 %v74
    %v158 = vunpack.c.h.b16 %v74
    %v159 = vunpack.c.l.b16 %v75
    %v160 = vunpack.c.l.b16 %v76
    %v161 = vunpack.c.h.b16 %v76
    %v162 = vunpack.c.l.b16 %v77
    %v163 = vunpack.c.l.b16 %v78
    %v164 = vunpack.c.h.b16 %v78
    %v165 = vunpack.c.l.b16 %v79
    %v166 = vpack.c.b16 %v121, %v118
    %v167 = vpack.c.b16 %v122, %v119
    %v168 = vpack.c.b16 %v123, %v120
    %v169 = vpack.c.b16 %v127, %v124
    %v170 = vpack.c.b16 %v128, %v125
    %v171 = vpack.c.b16 %v129, %v126
    %v172 = vpack.c.b16 %v133, %v130
    %v173 = vpack.c.b16 %v134, %v131
    %v174 = vpack.c.b16 %v135, %v132
    %v175 = vpack.c.b16 %v139, %v136
    %v176 = vpack.c.b16 %v140, %v137
    %v177 = vpack.c.b16 %v141, %v138
    %v178 = vpack.c.b16 %v145, %v142
    %v179 = vpack.c.b16 %v146, %v143
    %v180 = vpack.c.b16 %v147, %v144
    %v181 = vpack.c.b16 %v151, %v148
    %v182 = vpack.c.b16 %v152, %v149
    %v183 = vpack.c.b16 %v153, %v150
    %v184 = vpack.c.b16 %v157, %v154
    %v185 = vpack.c.b16 %v158, %v155
    %v186 = vpack.c.b16 %v159, %v156
    %v187 = vpack.c.b16 %v163, %v160
    %v188 = vpack.c.b16 %v164, %v161
    %v189 = vpack.c.b16 %v165, %v162
    %214 = vmatpush.bf16.msra.mxu0 %v187
    %215 = vmatpush.bf16.msra.mxu0 %v184
    %216 = vmatpush.bf16.msra.mxu0 %v181
    %217 = vmatpush.bf16.msra.mxu0 %v178
    %218 = vmatpush.bf16.msra.mxu0 %v175
    %219 = vmatpush.bf16.msra.mxu0 %v172
    %220 = vmatpush.bf16.msra.mxu0 %v169
    %221 = vmatpush.bf16.msra.mxu0 %v166
    %222 = vmatmul.bf16.gmra.mxu0 %v84
    %v223 = vpop.f32.mrf.mxu0
    %v224 = vadd.f32 0.0, %v223
    %v225 = vpop.f32.mrf.mxu0
    %v226 = vadd.f32 0.0, %v225
    %227 = vdwg.mxu0
    %228 = vmatpush.bf16.msra.mxu0 %v188
    %229 = vmatpush.bf16.msra.mxu0 %v185
    %230 = vmatpush.bf16.msra.mxu0 %v182
    %231 = vmatpush.bf16.msra.mxu0 %v179
    %232 = vmatpush.bf16.msra.mxu0 %v176
    %233 = vmatpush.bf16.msra.mxu0 %v173
    %234 = vmatpush.bf16.msra.mxu0 %v170
    %235 = vmatpush.bf16.msra.mxu0 %v167
    %236 = vmatmul.bf16.gmra.mxu0 %v84
    %v237 = vpop.f32.mrf.mxu0
    %v238 = vadd.f32 0.0, %v237
    %v239 = vpop.f32.mrf.mxu0
    %v240 = vadd.f32 0.0, %v239
    %241 = vdwg.mxu0
    %242 = vmatpush.bf16.msra.mxu0 %v189
    %243 = vmatpush.bf16.msra.mxu0 %v186
    %244 = vmatpush.bf16.msra.mxu0 %v183
    %245 = vmatpush.bf16.msra.mxu0 %v180
    %246 = vmatpush.bf16.msra.mxu0 %v177
    %247 = vmatpush.bf16.msra.mxu0 %v174
    %248 = vmatpush.bf16.msra.mxu0 %v171
    %249 = vmatpush.bf16.msra.mxu0 %v168
    %250 = vmatmul.bf16.gmra.mxu0 %v84
    %v251 = vpop.f32.mrf.mxu0
    %v252 = vadd.f32 0.0, %v251
    %v253 = vpop.f32.mrf.mxu0
    %v254 = vadd.f32 0.0, %v253
    %255 = vdwg.mxu0
    %v256 = vadd.f32 %v40, %v224
    %v257 = vadd.f32 %v41, %v238
    %v258 = vadd.f32 %v42, %v252
    %v259 = vadd.f32 %v43, %v226
    %v260 = vadd.f32 %v44, %v240
    %v261 = vadd.f32 %v45, %v254
    %262 = vst [vmem:[#allocation2] sm:$0xff] %v256
    %263 = vst [vmem:[#allocation2 + $0x8] sm:$0xff] %v257
    %264 = vst [vmem:[#allocation2 + $0x10] sm:$0xff] %v258
    %265 = vst [vmem:[#allocation2 + $0x18] sm:$0xff] %v259
    %266 = vst [vmem:[#allocation2 + $0x20] sm:$0xff] %v260
    %267 = vst [vmem:[#allocation2 + $0x28] sm:$0xff] %v261
    // Predicated region
    $region22: #{transformer_forward.34} parent=1 // pred_check
      %p268 = pneg %p30
    $region23: #{transformer_forward.34} parent=1 // pred_check_branch
      %270 = sbr.rel (%p268) target = $region25
    $region24: #{transformer_forward.34} parent=1 // pred_region
      %v271 = vld [vmem:[#allocation2] sm:$0xff]
      %v272 = vld [vmem:[#allocation2 + $0x8] sm:$0xff]
      %v273 = vld [vmem:[#allocation2 + $0x10] sm:$0xff]
      %v274 = vld [vmem:[#allocation2 + $0x18] sm:$0xff]
      %v275 = vld [vmem:[#allocation2 + $0x20] sm:$0xff]
      %v276 = vld [vmem:[#allocation2 + $0x28] sm:$0xff]
      %v277 = vld [vmem:[%s2] sm:$0x7]
      %v279 = vperm.slane %v277, 0
      %v280 = vperm.slane %v277, 1
      %v281 = vperm.slane %v277, 2
      %v285 = vadd.f32 %v271, %v279
      %v286 = vadd.f32 %v272, %v280
      %v287 = vadd.f32 %v273, %v281
      %v288 = vadd.f32 %v274, %v279
      %v289 = vadd.f32 %v275, %v280
      %v290 = vadd.f32 %v276, %v281
      %v291 = vpack.c.bf16 %v286, %v285
      %v292 = vpack.c.bf16 %v287, %v287
      %v293 = vpack.c.bf16 %v289, %v288
      %v294 = vpack.c.bf16 %v290, %v290
      %295 = vst [vmem:[%s3] sm:$0xff] %v291
      %296 = vst [vmem:[%s3 + $0x8] sm:$0xf] %v292
      %297 = vst [vmem:[%s3 + $0xc] sm:$0xff] %v293
      %298 = vst [vmem:[%s3 + $0x14] sm:$0xf] %v294
    $region25: #{transformer_forward.34} parent=1 // pred_fallthru
      _
    // Predicated region
    $region26: #{transformer_forward.34} parent=1 // pred_check
      _
    $region27: #{transformer_forward.34} parent=1 // pred_check_branch
      %300 = sbr.rel (0) target = $region29
    $region28: #{transformer_forward.34} parent=1 // pred_region
      _
    $region29: #{transformer_forward.34} parent=1 // pred_fallthru
      _
    // Predicated region
    $region30: #{transformer_forward.34} parent=1 // pred_check
      _
    $region31: #{transformer_forward.34} parent=1 // pred_check_branch
      %302 = sbr.rel (0) target = $region33
    $region32: #{transformer_forward.34} parent=1 // pred_region
      _
    $region33: #{transformer_forward.34} parent=1 // pred_fallthru
      _
    %303 = vsyncpa [#allocation4], 1

// kernel: transformer_forward.33
$region0: #{transformer_forward.33}
  #allocation0 [shape = 'u32[]', space=smem, size = 0x4, offset = 0x4, fixed_abs, tag = 'smem constant byte address 0x4 - core index']
  #allocation1 [shape = 'u32[72,128]{1,0:T(1,128)}', space=vmem, size = 0x9000, scoped, tag = 'internal scratch']
  #allocation2 [shape = 'f32[16,128]{1,0:T(8,128)}', space=vmem, size = 0x2000, scoped, tag = 'scratch operand']
  %s0 = inlined_call_operand.vmem [shape: bf16[16,256], index: 0, kind: input, shape index: {}]
  %s1 = inlined_call_operand.hbm [shape: bf16[256,128], index: 1, kind: input, shape index: {}]
  %s2 = inlined_call_operand.vmem [shape: f32[1,128], index: 2, kind: input, shape index: {}]
  %s3 = inlined_call_operand.vmem [shape: bf16[16,128], index: 3, kind: input, shape index: {}]
  %s4 = inlined_call_operand.vmem [shape: f32[1,128], index: 4, kind: input, shape index: {}]
  %s5 = inlined_call_operand.vmem [shape: f32[1,128], index: 5, kind: input, shape index: {}]
  %s6 = inlined_call_operand.vmem [shape: bf16[16,128], index: 6, kind: output, shape index: {}]
  %s7 = sld [smem:[#allocation0]]
  $region46: #{transformer_forward.33} parent=0
    _
  %s9 = ssub.s32 1, %s7
  %s10 = scalar_select 0, %s9, %s7
  $region1: #{transformer_forward.33} parent=0
    #allocation3 [shape = 'u8[65536]{0}', space=vmem, size = 0x10000, scoped, tag = 'input window, operand 1, single buffered']
    #allocation4 [shape = 's32[1]{0}', space=sflag, size = 0x4, scoped, tag = 'scoped memory for transformer_forward.33']
    %11 = vsyncpa [#allocation4], 0
    // Predicated region
    $region2: #{transformer_forward.33} parent=1 // pred_check
      _
    $region3: #{transformer_forward.33} parent=1 // pred_check_branch
      %13 = sbr.rel (0) target = $region5
    $region4: #{transformer_forward.33} parent=1 // pred_region
      _
    $region5: #{transformer_forward.33} parent=1 // pred_fallthru
      _
    // Predicated region
    $region6: #{transformer_forward.33} parent=1 // pred_check
      _
    $region7: #{transformer_forward.33} parent=1 // pred_check_branch
      %15 = sbr.rel (0) target = $region9
    $region8: #{transformer_forward.33} parent=1 // pred_region
      %17 = vsyncadd [#allocation4], 0
      %s18 = sshll.u32 %s1, 4
      %s19 = int_to_ptr.hbm [resolvable:$true] %s18
      %s20 = sshll.u32 [#allocation3], 4
      %s21 = int_to_ptr.vmem [resolvable:$true] %s20
      %26 = dma.hbm_to_vmem [thread:$0]  %s19, 2048, %s21, [#allocation4], 64, 64, 4
    $region9: #{transformer_forward.33} parent=1 // pred_fallthru
      _
    // Predicated region
    $region10: #{transformer_forward.33} parent=1 // pred_check
      _
    $region11: #{transformer_forward.33} parent=1 // pred_check_branch
      %28 = sbr.rel (0) target = $region13
    $region12: #{transformer_forward.33} parent=1 // pred_region
      _
    $region13: #{transformer_forward.33} parent=1 // pred_fallthru
      _
    // Predicated region
    $region14: #{transformer_forward.33} parent=1 // pred_check
      _
    $region15: #{transformer_forward.33} parent=1 // pred_check_branch
      %30 = sbr.rel (0) target = $region17
    $region16: #{transformer_forward.33} parent=1 // pred_region
      _
    $region17: #{transformer_forward.33} parent=1 // pred_fallthru
      _
    // Predicated region
    $region18: #{transformer_forward.33} parent=1 // pred_check
      _
    $region19: #{transformer_forward.33} parent=1 // pred_check_branch
      %32 = sbr.rel (0) target = $region21
    $region20: #{transformer_forward.33} parent=1 // pred_region
      _
    $region21: #{transformer_forward.33} parent=1 // pred_fallthru
      _
    // Predicated region
    $region22: #{transformer_forward.33} parent=1 // pred_check
      _
    $region23: #{transformer_forward.33} parent=1 // pred_check_branch
      %34 = sbr.rel (0) target = $region25
    $region24: #{transformer_forward.33} parent=1 // pred_region
      _
    $region25: #{transformer_forward.33} parent=1 // pred_fallthru
      _
    // Predicated region
    $region26: #{transformer_forward.33} parent=1 // pred_check
      _
    $region27: #{transformer_forward.33} parent=1 // pred_check_branch
      %36 = sbr.rel (0) target = $region29
    $region28: #{transformer_forward.33} parent=1 // pred_region
      %38 = dma.done [#allocation4], 2048
    $region29: #{transformer_forward.33} parent=1 // pred_fallthru
      _
    %p39 = scmp.eq.s32.totalorder 0, 0
    // Predicated region
    $region30: #{transformer_forward.33} parent=1 // pred_check
      %p40 = pneg %p39
    $region31: #{transformer_forward.33} parent=1 // pred_check_branch
      %42 = sbr.rel (%p40) target = $region33
    $region32: #{transformer_forward.33} parent=1 // pred_region
      %43 = vst [vmem:[#allocation2] sm:$0xff] 0.0
      %44 = vst [vmem:[#allocation2 + $0x8] sm:$0xff] 0.0
    $region33: #{transformer_forward.33} parent=1 // pred_fallthru
      _
    %v45 = vld [vmem:[#allocation2] sm:$0xff]
    %v46 = vld [vmem:[#allocation2 + $0x8] sm:$0xff]
    %v47 = vld [vmem:[%s0] sm:$0xff]
    %v48 = vld [vmem:[%s0 + $0x8] sm:$0xff]
    %v49 = vld [vmem:[#allocation3] sm:$0xf]
    %v50 = vld [vmem:[#allocation3 + $0x4] sm:$0xf]
    %v51 = vld [vmem:[#allocation3 + $0x8] sm:$0xf]
    %v52 = vld [vmem:[#allocation3 + $0xc] sm:$0xf]
    %v53 = vld [vmem:[#allocation3 + $0x10] sm:$0xf]
    %v54 = vld [vmem:[#allocation3 + $0x14] sm:$0xf]
    %v55 = vld [vmem:[#allocation3 + $0x18] sm:$0xf]
    %v56 = vld [vmem:[#allocation3 + $0x1c] sm:$0xf]
    %v57 = vld [vmem:[#allocation3 + $0x20] sm:$0xf]
    %v58 = vld [vmem:[#allocation3 + $0x24] sm:$0xf]
    %v59 = vld [vmem:[#allocation3 + $0x28] sm:$0xf]
    %v60 = vld [vmem:[#allocation3 + $0x2c] sm:$0xf]
    %v61 = vld [vmem:[#allocation3 + $0x30] sm:$0xf]
    %v62 = vld [vmem:[#allocation3 + $0x34] sm:$0xf]
    %v63 = vld [vmem:[#allocation3 + $0x38] sm:$0xf]
    %v64 = vld [vmem:[#allocation3 + $0x3c] sm:$0xf]
    %v65 = vld [vmem:[#allocation3 + $0x40] sm:$0xf]
    %v66 = vld [vmem:[#allocation3 + $0x44] sm:$0xf]
    %v67 = vld [vmem:[#allocation3 + $0x48] sm:$0xf]
    %v68 = vld [vmem:[#allocation3 + $0x4c] sm:$0xf]
    %v69 = vld [vmem:[#allocation3 + $0x50] sm:$0xf]
    %v70 = vld [vmem:[#allocation3 + $0x54] sm:$0xf]
    %v71 = vld [vmem:[#allocation3 + $0x58] sm:$0xf]
    %v72 = vld [vmem:[#allocation3 + $0x5c] sm:$0xf]
    %v73 = vld [vmem:[#allocation3 + $0x60] sm:$0xf]
    %v74 = vld [vmem:[#allocation3 + $0x64] sm:$0xf]
    %v75 = vld [vmem:[#allocation3 + $0x68] sm:$0xf]
    %v76 = vld [vmem:[#allocation3 + $0x6c] sm:$0xf]
    %v77 = vld [vmem:[#allocation3 + $0x70] sm:$0xf]
    %v78 = vld [vmem:[#allocation3 + $0x74] sm:$0xf]
    %v79 = vld [vmem:[#allocation3 + $0x78] sm:$0xf]
    %v80 = vld [vmem:[#allocation3 + $0x7c] sm:$0xf]
    %v83 = vunpack.c.l.b16 %v47
    %v84 = vunpack.c.h.b16 %v47
    %v85 = vunpack.c.l.b16 %v48
    %v86 = vunpack.c.h.b16 %v48
    %v87 = vpack.c.b16 %v85, %v83
    %v88 = vpack.c.b16 %v86, %v84
    %v123 = vunpack.c.l.b16 %v49
    %v124 = vunpack.c.l.b16 %v50
    %v125 = vunpack.c.l.b16 %v51
    %v126 = vunpack.c.l.b16 %v52
    %v127 = vunpack.c.l.b16 %v53
    %v128 = vunpack.c.l.b16 %v54
    %v129 = vunpack.c.l.b16 %v55
    %v130 = vunpack.c.l.b16 %v56
    %v131 = vunpack.c.l.b16 %v57
    %v132 = vunpack.c.l.b16 %v58
    %v133 = vunpack.c.l.b16 %v59
    %v134 = vunpack.c.l.b16 %v60
    %v135 = vunpack.c.l.b16 %v61
    %v136 = vunpack.c.l.b16 %v62
    %v137 = vunpack.c.l.b16 %v63
    %v138 = vunpack.c.l.b16 %v64
    %v139 = vunpack.c.l.b16 %v65
    %v140 = vunpack.c.l.b16 %v66
    %v141 = vunpack.c.l.b16 %v67
    %v142 = vunpack.c.l.b16 %v68
    %v143 = vunpack.c.l.b16 %v69
    %v144 = vunpack.c.l.b16 %v70
    %v145 = vunpack.c.l.b16 %v71
    %v146 = vunpack.c.l.b16 %v72
    %v147 = vunpack.c.l.b16 %v73
    %v148 = vunpack.c.l.b16 %v74
    %v149 = vunpack.c.l.b16 %v75
    %v150 = vunpack.c.l.b16 %v76
    %v151 = vunpack.c.l.b16 %v77
    %v152 = vunpack.c.l.b16 %v78
    %v153 = vunpack.c.l.b16 %v79
    %v154 = vunpack.c.l.b16 %v80
    %v155 = vpack.c.b16 %v124, %v123
    %v156 = vpack.c.b16 %v126, %v125
    %v157 = vpack.c.b16 %v128, %v127
    %v158 = vpack.c.b16 %v130, %v129
    %v159 = vpack.c.b16 %v132, %v131
    %v160 = vpack.c.b16 %v134, %v133
    %v161 = vpack.c.b16 %v136, %v135
    %v162 = vpack.c.b16 %v138, %v137
    %v163 = vpack.c.b16 %v140, %v139
    %v164 = vpack.c.b16 %v142, %v141
    %v165 = vpack.c.b16 %v144, %v143
    %v166 = vpack.c.b16 %v146, %v145
    %v167 = vpack.c.b16 %v148, %v147
    %v168 = vpack.c.b16 %v150, %v149
    %v169 = vpack.c.b16 %v152, %v151
    %v170 = vpack.c.b16 %v154, %v153
    %187 = vmatpush.bf16.msra.mxu0 %v162
    %188 = vmatpush.bf16.msra.mxu0 %v161
    %189 = vmatpush.bf16.msra.mxu0 %v160
    %190 = vmatpush.bf16.msra.mxu0 %v159
    %191 = vmatpush.bf16.msra.mxu0 %v158
    %192 = vmatpush.bf16.msra.mxu0 %v157
    %193 = vmatpush.bf16.msra.mxu0 %v156
    %194 = vmatpush.bf16.msra.mxu0 %v155
    %195 = vmatmul.bf16.gmra.mxu0 %v87
    %v196 = vpop.f32.mrf.mxu0
    %v197 = vadd.f32 0.0, %v196
    %v198 = vpop.f32.mrf.mxu0
    %v199 = vadd.f32 0.0, %v198
    %200 = vdwg.mxu0
    %201 = vmatpush.bf16.msra.mxu0 %v170
    %202 = vmatpush.bf16.msra.mxu0 %v169
    %203 = vmatpush.bf16.msra.mxu0 %v168
    %204 = vmatpush.bf16.msra.mxu0 %v167
    %205 = vmatpush.bf16.msra.mxu0 %v166
    %206 = vmatpush.bf16.msra.mxu0 %v165
    %207 = vmatpush.bf16.msra.mxu0 %v164
    %208 = vmatpush.bf16.msra.mxu0 %v163
    %209 = vmatmul.bf16.gmra.mxu0 %v88
    %v210 = vpop.f32.mrf.mxu0
    %v211 = vadd.f32 %v197, %v210
    %v212 = vpop.f32.mrf.mxu0
    %v213 = vadd.f32 %v199, %v212
    %214 = vdwg.mxu0
    %v215 = vadd.f32 %v45, %v211
    %v216 = vadd.f32 %v46, %v213
    %217 = vst [vmem:[#allocation2] sm:$0xff] %v215
    %218 = vst [vmem:[#allocation2 + $0x8] sm:$0xff] %v216
    // Predicated region
    $region34: #{transformer_forward.33} parent=1 // pred_check
      %p219 = pneg %p39
    $region35: #{transformer_forward.33} parent=1 // pred_check_branch
      %221 = sbr.rel (%p219) target = $region37
    $region36: #{transformer_forward.33} parent=1 // pred_region
      %v222 = vld [vmem:[#allocation2] sm:$0xff]
      %v223 = vld [vmem:[#allocation2 + $0x8] sm:$0xff]
      %v224 = vld [vmem:[%s2] sm:$0x1]
      %v226 = vperm.slane %v224, 0
      %v228 = vadd.f32 %v222, %v226
      %v229 = vadd.f32 %v223, %v226
      %v230 = vld [vmem:[%s3] sm:$0xf]
      %v231 = vld [vmem:[%s3 + $0x4] sm:$0xf]
      %v232 = vunpack.c.l.bf16 %v230
      %v233 = vunpack.c.l.bf16 %v231
      %v234 = vadd.f32 %v228, %v232
      %v235 = vadd.f32 %v229, %v233
      %236 = vadd.xlane.f32.xlu0 %v234
      %v237 = vpop.xlane.xlu0 %236
      %238 = vadd.xlane.f32.xlu0 %v235
      %v239 = vpop.xlane.xlu0 %238
      %v240 = vrcp.pop 128.0
      %v241 = vmul.f32 128.0, %v240
      %v242 = vsub.f32 1.0, %v241
      %v243 = vmul.f32 %v240, %v242
      %v244 = vadd.f32 %v240, %v243
      %vm245 = vweird.f32 %v240
      %v246 = vsel %vm245, %v240, %v244
      %v247 = vmul.f32 %v237, %v246
      %v248 = vmul.f32 %v239, %v246
      %v249 = vsub.f32 %v234, %v247
      %v250 = vsub.f32 %v235, %v248
      %v251 = vmul.f32 %v249, %v249
      %v252 = vmul.f32 %v250, %v250
      %253 = vadd.xlane.f32.xlu0 %v251
      %v254 = vpop.xlane.xlu0 %253
      %255 = vadd.xlane.f32.xlu0 %v252
      %v256 = vpop.xlane.xlu0 %255
      %v257 = vmul.f32 %v254, %v246
      %v258 = vmul.f32 %v256, %v246
      %v259 = vadd.f32 %v257, 1e-05
      %v260 = vadd.f32 %v258, 1e-05
      %v261 = vrsqrt.pop %v259
      %v262 = vmul.f32 %v261, %v259
      %v263 = vmul.f32 %v262, %v261
      %v264 = vmul.f32 0.5, %v263
      %v265 = vsub.f32 1.5, %v264
      %v266 = vmul.f32 %v261, %v265
      %vm267 = vweird.f32 %v259
      %vm268 = vweird.f32 %v261
      %vm269 = vmor %vm267, %vm268
      %v270 = vsel %vm269, %v261, %v266
      %v271 = vrsqrt.pop %v260
      %v272 = vmul.f32 %v271, %v260
      %v273 = vmul.f32 %v272, %v271
      %v274 = vmul.f32 0.5, %v273
      %v275 = vsub.f32 1.5, %v274
      %v276 = vmul.f32 %v271, %v275
      %vm277 = vweird.f32 %v260
      %vm278 = vweird.f32 %v271
      %vm279 = vmor %vm277, %vm278
      %v280 = vsel %vm279, %v271, %v276
      %v281 = vmul.f32 %v249, %v270
      %v282 = vmul.f32 %v250, %v280
      %v283 = vld [vmem:[%s4] sm:$0x1]
      %v285 = vperm.slane %v283, 0
      %v287 = vmul.f32 %v281, %v285
      %v288 = vmul.f32 %v282, %v285
      %v289 = vld [vmem:[%s5] sm:$0x1]
      %v291 = vperm.slane %v289, 0
      %v293 = vadd.f32 %v287, %v291
      %v294 = vadd.f32 %v288, %v291
      %v295 = vpack.c.bf16 %v293, %v293
      %v296 = vpack.c.bf16 %v294, %v294
      %297 = vst [vmem:[%s6] sm:$0xf] %v295
      %298 = vst [vmem:[%s6 + $0x4] sm:$0xf] %v296
    $region37: #{transformer_forward.33} parent=1 // pred_fallthru
      _
    // Predicated region
    $region38: #{transformer_forward.33} parent=1 // pred_check
      _
    $region39: #{transformer_forward.33} parent=1 // pred_check_branch
      %300 = sbr.rel (0) target = $region41
    $region40: #{transformer_forward.33} parent=1 // pred_region
      _
    $region41: #{transformer_forward.33} parent=1 // pred_fallthru
      _
    // Predicated region
    $region42: #{transformer_forward.33} parent=1 // pred_check
      _
    $region43: #{transformer_forward.33} parent=1 // pred_check_branch
      %302 = sbr.rel (0) target = $region45
    $region44: #{transformer_forward.33} parent=1 // pred_region
      _
    $region45: #{transformer_forward.33} parent=1 // pred_fallthru
      _
    %303 = vsyncpa [#allocation4], 1

// kernel: transformer_forward.42
$region0: #{transformer_forward.42}
  #allocation0 [shape = 'u32[]', space=smem, size = 0x4, offset = 0x4, fixed_abs, tag = 'smem constant byte address 0x4 - core index']
  #allocation1 [shape = 'u32[72,128]{1,0:T(1,128)}', space=vmem, size = 0x9000, scoped, tag = 'internal scratch']
  #allocation2 [shape = 'f32[16,128]{1,0:T(8,128)}', space=vmem, size = 0x2000, scoped, tag = 'scratch operand']
  %s0 = inlined_call_operand.vmem [shape: bf16[16,128], index: 0, kind: input, shape index: {}]
  %s1 = inlined_call_operand.hbm [shape: bf16[128,128], index: 1, kind: input, shape index: {}]
  %s2 = inlined_call_operand.vmem [shape: f32[1,128], index: 2, kind: input, shape index: {}]
  %s3 = inlined_call_operand.vmem [shape: bf16[16,128], index: 3, kind: output, shape index: {}]
  %s4 = sld [smem:[#allocation0]]
  $region34: #{transformer_forward.42} parent=0
    _
  %s6 = ssub.s32 1, %s4
  %s7 = scalar_select 0, %s6, %s4
  $region1: #{transformer_forward.42} parent=0
    #allocation3 [shape = 'u8[32768]{0}', space=vmem, size = 0x8000, scoped, tag = 'input window, operand 1, single buffered']
    #allocation4 [shape = 's32[1]{0}', space=sflag, size = 0x4, scoped, tag = 'scoped memory for transformer_forward.42']
    %8 = vsyncpa [#allocation4], 0
    // Predicated region
    $region2: #{transformer_forward.42} parent=1 // pred_check
      _
    $region3: #{transformer_forward.42} parent=1 // pred_check_branch
      %10 = sbr.rel (0) target = $region5
    $region4: #{transformer_forward.42} parent=1 // pred_region
      _
    $region5: #{transformer_forward.42} parent=1 // pred_fallthru
      _
    // Predicated region
    $region6: #{transformer_forward.42} parent=1 // pred_check
      _
    $region7: #{transformer_forward.42} parent=1 // pred_check_branch
      %12 = sbr.rel (0) target = $region9
    $region8: #{transformer_forward.42} parent=1 // pred_region
      %14 = vsyncadd [#allocation4], 0
      %s15 = sshll.u32 %s1, 4
      %s16 = int_to_ptr.hbm [resolvable:$true] %s15
      %s17 = sshll.u32 [#allocation3], 4
      %s18 = int_to_ptr.vmem [resolvable:$true] %s17
      %23 = dma.hbm_to_vmem [thread:$0]  %s16, 1024, %s18, [#allocation4], 64, 64, 4
    $region9: #{transformer_forward.42} parent=1 // pred_fallthru
      _
    // Predicated region
    $region10: #{transformer_forward.42} parent=1 // pred_check
      _
    $region11: #{transformer_forward.42} parent=1 // pred_check_branch
      %25 = sbr.rel (0) target = $region13
    $region12: #{transformer_forward.42} parent=1 // pred_region
      _
    $region13: #{transformer_forward.42} parent=1 // pred_fallthru
      _
    // Predicated region
    $region14: #{transformer_forward.42} parent=1 // pred_check
      _
    $region15: #{transformer_forward.42} parent=1 // pred_check_branch
      %27 = sbr.rel (0) target = $region17
    $region16: #{transformer_forward.42} parent=1 // pred_region
      %29 = dma.done [#allocation4], 1024
    $region17: #{transformer_forward.42} parent=1 // pred_fallthru
      _
    %p30 = scmp.eq.s32.totalorder 0, 0
    // Predicated region
    $region18: #{transformer_forward.42} parent=1 // pred_check
      %p31 = pneg %p30
    $region19: #{transformer_forward.42} parent=1 // pred_check_branch
      %33 = sbr.rel (%p31) target = $region21
    $region20: #{transformer_forward.42} parent=1 // pred_region
      %34 = vst [vmem:[#allocation2] sm:$0xff] 0.0
      %35 = vst [vmem:[#allocation2 + $0x8] sm:$0xff] 0.0
    $region21: #{transformer_forward.42} parent=1 // pred_fallthru
      _
    %v36 = vld [vmem:[#allocation2] sm:$0xff]
    %v37 = vld [vmem:[#allocation2 + $0x8] sm:$0xff]
    %v38 = vld [vmem:[%s0] sm:$0xf]
    %v39 = vld [vmem:[%s0 + $0x4] sm:$0xf]
    %v40 = vld [vmem:[#allocation3] sm:$0xf]
    %v41 = vld [vmem:[#allocation3 + $0x4] sm:$0xf]
    %v42 = vld [vmem:[#allocation3 + $0x8] sm:$0xf]
    %v43 = vld [vmem:[#allocation3 + $0xc] sm:$0xf]
    %v44 = vld [vmem:[#allocation3 + $0x10] sm:$0xf]
    %v45 = vld [vmem:[#allocation3 + $0x14] sm:$0xf]
    %v46 = vld [vmem:[#allocation3 + $0x18] sm:$0xf]
    %v47 = vld [vmem:[#allocation3 + $0x1c] sm:$0xf]
    %v48 = vld [vmem:[#allocation3 + $0x20] sm:$0xf]
    %v49 = vld [vmem:[#allocation3 + $0x24] sm:$0xf]
    %v50 = vld [vmem:[#allocation3 + $0x28] sm:$0xf]
    %v51 = vld [vmem:[#allocation3 + $0x2c] sm:$0xf]
    %v52 = vld [vmem:[#allocation3 + $0x30] sm:$0xf]
    %v53 = vld [vmem:[#allocation3 + $0x34] sm:$0xf]
    %v54 = vld [vmem:[#allocation3 + $0x38] sm:$0xf]
    %v55 = vld [vmem:[#allocation3 + $0x3c] sm:$0xf]
    %v58 = vunpack.c.l.b16 %v38
    %v59 = vunpack.c.l.b16 %v39
    %v60 = vpack.c.b16 %v59, %v58
    %v78 = vunpack.c.l.b16 %v40
    %v79 = vunpack.c.l.b16 %v41
    %v80 = vunpack.c.l.b16 %v42
    %v81 = vunpack.c.l.b16 %v43
    %v82 = vunpack.c.l.b16 %v44
    %v83 = vunpack.c.l.b16 %v45
    %v84 = vunpack.c.l.b16 %v46
    %v85 = vunpack.c.l.b16 %v47
    %v86 = vunpack.c.l.b16 %v48
    %v87 = vunpack.c.l.b16 %v49
    %v88 = vunpack.c.l.b16 %v50
    %v89 = vunpack.c.l.b16 %v51
    %v90 = vunpack.c.l.b16 %v52
    %v91 = vunpack.c.l.b16 %v53
    %v92 = vunpack.c.l.b16 %v54
    %v93 = vunpack.c.l.b16 %v55
    %v94 = vpack.c.b16 %v79, %v78
    %v95 = vpack.c.b16 %v81, %v80
    %v96 = vpack.c.b16 %v83, %v82
    %v97 = vpack.c.b16 %v85, %v84
    %v98 = vpack.c.b16 %v87, %v86
    %v99 = vpack.c.b16 %v89, %v88
    %v100 = vpack.c.b16 %v91, %v90
    %v101 = vpack.c.b16 %v93, %v92
    %110 = vmatpush.bf16.msra.mxu0 %v101
    %111 = vmatpush.bf16.msra.mxu0 %v100
    %112 = vmatpush.bf16.msra.mxu0 %v99
    %113 = vmatpush.bf16.msra.mxu0 %v98
    %114 = vmatpush.bf16.msra.mxu0 %v97
    %115 = vmatpush.bf16.msra.mxu0 %v96
    %116 = vmatpush.bf16.msra.mxu0 %v95
    %117 = vmatpush.bf16.msra.mxu0 %v94
    %118 = vmatmul.bf16.gmra.mxu0 %v60
    %v119 = vpop.f32.mrf.mxu0
    %v120 = vadd.f32 0.0, %v119
    %v121 = vpop.f32.mrf.mxu0
    %v122 = vadd.f32 0.0, %v121
    %123 = vdwg.mxu0
    %v124 = vadd.f32 %v36, %v120
    %v125 = vadd.f32 %v37, %v122
    %126 = vst [vmem:[#allocation2] sm:$0xff] %v124
    %127 = vst [vmem:[#allocation2 + $0x8] sm:$0xff] %v125
    // Predicated region
    $region22: #{transformer_forward.42} parent=1 // pred_check
      %p128 = pneg %p30
    $region23: #{transformer_forward.42} parent=1 // pred_check_branch
      %130 = sbr.rel (%p128) target = $region25
    $region24: #{transformer_forward.42} parent=1 // pred_region
      %v131 = vld [vmem:[#allocation2] sm:$0xff]
      %v132 = vld [vmem:[#allocation2 + $0x8] sm:$0xff]
      %v133 = vld [vmem:[%s2] sm:$0x1]
      %v135 = vperm.slane %v133, 0
      %v137 = vadd.f32 %v131, %v135
      %v138 = vadd.f32 %v132, %v135
      %v139 = vpack.c.bf16 %v137, %v137
      %v140 = vpack.c.bf16 %v138, %v138
      %141 = vst [vmem:[%s3] sm:$0xf] %v139
      %142 = vst [vmem:[%s3 + $0x4] sm:$0xf] %v140
    $region25: #{transformer_forward.42} parent=1 // pred_fallthru
      _
    // Predicated region
    $region26: #{transformer_forward.42} parent=1 // pred_check
      _
    $region27: #{transformer_forward.42} parent=1 // pred_check_branch
      %144 = sbr.rel (0) target = $region29
    $region28: #{transformer_forward.42} parent=1 // pred_region
      _
    $region29: #{transformer_forward.42} parent=1 // pred_fallthru
      _
    // Predicated region
    $region30: #{transformer_forward.42} parent=1 // pred_check
      _
    $region31: #{transformer_forward.42} parent=1 // pred_check_branch
      %146 = sbr.rel (0) target = $region33
    $region32: #{transformer_forward.42} parent=1 // pred_region
      _
    $region33: #{transformer_forward.42} parent=1 // pred_fallthru
      _
    %147 = vsyncpa [#allocation4], 1

// kernel: transformer_forward.40
$region0: #{transformer_forward.40}
  #allocation0 [shape = 'u32[]', space=smem, size = 0x4, offset = 0x4, fixed_abs, tag = 'smem constant byte address 0x4 - core index']
  #allocation1 [shape = 'u32[72,128]{1,0:T(1,128)}', space=vmem, size = 0x9000, scoped, tag = 'internal scratch']
  #allocation2 [shape = 'f32[4,8,1]{2,1,0:T(8,128)}', space=vmem, size = 0x4000, scoped, tag = 'scratch operand']
  #allocation3 [shape = 'f32[4,8,1]{2,1,0:T(8,128)}', space=vmem, size = 0x4000, scoped, tag = 'scratch operand']
  #allocation4 [shape = 'f32[4,8,32]{2,1,0:T(8,128)}', space=vmem, size = 0x4000, scoped, tag = 'scratch operand']
  %s0 = inlined_call_operand.vmem [shape: bf16[2,8,384], index: 0, kind: input, shape index: {}, may-alias: {0,1,2}]
  %s1 = inlined_call_operand.vmem [shape: bf16[2,8,384], index: 1, kind: input, shape index: {}, may-alias: {0,1,2}]
  %s2 = inlined_call_operand.vmem [shape: bf16[2,8,384], index: 2, kind: input, shape index: {}, may-alias: {0,1,2}]
  %s3 = inlined_call_operand.vmem [shape: f32[2,1,8], index: 3, kind: input, shape index: {}]
  %s4 = inlined_call_operand.vmem [shape: bf16[2,8,128], index: 4, kind: output, shape index: {}]
  %s5 = sld [smem:[#allocation0]]
  $region61: #{transformer_forward.40} parent=0
    _
  %s7 = ssub.s32 1, %s5
  %s8 = scalar_select 0, %s7, %s5
  loop: start=0, step=1, limit=4
  $region2: #{transformer_forward.40} parent=0 // loop_pre_header
    _
  $region3: #{transformer_forward.40} parent=0 // loop_header
    %s10 = sphi 0, %s14
    %p11 = scmp.ge.s32.totalorder %s10, 4
    %s17 = sphi 0, %s36
    %s18 = sphi 0, %s32
    %s19 = sphi 0, %s28
    %s20 = sphi 0, %s17
    %s21 = sphi 0, %s18
    %s22 = sphi 0, %s19
    %s23 = sphi 0, %s20
    %s24 = sphi 0, %s21
    %s25 = sphi 0, %s22
    %s41 = sphi 0, %s43
    %s44 = sphi 0, %s41
    %s45 = sphi 0, %s44
    %s61 = sphi 0, %s45
    %s69 = sphi 0, %s71
    %s72 = sphi 0, %s69
    %s73 = sphi 0, %s72
    %s89 = sphi 0, %s73
    %s97 = sphi 0, %s99
    %s100 = sphi 0, %s97
    %s101 = sphi 0, %s100
    %s117 = sphi 0, %s101
    %s125 = sphi 0, %s127
    %s128 = sphi 0, %s125
    %s129 = sphi 0, %s128
    %s145 = sphi 0, %s129
    %s153 = sphi 0, %s155
    %s156 = sphi 0, %s153
    %s157 = sphi 0, %s156
    %s173 = sphi 0, %s157
  $region4: #{transformer_forward.40} parent=0 // loop_header_branch
    %13 = sbr.rel (%p11) target = $region8
  $region5: #{transformer_forward.40} parent=0 // loop_body
    %s15 = ssub.s32 %s10, 1
    %s16 = ssub.s32 %s10, 2
    %s26 = sadd.s32 1, %s19
    %p27 = scmp.ge.s32.totalorder %s26, 1
    %s28 = scalar_select %p27, 0, %s26
    %s29 = sadd.s32 1, %s18
    %s30 = scalar_select %p27, %s29, %s18
    %p31 = scmp.ge.s32.totalorder %s30, 1
    %s32 = scalar_select %p31, 0, %s30
    %s33 = sadd.s32 1, %s17
    %s34 = scalar_select %p31, %s33, %s17
    %p35 = scmp.ge.s32.totalorder %s34, 2
    %s36 = scalar_select %p35, 0, %s34
    %s37 = ssub.s32 %s17, %s36
    %s38 = ssub.s32 %s18, %s32
    %s39 = sor.u32 %s37, %s38
    %p40 = scmp.eq.s32.totalorder %s39, 0
    %s42 = sadd.s32 %s41, 1
    %s43 = scalar_select %p40, %s41, %s42
    %p46 = pneg %p40
    %p47 = scmp.eq.s32.totalorder %s10, 1
    %p48 = por %p46, %p47
    %p49 = scmp.ne.s32.totalorder %s41, %s44
    %p50 = scmp.eq.s32.totalorder %s10, 0
    %p51 = por %p49, %p50
    %p52 = scmp.ne.s32.totalorder %s41, %s44
    %p53 = scmp.eq.s32.totalorder %s15, 1
    %p54 = por %p52, %p53
    %p55 = scmp.ne.s32.totalorder %s44, %s45
    %p56 = scmp.eq.s32.totalorder %s15, 0
    %p57 = por %p55, %p56
    %p58 = scmp.ne.s32.totalorder %s44, %s45
    %p59 = scmp.eq.s32.totalorder %s16, 1
    %p60 = por %p58, %p59
    %p62 = scmp.ne.s32.totalorder %s45, %s61
    %p63 = scmp.eq.s32.totalorder %s16, 0
    %p64 = por %p62, %p63
    %s65 = ssub.s32 %s17, %s36
    %s66 = ssub.s32 %s19, %s28
    %s67 = sor.u32 %s65, %s66
    %p68 = scmp.eq.s32.totalorder %s67, 0
    %s70 = sadd.s32 %s69, 1
    %s71 = scalar_select %p68, %s69, %s70
    %p74 = pneg %p68
    %p75 = scmp.eq.s32.totalorder %s10, 1
    %p76 = por %p74, %p75
    %p77 = scmp.ne.s32.totalorder %s69, %s72
    %p78 = scmp.eq.s32.totalorder %s10, 0
    %p79 = por %p77, %p78
    %p80 = scmp.ne.s32.totalorder %s69, %s72
    %p81 = scmp.eq.s32.totalorder %s15, 1
    %p82 = por %p80, %p81
    %p83 = scmp.ne.s32.totalorder %s72, %s73
    %p84 = scmp.eq.s32.totalorder %s15, 0
    %p85 = por %p83, %p84
    %p86 = scmp.ne.s32.totalorder %s72, %s73
    %p87 = scmp.eq.s32.totalorder %s16, 1
    %p88 = por %p86, %p87
    %p90 = scmp.ne.s32.totalorder %s73, %s89
    %p91 = scmp.eq.s32.totalorder %s16, 0
    %p92 = por %p90, %p91
    %s93 = ssub.s32 %s17, %s36
    %s94 = ssub.s32 %s19, %s28
    %s95 = sor.u32 %s93, %s94
    %p96 = scmp.eq.s32.totalorder %s95, 0
    %s98 = sadd.s32 %s97, 1
    %s99 = scalar_select %p96, %s97, %s98
    %p102 = pneg %p96
    %p103 = scmp.eq.s32.totalorder %s10, 1
    %p104 = por %p102, %p103
    %p105 = scmp.ne.s32.totalorder %s97, %s100
    %p106 = scmp.eq.s32.totalorder %s10, 0
    %p107 = por %p105, %p106
    %p108 = scmp.ne.s32.totalorder %s97, %s100
    %p109 = scmp.eq.s32.totalorder %s15, 1
    %p110 = por %p108, %p109
    %p111 = scmp.ne.s32.totalorder %s100, %s101
    %p112 = scmp.eq.s32.totalorder %s15, 0
    %p113 = por %p111, %p112
    %p114 = scmp.ne.s32.totalorder %s100, %s101
    %p115 = scmp.eq.s32.totalorder %s16, 1
    %p116 = por %p114, %p115
    %p118 = scmp.ne.s32.totalorder %s101, %s117
    %p119 = scmp.eq.s32.totalorder %s16, 0
    %p120 = por %p118, %p119
    %s121 = ssub.s32 %s17, %s36
    %s122 = ssub.s32 %s19, %s28
    %s123 = sor.u32 %s121, %s122
    %p124 = scmp.eq.s32.totalorder %s123, 0
    %s126 = sadd.s32 %s125, 1
    %s127 = scalar_select %p124, %s125, %s126
    %p130 = pneg %p124
    %p131 = scmp.eq.s32.totalorder %s10, 1
    %p132 = por %p130, %p131
    %p133 = scmp.ne.s32.totalorder %s125, %s128
    %p134 = scmp.eq.s32.totalorder %s10, 0
    %p135 = por %p133, %p134
    %p136 = scmp.ne.s32.totalorder %s125, %s128
    %p137 = scmp.eq.s32.totalorder %s15, 1
    %p138 = por %p136, %p137
    %p139 = scmp.ne.s32.totalorder %s128, %s129
    %p140 = scmp.eq.s32.totalorder %s15, 0
    %p141 = por %p139, %p140
    %p142 = scmp.ne.s32.totalorder %s128, %s129
    %p143 = scmp.eq.s32.totalorder %s16, 1
    %p144 = por %p142, %p143
    %p146 = scmp.ne.s32.totalorder %s129, %s145
    %p147 = scmp.eq.s32.totalorder %s16, 0
    %p148 = por %p146, %p147
    %s149 = ssub.s32 %s17, %s36
    %s150 = ssub.s32 %s18, %s32
    %s151 = sor.u32 %s149, %s150
    %p152 = scmp.eq.s32.totalorder %s151, 0
    %s154 = sadd.s32 %s153, 1
    %s155 = scalar_select %p152, %s153, %s154
    %p158 = pneg %p152
    %p159 = scmp.eq.s32.totalorder %s10, 1
    %p160 = por %p158, %p159
    %p161 = scmp.ne.s32.totalorder %s153, %s156
    %p162 = scmp.eq.s32.totalorder %s10, 0
    %p163 = por %p161, %p162
    %p164 = scmp.ne.s32.totalorder %s153, %s156
    %p165 = scmp.eq.s32.totalorder %s15, 1
    %p166 = por %p164, %p165
    %p167 = scmp.ne.s32.totalorder %s156, %s157
    %p168 = scmp.eq.s32.totalorder %s15, 0
    %p169 = por %p167, %p168
    %p170 = scmp.ne.s32.totalorder %s156, %s157
    %p171 = scmp.eq.s32.totalorder %s16, 1
    %p172 = por %p170, %p171
    %p174 = scmp.ne.s32.totalorder %s157, %s173
    %p175 = scmp.eq.s32.totalorder %s16, 0
    %p176 = por %p174, %p175
    %p177 = scmp.le.s32.totalorder 1, %s10
    %p178 = scmp.lt.s32.totalorder %s10, 3
    %p179 = pnand %p177, %p178
    %p180 = pneg %p179
    // Predicated region
    $region9: #{transformer_forward.40} parent=5 // pred_check
      _
    $region10: #{transformer_forward.40} parent=5 // pred_check_branch
      %182 = sbr.rel (%p179) target = $region12
    $region11: #{transformer_forward.40} parent=5 // pred_region
      %s183 = ssub.s32 %s10, 1
    $region12: #{transformer_forward.40} parent=5 // pred_fallthru
      _
    %p184 = scmp.lt.s32.totalorder %s10, 2
    // Predicated region
    $region13: #{transformer_forward.40} parent=5 // pred_check
      %p185 = pneg %p184
    $region14: #{transformer_forward.40} parent=5 // pred_check_branch
      %187 = sbr.rel (%p185) target = $region16
    $region15: #{transformer_forward.40} parent=5 // pred_region
      // Predicated region
      $region17: #{transformer_forward.40} parent=15 // pred_check
        %p188 = pneg %p51
      $region18: #{transformer_forward.40} parent=15 // pred_check_branch
        %190 = sbr.rel (%p188) target = $region20
      $region19: #{transformer_forward.40} parent=15 // pred_region
        %p191 = scmp.lt.s32.totalorder %s17, 1
        %s192 = scalar_select %p191, %s17, 1
        %p193 = scmp.lt.s32.totalorder %s18, 0
        %s194 = scalar_select %p193, %s18, 0
        %s195 = smul.addr %s194, 3
        %s196 = smul.addr %s192, 3
        %s197 = sadd.s32 %s195, %s196
        %s198 = smul.addr %s197, 4
        %s199 = scalar_lea.vmem %s0, %s198
      $region20: #{transformer_forward.40} parent=15 // pred_fallthru
        _
      // Predicated region
      $region21: #{transformer_forward.40} parent=15 // pred_check
        %p200 = pneg %p79
      $region22: #{transformer_forward.40} parent=15 // pred_check_branch
        %202 = sbr.rel (%p200) target = $region24
      $region23: #{transformer_forward.40} parent=15 // pred_region
        %p203 = scmp.lt.s32.totalorder %s17, 1
        %s204 = scalar_select %p203, %s17, 1
        %p205 = scmp.lt.s32.totalorder %s19, 0
        %s206 = scalar_select %p205, %s19, 0
        %s207 = smul.addr %s206, 3
        %s208 = sadd.s32 1, %s207
        %s209 = smul.addr %s204, 3
        %s210 = sadd.s32 %s208, %s209
        %s211 = smul.addr %s210, 4
        %s212 = scalar_lea.vmem %s1, %s211
      $region24: #{transformer_forward.40} parent=15 // pred_fallthru
        _
      // Predicated region
      $region25: #{transformer_forward.40} parent=15 // pred_check
        %p213 = pneg %p107
      $region26: #{transformer_forward.40} parent=15 // pred_check_branch
        %215 = sbr.rel (%p213) target = $region28
      $region27: #{transformer_forward.40} parent=15 // pred_region
        %p216 = scmp.lt.s32.totalorder %s17, 1
        %s217 = scalar_select %p216, %s17, 1
        %p218 = scmp.lt.s32.totalorder %s19, 0
        %s219 = scalar_select %p218, %s19, 0
        %s220 = smul.addr %s219, 3
        %s221 = sadd.s32 2, %s220
        %s222 = smul.addr %s217, 3
        %s223 = sadd.s32 %s221, %s222
        %s224 = smul.addr %s223, 4
        %s225 = scalar_lea.vmem %s2, %s224
      $region28: #{transformer_forward.40} parent=15 // pred_fallthru
        _
      // Predicated region
      $region29: #{transformer_forward.40} parent=15 // pred_check
        %p226 = pneg %p135
      $region30: #{transformer_forward.40} parent=15 // pred_check_branch
        %228 = sbr.rel (%p226) target = $region32
      $region31: #{transformer_forward.40} parent=15 // pred_region
        %p229 = scmp.lt.s32.totalorder %s17, 1
        %s230 = scalar_select %p229, %s17, 1
        %p231 = scmp.lt.s32.totalorder %s19, 0
        %s232 = scalar_select %p231, %s19, 0
        %s233 = sadd.s32 %s232, %s230
        %s234 = scalar_lea.vmem %s3, %s233
      $region32: #{transformer_forward.40} parent=15 // pred_fallthru
        _
    $region16: #{transformer_forward.40} parent=5 // pred_fallthru
      _
    %p235 = scmp.le.s32.totalorder 1, %s10
    %p236 = scmp.lt.s32.totalorder %s10, 3
    %p237 = pnand %p235, %p236
    %p238 = pneg %p237
    // Predicated region
    $region33: #{transformer_forward.40} parent=5 // pred_check
      _
    $region34: #{transformer_forward.40} parent=5 // pred_check_branch
      %240 = sbr.rel (%p237) target = $region36
    $region35: #{transformer_forward.40} parent=5 // pred_region
      %s241 = ssub.s32 %s10, 1
      %p242 = scmp.lt.s32.totalorder %s20, 1
      %s243 = scalar_select %p242, %s20, 1
      %p244 = scmp.lt.s32.totalorder %s21, 0
      %s245 = scalar_select %p244, %s21, 0
      %s246 = smul.addr %s245, 3
      %s247 = smul.addr %s243, 3
      %s248 = sadd.s32 %s246, %s247
      %s249 = smul.addr %s248, 4
      %s250 = scalar_lea.vmem %s0, %s249
      %p251 = pneg %p57
      %p252 = pneg %p54
      %p253 = scmp.lt.s32.totalorder %s20, 1
      %s254 = scalar_select %p253, %s20, 1
      %p255 = scmp.lt.s32.totalorder %s22, 0
      %s256 = scalar_select %p255, %s22, 0
      %s257 = smul.addr %s256, 3
      %s258 = sadd.s32 1, %s257
      %s259 = smul.addr %s254, 3
      %s260 = sadd.s32 %s258, %s259
      %s261 = smul.addr %s260, 4
      %s262 = scalar_lea.vmem %s1, %s261
      %p263 = pneg %p85
      %p264 = pneg %p82
      %p265 = scmp.lt.s32.totalorder %s20, 1
      %s266 = scalar_select %p265, %s20, 1
      %p267 = scmp.lt.s32.totalorder %s22, 0
      %s268 = scalar_select %p267, %s22, 0
      %s269 = smul.addr %s268, 3
      %s270 = sadd.s32 2, %s269
      %s271 = smul.addr %s266, 3
      %s272 = sadd.s32 %s270, %s271
      %s273 = smul.addr %s272, 4
      %s274 = scalar_lea.vmem %s2, %s273
      %p275 = pneg %p113
      %p276 = pneg %p110
      %p277 = scmp.lt.s32.totalorder %s20, 1
      %s278 = scalar_select %p277, %s20, 1
      %p279 = scmp.lt.s32.totalorder %s22, 0
      %s280 = scalar_select %p279, %s22, 0
      %s281 = sadd.s32 %s280, %s278
      %s282 = scalar_lea.vmem %s3, %s281
      %p283 = pneg %p141
      %p284 = pneg %p138
      %p285 = pneg %p169
      %p286 = pneg %p166
      %p287 = scmp.lt.s32.totalorder %s20, 1
      %s288 = scalar_select %p287, %s20, 1
      %p289 = scmp.lt.s32.totalorder %s21, 0
      %s290 = scalar_select %p289, %s21, 0
      %s291 = sadd.s32 %s290, %s288
      %s292 = smul.addr %s291, 4
      %s293 = scalar_lea.vmem %s4, %s292
      %p294 = scmp.lt.s32.totalorder %s20, 1
      %s295 = scalar_select %p294, %s20, 1
      %p296 = scmp.lt.s32.totalorder %s21, 0
      %s297 = scalar_select %p296, %s21, 0
      %s298 = smul.addr %s297, 3
      %s299 = smul.addr %s295, 3
      %s300 = sadd.s32 %s298, %s299
      %s301 = smul.addr %s300, 4
      %s302 = scalar_lea.vmem %s0, %s301
      %p303 = scmp.lt.s32.totalorder %s20, 1
      %s304 = scalar_select %p303, %s20, 1
      %p305 = scmp.lt.s32.totalorder %s22, 0
      %s306 = scalar_select %p305, %s22, 0
      %s307 = smul.addr %s306, 3
      %s308 = sadd.s32 1, %s307
      %s309 = smul.addr %s304, 3
      %s310 = sadd.s32 %s308, %s309
      %s311 = smul.addr %s310, 4
      %s312 = scalar_lea.vmem %s1, %s311
      %p313 = scmp.lt.s32.totalorder %s20, 1
      %s314 = scalar_select %p313, %s20, 1
      %p315 = scmp.lt.s32.totalorder %s22, 0
      %s316 = scalar_select %p315, %s22, 0
      %s317 = smul.addr %s316, 3
      %s318 = sadd.s32 2, %s317
      %s319 = smul.addr %s314, 3
      %s320 = sadd.s32 %s318, %s319
      %s321 = smul.addr %s320, 4
      %s322 = scalar_lea.vmem %s2, %s321
      %p323 = scmp.lt.s32.totalorder %s20, 1
      %s324 = scalar_select %p323, %s20, 1
      %p325 = scmp.lt.s32.totalorder %s22, 0
      %s326 = scalar_select %p325, %s22, 0
      %s327 = sadd.s32 %s326, %s324
      %s328 = scalar_lea.vmem %s3, %s327
      %p329 = scmp.lt.s32.totalorder %s20, 1
      %s330 = scalar_select %p329, %s20, 1
      %p331 = scmp.lt.s32.totalorder %s21, 0
      %s332 = scalar_select %p331, %s21, 0
      %s333 = sadd.s32 %s332, %s330
      %s334 = smul.addr %s333, 4
      %s335 = scalar_lea.vmem %s4, %s334
      %p337 = scmp.eq.s32.totalorder %s22, 0
      // Predicated region
      $region37: #{transformer_forward.40} parent=35 // pred_check
        %p338 = pneg %p337
      $region38: #{transformer_forward.40} parent=35 // pred_check_branch
        %340 = sbr.rel (%p338) target = $region40
      $region39: #{transformer_forward.40} parent=35 // pred_region
        %vm341 = vcmask 7168
        %342 = vst.msk [vmem:[#allocation2] sm:$0xff] %vm341, -inf
        %343 = vst.msk [vmem:[#allocation2 + $0x8] sm:$0xff] %vm341, -inf
        %344 = vst.msk [vmem:[#allocation2 + $0x10] sm:$0xff] %vm341, -inf
        %345 = vst.msk [vmem:[#allocation2 + $0x18] sm:$0xff] %vm341, -inf
        %346 = vst.msk [vmem:[#allocation3] sm:$0xff] %vm341, 0.0
        %347 = vst.msk [vmem:[#allocation3 + $0x8] sm:$0xff] %vm341, 0.0
        %348 = vst.msk [vmem:[#allocation3 + $0x10] sm:$0xff] %vm341, 0.0
        %349 = vst.msk [vmem:[#allocation3 + $0x18] sm:$0xff] %vm341, 0.0
        %vm350 = vcmask 261120
        %351 = vst.msk [vmem:[#allocation4] sm:$0xff] %vm350, 0.0
        %352 = vst.msk [vmem:[#allocation4 + $0x8] sm:$0xff] %vm350, 0.0
        %353 = vst.msk [vmem:[#allocation4 + $0x10] sm:$0xff] %vm350, 0.0
        %354 = vst.msk [vmem:[#allocation4 + $0x18] sm:$0xff] %vm350, 0.0
      $region40: #{transformer_forward.40} parent=35 // pred_fallthru
        _
      %s355 = smul.u32 %s22, 8
      %s356 = smul.u32 %s21, 8
      %s357 = sadd.s32 %s356, 7
      %p358 = scmp.le.s32.totalorder %s355, %s357
      // Predicated region
      $region41: #{transformer_forward.40} parent=35 // pred_check
        %p359 = pneg %p358
      $region42: #{transformer_forward.40} parent=35 // pred_check_branch
        %361 = sbr.rel (%p359) target = $region44
      $region43: #{transformer_forward.40} parent=35 // pred_region
        %v362 = vld [vmem:[%s302] sm:$0xf]
        %v363 = vld [vmem:[%s312] sm:$0xf]
        %v364 = vld [vmem:[%s322] sm:$0xf]
        %v365 = vld [vmem:[%s328] sm:$0x1]
        %vm366 = vcmp.gt.f32.partialorder %v365, 0.5
        %v367 = vsel %vm366, -1e+09, 0.0
        %v369 = vperm.slane %v367, 0
        %v371 = vlaneseq
        %v372 = vshrl.u32 %v371, 7
        %v373 = vstv %s356
        %v374 = vadd.s32 %v373, %v372
        %v375 = vlaneseq
        %v376 = vand.u32 %v375, 127
        %v377 = vstv %s355
        %v378 = vadd.s32 %v377, %v376
        %vm379 = vcmp.gt.s32.totalorder %v378, %v374
        %v380 = vsel %vm379, -1e+09, %v369
        %vm381 = vcmask 261120
        %v383 = vsel %vm381, %v362, 0
        %v386 = vsel %vm381, %v363, 0
        %388 = vmatpush.bf16.xpose.msra.mxu0 0
        %389 = vmatpush.bf16.xpose.msra.mxu0 0
        %390 = vmatpush.bf16.xpose.msra.mxu0 0
        %391 = vmatpush.bf16.xpose.msra.mxu0 0
        %392 = vmatpush.bf16.xpose.msra.mxu0 0
        %393 = vmatpush.bf16.xpose.msra.mxu0 0
        %394 = vmatpush.bf16.xpose.msra.mxu0 0
        %395 = vmatpush.bf16.xpose.msra.mxu0 %v386
        %396 = vmatmul.bf16.gmra.mxu0 %v383
        %v397 = vpop.f32.mrf.mxu0
        %v398 = vadd.f32 %v380, %v397
        %v399 = vpop.f32.mrf.mxu0
        %400 = vdwg.mxu0
        %v401 = vld [vmem:[#allocation2] sm:$0xff]
        %vm402 = vcmask 64512
        %v403 = vsel %vm402, %v398, -inf
        %404 = vmax.xlane.f32.xlu0 %v403
        %v405 = vpop.xlane.xlu0 %404
        %v406 = vmax.f32 %v401, %v405
        %v407 = vsub.f32 %v401, %v406
        %v408 = vmul.f32 %v407, 1.442695
        %v409 = vpow.pop %v408
        %411 = vset.pattern.permute.xlu0 0
        %412 = vperm.xlu0 %411, %v406
        %v413 = vpop.permute.xlu0 %412
        %v415 = vsub.f32 %v398, %v413
        %v416 = vmul.f32 %v415, 1.442695
        %v417 = vpow.pop %v416
        %v418 = vld [vmem:[#allocation3] sm:$0xff]
        %v419 = vmul.f32 %v409, %v418
        %v420 = vsel %vm402, %v417, 0.0
        %421 = vadd.xlane.f32.xlu0 %v420
        %v422 = vpop.xlane.xlu0 %421
        %v423 = vadd.f32 %v419, %v422
        %vm424 = vcmask 7168
        %425 = vst.msk [vmem:[#allocation3] sm:$0xff] %vm424, %v423
        %v426 = vpack.c.bf16 %v417, %v417
        %v428 = vsel %vm402, %v426, 0
        %vm430 = vcmask 1043456
        %v432 = vsel %vm430, %v364, 0
        %434 = vmatpush.bf16.msra.mxu0 0
        %435 = vmatpush.bf16.msra.mxu0 0
        %436 = vmatpush.bf16.msra.mxu0 0
        %437 = vmatpush.bf16.msra.mxu0 0
        %438 = vmatpush.bf16.msra.mxu0 0
        %439 = vmatpush.bf16.msra.mxu0 0
        %440 = vmatpush.bf16.msra.mxu0 0
        %441 = vmatpush.bf16.msra.mxu0 %v432
        %442 = vmatmul.bf16.gmra.mxu0 %v428
        %v443 = vpop.f32.mrf.mxu0
        %v444 = vadd.f32 0.0, %v443
        %v445 = vpop.f32.mrf.mxu0
        %446 = vdwg.mxu0
        %v447 = vld [vmem:[#allocation4] sm:$0xff]
        %449 = vset.pattern.permute.xlu0 0
        %450 = vperm.xlu0 %449, %v409
        %v451 = vpop.permute.xlu0 %450
        %v453 = vmul.f32 %v451, %v447
        %v454 = vadd.f32 %v453, %v444
        %455 = vst.msk [vmem:[#allocation4] sm:$0xff] %vm381, %v454
        %456 = vst.msk [vmem:[#allocation2] sm:$0xff] %vm424, %v406
        %v458 = vunpack.c.l.b16 %v362
        %v459 = vpack.c.b16 %v458, %v458
        %460 = vrot.lane.b32.xlu0 %v459, 96
        %v461 = vpop.permute.xlu0 %460
        %v463 = vunpack.c.l.b16 %v363
        %v464 = vpack.c.b16 %v463, %v463
        %465 = vrot.lane.b32.xlu0 %v464, 96
        %v466 = vpop.permute.xlu0 %465
        %v468 = vsel %vm381, %v461, 0
        %v471 = vsel %vm381, %v466, 0
        %473 = vmatpush.bf16.xpose.msra.mxu0 0
        %474 = vmatpush.bf16.xpose.msra.mxu0 0
        %475 = vmatpush.bf16.xpose.msra.mxu0 0
        %476 = vmatpush.bf16.xpose.msra.mxu0 0
        %477 = vmatpush.bf16.xpose.msra.mxu0 0
        %478 = vmatpush.bf16.xpose.msra.mxu0 0
        %479 = vmatpush.bf16.xpose.msra.mxu0 0
        %480 = vmatpush.bf16.xpose.msra.mxu0 %v471
        %481 = vmatmul.bf16.gmra.mxu0 %v468
        %v482 = vpop.f32.mrf.mxu0
        %v483 = vadd.f32 %v380, %v482
        %v484 = vpop.f32.mrf.mxu0
        %485 = vdwg.mxu0
        %s486 = scalar_lea.vmem [#allocation2], 8
        %v487 = vld [vmem:[%s486] sm:$0xff]
        %v488 = vsel %vm402, %v483, -inf
        %489 = vmax.xlane.f32.xlu0 %v488
        %v490 = vpop.xlane.xlu0 %489
        %v491 = vmax.f32 %v487, %v490
        %v492 = vsub.f32 %v487, %v491
        %v493 = vmul.f32 %v492, 1.442695
        %v494 = vpow.pop %v493
        %496 = vset.pattern.permute.xlu0 0
        %497 = vperm.xlu0 %496, %v491
        %v498 = vpop.permute.xlu0 %497
        %v500 = vsub.f32 %v483, %v498
        %v501 = vmul.f32 %v500, 1.442695
        %v502 = vpow.pop %v501
        %s503 = scalar_lea.vmem [#allocation3], 8
        %v504 = vld [vmem:[%s503] sm:$0xff]
        %v505 = vmul.f32 %v494, %v504
        %v506 = vsel %vm402, %v502, 0.0
        %507 = vadd.xlane.f32.xlu0 %v506
        %v508 = vpop.xlane.xlu0 %507
        %v509 = vadd.f32 %v505, %v508
        %510 = vst.msk [vmem:[%s503] sm:$0xff] %vm424, %v509
        %v511 = vpack.c.bf16 %v502, %v502
        %v513 = vunpack.c.l.b16 %v364
        %v514 = vpack.c.b16 %v513, %v513
        %515 = vrot.lane.b32.xlu0 %v514, 96
        %v516 = vpop.permute.xlu0 %515
        %v518 = vsel %vm402, %v511, 0
        %v521 = vsel %vm430, %v516, 0
        %523 = vmatpush.bf16.msra.mxu0 0
        %524 = vmatpush.bf16.msra.mxu0 0
        %525 = vmatpush.bf16.msra.mxu0 0
        %526 = vmatpush.bf16.msra.mxu0 0
        %527 = vmatpush.bf16.msra.mxu0 0
        %528 = vmatpush.bf16.msra.mxu0 0
        %529 = vmatpush.bf16.msra.mxu0 0
        %530 = vmatpush.bf16.msra.mxu0 %v521
        %531 = vmatmul.bf16.gmra.mxu0 %v518
        %v532 = vpop.f32.mrf.mxu0
        %v533 = vadd.f32 0.0, %v532
        %v534 = vpop.f32.mrf.mxu0
        %535 = vdwg.mxu0
        %s536 = scalar_lea.vmem [#allocation4], 8
        %v537 = vld [vmem:[%s536] sm:$0xff]
        %539 = vset.pattern.permute.xlu0 0
        %540 = vperm.xlu0 %539, %v494
        %v541 = vpop.permute.xlu0 %540
        %v543 = vmul.f32 %v541, %v537
        %v544 = vadd.f32 %v543, %v533
        %545 = vst.msk [vmem:[%s536] sm:$0xff] %vm381, %v544
        %546 = vst.msk [vmem:[%s486] sm:$0xff] %vm424, %v491
        %547 = vrot.lane.b32.xlu0 %v459, 64
        %v548 = vpop.permute.xlu0 %547
        %549 = vrot.lane.b32.xlu0 %v464, 64
        %v550 = vpop.permute.xlu0 %549
        %v552 = vsel %vm381, %v548, 0
        %v555 = vsel %vm381, %v550, 0
        %557 = vmatpush.bf16.xpose.msra.mxu0 0
        %558 = vmatpush.bf16.xpose.msra.mxu0 0
        %559 = vmatpush.bf16.xpose.msra.mxu0 0
        %560 = vmatpush.bf16.xpose.msra.mxu0 0
        %561 = vmatpush.bf16.xpose.msra.mxu0 0
        %562 = vmatpush.bf16.xpose.msra.mxu0 0
        %563 = vmatpush.bf16.xpose.msra.mxu0 0
        %564 = vmatpush.bf16.xpose.msra.mxu0 %v555
        %565 = vmatmul.bf16.gmra.mxu0 %v552
        %v566 = vpop.f32.mrf.mxu0
        %v567 = vadd.f32 %v380, %v566
        %v568 = vpop.f32.mrf.mxu0
        %569 = vdwg.mxu0
        %s570 = scalar_lea.vmem [#allocation2], 16
        %v571 = vld [vmem:[%s570] sm:$0xff]
        %v572 = vsel %vm402, %v567, -inf
        %573 = vmax.xlane.f32.xlu0 %v572
        %v574 = vpop.xlane.xlu0 %573
        %v575 = vmax.f32 %v571, %v574
        %v576 = vsub.f32 %v571, %v575
        %v577 = vmul.f32 %v576, 1.442695
        %v578 = vpow.pop %v577
        %580 = vset.pattern.permute.xlu0 0
        %581 = vperm.xlu0 %580, %v575
        %v582 = vpop.permute.xlu0 %581
        %v584 = vsub.f32 %v567, %v582
        %v585 = vmul.f32 %v584, 1.442695
        %v586 = vpow.pop %v585
        %s587 = scalar_lea.vmem [#allocation3], 16
        %v588 = vld [vmem:[%s587] sm:$0xff]
        %v589 = vmul.f32 %v578, %v588
        %v590 = vsel %vm402, %v586, 0.0
        %591 = vadd.xlane.f32.xlu0 %v590
        %v592 = vpop.xlane.xlu0 %591
        %v593 = vadd.f32 %v589, %v592
        %594 = vst.msk [vmem:[%s587] sm:$0xff] %vm424, %v593
        %v595 = vpack.c.bf16 %v586, %v586
        %596 = vrot.lane.b32.xlu0 %v514, 64
        %v597 = vpop.permute.xlu0 %596
        %v599 = vsel %vm402, %v595, 0
        %v602 = vsel %vm430, %v597, 0
        %604 = vmatpush.bf16.msra.mxu0 0
        %605 = vmatpush.bf16.msra.mxu0 0
        %606 = vmatpush.bf16.msra.mxu0 0
        %607 = vmatpush.bf16.msra.mxu0 0
        %608 = vmatpush.bf16.msra.mxu0 0
        %609 = vmatpush.bf16.msra.mxu0 0
        %610 = vmatpush.bf16.msra.mxu0 0
        %611 = vmatpush.bf16.msra.mxu0 %v602
        %612 = vmatmul.bf16.gmra.mxu0 %v599
        %v613 = vpop.f32.mrf.mxu0
        %v614 = vadd.f32 0.0, %v613
        %v615 = vpop.f32.mrf.mxu0
        %616 = vdwg.mxu0
        %s617 = scalar_lea.vmem [#allocation4], 16
        %v618 = vld [vmem:[%s617] sm:$0xff]
        %620 = vset.pattern.permute.xlu0 0
        %621 = vperm.xlu0 %620, %v578
        %v622 = vpop.permute.xlu0 %621
        %v624 = vmul.f32 %v622, %v618
        %v625 = vadd.f32 %v624, %v614
        %626 = vst.msk [vmem:[%s617] sm:$0xff] %vm381, %v625
        %627 = vst.msk [vmem:[%s570] sm:$0xff] %vm424, %v575
        %628 = vrot.lane.b32.xlu0 %v459, 32
        %v629 = vpop.permute.xlu0 %628
        %630 = vrot.lane.b32.xlu0 %v464, 32
        %v631 = vpop.permute.xlu0 %630
        %v633 = vsel %vm381, %v629, 0
        %v636 = vsel %vm381, %v631, 0
        %638 = vmatpush.bf16.xpose.msra.mxu0 0
        %639 = vmatpush.bf16.xpose.msra.mxu0 0
        %640 = vmatpush.bf16.xpose.msra.mxu0 0
        %641 = vmatpush.bf16.xpose.msra.mxu0 0
        %642 = vmatpush.bf16.xpose.msra.mxu0 0
        %643 = vmatpush.bf16.xpose.msra.mxu0 0
        %644 = vmatpush.bf16.xpose.msra.mxu0 0
        %645 = vmatpush.bf16.xpose.msra.mxu0 %v636
        %646 = vmatmul.bf16.gmra.mxu0 %v633
        %v647 = vpop.f32.mrf.mxu0
        %v648 = vadd.f32 %v380, %v647
        %v649 = vpop.f32.mrf.mxu0
        %650 = vdwg.mxu0
        %s651 = scalar_lea.vmem [#allocation2], 24
        %v652 = vld [vmem:[%s651] sm:$0xff]
        %v653 = vsel %vm402, %v648, -inf
        %654 = vmax.xlane.f32.xlu0 %v653
        %v655 = vpop.xlane.xlu0 %654
        %v656 = vmax.f32 %v652, %v655
        %v657 = vsub.f32 %v652, %v656
        %v658 = vmul.f32 %v657, 1.442695
        %v659 = vpow.pop %v658
        %661 = vset.pattern.permute.xlu0 0
        %662 = vperm.xlu0 %661, %v656
        %v663 = vpop.permute.xlu0 %662
        %v665 = vsub.f32 %v648, %v663
        %v666 = vmul.f32 %v665, 1.442695
        %v667 = vpow.pop %v666
        %s668 = scalar_lea.vmem [#allocation3], 24
        %v669 = vld [vmem:[%s668] sm:$0xff]
        %v670 = vmul.f32 %v659, %v669
        %v671 = vsel %vm402, %v667, 0.0
        %672 = vadd.xlane.f32.xlu0 %v671
        %v673 = vpop.xlane.xlu0 %672
        %v674 = vadd.f32 %v670, %v673
        %675 = vst.msk [vmem:[%s668] sm:$0xff] %vm424, %v674
        %v676 = vpack.c.bf16 %v667, %v667
        %677 = vrot.lane.b32.xlu0 %v514, 32
        %v678 = vpop.permute.xlu0 %677
        %v680 = vsel %vm402, %v676, 0
        %v683 = vsel %vm430, %v678, 0
        %685 = vmatpush.bf16.msra.mxu0 0
        %686 = vmatpush.bf16.msra.mxu0 0
        %687 = vmatpush.bf16.msra.mxu0 0
        %688 = vmatpush.bf16.msra.mxu0 0
        %689 = vmatpush.bf16.msra.mxu0 0
        %690 = vmatpush.bf16.msra.mxu0 0
        %691 = vmatpush.bf16.msra.mxu0 0
        %692 = vmatpush.bf16.msra.mxu0 %v683
        %693 = vmatmul.bf16.gmra.mxu0 %v680
        %v694 = vpop.f32.mrf.mxu0
        %v695 = vadd.f32 0.0, %v694
        %v696 = vpop.f32.mrf.mxu0
        %697 = vdwg.mxu0
        %s698 = scalar_lea.vmem [#allocation4], 24
        %v699 = vld [vmem:[%s698] sm:$0xff]
        %701 = vset.pattern.permute.xlu0 0
        %702 = vperm.xlu0 %701, %v659
        %v703 = vpop.permute.xlu0 %702
        %v705 = vmul.f32 %v703, %v699
        %v706 = vadd.f32 %v705, %v695
        %707 = vst.msk [vmem:[%s698] sm:$0xff] %vm381, %v706
        %708 = vst.msk [vmem:[%s651] sm:$0xff] %vm424, %v656
      $region44: #{transformer_forward.40} parent=35 // pred_fallthru
        _
      // Predicated region
      $region45: #{transformer_forward.40} parent=35 // pred_check
        %p709 = pneg %p337
      $region46: #{transformer_forward.40} parent=35 // pred_check_branch
        %711 = sbr.rel (%p709) target = $region48
      $region47: #{transformer_forward.40} parent=35 // pred_region
        %v712 = vld [vmem:[#allocation3] sm:$0xff]
        %v713 = vrcp.pop %v712
        %v714 = vld [vmem:[#allocation4] sm:$0xff]
        %716 = vset.pattern.permute.xlu0 0
        %717 = vperm.xlu0 %716, %v713
        %v718 = vpop.permute.xlu0 %717
        %v720 = vmul.f32 %v714, %v718
        %v721 = vpack.c.bf16 %v720, %v720
        %vm722 = vcmask 257024
        %723 = vst.msk [vmem:[%s335] sm:$0xf] %vm722, %v721
        %s724 = scalar_lea.vmem [#allocation3], 8
        %v725 = vld [vmem:[%s724] sm:$0xff]
        %v726 = vrcp.pop %v725
        %s727 = scalar_lea.vmem [#allocation4], 8
        %v728 = vld [vmem:[%s727] sm:$0xff]
        %730 = vset.pattern.permute.xlu0 0
        %731 = vperm.xlu0 %730, %v726
        %v732 = vpop.permute.xlu0 %731
        %v734 = vmul.f32 %v728, %v732
        %v735 = vpack.c.bf16 %v734, %v734
        %737 = vrot.lane.b32.xlu0 %v735, 32
        %v738 = vpop.permute.xlu0 %737
        %vm740 = vcmask 519424
        %741 = vst.msk [vmem:[%s335] sm:$0xf] %vm740, %v738
        %s742 = scalar_lea.vmem [#allocation3], 16
        %v743 = vld [vmem:[%s742] sm:$0xff]
        %v744 = vrcp.pop %v743
        %s745 = scalar_lea.vmem [#allocation4], 16
        %v746 = vld [vmem:[%s745] sm:$0xff]
        %748 = vset.pattern.permute.xlu0 0
        %749 = vperm.xlu0 %748, %v744
        %v750 = vpop.permute.xlu0 %749
        %v752 = vmul.f32 %v746, %v750
        %v753 = vpack.c.bf16 %v752, %v752
        %755 = vrot.lane.b32.xlu0 %v753, 64
        %v756 = vpop.permute.xlu0 %755
        %vm758 = vcmask 781824
        %759 = vst.msk [vmem:[%s335] sm:$0xf] %vm758, %v756
        %s760 = scalar_lea.vmem [#allocation3], 24
        %v761 = vld [vmem:[%s760] sm:$0xff]
        %v762 = vrcp.pop %v761
        %s763 = scalar_lea.vmem [#allocation4], 24
        %v764 = vld [vmem:[%s763] sm:$0xff]
        %766 = vset.pattern.permute.xlu0 0
        %767 = vperm.xlu0 %766, %v762
        %v768 = vpop.permute.xlu0 %767
        %v770 = vmul.f32 %v764, %v768
        %v771 = vpack.c.bf16 %v770, %v770
        %773 = vrot.lane.b32.xlu0 %v771, 96
        %v774 = vpop.permute.xlu0 %773
        %vm776 = vcmask 1044224
        %777 = vst.msk [vmem:[%s335] sm:$0xf] %vm776, %v774
      $region48: #{transformer_forward.40} parent=35 // pred_fallthru
        _
      %p778 = scmp.lt.s32.totalorder %s20, 1
      %s779 = scalar_select %p778, %s20, 1
      %p780 = scmp.lt.s32.totalorder %s21, 0
      %s781 = scalar_select %p780, %s21, 0
      %s782 = sadd.s32 %s781, %s779
      %s783 = smul.addr %s782, 4
      %s784 = scalar_lea.vmem %s4, %s783
      // Predicated region
      $region49: #{transformer_forward.40} parent=35 // pred_check
        %p785 = pneg %p166
      $region50: #{transformer_forward.40} parent=35 // pred_check_branch
        %787 = sbr.rel (%p785) target = $region52
      $region51: #{transformer_forward.40} parent=35 // pred_region
        _
      $region52: #{transformer_forward.40} parent=35 // pred_fallthru
        _
    $region36: #{transformer_forward.40} parent=5 // pred_fallthru
      _
    %p788 = scmp.le.s32.totalorder 2, %s10
    // Predicated region
    $region53: #{transformer_forward.40} parent=5 // pred_check
      %p789 = pneg %p788
    $region54: #{transformer_forward.40} parent=5 // pred_check_branch
      %791 = sbr.rel (%p789) target = $region56
    $region55: #{transformer_forward.40} parent=5 // pred_region
      %s792 = ssub.s32 %s10, 2
      // Predicated region
      $region57: #{transformer_forward.40} parent=55 // pred_check
        %p793 = pneg %p172
      $region58: #{transformer_forward.40} parent=55 // pred_check_branch
        %795 = sbr.rel (%p793) target = $region60
      $region59: #{transformer_forward.40} parent=55 // pred_region
        %p796 = scmp.lt.s32.totalorder %s23, 1
        %s797 = scalar_select %p796, %s23, 1
        %p798 = scmp.lt.s32.totalorder %s24, 0
        %s799 = scalar_select %p798, %s24, 0
        %s800 = sadd.s32 %s799, %s797
        %s801 = smul.addr %s800, 4
        %s802 = scalar_lea.vmem %s4, %s801
      $region60: #{transformer_forward.40} parent=55 // pred_fallthru
        _
    $region56: #{transformer_forward.40} parent=5 // pred_fallthru
      _
  $region6: #{transformer_forward.40} parent=0 // loop_footer
    %s14 = sadd.s32 1, %s10
  $region7: #{transformer_forward.40} parent=0 // loop_footer_branch
    %9 = sbr.rel target = $region3
  $region8: #{transformer_forward.40} parent=0 // loop_exit
    _

// kernel: transformer_forward.41
$region0: #{transformer_forward.41}
  #allocation0 [shape = 'u32[]', space=smem, size = 0x4, offset = 0x4, fixed_abs, tag = 'smem constant byte address 0x4 - core index']
  #allocation1 [shape = 'u32[72,128]{1,0:T(1,128)}', space=vmem, size = 0x9000, scoped, tag = 'internal scratch']
  #allocation2 [shape = 'f32[16,128]{1,0:T(8,128)}', space=vmem, size = 0x2000, scoped, tag = 'scratch operand']
  %s0 = inlined_call_operand.vmem [shape: bf16[16,128], index: 0, kind: input, shape index: {}]
  %s1 = inlined_call_operand.hbm [shape: bf16[128,128], index: 1, kind: input, shape index: {}]
  %s2 = inlined_call_operand.vmem [shape: f32[1,128], index: 2, kind: input, shape index: {}]
  %s3 = inlined_call_operand.vmem [shape: bf16[16,128], index: 3, kind: input, shape index: {}]
  %s4 = inlined_call_operand.vmem [shape: f32[1,128], index: 4, kind: input, shape index: {}]
  %s5 = inlined_call_operand.vmem [shape: f32[1,128], index: 5, kind: input, shape index: {}]
  %s6 = inlined_call_operand.vmem [shape: bf16[16,128], index: 6, kind: output, shape index: {}]
  %s7 = sld [smem:[#allocation0]]
  $region46: #{transformer_forward.41} parent=0
    _
  %s9 = ssub.s32 1, %s7
  %s10 = scalar_select 0, %s9, %s7
  $region1: #{transformer_forward.41} parent=0
    #allocation3 [shape = 'u8[32768]{0}', space=vmem, size = 0x8000, scoped, tag = 'input window, operand 1, single buffered']
    #allocation4 [shape = 's32[1]{0}', space=sflag, size = 0x4, scoped, tag = 'scoped memory for transformer_forward.41']
    %11 = vsyncpa [#allocation4], 0
    // Predicated region
    $region2: #{transformer_forward.41} parent=1 // pred_check
      _
    $region3: #{transformer_forward.41} parent=1 // pred_check_branch
      %13 = sbr.rel (0) target = $region5
    $region4: #{transformer_forward.41} parent=1 // pred_region
      _
    $region5: #{transformer_forward.41} parent=1 // pred_fallthru
      _
    // Predicated region
    $region6: #{transformer_forward.41} parent=1 // pred_check
      _
    $region7: #{transformer_forward.41} parent=1 // pred_check_branch
      %15 = sbr.rel (0) target = $region9
    $region8: #{transformer_forward.41} parent=1 // pred_region
      %17 = vsyncadd [#allocation4], 0
      %s18 = sshll.u32 %s1, 4
      %s19 = int_to_ptr.hbm [resolvable:$true] %s18
      %s20 = sshll.u32 [#allocation3], 4
      %s21 = int_to_ptr.vmem [resolvable:$true] %s20
      %26 = dma.hbm_to_vmem [thread:$0]  %s19, 1024, %s21, [#allocation4], 64, 64, 4
    $region9: #{transformer_forward.41} parent=1 // pred_fallthru
      _
    // Predicated region
    $region10: #{transformer_forward.41} parent=1 // pred_check
      _
    $region11: #{transformer_forward.41} parent=1 // pred_check_branch
      %28 = sbr.rel (0) target = $region13
    $region12: #{transformer_forward.41} parent=1 // pred_region
      _
    $region13: #{transformer_forward.41} parent=1 // pred_fallthru
      _
    // Predicated region
    $region14: #{transformer_forward.41} parent=1 // pred_check
      _
    $region15: #{transformer_forward.41} parent=1 // pred_check_branch
      %30 = sbr.rel (0) target = $region17
    $region16: #{transformer_forward.41} parent=1 // pred_region
      _
    $region17: #{transformer_forward.41} parent=1 // pred_fallthru
      _
    // Predicated region
    $region18: #{transformer_forward.41} parent=1 // pred_check
      _
    $region19: #{transformer_forward.41} parent=1 // pred_check_branch
      %32 = sbr.rel (0) target = $region21
    $region20: #{transformer_forward.41} parent=1 // pred_region
      _
    $region21: #{transformer_forward.41} parent=1 // pred_fallthru
      _
    // Predicated region
    $region22: #{transformer_forward.41} parent=1 // pred_check
      _
    $region23: #{transformer_forward.41} parent=1 // pred_check_branch
      %34 = sbr.rel (0) target = $region25
    $region24: #{transformer_forward.41} parent=1 // pred_region
      _
    $region25: #{transformer_forward.41} parent=1 // pred_fallthru
      _
    // Predicated region
    $region26: #{transformer_forward.41} parent=1 // pred_check
      _
    $region27: #{transformer_forward.41} parent=1 // pred_check_branch
      %36 = sbr.rel (0) target = $region29
    $region28: #{transformer_forward.41} parent=1 // pred_region
      %38 = dma.done [#allocation4], 1024
    $region29: #{transformer_forward.41} parent=1 // pred_fallthru
      _
    %p39 = scmp.eq.s32.totalorder 0, 0
    // Predicated region
    $region30: #{transformer_forward.41} parent=1 // pred_check
      %p40 = pneg %p39
    $region31: #{transformer_forward.41} parent=1 // pred_check_branch
      %42 = sbr.rel (%p40) target = $region33
    $region32: #{transformer_forward.41} parent=1 // pred_region
      %43 = vst [vmem:[#allocation2] sm:$0xff] 0.0
      %44 = vst [vmem:[#allocation2 + $0x8] sm:$0xff] 0.0
    $region33: #{transformer_forward.41} parent=1 // pred_fallthru
      _
    %v45 = vld [vmem:[#allocation2] sm:$0xff]
    %v46 = vld [vmem:[#allocation2 + $0x8] sm:$0xff]
    %v47 = vld [vmem:[%s0] sm:$0xf]
    %v48 = vld [vmem:[%s0 + $0x4] sm:$0xf]
    %v49 = vld [vmem:[#allocation3] sm:$0xf]
    %v50 = vld [vmem:[#allocation3 + $0x4] sm:$0xf]
    %v51 = vld [vmem:[#allocation3 + $0x8] sm:$0xf]
    %v52 = vld [vmem:[#allocation3 + $0xc] sm:$0xf]
    %v53 = vld [vmem:[#allocation3 + $0x10] sm:$0xf]
    %v54 = vld [vmem:[#allocation3 + $0x14] sm:$0xf]
    %v55 = vld [vmem:[#allocation3 + $0x18] sm:$0xf]
    %v56 = vld [vmem:[#allocation3 + $0x1c] sm:$0xf]
    %v57 = vld [vmem:[#allocation3 + $0x20] sm:$0xf]
    %v58 = vld [vmem:[#allocation3 + $0x24] sm:$0xf]
    %v59 = vld [vmem:[#allocation3 + $0x28] sm:$0xf]
    %v60 = vld [vmem:[#allocation3 + $0x2c] sm:$0xf]
    %v61 = vld [vmem:[#allocation3 + $0x30] sm:$0xf]
    %v62 = vld [vmem:[#allocation3 + $0x34] sm:$0xf]
    %v63 = vld [vmem:[#allocation3 + $0x38] sm:$0xf]
    %v64 = vld [vmem:[#allocation3 + $0x3c] sm:$0xf]
    %v67 = vunpack.c.l.b16 %v47
    %v68 = vunpack.c.l.b16 %v48
    %v69 = vpack.c.b16 %v68, %v67
    %v87 = vunpack.c.l.b16 %v49
    %v88 = vunpack.c.l.b16 %v50
    %v89 = vunpack.c.l.b16 %v51
    %v90 = vunpack.c.l.b16 %v52
    %v91 = vunpack.c.l.b16 %v53
    %v92 = vunpack.c.l.b16 %v54
    %v93 = vunpack.c.l.b16 %v55
    %v94 = vunpack.c.l.b16 %v56
    %v95 = vunpack.c.l.b16 %v57
    %v96 = vunpack.c.l.b16 %v58
    %v97 = vunpack.c.l.b16 %v59
    %v98 = vunpack.c.l.b16 %v60
    %v99 = vunpack.c.l.b16 %v61
    %v100 = vunpack.c.l.b16 %v62
    %v101 = vunpack.c.l.b16 %v63
    %v102 = vunpack.c.l.b16 %v64
    %v103 = vpack.c.b16 %v88, %v87
    %v104 = vpack.c.b16 %v90, %v89
    %v105 = vpack.c.b16 %v92, %v91
    %v106 = vpack.c.b16 %v94, %v93
    %v107 = vpack.c.b16 %v96, %v95
    %v108 = vpack.c.b16 %v98, %v97
    %v109 = vpack.c.b16 %v100, %v99
    %v110 = vpack.c.b16 %v102, %v101
    %119 = vmatpush.bf16.msra.mxu0 %v110
    %120 = vmatpush.bf16.msra.mxu0 %v109
    %121 = vmatpush.bf16.msra.mxu0 %v108
    %122 = vmatpush.bf16.msra.mxu0 %v107
    %123 = vmatpush.bf16.msra.mxu0 %v106
    %124 = vmatpush.bf16.msra.mxu0 %v105
    %125 = vmatpush.bf16.msra.mxu0 %v104
    %126 = vmatpush.bf16.msra.mxu0 %v103
    %127 = vmatmul.bf16.gmra.mxu0 %v69
    %v128 = vpop.f32.mrf.mxu0
    %v129 = vadd.f32 0.0, %v128
    %v130 = vpop.f32.mrf.mxu0
    %v131 = vadd.f32 0.0, %v130
    %132 = vdwg.mxu0
    %v133 = vadd.f32 %v45, %v129
    %v134 = vadd.f32 %v46, %v131
    %135 = vst [vmem:[#allocation2] sm:$0xff] %v133
    %136 = vst [vmem:[#allocation2 + $0x8] sm:$0xff] %v134
    // Predicated region
    $region34: #{transformer_forward.41} parent=1 // pred_check
      %p137 = pneg %p39
    $region35: #{transformer_forward.41} parent=1 // pred_check_branch
      %139 = sbr.rel (%p137) target = $region37
    $region36: #{transformer_forward.41} parent=1 // pred_region
      %v140 = vld [vmem:[#allocation2] sm:$0xff]
      %v141 = vld [vmem:[#allocation2 + $0x8] sm:$0xff]
      %v142 = vld [vmem:[%s2] sm:$0x1]
      %v144 = vperm.slane %v142, 0
      %v146 = vadd.f32 %v140, %v144
      %v147 = vadd.f32 %v141, %v144
      %v148 = vld [vmem:[%s3] sm:$0xf]
      %v149 = vld [vmem:[%s3 + $0x4] sm:$0xf]
      %v150 = vunpack.c.l.bf16 %v148
      %v151 = vunpack.c.l.bf16 %v149
      %v152 = vadd.f32 %v146, %v150
      %v153 = vadd.f32 %v147, %v151
      %154 = vadd.xlane.f32.xlu0 %v152
      %v155 = vpop.xlane.xlu0 %154
      %156 = vadd.xlane.f32.xlu0 %v153
      %v157 = vpop.xlane.xlu0 %156
      %v158 = vrcp.pop 128.0
      %v159 = vmul.f32 128.0, %v158
      %v160 = vsub.f32 1.0, %v159
      %v161 = vmul.f32 %v158, %v160
      %v162 = vadd.f32 %v158, %v161
      %vm163 = vweird.f32 %v158
      %v164 = vsel %vm163, %v158, %v162
      %v165 = vmul.f32 %v155, %v164
      %v166 = vmul.f32 %v157, %v164
      %v167 = vsub.f32 %v152, %v165
      %v168 = vsub.f32 %v153, %v166
      %v169 = vmul.f32 %v167, %v167
      %v170 = vmul.f32 %v168, %v168
      %171 = vadd.xlane.f32.xlu0 %v169
      %v172 = vpop.xlane.xlu0 %171
      %173 = vadd.xlane.f32.xlu0 %v170
      %v174 = vpop.xlane.xlu0 %173
      %v175 = vmul.f32 %v172, %v164
      %v176 = vmul.f32 %v174, %v164
      %v177 = vadd.f32 %v175, 1e-05
      %v178 = vadd.f32 %v176, 1e-05
      %v179 = vrsqrt.pop %v177
      %v180 = vmul.f32 %v179, %v177
      %v181 = vmul.f32 %v180, %v179
      %v182 = vmul.f32 0.5, %v181
      %v183 = vsub.f32 1.5, %v182
      %v184 = vmul.f32 %v179, %v183
      %vm185 = vweird.f32 %v177
      %vm186 = vweird.f32 %v179
      %vm187 = vmor %vm185, %vm186
      %v188 = vsel %vm187, %v179, %v184
      %v189 = vrsqrt.pop %v178
      %v190 = vmul.f32 %v189, %v178
      %v191 = vmul.f32 %v190, %v189
      %v192 = vmul.f32 0.5, %v191
      %v193 = vsub.f32 1.5, %v192
      %v194 = vmul.f32 %v189, %v193
      %vm195 = vweird.f32 %v178
      %vm196 = vweird.f32 %v189
      %vm197 = vmor %vm195, %vm196
      %v198 = vsel %vm197, %v189, %v194
      %v199 = vmul.f32 %v167, %v188
      %v200 = vmul.f32 %v168, %v198
      %v201 = vld [vmem:[%s4] sm:$0x1]
      %v203 = vperm.slane %v201, 0
      %v205 = vmul.f32 %v199, %v203
      %v206 = vmul.f32 %v200, %v203
      %v207 = vld [vmem:[%s5] sm:$0x1]
      %v209 = vperm.slane %v207, 0
      %v211 = vadd.f32 %v205, %v209
      %v212 = vadd.f32 %v206, %v209
      %v213 = vpack.c.bf16 %v211, %v211
      %v214 = vpack.c.bf16 %v212, %v212
      %215 = vst [vmem:[%s6] sm:$0xf] %v213
      %216 = vst [vmem:[%s6 + $0x4] sm:$0xf] %v214
    $region37: #{transformer_forward.41} parent=1 // pred_fallthru
      _
    // Predicated region
    $region38: #{transformer_forward.41} parent=1 // pred_check
      _
    $region39: #{transformer_forward.41} parent=1 // pred_check_branch
      %218 = sbr.rel (0) target = $region41
    $region40: #{transformer_forward.41} parent=1 // pred_region
      _
    $region41: #{transformer_forward.41} parent=1 // pred_fallthru
      _
    // Predicated region
    $region42: #{transformer_forward.41} parent=1 // pred_check
      _
    $region43: #{transformer_forward.41} parent=1 // pred_check_branch
      %220 = sbr.rel (0) target = $region45
    $region44: #{transformer_forward.41} parent=1 // pred_region
      _
    $region45: #{transformer_forward.41} parent=1 // pred_fallthru
      _
    %221 = vsyncpa [#allocation4], 1

// kernel: transformer_forward.44
$region0: #{transformer_forward.44}
  #allocation0 [shape = 'u32[]', space=smem, size = 0x4, offset = 0x4, fixed_abs, tag = 'smem constant byte address 0x4 - core index']
  #allocation1 [shape = 'u32[72,128]{1,0:T(1,128)}', space=vmem, size = 0x9000, scoped, tag = 'internal scratch']
  #allocation2 [shape = 'f32[4,8,1]{2,1,0:T(8,128)}', space=vmem, size = 0x4000, scoped, tag = 'scratch operand']
  #allocation3 [shape = 'f32[4,8,1]{2,1,0:T(8,128)}', space=vmem, size = 0x4000, scoped, tag = 'scratch operand']
  #allocation4 [shape = 'f32[4,8,32]{2,1,0:T(8,128)}', space=vmem, size = 0x4000, scoped, tag = 'scratch operand']
  %s0 = inlined_call_operand.vmem [shape: bf16[2,8,128], index: 0, kind: input, shape index: {}]
  %s1 = inlined_call_operand.vmem [shape: bf16[2,8,256], index: 1, kind: input, shape index: {}, may-alias: {1,2}]
  %s2 = inlined_call_operand.vmem [shape: bf16[2,8,256], index: 2, kind: input, shape index: {}, may-alias: {1,2}]
  %s3 = inlined_call_operand.vmem [shape: f32[2,1,8], index: 3, kind: input, shape index: {}]
  %s4 = inlined_call_operand.vmem [shape: bf16[2,8,128], index: 4, kind: output, shape index: {}]
  %s5 = sld [smem:[#allocation0]]
  $region57: #{transformer_forward.44} parent=0
    _
  %s7 = ssub.s32 1, %s5
  %s8 = scalar_select 0, %s7, %s5
  loop: start=0, step=1, limit=4
  $region2: #{transformer_forward.44} parent=0 // loop_pre_header
    _
  $region3: #{transformer_forward.44} parent=0 // loop_header
    %s10 = sphi 0, %s14
    %p11 = scmp.ge.s32.totalorder %s10, 4
    %s17 = sphi 0, %s36
    %s18 = sphi 0, %s32
    %s19 = sphi 0, %s28
    %s20 = sphi 0, %s17
    %s21 = sphi 0, %s18
    %s22 = sphi 0, %s19
    %s23 = sphi 0, %s20
    %s24 = sphi 0, %s21
    %s25 = sphi 0, %s22
    %s41 = sphi 0, %s43
    %s44 = sphi 0, %s41
    %s45 = sphi 0, %s44
    %s61 = sphi 0, %s45
    %s69 = sphi 0, %s71
    %s72 = sphi 0, %s69
    %s73 = sphi 0, %s72
    %s89 = sphi 0, %s73
    %s97 = sphi 0, %s99
    %s100 = sphi 0, %s97
    %s101 = sphi 0, %s100
    %s117 = sphi 0, %s101
    %s125 = sphi 0, %s127
    %s128 = sphi 0, %s125
    %s129 = sphi 0, %s128
    %s145 = sphi 0, %s129
    %s153 = sphi 0, %s155
    %s156 = sphi 0, %s153
    %s157 = sphi 0, %s156
    %s173 = sphi 0, %s157
  $region4: #{transformer_forward.44} parent=0 // loop_header_branch
    %13 = sbr.rel (%p11) target = $region8
  $region5: #{transformer_forward.44} parent=0 // loop_body
    %s15 = ssub.s32 %s10, 1
    %s16 = ssub.s32 %s10, 2
    %s26 = sadd.s32 1, %s19
    %p27 = scmp.ge.s32.totalorder %s26, 1
    %s28 = scalar_select %p27, 0, %s26
    %s29 = sadd.s32 1, %s18
    %s30 = scalar_select %p27, %s29, %s18
    %p31 = scmp.ge.s32.totalorder %s30, 1
    %s32 = scalar_select %p31, 0, %s30
    %s33 = sadd.s32 1, %s17
    %s34 = scalar_select %p31, %s33, %s17
    %p35 = scmp.ge.s32.totalorder %s34, 2
    %s36 = scalar_select %p35, 0, %s34
    %s37 = ssub.s32 %s17, %s36
    %s38 = ssub.s32 %s18, %s32
    %s39 = sor.u32 %s37, %s38
    %p40 = scmp.eq.s32.totalorder %s39, 0
    %s42 = sadd.s32 %s41, 1
    %s43 = scalar_select %p40, %s41, %s42
    %p46 = pneg %p40
    %p47 = scmp.eq.s32.totalorder %s10, 1
    %p48 = por %p46, %p47
    %p49 = scmp.ne.s32.totalorder %s41, %s44
    %p50 = scmp.eq.s32.totalorder %s10, 0
    %p51 = por %p49, %p50
    %p52 = scmp.ne.s32.totalorder %s41, %s44
    %p53 = scmp.eq.s32.totalorder %s15, 1
    %p54 = por %p52, %p53
    %p55 = scmp.ne.s32.totalorder %s44, %s45
    %p56 = scmp.eq.s32.totalorder %s15, 0
    %p57 = por %p55, %p56
    %p58 = scmp.ne.s32.totalorder %s44, %s45
    %p59 = scmp.eq.s32.totalorder %s16, 1
    %p60 = por %p58, %p59
    %p62 = scmp.ne.s32.totalorder %s45, %s61
    %p63 = scmp.eq.s32.totalorder %s16, 0
    %p64 = por %p62, %p63
    %s65 = ssub.s32 %s17, %s36
    %s66 = ssub.s32 %s19, %s28
    %s67 = sor.u32 %s65, %s66
    %p68 = scmp.eq.s32.totalorder %s67, 0
    %s70 = sadd.s32 %s69, 1
    %s71 = scalar_select %p68, %s69, %s70
    %p74 = pneg %p68
    %p75 = scmp.eq.s32.totalorder %s10, 1
    %p76 = por %p74, %p75
    %p77 = scmp.ne.s32.totalorder %s69, %s72
    %p78 = scmp.eq.s32.totalorder %s10, 0
    %p79 = por %p77, %p78
    %p80 = scmp.ne.s32.totalorder %s69, %s72
    %p81 = scmp.eq.s32.totalorder %s15, 1
    %p82 = por %p80, %p81
    %p83 = scmp.ne.s32.totalorder %s72, %s73
    %p84 = scmp.eq.s32.totalorder %s15, 0
    %p85 = por %p83, %p84
    %p86 = scmp.ne.s32.totalorder %s72, %s73
    %p87 = scmp.eq.s32.totalorder %s16, 1
    %p88 = por %p86, %p87
    %p90 = scmp.ne.s32.totalorder %s73, %s89
    %p91 = scmp.eq.s32.totalorder %s16, 0
    %p92 = por %p90, %p91
    %s93 = ssub.s32 %s17, %s36
    %s94 = ssub.s32 %s19, %s28
    %s95 = sor.u32 %s93, %s94
    %p96 = scmp.eq.s32.totalorder %s95, 0
    %s98 = sadd.s32 %s97, 1
    %s99 = scalar_select %p96, %s97, %s98
    %p102 = pneg %p96
    %p103 = scmp.eq.s32.totalorder %s10, 1
    %p104 = por %p102, %p103
    %p105 = scmp.ne.s32.totalorder %s97, %s100
    %p106 = scmp.eq.s32.totalorder %s10, 0
    %p107 = por %p105, %p106
    %p108 = scmp.ne.s32.totalorder %s97, %s100
    %p109 = scmp.eq.s32.totalorder %s15, 1
    %p110 = por %p108, %p109
    %p111 = scmp.ne.s32.totalorder %s100, %s101
    %p112 = scmp.eq.s32.totalorder %s15, 0
    %p113 = por %p111, %p112
    %p114 = scmp.ne.s32.totalorder %s100, %s101
    %p115 = scmp.eq.s32.totalorder %s16, 1
    %p116 = por %p114, %p115
    %p118 = scmp.ne.s32.totalorder %s101, %s117
    %p119 = scmp.eq.s32.totalorder %s16, 0
    %p120 = por %p118, %p119
    %s121 = ssub.s32 %s17, %s36
    %s122 = ssub.s32 %s19, %s28
    %s123 = sor.u32 %s121, %s122
    %p124 = scmp.eq.s32.totalorder %s123, 0
    %s126 = sadd.s32 %s125, 1
    %s127 = scalar_select %p124, %s125, %s126
    %p130 = pneg %p124
    %p131 = scmp.eq.s32.totalorder %s10, 1
    %p132 = por %p130, %p131
    %p133 = scmp.ne.s32.totalorder %s125, %s128
    %p134 = scmp.eq.s32.totalorder %s10, 0
    %p135 = por %p133, %p134
    %p136 = scmp.ne.s32.totalorder %s125, %s128
    %p137 = scmp.eq.s32.totalorder %s15, 1
    %p138 = por %p136, %p137
    %p139 = scmp.ne.s32.totalorder %s128, %s129
    %p140 = scmp.eq.s32.totalorder %s15, 0
    %p141 = por %p139, %p140
    %p142 = scmp.ne.s32.totalorder %s128, %s129
    %p143 = scmp.eq.s32.totalorder %s16, 1
    %p144 = por %p142, %p143
    %p146 = scmp.ne.s32.totalorder %s129, %s145
    %p147 = scmp.eq.s32.totalorder %s16, 0
    %p148 = por %p146, %p147
    %s149 = ssub.s32 %s17, %s36
    %s150 = ssub.s32 %s18, %s32
    %s151 = sor.u32 %s149, %s150
    %p152 = scmp.eq.s32.totalorder %s151, 0
    %s154 = sadd.s32 %s153, 1
    %s155 = scalar_select %p152, %s153, %s154
    %p158 = pneg %p152
    %p159 = scmp.eq.s32.totalorder %s10, 1
    %p160 = por %p158, %p159
    %p161 = scmp.ne.s32.totalorder %s153, %s156
    %p162 = scmp.eq.s32.totalorder %s10, 0
    %p163 = por %p161, %p162
    %p164 = scmp.ne.s32.totalorder %s153, %s156
    %p165 = scmp.eq.s32.totalorder %s15, 1
    %p166 = por %p164, %p165
    %p167 = scmp.ne.s32.totalorder %s156, %s157
    %p168 = scmp.eq.s32.totalorder %s15, 0
    %p169 = por %p167, %p168
    %p170 = scmp.ne.s32.totalorder %s156, %s157
    %p171 = scmp.eq.s32.totalorder %s16, 1
    %p172 = por %p170, %p171
    %p174 = scmp.ne.s32.totalorder %s157, %s173
    %p175 = scmp.eq.s32.totalorder %s16, 0
    %p176 = por %p174, %p175
    %p177 = scmp.le.s32.totalorder 1, %s10
    %p178 = scmp.lt.s32.totalorder %s10, 3
    %p179 = pnand %p177, %p178
    %p180 = pneg %p179
    // Predicated region
    $region9: #{transformer_forward.44} parent=5 // pred_check
      _
    $region10: #{transformer_forward.44} parent=5 // pred_check_branch
      %182 = sbr.rel (%p179) target = $region12
    $region11: #{transformer_forward.44} parent=5 // pred_region
      %s183 = ssub.s32 %s10, 1
    $region12: #{transformer_forward.44} parent=5 // pred_fallthru
      _
    %p184 = scmp.lt.s32.totalorder %s10, 2
    // Predicated region
    $region13: #{transformer_forward.44} parent=5 // pred_check
      %p185 = pneg %p184
    $region14: #{transformer_forward.44} parent=5 // pred_check_branch
      %187 = sbr.rel (%p185) target = $region16
    $region15: #{transformer_forward.44} parent=5 // pred_region
      // Predicated region
      $region17: #{transformer_forward.44} parent=15 // pred_check
        %p188 = pneg %p51
      $region18: #{transformer_forward.44} parent=15 // pred_check_branch
        %190 = sbr.rel (%p188) target = $region20
      $region19: #{transformer_forward.44} parent=15 // pred_region
        %p191 = scmp.lt.s32.totalorder %s17, 1
        %s192 = scalar_select %p191, %s17, 1
        %p193 = scmp.lt.s32.totalorder %s18, 0
        %s194 = scalar_select %p193, %s18, 0
        %s195 = sadd.s32 %s194, %s192
        %s196 = smul.addr %s195, 4
        %s197 = scalar_lea.vmem %s0, %s196
      $region20: #{transformer_forward.44} parent=15 // pred_fallthru
        _
      // Predicated region
      $region21: #{transformer_forward.44} parent=15 // pred_check
        %p198 = pneg %p79
      $region22: #{transformer_forward.44} parent=15 // pred_check_branch
        %200 = sbr.rel (%p198) target = $region24
      $region23: #{transformer_forward.44} parent=15 // pred_region
        %p201 = scmp.lt.s32.totalorder %s17, 1
        %s202 = scalar_select %p201, %s17, 1
        %p203 = scmp.lt.s32.totalorder %s19, 0
        %s204 = scalar_select %p203, %s19, 0
        %s205 = smul.addr %s204, 2
        %s206 = smul.addr %s202, 2
        %s207 = sadd.s32 %s205, %s206
        %s208 = smul.addr %s207, 4
        %s209 = scalar_lea.vmem %s1, %s208
      $region24: #{transformer_forward.44} parent=15 // pred_fallthru
        _
      // Predicated region
      $region25: #{transformer_forward.44} parent=15 // pred_check
        %p210 = pneg %p107
      $region26: #{transformer_forward.44} parent=15 // pred_check_branch
        %212 = sbr.rel (%p210) target = $region28
      $region27: #{transformer_forward.44} parent=15 // pred_region
        %p213 = scmp.lt.s32.totalorder %s17, 1
        %s214 = scalar_select %p213, %s17, 1
        %p215 = scmp.lt.s32.totalorder %s19, 0
        %s216 = scalar_select %p215, %s19, 0
        %s217 = smul.addr %s216, 2
        %s218 = sadd.s32 1, %s217
        %s219 = smul.addr %s214, 2
        %s220 = sadd.s32 %s218, %s219
        %s221 = smul.addr %s220, 4
        %s222 = scalar_lea.vmem %s2, %s221
      $region28: #{transformer_forward.44} parent=15 // pred_fallthru
        _
      // Predicated region
      $region29: #{transformer_forward.44} parent=15 // pred_check
        %p223 = pneg %p135
      $region30: #{transformer_forward.44} parent=15 // pred_check_branch
        %225 = sbr.rel (%p223) target = $region32
      $region31: #{transformer_forward.44} parent=15 // pred_region
        %p226 = scmp.lt.s32.totalorder %s17, 1
        %s227 = scalar_select %p226, %s17, 1
        %p228 = scmp.lt.s32.totalorder %s19, 0
        %s229 = scalar_select %p228, %s19, 0
        %s230 = sadd.s32 %s229, %s227
        %s231 = scalar_lea.vmem %s3, %s230
      $region32: #{transformer_forward.44} parent=15 // pred_fallthru
        _
    $region16: #{transformer_forward.44} parent=5 // pred_fallthru
      _
    %p232 = scmp.le.s32.totalorder 1, %s10
    %p233 = scmp.lt.s32.totalorder %s10, 3
    %p234 = pnand %p232, %p233
    %p235 = pneg %p234
    // Predicated region
    $region33: #{transformer_forward.44} parent=5 // pred_check
      _
    $region34: #{transformer_forward.44} parent=5 // pred_check_branch
      %237 = sbr.rel (%p234) target = $region36
    $region35: #{transformer_forward.44} parent=5 // pred_region
      %s238 = ssub.s32 %s10, 1
      %p239 = scmp.lt.s32.totalorder %s20, 1
      %s240 = scalar_select %p239, %s20, 1
      %p241 = scmp.lt.s32.totalorder %s21, 0
      %s242 = scalar_select %p241, %s21, 0
      %s243 = sadd.s32 %s242, %s240
      %s244 = smul.addr %s243, 4
      %s245 = scalar_lea.vmem %s0, %s244
      %p246 = pneg %p57
      %p247 = pneg %p54
      %p248 = scmp.lt.s32.totalorder %s20, 1
      %s249 = scalar_select %p248, %s20, 1
      %p250 = scmp.lt.s32.totalorder %s22, 0
      %s251 = scalar_select %p250, %s22, 0
      %s252 = smul.addr %s251, 2
      %s253 = smul.addr %s249, 2
      %s254 = sadd.s32 %s252, %s253
      %s255 = smul.addr %s254, 4
      %s256 = scalar_lea.vmem %s1, %s255
      %p257 = pneg %p85
      %p258 = pneg %p82
      %p259 = scmp.lt.s32.totalorder %s20, 1
      %s260 = scalar_select %p259, %s20, 1
      %p261 = scmp.lt.s32.totalorder %s22, 0
      %s262 = scalar_select %p261, %s22, 0
      %s263 = smul.addr %s262, 2
      %s264 = sadd.s32 1, %s263
      %s265 = smul.addr %s260, 2
      %s266 = sadd.s32 %s264, %s265
      %s267 = smul.addr %s266, 4
      %s268 = scalar_lea.vmem %s2, %s267
      %p269 = pneg %p113
      %p270 = pneg %p110
      %p271 = scmp.lt.s32.totalorder %s20, 1
      %s272 = scalar_select %p271, %s20, 1
      %p273 = scmp.lt.s32.totalorder %s22, 0
      %s274 = scalar_select %p273, %s22, 0
      %s275 = sadd.s32 %s274, %s272
      %s276 = scalar_lea.vmem %s3, %s275
      %p277 = pneg %p141
      %p278 = pneg %p138
      %p279 = pneg %p169
      %p280 = pneg %p166
      %p281 = scmp.lt.s32.totalorder %s20, 1
      %s282 = scalar_select %p281, %s20, 1
      %p283 = scmp.lt.s32.totalorder %s21, 0
      %s284 = scalar_select %p283, %s21, 0
      %s285 = sadd.s32 %s284, %s282
      %s286 = smul.addr %s285, 4
      %s287 = scalar_lea.vmem %s4, %s286
      %p288 = scmp.lt.s32.totalorder %s20, 1
      %s289 = scalar_select %p288, %s20, 1
      %p290 = scmp.lt.s32.totalorder %s21, 0
      %s291 = scalar_select %p290, %s21, 0
      %s292 = sadd.s32 %s291, %s289
      %s293 = smul.addr %s292, 4
      %s294 = scalar_lea.vmem %s0, %s293
      %p295 = scmp.lt.s32.totalorder %s20, 1
      %s296 = scalar_select %p295, %s20, 1
      %p297 = scmp.lt.s32.totalorder %s22, 0
      %s298 = scalar_select %p297, %s22, 0
      %s299 = smul.addr %s298, 2
      %s300 = smul.addr %s296, 2
      %s301 = sadd.s32 %s299, %s300
      %s302 = smul.addr %s301, 4
      %s303 = scalar_lea.vmem %s1, %s302
      %p304 = scmp.lt.s32.totalorder %s20, 1
      %s305 = scalar_select %p304, %s20, 1
      %p306 = scmp.lt.s32.totalorder %s22, 0
      %s307 = scalar_select %p306, %s22, 0
      %s308 = smul.addr %s307, 2
      %s309 = sadd.s32 1, %s308
      %s310 = smul.addr %s305, 2
      %s311 = sadd.s32 %s309, %s310
      %s312 = smul.addr %s311, 4
      %s313 = scalar_lea.vmem %s2, %s312
      %p314 = scmp.lt.s32.totalorder %s20, 1
      %s315 = scalar_select %p314, %s20, 1
      %p316 = scmp.lt.s32.totalorder %s22, 0
      %s317 = scalar_select %p316, %s22, 0
      %s318 = sadd.s32 %s317, %s315
      %s319 = scalar_lea.vmem %s3, %s318
      %p320 = scmp.lt.s32.totalorder %s20, 1
      %s321 = scalar_select %p320, %s20, 1
      %p322 = scmp.lt.s32.totalorder %s21, 0
      %s323 = scalar_select %p322, %s21, 0
      %s324 = sadd.s32 %s323, %s321
      %s325 = smul.addr %s324, 4
      %s326 = scalar_lea.vmem %s4, %s325
      %p328 = scmp.eq.s32.totalorder %s22, 0
      // Predicated region
      $region37: #{transformer_forward.44} parent=35 // pred_check
        %p329 = pneg %p328
      $region38: #{transformer_forward.44} parent=35 // pred_check_branch
        %331 = sbr.rel (%p329) target = $region40
      $region39: #{transformer_forward.44} parent=35 // pred_region
        %vm332 = vcmask 7168
        %333 = vst.msk [vmem:[#allocation2] sm:$0xff] %vm332, -inf
        %334 = vst.msk [vmem:[#allocation2 + $0x8] sm:$0xff] %vm332, -inf
        %335 = vst.msk [vmem:[#allocation2 + $0x10] sm:$0xff] %vm332, -inf
        %336 = vst.msk [vmem:[#allocation2 + $0x18] sm:$0xff] %vm332, -inf
        %337 = vst.msk [vmem:[#allocation3] sm:$0xff] %vm332, 0.0
        %338 = vst.msk [vmem:[#allocation3 + $0x8] sm:$0xff] %vm332, 0.0
        %339 = vst.msk [vmem:[#allocation3 + $0x10] sm:$0xff] %vm332, 0.0
        %340 = vst.msk [vmem:[#allocation3 + $0x18] sm:$0xff] %vm332, 0.0
        %vm341 = vcmask 261120
        %342 = vst.msk [vmem:[#allocation4] sm:$0xff] %vm341, 0.0
        %343 = vst.msk [vmem:[#allocation4 + $0x8] sm:$0xff] %vm341, 0.0
        %344 = vst.msk [vmem:[#allocation4 + $0x10] sm:$0xff] %vm341, 0.0
        %345 = vst.msk [vmem:[#allocation4 + $0x18] sm:$0xff] %vm341, 0.0
      $region40: #{transformer_forward.44} parent=35 // pred_fallthru
        _
      %v346 = vld [vmem:[%s294] sm:$0xf]
      %v347 = vld [vmem:[%s303] sm:$0xf]
      %v348 = vld [vmem:[%s313] sm:$0xf]
      %v349 = vld [vmem:[%s319] sm:$0x1]
      %vm350 = vcmp.gt.f32.partialorder %v349, 0.5
      %v351 = vsel %vm350, -1e+09, 0.0
      %v353 = vperm.slane %v351, 0
      %vm355 = vcmask 261120
      %v357 = vsel %vm355, %v346, 0
      %v360 = vsel %vm355, %v347, 0
      %362 = vmatpush.bf16.xpose.msra.mxu0 0
      %363 = vmatpush.bf16.xpose.msra.mxu0 0
      %364 = vmatpush.bf16.xpose.msra.mxu0 0
      %365 = vmatpush.bf16.xpose.msra.mxu0 0
      %366 = vmatpush.bf16.xpose.msra.mxu0 0
      %367 = vmatpush.bf16.xpose.msra.mxu0 0
      %368 = vmatpush.bf16.xpose.msra.mxu0 0
      %369 = vmatpush.bf16.xpose.msra.mxu0 %v360
      %370 = vmatmul.bf16.gmra.mxu0 %v357
      %v371 = vpop.f32.mrf.mxu0
      %v372 = vadd.f32 %v353, %v371
      %v373 = vpop.f32.mrf.mxu0
      %374 = vdwg.mxu0
      %v375 = vld [vmem:[#allocation2] sm:$0xff]
      %vm376 = vcmask 64512
      %v377 = vsel %vm376, %v372, -inf
      %378 = vmax.xlane.f32.xlu0 %v377
      %v379 = vpop.xlane.xlu0 %378
      %v380 = vmax.f32 %v375, %v379
      %v381 = vsub.f32 %v375, %v380
      %v382 = vmul.f32 %v381, 1.442695
      %v383 = vpow.pop %v382
      %385 = vset.pattern.permute.xlu0 0
      %386 = vperm.xlu0 %385, %v380
      %v387 = vpop.permute.xlu0 %386
      %v389 = vsub.f32 %v372, %v387
      %v390 = vmul.f32 %v389, 1.442695
      %v391 = vpow.pop %v390
      %v392 = vld [vmem:[#allocation3] sm:$0xff]
      %v393 = vmul.f32 %v383, %v392
      %v394 = vsel %vm376, %v391, 0.0
      %395 = vadd.xlane.f32.xlu0 %v394
      %v396 = vpop.xlane.xlu0 %395
      %v397 = vadd.f32 %v393, %v396
      %vm398 = vcmask 7168
      %399 = vst.msk [vmem:[#allocation3] sm:$0xff] %vm398, %v397
      %v400 = vpack.c.bf16 %v391, %v391
      %v402 = vsel %vm376, %v400, 0
      %vm404 = vcmask 1043456
      %v406 = vsel %vm404, %v348, 0
      %408 = vmatpush.bf16.msra.mxu0 0
      %409 = vmatpush.bf16.msra.mxu0 0
      %410 = vmatpush.bf16.msra.mxu0 0
      %411 = vmatpush.bf16.msra.mxu0 0
      %412 = vmatpush.bf16.msra.mxu0 0
      %413 = vmatpush.bf16.msra.mxu0 0
      %414 = vmatpush.bf16.msra.mxu0 0
      %415 = vmatpush.bf16.msra.mxu0 %v406
      %416 = vmatmul.bf16.gmra.mxu0 %v402
      %v417 = vpop.f32.mrf.mxu0
      %v418 = vadd.f32 0.0, %v417
      %v419 = vpop.f32.mrf.mxu0
      %420 = vdwg.mxu0
      %v421 = vld [vmem:[#allocation4] sm:$0xff]
      %423 = vset.pattern.permute.xlu0 0
      %424 = vperm.xlu0 %423, %v383
      %v425 = vpop.permute.xlu0 %424
      %v427 = vmul.f32 %v425, %v421
      %v428 = vadd.f32 %v427, %v418
      %429 = vst.msk [vmem:[#allocation4] sm:$0xff] %vm355, %v428
      %430 = vst.msk [vmem:[#allocation2] sm:$0xff] %vm398, %v380
      %v432 = vunpack.c.l.b16 %v346
      %v433 = vpack.c.b16 %v432, %v432
      %434 = vrot.lane.b32.xlu0 %v433, 96
      %v435 = vpop.permute.xlu0 %434
      %v437 = vunpack.c.l.b16 %v347
      %v438 = vpack.c.b16 %v437, %v437
      %439 = vrot.lane.b32.xlu0 %v438, 96
      %v440 = vpop.permute.xlu0 %439
      %v442 = vsel %vm355, %v435, 0
      %v445 = vsel %vm355, %v440, 0
      %447 = vmatpush.bf16.xpose.msra.mxu0 0
      %448 = vmatpush.bf16.xpose.msra.mxu0 0
      %449 = vmatpush.bf16.xpose.msra.mxu0 0
      %450 = vmatpush.bf16.xpose.msra.mxu0 0
      %451 = vmatpush.bf16.xpose.msra.mxu0 0
      %452 = vmatpush.bf16.xpose.msra.mxu0 0
      %453 = vmatpush.bf16.xpose.msra.mxu0 0
      %454 = vmatpush.bf16.xpose.msra.mxu0 %v445
      %455 = vmatmul.bf16.gmra.mxu0 %v442
      %v456 = vpop.f32.mrf.mxu0
      %v457 = vadd.f32 %v353, %v456
      %v458 = vpop.f32.mrf.mxu0
      %459 = vdwg.mxu0
      %s460 = scalar_lea.vmem [#allocation2], 8
      %v461 = vld [vmem:[%s460] sm:$0xff]
      %v462 = vsel %vm376, %v457, -inf
      %463 = vmax.xlane.f32.xlu0 %v462
      %v464 = vpop.xlane.xlu0 %463
      %v465 = vmax.f32 %v461, %v464
      %v466 = vsub.f32 %v461, %v465
      %v467 = vmul.f32 %v466, 1.442695
      %v468 = vpow.pop %v467
      %470 = vset.pattern.permute.xlu0 0
      %471 = vperm.xlu0 %470, %v465
      %v472 = vpop.permute.xlu0 %471
      %v474 = vsub.f32 %v457, %v472
      %v475 = vmul.f32 %v474, 1.442695
      %v476 = vpow.pop %v475
      %s477 = scalar_lea.vmem [#allocation3], 8
      %v478 = vld [vmem:[%s477] sm:$0xff]
      %v479 = vmul.f32 %v468, %v478
      %v480 = vsel %vm376, %v476, 0.0
      %481 = vadd.xlane.f32.xlu0 %v480
      %v482 = vpop.xlane.xlu0 %481
      %v483 = vadd.f32 %v479, %v482
      %484 = vst.msk [vmem:[%s477] sm:$0xff] %vm398, %v483
      %v485 = vpack.c.bf16 %v476, %v476
      %v487 = vunpack.c.l.b16 %v348
      %v488 = vpack.c.b16 %v487, %v487
      %489 = vrot.lane.b32.xlu0 %v488, 96
      %v490 = vpop.permute.xlu0 %489
      %v492 = vsel %vm376, %v485, 0
      %v495 = vsel %vm404, %v490, 0
      %497 = vmatpush.bf16.msra.mxu0 0
      %498 = vmatpush.bf16.msra.mxu0 0
      %499 = vmatpush.bf16.msra.mxu0 0
      %500 = vmatpush.bf16.msra.mxu0 0
      %501 = vmatpush.bf16.msra.mxu0 0
      %502 = vmatpush.bf16.msra.mxu0 0
      %503 = vmatpush.bf16.msra.mxu0 0
      %504 = vmatpush.bf16.msra.mxu0 %v495
      %505 = vmatmul.bf16.gmra.mxu0 %v492
      %v506 = vpop.f32.mrf.mxu0
      %v507 = vadd.f32 0.0, %v506
      %v508 = vpop.f32.mrf.mxu0
      %509 = vdwg.mxu0
      %s510 = scalar_lea.vmem [#allocation4], 8
      %v511 = vld [vmem:[%s510] sm:$0xff]
      %513 = vset.pattern.permute.xlu0 0
      %514 = vperm.xlu0 %513, %v468
      %v515 = vpop.permute.xlu0 %514
      %v517 = vmul.f32 %v515, %v511
      %v518 = vadd.f32 %v517, %v507
      %519 = vst.msk [vmem:[%s510] sm:$0xff] %vm355, %v518
      %520 = vst.msk [vmem:[%s460] sm:$0xff] %vm398, %v465
      %521 = vrot.lane.b32.xlu0 %v433, 64
      %v522 = vpop.permute.xlu0 %521
      %523 = vrot.lane.b32.xlu0 %v438, 64
      %v524 = vpop.permute.xlu0 %523
      %v526 = vsel %vm355, %v522, 0
      %v529 = vsel %vm355, %v524, 0
      %531 = vmatpush.bf16.xpose.msra.mxu0 0
      %532 = vmatpush.bf16.xpose.msra.mxu0 0
      %533 = vmatpush.bf16.xpose.msra.mxu0 0
      %534 = vmatpush.bf16.xpose.msra.mxu0 0
      %535 = vmatpush.bf16.xpose.msra.mxu0 0
      %536 = vmatpush.bf16.xpose.msra.mxu0 0
      %537 = vmatpush.bf16.xpose.msra.mxu0 0
      %538 = vmatpush.bf16.xpose.msra.mxu0 %v529
      %539 = vmatmul.bf16.gmra.mxu0 %v526
      %v540 = vpop.f32.mrf.mxu0
      %v541 = vadd.f32 %v353, %v540
      %v542 = vpop.f32.mrf.mxu0
      %543 = vdwg.mxu0
      %s544 = scalar_lea.vmem [#allocation2], 16
      %v545 = vld [vmem:[%s544] sm:$0xff]
      %v546 = vsel %vm376, %v541, -inf
      %547 = vmax.xlane.f32.xlu0 %v546
      %v548 = vpop.xlane.xlu0 %547
      %v549 = vmax.f32 %v545, %v548
      %v550 = vsub.f32 %v545, %v549
      %v551 = vmul.f32 %v550, 1.442695
      %v552 = vpow.pop %v551
      %554 = vset.pattern.permute.xlu0 0
      %555 = vperm.xlu0 %554, %v549
      %v556 = vpop.permute.xlu0 %555
      %v558 = vsub.f32 %v541, %v556
      %v559 = vmul.f32 %v558, 1.442695
      %v560 = vpow.pop %v559
      %s561 = scalar_lea.vmem [#allocation3], 16
      %v562 = vld [vmem:[%s561] sm:$0xff]
      %v563 = vmul.f32 %v552, %v562
      %v564 = vsel %vm376, %v560, 0.0
      %565 = vadd.xlane.f32.xlu0 %v564
      %v566 = vpop.xlane.xlu0 %565
      %v567 = vadd.f32 %v563, %v566
      %568 = vst.msk [vmem:[%s561] sm:$0xff] %vm398, %v567
      %v569 = vpack.c.bf16 %v560, %v560
      %570 = vrot.lane.b32.xlu0 %v488, 64
      %v571 = vpop.permute.xlu0 %570
      %v573 = vsel %vm376, %v569, 0
      %v576 = vsel %vm404, %v571, 0
      %578 = vmatpush.bf16.msra.mxu0 0
      %579 = vmatpush.bf16.msra.mxu0 0
      %580 = vmatpush.bf16.msra.mxu0 0
      %581 = vmatpush.bf16.msra.mxu0 0
      %582 = vmatpush.bf16.msra.mxu0 0
      %583 = vmatpush.bf16.msra.mxu0 0
      %584 = vmatpush.bf16.msra.mxu0 0
      %585 = vmatpush.bf16.msra.mxu0 %v576
      %586 = vmatmul.bf16.gmra.mxu0 %v573
      %v587 = vpop.f32.mrf.mxu0
      %v588 = vadd.f32 0.0, %v587
      %v589 = vpop.f32.mrf.mxu0
      %590 = vdwg.mxu0
      %s591 = scalar_lea.vmem [#allocation4], 16
      %v592 = vld [vmem:[%s591] sm:$0xff]
      %594 = vset.pattern.permute.xlu0 0
      %595 = vperm.xlu0 %594, %v552
      %v596 = vpop.permute.xlu0 %595
      %v598 = vmul.f32 %v596, %v592
      %v599 = vadd.f32 %v598, %v588
      %600 = vst.msk [vmem:[%s591] sm:$0xff] %vm355, %v599
      %601 = vst.msk [vmem:[%s544] sm:$0xff] %vm398, %v549
      %602 = vrot.lane.b32.xlu0 %v433, 32
      %v603 = vpop.permute.xlu0 %602
      %604 = vrot.lane.b32.xlu0 %v438, 32
      %v605 = vpop.permute.xlu0 %604
      %v607 = vsel %vm355, %v603, 0
      %v610 = vsel %vm355, %v605, 0
      %612 = vmatpush.bf16.xpose.msra.mxu0 0
      %613 = vmatpush.bf16.xpose.msra.mxu0 0
      %614 = vmatpush.bf16.xpose.msra.mxu0 0
      %615 = vmatpush.bf16.xpose.msra.mxu0 0
      %616 = vmatpush.bf16.xpose.msra.mxu0 0
      %617 = vmatpush.bf16.xpose.msra.mxu0 0
      %618 = vmatpush.bf16.xpose.msra.mxu0 0
      %619 = vmatpush.bf16.xpose.msra.mxu0 %v610
      %620 = vmatmul.bf16.gmra.mxu0 %v607
      %v621 = vpop.f32.mrf.mxu0
      %v622 = vadd.f32 %v353, %v621
      %v623 = vpop.f32.mrf.mxu0
      %624 = vdwg.mxu0
      %s625 = scalar_lea.vmem [#allocation2], 24
      %v626 = vld [vmem:[%s625] sm:$0xff]
      %v627 = vsel %vm376, %v622, -inf
      %628 = vmax.xlane.f32.xlu0 %v627
      %v629 = vpop.xlane.xlu0 %628
      %v630 = vmax.f32 %v626, %v629
      %v631 = vsub.f32 %v626, %v630
      %v632 = vmul.f32 %v631, 1.442695
      %v633 = vpow.pop %v632
      %635 = vset.pattern.permute.xlu0 0
      %636 = vperm.xlu0 %635, %v630
      %v637 = vpop.permute.xlu0 %636
      %v639 = vsub.f32 %v622, %v637
      %v640 = vmul.f32 %v639, 1.442695
      %v641 = vpow.pop %v640
      %s642 = scalar_lea.vmem [#allocation3], 24
      %v643 = vld [vmem:[%s642] sm:$0xff]
      %v644 = vmul.f32 %v633, %v643
      %v645 = vsel %vm376, %v641, 0.0
      %646 = vadd.xlane.f32.xlu0 %v645
      %v647 = vpop.xlane.xlu0 %646
      %v648 = vadd.f32 %v644, %v647
      %649 = vst.msk [vmem:[%s642] sm:$0xff] %vm398, %v648
      %v650 = vpack.c.bf16 %v641, %v641
      %651 = vrot.lane.b32.xlu0 %v488, 32
      %v652 = vpop.permute.xlu0 %651
      %v654 = vsel %vm376, %v650, 0
      %v657 = vsel %vm404, %v652, 0
      %659 = vmatpush.bf16.msra.mxu0 0
      %660 = vmatpush.bf16.msra.mxu0 0
      %661 = vmatpush.bf16.msra.mxu0 0
      %662 = vmatpush.bf16.msra.mxu0 0
      %663 = vmatpush.bf16.msra.mxu0 0
      %664 = vmatpush.bf16.msra.mxu0 0
      %665 = vmatpush.bf16.msra.mxu0 0
      %666 = vmatpush.bf16.msra.mxu0 %v657
      %667 = vmatmul.bf16.gmra.mxu0 %v654
      %v668 = vpop.f32.mrf.mxu0
      %v669 = vadd.f32 0.0, %v668
      %v670 = vpop.f32.mrf.mxu0
      %671 = vdwg.mxu0
      %s672 = scalar_lea.vmem [#allocation4], 24
      %v673 = vld [vmem:[%s672] sm:$0xff]
      %675 = vset.pattern.permute.xlu0 0
      %676 = vperm.xlu0 %675, %v633
      %v677 = vpop.permute.xlu0 %676
      %v679 = vmul.f32 %v677, %v673
      %v680 = vadd.f32 %v679, %v669
      %681 = vst.msk [vmem:[%s672] sm:$0xff] %vm355, %v680
      %682 = vst.msk [vmem:[%s625] sm:$0xff] %vm398, %v630
      // Predicated region
      $region41: #{transformer_forward.44} parent=35 // pred_check
        %p683 = pneg %p328
      $region42: #{transformer_forward.44} parent=35 // pred_check_branch
        %685 = sbr.rel (%p683) target = $region44
      $region43: #{transformer_forward.44} parent=35 // pred_region
        %v686 = vld [vmem:[#allocation3] sm:$0xff]
        %v687 = vrcp.pop %v686
        %v688 = vld [vmem:[#allocation4] sm:$0xff]
        %690 = vset.pattern.permute.xlu0 0
        %691 = vperm.xlu0 %690, %v687
        %v692 = vpop.permute.xlu0 %691
        %v694 = vmul.f32 %v688, %v692
        %v695 = vpack.c.bf16 %v694, %v694
        %vm696 = vcmask 257024
        %697 = vst.msk [vmem:[%s326] sm:$0xf] %vm696, %v695
        %v698 = vld [vmem:[%s477] sm:$0xff]
        %v699 = vrcp.pop %v698
        %v700 = vld [vmem:[%s510] sm:$0xff]
        %702 = vset.pattern.permute.xlu0 0
        %703 = vperm.xlu0 %702, %v699
        %v704 = vpop.permute.xlu0 %703
        %v706 = vmul.f32 %v700, %v704
        %v707 = vpack.c.bf16 %v706, %v706
        %709 = vrot.lane.b32.xlu0 %v707, 32
        %v710 = vpop.permute.xlu0 %709
        %vm712 = vcmask 519424
        %713 = vst.msk [vmem:[%s326] sm:$0xf] %vm712, %v710
        %v714 = vld [vmem:[%s561] sm:$0xff]
        %v715 = vrcp.pop %v714
        %v716 = vld [vmem:[%s591] sm:$0xff]
        %718 = vset.pattern.permute.xlu0 0
        %719 = vperm.xlu0 %718, %v715
        %v720 = vpop.permute.xlu0 %719
        %v722 = vmul.f32 %v716, %v720
        %v723 = vpack.c.bf16 %v722, %v722
        %725 = vrot.lane.b32.xlu0 %v723, 64
        %v726 = vpop.permute.xlu0 %725
        %vm728 = vcmask 781824
        %729 = vst.msk [vmem:[%s326] sm:$0xf] %vm728, %v726
        %v730 = vld [vmem:[%s642] sm:$0xff]
        %v731 = vrcp.pop %v730
        %v732 = vld [vmem:[%s672] sm:$0xff]
        %734 = vset.pattern.permute.xlu0 0
        %735 = vperm.xlu0 %734, %v731
        %v736 = vpop.permute.xlu0 %735
        %v738 = vmul.f32 %v732, %v736
        %v739 = vpack.c.bf16 %v738, %v738
        %741 = vrot.lane.b32.xlu0 %v739, 96
        %v742 = vpop.permute.xlu0 %741
        %vm744 = vcmask 1044224
        %745 = vst.msk [vmem:[%s326] sm:$0xf] %vm744, %v742
      $region44: #{transformer_forward.44} parent=35 // pred_fallthru
        _
      %p746 = scmp.lt.s32.totalorder %s20, 1
      %s747 = scalar_select %p746, %s20, 1
      %p748 = scmp.lt.s32.totalorder %s21, 0
      %s749 = scalar_select %p748, %s21, 0
      %s750 = sadd.s32 %s749, %s747
      %s751 = smul.addr %s750, 4
      %s752 = scalar_lea.vmem %s4, %s751
      // Predicated region
      $region45: #{transformer_forward.44} parent=35 // pred_check
        %p753 = pneg %p166
      $region46: #{transformer_forward.44} parent=35 // pred_check_branch
        %755 = sbr.rel (%p753) target = $region48
      $region47: #{transformer_forward.44} parent=35 // pred_region
        _
      $region48: #{transformer_forward.44} parent=35 // pred_fallthru
        _
    $region36: #{transformer_forward.44} parent=5 // pred_fallthru
      _
    %p756 = scmp.le.s32.totalorder 2, %s10
    // Predicated region
    $region49: #{transformer_forward.44} parent=5 // pred_check
      %p757 = pneg %p756
    $region50: #{transformer_forward.44} parent=5 // pred_check_branch
      %759 = sbr.rel (%p757) target = $region52
    $region51: #{transformer_forward.44} parent=5 // pred_region
      %s760 = ssub.s32 %s10, 2
      // Predicated region
      $region53: #{transformer_forward.44} parent=51 // pred_check
        %p761 = pneg %p172
      $region54: #{transformer_forward.44} parent=51 // pred_check_branch
        %763 = sbr.rel (%p761) target = $region56
      $region55: #{transformer_forward.44} parent=51 // pred_region
        %p764 = scmp.lt.s32.totalorder %s23, 1
        %s765 = scalar_select %p764, %s23, 1
        %p766 = scmp.lt.s32.totalorder %s24, 0
        %s767 = scalar_select %p766, %s24, 0
        %s768 = sadd.s32 %s767, %s765
        %s769 = smul.addr %s768, 4
        %s770 = scalar_lea.vmem %s4, %s769
      $region56: #{transformer_forward.44} parent=51 // pred_fallthru
        _
    $region52: #{transformer_forward.44} parent=5 // pred_fallthru
      _
  $region6: #{transformer_forward.44} parent=0 // loop_footer
    %s14 = sadd.s32 1, %s10
  $region7: #{transformer_forward.44} parent=0 // loop_footer_branch
    %9 = sbr.rel target = $region3
  $region8: #{transformer_forward.44} parent=0 // loop_exit
    _

// kernel: transformer_forward.54
$region0: #{transformer_forward.54}
  #allocation0 [shape = 'u32[]', space=smem, size = 0x4, offset = 0x4, fixed_abs, tag = 'smem constant byte address 0x4 - core index']
  #allocation1 [shape = 'u32[72,128]{1,0:T(1,128)}', space=vmem, size = 0x9000, scoped, tag = 'internal scratch']
  #allocation2 [shape = 'f32[16,128]{1,0:T(8,128)}', space=vmem, size = 0x2000, scoped, tag = 'scratch operand']
  %s0 = inlined_call_operand.vmem [shape: bf16[16,128], index: 0, kind: input, shape index: {}]
  %s1 = inlined_call_operand.hbm [shape: bf16[128,128], index: 1, kind: input, shape index: {}]
  %s2 = inlined_call_operand.hbm [shape: f32[1,128], index: 2, kind: input, shape index: {}]
  %s3 = inlined_call_operand.vmem [shape: bf16[16,128], index: 3, kind: input, shape index: {}]
  %s4 = inlined_call_operand.hbm [shape: f32[1,128], index: 4, kind: input, shape index: {}]
  %s5 = inlined_call_operand.hbm [shape: f32[1,128], index: 5, kind: input, shape index: {}]
  %s6 = inlined_call_operand.vmem [shape: bf16[16,128], index: 6, kind: output, shape index: {}]
  %s7 = sld [smem:[#allocation0]]
  $region58: #{transformer_forward.54} parent=0
    _
  %s9 = ssub.s32 1, %s7
  %s10 = scalar_select 0, %s9, %s7
  $region1: #{transformer_forward.54} parent=0
    #allocation3 [shape = 'u8[32768]{0}', space=vmem, size = 0x8000, scoped, tag = 'input window, operand 1, single buffered']
    #allocation4 [shape = 's32[1]{0}', space=sflag, size = 0x4, scoped, tag = 'scoped memory for transformer_forward.54']
    #allocation5 [shape = 'u8[512]{0}', space=vmem, size = 0x400, scoped, tag = 'input window, operand 2, single buffered']
    #allocation6 [shape = 's32[1]{0}', space=sflag, size = 0x4, scoped, tag = 'scoped memory for transformer_forward.54']
    #allocation7 [shape = 'u8[512]{0}', space=vmem, size = 0x400, scoped, tag = 'input window, operand 4, single buffered']
    #allocation8 [shape = 'u8[512]{0}', space=vmem, size = 0x400, scoped, tag = 'input window, operand 5, single buffered']
    #allocation9 [shape = 's32[1]{0}', space=sflag, size = 0x4, scoped, tag = 'scoped memory for transformer_forward.54']
    %11 = vsyncpa [#allocation4], 0
    %12 = vsyncpa [#allocation6], 0
    %13 = vsyncpa [#allocation9], 0
    // Predicated region
    $region2: #{transformer_forward.54} parent=1 // pred_check
      _
    $region3: #{transformer_forward.54} parent=1 // pred_check_branch
      %15 = sbr.rel (0) target = $region5
    $region4: #{transformer_forward.54} parent=1 // pred_region
      _
    $region5: #{transformer_forward.54} parent=1 // pred_fallthru
      _
    // Predicated region
    $region6: #{transformer_forward.54} parent=1 // pred_check
      _
    $region7: #{transformer_forward.54} parent=1 // pred_check_branch
      %17 = sbr.rel (0) target = $region9
    $region8: #{transformer_forward.54} parent=1 // pred_region
      %19 = vsyncadd [#allocation4], 0
      %s20 = sshll.u32 %s1, 4
      %s21 = int_to_ptr.hbm [resolvable:$true] %s20
      %s22 = sshll.u32 [#allocation3], 4
      %s23 = int_to_ptr.vmem [resolvable:$true] %s22
      %28 = dma.hbm_to_vmem [thread:$0]  %s21, 1024, %s23, [#allocation4], 64, 64, 4
    $region9: #{transformer_forward.54} parent=1 // pred_fallthru
      _
    // Predicated region
    $region10: #{transformer_forward.54} parent=1 // pred_check
      _
    $region11: #{transformer_forward.54} parent=1 // pred_check_branch
      %30 = sbr.rel (0) target = $region13
    $region12: #{transformer_forward.54} parent=1 // pred_region
      %32 = vsyncadd [#allocation6], 0
      %s34 = sshll.u32 %s2, 4
      %s35 = int_to_ptr.hbm [resolvable:$true] %s34
      %s36 = sshll.u32 [#allocation5], 4
      %s37 = int_to_ptr.vmem [resolvable:$true] %s36
      %39 = dma.hbm_to_vmem [thread:$0]  %s35, 16, %s37, [#allocation6]
    $region13: #{transformer_forward.54} parent=1 // pred_fallthru
      _
    // Predicated region
    $region14: #{transformer_forward.54} parent=1 // pred_check
      _
    $region15: #{transformer_forward.54} parent=1 // pred_check_branch
      %41 = sbr.rel (0) target = $region17
    $region16: #{transformer_forward.54} parent=1 // pred_region
      _
    $region17: #{transformer_forward.54} parent=1 // pred_fallthru
      _
    // Predicated region
    $region18: #{transformer_forward.54} parent=1 // pred_check
      _
    $region19: #{transformer_forward.54} parent=1 // pred_check_branch
      %43 = sbr.rel (0) target = $region21
    $region20: #{transformer_forward.54} parent=1 // pred_region
      %45 = vsyncadd [#allocation6], 0
      %s47 = sshll.u32 %s4, 4
      %s48 = int_to_ptr.hbm [resolvable:$true] %s47
      %s49 = sshll.u32 [#allocation7], 4
      %s50 = int_to_ptr.vmem [resolvable:$true] %s49
      %52 = dma.hbm_to_vmem [thread:$0]  %s48, 16, %s50, [#allocation6]
    $region21: #{transformer_forward.54} parent=1 // pred_fallthru
      _
    // Predicated region
    $region22: #{transformer_forward.54} parent=1 // pred_check
      _
    $region23: #{transformer_forward.54} parent=1 // pred_check_branch
      %54 = sbr.rel (0) target = $region25
    $region24: #{transformer_forward.54} parent=1 // pred_region
      %56 = vsyncadd [#allocation9], 0
      %s58 = sshll.u32 %s5, 4
      %s59 = int_to_ptr.hbm [resolvable:$true] %s58
      %s60 = sshll.u32 [#allocation8], 4
      %s61 = int_to_ptr.vmem [resolvable:$true] %s60
      %63 = dma.hbm_to_vmem [thread:$0]  %s59, 16, %s61, [#allocation9]
    $region25: #{transformer_forward.54} parent=1 // pred_fallthru
      _
    // Predicated region
    $region26: #{transformer_forward.54} parent=1 // pred_check
      _
    $region27: #{transformer_forward.54} parent=1 // pred_check_branch
      %65 = sbr.rel (0) target = $region29
    $region28: #{transformer_forward.54} parent=1 // pred_region
      %67 = dma.done [#allocation4], 1024
    $region29: #{transformer_forward.54} parent=1 // pred_fallthru
      _
    // Predicated region
    $region30: #{transformer_forward.54} parent=1 // pred_check
      _
    $region31: #{transformer_forward.54} parent=1 // pred_check_branch
      %69 = sbr.rel (0) target = $region33
    $region32: #{transformer_forward.54} parent=1 // pred_region
      %71 = dma.done [#allocation6], 16
    $region33: #{transformer_forward.54} parent=1 // pred_fallthru
      _
    // Predicated region
    $region34: #{transformer_forward.54} parent=1 // pred_check
      _
    $region35: #{transformer_forward.54} parent=1 // pred_check_branch
      %73 = sbr.rel (0) target = $region37
    $region36: #{transformer_forward.54} parent=1 // pred_region
      %75 = dma.done [#allocation6], 16
    $region37: #{transformer_forward.54} parent=1 // pred_fallthru
      _
    // Predicated region
    $region38: #{transformer_forward.54} parent=1 // pred_check
      _
    $region39: #{transformer_forward.54} parent=1 // pred_check_branch
      %77 = sbr.rel (0) target = $region41
    $region40: #{transformer_forward.54} parent=1 // pred_region
      %79 = dma.done [#allocation9], 16
    $region41: #{transformer_forward.54} parent=1 // pred_fallthru
      _
    %p80 = scmp.eq.s32.totalorder 0, 0
    // Predicated region
    $region42: #{transformer_forward.54} parent=1 // pred_check
      %p81 = pneg %p80
    $region43: #{transformer_forward.54} parent=1 // pred_check_branch
      %83 = sbr.rel (%p81) target = $region45
    $region44: #{transformer_forward.54} parent=1 // pred_region
      %84 = vst [vmem:[#allocation2] sm:$0xff] 0.0
      %85 = vst [vmem:[#allocation2 + $0x8] sm:$0xff] 0.0
    $region45: #{transformer_forward.54} parent=1 // pred_fallthru
      _
    %v86 = vld [vmem:[#allocation2] sm:$0xff]
    %v87 = vld [vmem:[#allocation2 + $0x8] sm:$0xff]
    %v88 = vld [vmem:[%s0] sm:$0xf]
    %v89 = vld [vmem:[%s0 + $0x4] sm:$0xf]
    %v90 = vld [vmem:[#allocation3] sm:$0xf]
    %v91 = vld [vmem:[#allocation3 + $0x4] sm:$0xf]
    %v92 = vld [vmem:[#allocation3 + $0x8] sm:$0xf]
    %v93 = vld [vmem:[#allocation3 + $0xc] sm:$0xf]
    %v94 = vld [vmem:[#allocation3 + $0x10] sm:$0xf]
    %v95 = vld [vmem:[#allocation3 + $0x14] sm:$0xf]
    %v96 = vld [vmem:[#allocation3 + $0x18] sm:$0xf]
    %v97 = vld [vmem:[#allocation3 + $0x1c] sm:$0xf]
    %v98 = vld [vmem:[#allocation3 + $0x20] sm:$0xf]
    %v99 = vld [vmem:[#allocation3 + $0x24] sm:$0xf]
    %v100 = vld [vmem:[#allocation3 + $0x28] sm:$0xf]
    %v101 = vld [vmem:[#allocation3 + $0x2c] sm:$0xf]
    %v102 = vld [vmem:[#allocation3 + $0x30] sm:$0xf]
    %v103 = vld [vmem:[#allocation3 + $0x34] sm:$0xf]
    %v104 = vld [vmem:[#allocation3 + $0x38] sm:$0xf]
    %v105 = vld [vmem:[#allocation3 + $0x3c] sm:$0xf]
    %v108 = vunpack.c.l.b16 %v88
    %v109 = vunpack.c.l.b16 %v89
    %v110 = vpack.c.b16 %v109, %v108
    %v128 = vunpack.c.l.b16 %v90
    %v129 = vunpack.c.l.b16 %v91
    %v130 = vunpack.c.l.b16 %v92
    %v131 = vunpack.c.l.b16 %v93
    %v132 = vunpack.c.l.b16 %v94
    %v133 = vunpack.c.l.b16 %v95
    %v134 = vunpack.c.l.b16 %v96
    %v135 = vunpack.c.l.b16 %v97
    %v136 = vunpack.c.l.b16 %v98
    %v137 = vunpack.c.l.b16 %v99
    %v138 = vunpack.c.l.b16 %v100
    %v139 = vunpack.c.l.b16 %v101
    %v140 = vunpack.c.l.b16 %v102
    %v141 = vunpack.c.l.b16 %v103
    %v142 = vunpack.c.l.b16 %v104
    %v143 = vunpack.c.l.b16 %v105
    %v144 = vpack.c.b16 %v129, %v128
    %v145 = vpack.c.b16 %v131, %v130
    %v146 = vpack.c.b16 %v133, %v132
    %v147 = vpack.c.b16 %v135, %v134
    %v148 = vpack.c.b16 %v137, %v136
    %v149 = vpack.c.b16 %v139, %v138
    %v150 = vpack.c.b16 %v141, %v140
    %v151 = vpack.c.b16 %v143, %v142
    %160 = vmatpush.bf16.msra.mxu0 %v151
    %161 = vmatpush.bf16.msra.mxu0 %v150
    %162 = vmatpush.bf16.msra.mxu0 %v149
    %163 = vmatpush.bf16.msra.mxu0 %v148
    %164 = vmatpush.bf16.msra.mxu0 %v147
    %165 = vmatpush.bf16.msra.mxu0 %v146
    %166 = vmatpush.bf16.msra.mxu0 %v145
    %167 = vmatpush.bf16.msra.mxu0 %v144
    %168 = vmatmul.bf16.gmra.mxu0 %v110
    %v169 = vpop.f32.mrf.mxu0
    %v170 = vadd.f32 0.0, %v169
    %v171 = vpop.f32.mrf.mxu0
    %v172 = vadd.f32 0.0, %v171
    %173 = vdwg.mxu0
    %v174 = vadd.f32 %v86, %v170
    %v175 = vadd.f32 %v87, %v172
    %176 = vst [vmem:[#allocation2] sm:$0xff] %v174
    %177 = vst [vmem:[#allocation2 + $0x8] sm:$0xff] %v175
    // Predicated region
    $region46: #{transformer_forward.54} parent=1 // pred_check
      %p178 = pneg %p80
    $region47: #{transformer_forward.54} parent=1 // pred_check_branch
      %180 = sbr.rel (%p178) target = $region49
    $region48: #{transformer_forward.54} parent=1 // pred_region
      %v181 = vld [vmem:[#allocation2] sm:$0xff]
      %v182 = vld [vmem:[#allocation2 + $0x8] sm:$0xff]
      %v183 = vld [vmem:[#allocation5] sm:$0x1]
      %v185 = vperm.slane %v183, 0
      %v187 = vadd.f32 %v181, %v185
      %v188 = vadd.f32 %v182, %v185
      %v189 = vld [vmem:[%s3] sm:$0xf]
      %v190 = vld [vmem:[%s3 + $0x4] sm:$0xf]
      %v191 = vunpack.c.l.bf16 %v189
      %v192 = vunpack.c.l.bf16 %v190
      %v193 = vadd.f32 %v187, %v191
      %v194 = vadd.f32 %v188, %v192
      %195 = vadd.xlane.f32.xlu0 %v193
      %v196 = vpop.xlane.xlu0 %195
      %197 = vadd.xlane.f32.xlu0 %v194
      %v198 = vpop.xlane.xlu0 %197
      %v199 = vrcp.pop 128.0
      %v200 = vmul.f32 128.0, %v199
      %v201 = vsub.f32 1.0, %v200
      %v202 = vmul.f32 %v199, %v201
      %v203 = vadd.f32 %v199, %v202
      %vm204 = vweird.f32 %v199
      %v205 = vsel %vm204, %v199, %v203
      %v206 = vmul.f32 %v196, %v205
      %v207 = vmul.f32 %v198, %v205
      %v208 = vsub.f32 %v193, %v206
      %v209 = vsub.f32 %v194, %v207
      %v210 = vmul.f32 %v208, %v208
      %v211 = vmul.f32 %v209, %v209
      %212 = vadd.xlane.f32.xlu0 %v210
      %v213 = vpop.xlane.xlu0 %212
      %214 = vadd.xlane.f32.xlu0 %v211
      %v215 = vpop.xlane.xlu0 %214
      %v216 = vmul.f32 %v213, %v205
      %v217 = vmul.f32 %v215, %v205
      %v218 = vadd.f32 %v216, 1e-05
      %v219 = vadd.f32 %v217, 1e-05
      %v220 = vrsqrt.pop %v218
      %v221 = vmul.f32 %v220, %v218
      %v222 = vmul.f32 %v221, %v220
      %v223 = vmul.f32 0.5, %v222
      %v224 = vsub.f32 1.5, %v223
      %v225 = vmul.f32 %v220, %v224
      %vm226 = vweird.f32 %v218
      %vm227 = vweird.f32 %v220
      %vm228 = vmor %vm226, %vm227
      %v229 = vsel %vm228, %v220, %v225
      %v230 = vrsqrt.pop %v219
      %v231 = vmul.f32 %v230, %v219
      %v232 = vmul.f32 %v231, %v230
      %v233 = vmul.f32 0.5, %v232
      %v234 = vsub.f32 1.5, %v233
      %v235 = vmul.f32 %v230, %v234
      %vm236 = vweird.f32 %v219
      %vm237 = vweird.f32 %v230
      %vm238 = vmor %vm236, %vm237
      %v239 = vsel %vm238, %v230, %v235
      %v240 = vmul.f32 %v208, %v229
      %v241 = vmul.f32 %v209, %v239
      %v242 = vld [vmem:[#allocation7] sm:$0x1]
      %v244 = vperm.slane %v242, 0
      %v246 = vmul.f32 %v240, %v244
      %v247 = vmul.f32 %v241, %v244
      %v248 = vld [vmem:[#allocation8] sm:$0x1]
      %v250 = vperm.slane %v248, 0
      %v252 = vadd.f32 %v246, %v250
      %v253 = vadd.f32 %v247, %v250
      %v254 = vpack.c.bf16 %v252, %v252
      %v255 = vpack.c.bf16 %v253, %v253
      %256 = vst [vmem:[%s6] sm:$0xf] %v254
      %257 = vst [vmem:[%s6 + $0x4] sm:$0xf] %v255
    $region49: #{transformer_forward.54} parent=1 // pred_fallthru
      _
    // Predicated region
    $region50: #{transformer_forward.54} parent=1 // pred_check
      _
    $region51: #{transformer_forward.54} parent=1 // pred_check_branch
      %259 = sbr.rel (0) target = $region53
    $region52: #{transformer_forward.54} parent=1 // pred_region
      _
    $region53: #{transformer_forward.54} parent=1 // pred_fallthru
      _
    // Predicated region
    $region54: #{transformer_forward.54} parent=1 // pred_check
      _
    $region55: #{transformer_forward.54} parent=1 // pred_check_branch
      %261 = sbr.rel (0) target = $region57
    $region56: #{transformer_forward.54} parent=1 // pred_region
      _
    $region57: #{transformer_forward.54} parent=1 // pred_fallthru
      _
    %262 = vsyncpa [#allocation4], 1
    %263 = vsyncpa [#allocation6], 1
    %264 = vsyncpa [#allocation9], 1

// kernel: transformer_forward.57
$region0: #{transformer_forward.57}
  #allocation0 [shape = 'u32[]', space=smem, size = 0x4, offset = 0x4, fixed_abs, tag = 'smem constant byte address 0x4 - core index']
  #allocation1 [shape = 'u32[72,128]{1,0:T(1,128)}', space=vmem, size = 0x9000, scoped, tag = 'internal scratch']
  #allocation2 [shape = 'f32[16,32]{1,0:T(8,128)}', space=vmem, size = 0x2000, scoped, tag = 'scratch operand']
  %s0 = inlined_call_operand.vmem [shape: bf16[16,128], index: 0, kind: input, shape index: {}]
  %s1 = inlined_call_operand.vmem [shape: bf16[128,32], index: 1, kind: input, shape index: {}]
  %s2 = inlined_call_operand.vmem [shape: f32[1,32], index: 2, kind: input, shape index: {}]
  %s3 = inlined_call_operand.hbm [shape: f32[16,32], index: 3, kind: output, shape index: {}]
  %s4 = sld [smem:[#allocation0]]
  $region30: #{transformer_forward.57} parent=0
    _
  %s6 = ssub.s32 1, %s4
  %s7 = scalar_select 0, %s6, %s4
  $region1: #{transformer_forward.57} parent=0
    #allocation3 [shape = 'u8[8192]{0}', space=vmem, size = 0x2000, scoped, tag = 'output window, operand 0, single buffered']
    #allocation4 [shape = 's32[1]{0}', space=sflag, size = 0x4, scoped, tag = 'scoped memory for transformer_forward.57']
    %8 = vsyncpa [#allocation4], 0
    // Predicated region
    $region2: #{transformer_forward.57} parent=1 // pred_check
      _
    $region3: #{transformer_forward.57} parent=1 // pred_check_branch
      %10 = sbr.rel (0) target = $region5
    $region4: #{transformer_forward.57} parent=1 // pred_region
      _
    $region5: #{transformer_forward.57} parent=1 // pred_fallthru
      _
    // Predicated region
    $region6: #{transformer_forward.57} parent=1 // pred_check
      _
    $region7: #{transformer_forward.57} parent=1 // pred_check_branch
      %12 = sbr.rel (0) target = $region9
    $region8: #{transformer_forward.57} parent=1 // pred_region
      _
    $region9: #{transformer_forward.57} parent=1 // pred_fallthru
      _
    // Predicated region
    $region10: #{transformer_forward.57} parent=1 // pred_check
      _
    $region11: #{transformer_forward.57} parent=1 // pred_check_branch
      %14 = sbr.rel (0) target = $region13
    $region12: #{transformer_forward.57} parent=1 // pred_region
      _
    $region13: #{transformer_forward.57} parent=1 // pred_fallthru
      _
    %p15 = scmp.eq.s32.totalorder 0, 0
    // Predicated region
    $region14: #{transformer_forward.57} parent=1 // pred_check
      %p16 = pneg %p15
    $region15: #{transformer_forward.57} parent=1 // pred_check_branch
      %18 = sbr.rel (%p16) target = $region17
    $region16: #{transformer_forward.57} parent=1 // pred_region
      %vm19 = vcmask 261120
      %20 = vst.msk [vmem:[#allocation2] sm:$0xff] %vm19, 0.0
      %21 = vst.msk [vmem:[#allocation2 + $0x8] sm:$0xff] %vm19, 0.0
    $region17: #{transformer_forward.57} parent=1 // pred_fallthru
      _
    %v22 = vld [vmem:[#allocation2] sm:$0xff]
    %v23 = vld [vmem:[#allocation2 + $0x8] sm:$0xff]
    %v24 = vld [vmem:[%s0] sm:$0xf]
    %v25 = vld [vmem:[%s0 + $0x4] sm:$0xf]
    %v26 = vld [vmem:[%s1] sm:$0xf]
    %v27 = vld [vmem:[%s1 + $0x4] sm:$0xf]
    %v28 = vld [vmem:[%s1 + $0x8] sm:$0xf]
    %v29 = vld [vmem:[%s1 + $0xc] sm:$0xf]
    %v30 = vld [vmem:[%s1 + $0x10] sm:$0xf]
    %v31 = vld [vmem:[%s1 + $0x14] sm:$0xf]
    %v32 = vld [vmem:[%s1 + $0x18] sm:$0xf]
    %v33 = vld [vmem:[%s1 + $0x1c] sm:$0xf]
    %v34 = vld [vmem:[%s1 + $0x20] sm:$0xf]
    %v35 = vld [vmem:[%s1 + $0x24] sm:$0xf]
    %v36 = vld [vmem:[%s1 + $0x28] sm:$0xf]
    %v37 = vld [vmem:[%s1 + $0x2c] sm:$0xf]
    %v38 = vld [vmem:[%s1 + $0x30] sm:$0xf]
    %v39 = vld [vmem:[%s1 + $0x34] sm:$0xf]
    %v40 = vld [vmem:[%s1 + $0x38] sm:$0xf]
    %v41 = vld [vmem:[%s1 + $0x3c] sm:$0xf]
    %v44 = vunpack.c.l.b16 %v24
    %v45 = vunpack.c.l.b16 %v25
    %v46 = vpack.c.b16 %v45, %v44
    %v64 = vunpack.c.l.b16 %v26
    %v65 = vunpack.c.l.b16 %v27
    %v66 = vunpack.c.l.b16 %v28
    %v67 = vunpack.c.l.b16 %v29
    %v68 = vunpack.c.l.b16 %v30
    %v69 = vunpack.c.l.b16 %v31
    %v70 = vunpack.c.l.b16 %v32
    %v71 = vunpack.c.l.b16 %v33
    %v72 = vunpack.c.l.b16 %v34
    %v73 = vunpack.c.l.b16 %v35
    %v74 = vunpack.c.l.b16 %v36
    %v75 = vunpack.c.l.b16 %v37
    %v76 = vunpack.c.l.b16 %v38
    %v77 = vunpack.c.l.b16 %v39
    %v78 = vunpack.c.l.b16 %v40
    %v79 = vunpack.c.l.b16 %v41
    %v80 = vpack.c.b16 %v65, %v64
    %v81 = vpack.c.b16 %v67, %v66
    %v82 = vpack.c.b16 %v69, %v68
    %v83 = vpack.c.b16 %v71, %v70
    %v84 = vpack.c.b16 %v73, %v72
    %v85 = vpack.c.b16 %v75, %v74
    %v86 = vpack.c.b16 %v77, %v76
    %v87 = vpack.c.b16 %v79, %v78
    %96 = vmatpush.bf16.msra.mxu0 %v87
    %97 = vmatpush.bf16.msra.mxu0 %v86
    %98 = vmatpush.bf16.msra.mxu0 %v85
    %99 = vmatpush.bf16.msra.mxu0 %v84
    %100 = vmatpush.bf16.msra.mxu0 %v83
    %101 = vmatpush.bf16.msra.mxu0 %v82
    %102 = vmatpush.bf16.msra.mxu0 %v81
    %103 = vmatpush.bf16.msra.mxu0 %v80
    %104 = vmatmul.bf16.gmra.mxu0 %v46
    %v105 = vpop.f32.mrf.mxu0
    %v106 = vadd.f32 0.0, %v105
    %v107 = vpop.f32.mrf.mxu0
    %v108 = vadd.f32 0.0, %v107
    %109 = vdwg.mxu0
    %v110 = vadd.f32 %v22, %v106
    %v111 = vadd.f32 %v23, %v108
    %vm112 = vcmask 261120
    %113 = vst.msk [vmem:[#allocation2] sm:$0xff] %vm112, %v110
    %114 = vst.msk [vmem:[#allocation2 + $0x8] sm:$0xff] %vm112, %v111
    // Predicated region
    $region18: #{transformer_forward.57} parent=1 // pred_check
      %p115 = pneg %p15
    $region19: #{transformer_forward.57} parent=1 // pred_check_branch
      %117 = sbr.rel (%p115) target = $region21
    $region20: #{transformer_forward.57} parent=1 // pred_region
      %v118 = vld [vmem:[#allocation2] sm:$0xff]
      %v119 = vld [vmem:[#allocation2 + $0x8] sm:$0xff]
      %v120 = vld [vmem:[%s2] sm:$0x1]
      %v122 = vperm.slane %v120, 0
      %v124 = vadd.f32 %v118, %v122
      %v125 = vadd.f32 %v119, %v122
      %126 = vst.msk [vmem:[#allocation3] sm:$0xff] %vm112, %v124
      %127 = vst.msk [vmem:[#allocation3 + $0x8] sm:$0xff] %vm112, %v125
    $region21: #{transformer_forward.57} parent=1 // pred_fallthru
      _
    // Predicated region
    $region22: #{transformer_forward.57} parent=1 // pred_check
      _
    $region23: #{transformer_forward.57} parent=1 // pred_check_branch
      %129 = sbr.rel (0) target = $region25
    $region24: #{transformer_forward.57} parent=1 // pred_region
      %131 = vsyncadd [#allocation4], 0
      %s132 = sshll.u32 [#allocation3], 4
      %s133 = int_to_ptr.vmem [resolvable:$true] %s132
      %s134 = sshll.u32 %s3, 4
      %s135 = int_to_ptr.hbm [resolvable:$true] %s134
      %140 = dma.vmem_to_hbm [thread:$0]  %s133, 256, %s135, [#allocation4], 128, 128, 8
    $region25: #{transformer_forward.57} parent=1 // pred_fallthru
      _
    // Predicated region
    $region26: #{transformer_forward.57} parent=1 // pred_check
      _
    $region27: #{transformer_forward.57} parent=1 // pred_check_branch
      %142 = sbr.rel (0) target = $region29
    $region28: #{transformer_forward.57} parent=1 // pred_region
      %144 = dma.done [#allocation4], 256
    $region29: #{transformer_forward.57} parent=1 // pred_fallthru
      _
    %145 = vsyncpa [#allocation4], 1

</llo_original>
